<compile_context>
chip_gen: v5e
topology: v5e:2x2
jax: 0.10.0
libtpu: 0.0.40
codegen_flags: <defaults>
</compile_context>

<pallas_src>
import functools
import math

import jax
import jax.numpy as jnp
from jax.experimental import pallas as pl
from jax.experimental.pallas import tpu as pltpu

BN_EPS = 1e-5
LANE = 128
VMEM_LIMIT = 48 * 1024 * 1024   # explicit scoped-VMEM budget (headroom on v5e/v6e/v7x)


# ----------------------------- small helpers --------------------------------

def _pad_to_lane(c):
    return max(LANE, ((c + LANE - 1) // LANE) * LANE)


def _pad_last(x, cp):
    c = x.shape[-1]
    if c == cp:
        return x
    pad = [(0, 0)] * (x.ndim - 1) + [(0, cp - c)]
    return jnp.pad(x, pad)


def _vmem_spec():
    return pl.BlockSpec(memory_space=pltpu.MemorySpace.VMEM)


def _conv_compiler_params():
    return pltpu.CompilerParams(
        dimension_semantics=("parallel", "parallel"),
        vmem_limit_bytes=VMEM_LIMIT)


# ----------------------------- kernel helpers --------------------------------

def _stage_tile(xs_ref, top, body, bot, TH, W):
    """Stage the (TH+2, W+2, C) stencil tile: body + 1-row halos at column
    offset 1; zero ONLY the invalid regions (left/right padding columns, and
    the halo rows when the index_map clamped at the image border)."""
    C = xs_ref.shape[-1]
    t = pl.program_id(1)
    nt = pl.num_programs(1)

    xs_ref[0:1, 1:W + 1, :] = top
    xs_ref[1:TH + 1, 1:W + 1, :] = body
    xs_ref[TH + 1:TH + 2, 1:W + 1, :] = bot
    xs_ref[:, 0:1, :] = jnp.zeros((TH + 2, 1, C), xs_ref.dtype)
    xs_ref[:, W + 1:W + 2, :] = jnp.zeros((TH + 2, 1, C), xs_ref.dtype)

    @pl.when(t == 0)            # top halo row lies above the image
    def _():
        xs_ref[0:1, :, :] = jnp.zeros((1, W + 2, C), xs_ref.dtype)

    @pl.when(t == nt - 1)       # bottom halo row lies below the image
    def _():
        xs_ref[TH + 1:TH + 2, :, :] = jnp.zeros((1, W + 2, C), xs_ref.dtype)


def _conv3x3(tile, w_ref, TH, W):
    """3x3 conv on a zero-padded (TH+2, W+2, Cin) bf16 tile.
    The three ky row taps are concatenated along the contraction dim, so each
    kx column window is a single (TH*W, 3*Cin) x (3*Cin, Cout) MXU matmul
    (3 matmuls total). f32 accumulation."""
    C = tile.shape[-1]
    M = TH * W
    acc = None
    for kx in range(3):
        win = tile[:, kx:kx + W, :]                               # (TH+2, W, Cin)
        patch = jnp.concatenate(
            [win[ky:ky + TH].reshape(M, C) for ky in range(3)], axis=-1)
        d = jnp.dot(patch, w_ref[kx], preferred_element_type=jnp.float32)
        acc = d if acc is None else acc + d
    return acc                                                    # (M, Cout) f32


def _store_stats(stat_ref, acc):
    """Per-tile partial BatchNorm statistics (channel-wise sum, sum-of-squares)
    written as one store."""
    s = jnp.sum(acc, axis=0, keepdims=True)
    sq = jnp.sum(acc * acc, axis=0, keepdims=True)
    stat_ref[...] = jnp.concatenate([s, sq], axis=0).reshape(stat_ref.shape)


# ----------------------------- kernels ---------------------------------------

def _conv1_kernel(*refs, TH, W, has_ds):
    """conv1 (alpha folded into weights) + fused 1x1 downsample + BN partials."""
    if has_ds:
        (xb, xt, xbo, w1_ref, wds_ref,
         y1_ref, s1_ref, r_ref, sds_ref, xs_ref) = refs
    else:
        xb, xt, xbo, w1_ref, y1_ref, s1_ref, xs_ref = refs

    _stage_tile(xs_ref, xt[0], xb[0], xbo[0], TH, W)

    acc = _conv3x3(xs_ref[...], w1_ref, TH, W)                    # (M, C1) f32
    y1_ref[...] = acc.reshape(y1_ref.shape).astype(y1_ref.dtype)  # bf16 writeback
    _store_stats(s1_ref, acc)

    if has_ds:
        xflat = xb[0].reshape(TH * W, xb.shape[-1])               # bf16 body pixels
        racc = jnp.dot(xflat, wds_ref[...], preferred_element_type=jnp.float32)
        r_ref[...] = racc.reshape(r_ref.shape).astype(r_ref.dtype)
        _store_stats(sds_ref, racc)


def _conv2_kernel(yb, yt, ybo, sc1_ref, sh1_ref, w2_ref, y2_ref, s2_ref, ys_ref,
                  *, TH, W):
    """BN1 + ReLU applied on the fly to conv1's bf16 output, then conv2 + BN
    partials.  Borders are zeroed in x1 (post-activation) space."""
    sc = sc1_ref[...].reshape(1, 1, -1)
    sh = sh1_ref[...].reshape(1, 1, -1)

    def act(v):   # BN1 + ReLU in f32, bf16 result for the MXU
        return jnp.maximum(v.astype(jnp.float32) * sc + sh, 0.0).astype(ys_ref.dtype)

    _stage_tile(ys_ref, act(yt[0]), act(yb[0]), act(ybo[0]), TH, W)

    acc = _conv3x3(ys_ref[...], w2_ref, TH, W)                    # (M, C2) f32
    y2_ref[...] = acc.reshape(y2_ref.shape)
    _store_stats(s2_ref, acc)


def _finalize_kernel(y2_ref, res_ref, sc2_ref, sh2_ref, scr_ref, shr_ref, out_ref):
    """out = relu( BN2(y2) + BN_ds(res or identity) ) -- lane-dense elementwise."""
    res = res_ref[...].astype(jnp.float32)
    out_ref[...] = jnp.maximum(
        y2_ref[...] * sc2_ref[...] + sh2_ref[...] + res * scr_ref[...] + shr_ref[...],
        0.0)


# ----------------------------- pallas_call wrappers ---------------------------

def _halo_specs(TH, H, W, C):
    body = pl.BlockSpec((1, TH, W, C), lambda n, t: (n, t, 0, 0))
    top = pl.BlockSpec((1, 1, W, C),
                       lambda n, t: (n, jnp.maximum(t * TH - 1, 0), 0, 0))
    bot = pl.BlockSpec((1, 1, W, C),
                       lambda n, t: (n, jnp.minimum((t + 1) * TH, H - 1), 0, 0))
    return body, top, bot


def _conv_stage1(x_bf16, w1_eff, wds_eff, TH):
    N, H, W, Ci = x_bf16.shape
    C1 = w1_eff.shape[-1]
    HT = H // TH
    has_ds = wds_eff is not None

    body, top, bot = _halo_specs(TH, H, W, Ci)
    in_specs = [body, top, bot, _vmem_spec()]
    args = [x_bf16, x_bf16, x_bf16, w1_eff]
    out_specs = [pl.BlockSpec((1, TH, W, C1), lambda n, t: (n, t, 0, 0)),
                 pl.BlockSpec((1, 1, 2, C1), lambda n, t: (n, t, 0, 0))]
    out_shape = [jax.ShapeDtypeStruct((N, H, W, C1), jnp.bfloat16),
                 jax.ShapeDtypeStruct((N, HT, 2, C1), jnp.float32)]
    if has_ds:
        C2 = wds_eff.shape[-1]
        in_specs.append(_vmem_spec())
        args.append(wds_eff)
        out_specs += [pl.BlockSpec((1, TH, W, C2), lambda n, t: (n, t, 0, 0)),
                      pl.BlockSpec((1, 1, 2, C2), lambda n, t: (n, t, 0, 0))]
        out_shape += [jax.ShapeDtypeStruct((N, H, W, C2), jnp.bfloat16),
                      jax.ShapeDtypeStruct((N, HT, 2, C2), jnp.float32)]

    return pl.pallas_call(
        functools.partial(_conv1_kernel, TH=TH, W=W, has_ds=has_ds),
        grid=(N, HT),
        in_specs=in_specs,
        out_specs=out_specs,
        out_shape=out_shape,
        scratch_shapes=[pltpu.VMEM((TH + 2, W + 2, Ci), jnp.bfloat16)],
        compiler_params=_conv_compiler_params(),
    )(*args)


def _conv_stage2(y1, scale1, shift1, w2_eff, TH):
    N, H, W, C1 = y1.shape
    C2 = w2_eff.shape[-1]
    HT = H // TH
    body, top, bot = _halo_specs(TH, H, W, C1)
    return pl.pallas_call(
        functools.partial(_conv2_kernel, TH=TH, W=W),
        grid=(N, HT),
        in_specs=[body, top, bot, _vmem_spec(), _vmem_spec(), _vmem_spec()],
        out_specs=[pl.BlockSpec((1, TH, W, C2), lambda n, t: (n, t, 0, 0)),
                   pl.BlockSpec((1, 1, 2, C2), lambda n, t: (n, t, 0, 0))],
        out_shape=[jax.ShapeDtypeStruct((N, H, W, C2), jnp.float32),
                   jax.ShapeDtypeStruct((N, HT, 2, C2), jnp.float32)],
        scratch_shapes=[pltpu.VMEM((TH + 2, W + 2, C1), jnp.bfloat16)],
        compiler_params=_conv_compiler_params(),
    )(y1, y1, y1, scale1, shift1, w2_eff)


def _finalize(y2_flat, res_flat, scale2, shift2, scale_r, shift_r):
    R, C2 = y2_flat.shape
    TR = math.gcd(R, 4096)          # big elementwise tiles -> near HBM roofline
    if TR < 8:
        TR = R
    return pl.pallas_call(
        _finalize_kernel,
        grid=(R // TR,),
        in_specs=[pl.BlockSpec((TR, C2), lambda i: (i, 0)),
                  pl.BlockSpec((TR, C2), lambda i: (i, 0)),
                  _vmem_spec(), _vmem_spec(), _vmem_spec(), _vmem_spec()],
        out_specs=pl.BlockSpec((TR, C2), lambda i: (i, 0)),
        out_shape=jax.ShapeDtypeStruct((R, C2), jnp.float32),
        compiler_params=pltpu.CompilerParams(
            dimension_semantics=("parallel",), vmem_limit_bytes=VMEM_LIMIT),
    )(y2_flat, res_flat, scale2, shift2, scale_r, shift_r)


# ----------------------------- BN / weight prep -------------------------------

def _bn_affine(stats, gamma, beta, count):
    """Fold training-mode BN into per-channel (scale, shift) from (sum, sum_sq)."""
    s = jnp.sum(stats, axis=(0, 1))                 # (2, C)
    mean = s[0] / count
    var = jnp.maximum(s[1] / count - mean * mean, 0.0)
    scale = gamma * jax.lax.rsqrt(var + BN_EPS)
    shift = beta - mean * scale
    return (scale.reshape(1, -1).astype(jnp.float32),
            shift.reshape(1, -1).astype(jnp.float32))


def _prep_conv_weights(params, Ci, C1, C2, use_ds):
    """Fold the adaptive per-output-channel alpha into the conv weights, pad to
    lane-dense channel counts, and pre-concatenate the three ky taps along the
    contraction dim: (ky, kx, ci, co) -> (kx, 3*ci, co).  Cast to bf16."""
    def prep(w, alpha, cin_p, cout_p):
        w = w * alpha[None, None, None, :]
        wp = jnp.zeros((3, 3, cin_p, cout_p), jnp.float32)
        wp = wp.at[:, :, :w.shape[2], :w.shape[3]].set(w)
        wp = jnp.transpose(wp, (1, 0, 2, 3)).reshape(3, 3 * cin_p, cout_p)
        return wp.astype(jnp.bfloat16)

    w1 = prep(params["w1"], params["alpha1"], Ci, C1)
    w2 = prep(params["w2"], params["alpha2"], C1, C2)
    wds = None
    if use_ds:
        w = params["w_ds"]
        wds = jnp.zeros((Ci, C2), jnp.float32).at[:w.shape[0], :w.shape[1]].set(w)
        wds = wds.astype(jnp.bfloat16)
    return w1, w2, wds


# ----------------------------- module forward ---------------------------------

def init_basic_block_adaptive(key, len_list, stride=1, downsampling=False):
    assert stride == 1  # TODO(synk): stride > 1 not implemented in-kernel.
    cin, cmid, cout = len_list
    k = jax.random.split(key, 5)
    params = dict(
        w1=0.1 * jax.random.normal(k[0], (3, 3, cin, cmid), jnp.float32),
        alpha1=jax.random.uniform(k[1], (cmid,), jnp.float32),   # ~ torch.rand
        gamma1=jnp.ones((cmid,), jnp.float32),
        beta1=jnp.zeros((cmid,), jnp.float32),
        w2=0.1 * jax.random.normal(k[2], (3, 3, cmid, cout), jnp.float32),
        alpha2=jax.random.uniform(k[3], (cout,), jnp.float32),
        gamma2=jnp.ones((cout,), jnp.float32),
        beta2=jnp.zeros((cout,), jnp.float32),
    )
    use_downsample = downsampling or (cin != cout)
    if use_downsample:
        params.update(
            w_ds=0.1 * jax.random.normal(k[4], (cin, cout), jnp.float32),
            gamma_ds=jnp.ones((cout,), jnp.float32),
            beta_ds=jnp.zeros((cout,), jnp.float32),
        )
    return params, use_downsample


def basic_block_adaptive_forward(x_nchw, params, downsampling, *, tile_rows=16):
    x = jnp.transpose(x_nchw, (0, 2, 3, 1)).astype(jnp.float32)   # NCHW -> NHWC
    N, H, W, cin = x.shape
    cmid = params["w1"].shape[-1]
    cout = params["w2"].shape[-1]
    Ci, C1, C2 = _pad_to_lane(cin), _pad_to_lane(cmid), _pad_to_lane(cout)
    # Largest divisor of H <= tile_rows: bounds VMEM for any image height.
    # TODO(synk): ragged last tile would avoid tiny TH when H is prime.
    TH = max(d for d in range(1, min(tile_rows, H) + 1) if H % d == 0)
    count = float(N * H * W)

    xp_bf16 = _pad_last(x, Ci).astype(jnp.bfloat16)
    w1e, w2e, wdse = _prep_conv_weights(params, Ci, C1, C2, downsampling)
    g1, b1 = _pad_last(params["gamma1"], C1), _pad_last(params["beta1"], C1)
    g2, b2 = _pad_last(params["gamma2"], C2), _pad_last(params["beta2"], C2)

    # stage 1: conv1 (+ fused 1x1 downsample projection) + BN partial stats
    if downsampling:
        y1, s1, r_raw, sds = _conv_stage1(xp_bf16, w1e, wdse, TH)
    else:
        y1, s1 = _conv_stage1(xp_bf16, w1e, None, TH)
    scale1, shift1 = _bn_affine(s1, g1, b1, count)

    # stage 2: BN1 + ReLU fused into conv2 + BN2 partial stats
    y2, s2 = _conv_stage2(y1, scale1, shift1, w2e, TH)
    scale2, shift2 = _bn_affine(s2, g2, b2, count)

    # residual path
    if downsampling:
        gds = _pad_last(params["gamma_ds"], C2)
        bds = _pad_last(params["beta_ds"], C2)
        scale_r, shift_r = _bn_affine(sds, gds, bds, count)
        res_flat = r_raw.reshape(N * H * W, C2)
    else:
        scale_r = jnp.ones((1, C2), jnp.float32)
        shift_r = jnp.zeros((1, C2), jnp.float32)
        res_flat = _pad_last(xp_bf16, C2).reshape(N * H * W, C2)

    # stage 3: BN2 + residual add + ReLU (elementwise, big lane-dense tiles)
    out_flat = _finalize(y2.reshape(N * H * W, C2), res_flat,
                         scale2, shift2, scale_r, shift_r)
    out = out_flat.reshape(N, H, W, C2)[..., :cout]
    return jnp.transpose(out, (0, 3, 1, 2))        # NHWC -> NCHW


# ----------------------------- reference & main --------------------------------

def _ref_forward(x_nchw, params, downsampling):
    x = jnp.transpose(x_nchw, (0, 2, 3, 1)).astype(jnp.float32)
    w1e = (params["w1"] * params["alpha1"]).astype(jnp.bfloat16)
    w2e = (params["w2"] * params["alpha2"]).astype(jnp.bfloat16)

    def conv3x3(v, w):
        return jax.lax.conv_general_dilated(
            v.astype(jnp.bfloat16), w, window_strides=(1, 1),
            padding=((1, 1), (1, 1)),
            dimension_numbers=("NHWC", "HWIO", "NHWC"),
            preferred_element_type=jnp.float32)

    def bn(y, gamma, beta):
        mean = jnp.mean(y, axis=(0, 1, 2), keepdims=True)
        var = jnp.mean(jnp.square(y - mean), axis=(0, 1, 2), keepdims=True)
        return (y - mean) * jax.lax.rsqrt(var + BN_EPS) * gamma + beta

    x1 = jax.nn.relu(bn(conv3x3(x, w1e), params["gamma1"], params["beta1"]))
    y2 = bn(conv3x3(x1, w2e), params["gamma2"], params["beta2"])
    if downsampling:
        r = bn(jnp.einsum("nhwc,cd->nhwd", x.astype(jnp.bfloat16),
                          params["w_ds"].astype(jnp.bfloat16),
                          preferred_element_type=jnp.float32),
               params["gamma_ds"], params["beta_ds"])
    else:
        r = x
    return jnp.transpose(jax.nn.relu(y2 + r), (0, 3, 1, 2))


if __name__ == "__main__":
    key = jax.random.PRNGKey(0)
    k_x, k_p = jax.random.split(key)

    # len_list picks (in, mid, out) channels; 4 != 8 triggers the downsample path.
    len_list = [4, 8, 8]
    x = jax.random.normal(k_x, (2, len_list[0], 16, 16), jnp.float32)  # NCHW

    params, use_ds = init_basic_block_adaptive(k_p, len_list, stride=1)

    fwd = jax.jit(lambda xx, pp: basic_block_adaptive_forward(
        xx, pp, use_ds, tile_rows=16))
    out = jax.block_until_ready(fwd(x, params))

    ref = _ref_forward(x, params, use_ds)
    assert out.shape == (2, len_list[2], 16, 16), out.shape
    max_err = float(jnp.max(jnp.abs(out - ref)))
    # bf16 storage of the stage-1 intermediates (y1 / downsample projection)
    # relaxes the tolerance vs. the f32-intermediate reference; structural
    # errors (wrong taps / BN / residual) would be O(1).
    assert jnp.allclose(out, ref, atol=2e-2, rtol=2e-2), max_err

    print("KERNEL_OK")
</pallas_src>

<mosaic_0001>
module attributes {stable_mosaic.version = 11 : i64} {
  func.func @_finalize_kernel(%arg0: i32, %arg1: memref<512x128xf32, #tpu.memory_space<vmem>>, %arg2: memref<512x128xbf16, #tpu.memory_space<vmem>>, %arg3: memref<1x128xf32, #tpu.memory_space<vmem>>, %arg4: memref<1x128xf32, #tpu.memory_space<vmem>>, %arg5: memref<1x128xf32, #tpu.memory_space<vmem>>, %arg6: memref<1x128xf32, #tpu.memory_space<vmem>>, %arg7: memref<512x128xf32, #tpu.memory_space<vmem>>) attributes {dimension_semantics = [#tpu.dimension_semantics<parallel>], iteration_bounds = array<i64: 1>, scalar_prefetch = 0 : i64, scratch_operands = 0 : i64, tpu.core_type = #tpu.core_type<tc>, window_params = [{transform_indices = @transform_0, window_bounds = array<i64: 512, 128>}, {transform_indices = @transform_1, window_bounds = array<i64: 512, 128>}, {pipeline_mode = #tpu.pipeline_mode<synchronous>, transform_indices = @transform_2, window_bounds = array<i64: 1, 128>}, {pipeline_mode = #tpu.pipeline_mode<synchronous>, transform_indices = @transform_3, window_bounds = array<i64: 1, 128>}, {pipeline_mode = #tpu.pipeline_mode<synchronous>, transform_indices = @transform_4, window_bounds = array<i64: 1, 128>}, {pipeline_mode = #tpu.pipeline_mode<synchronous>, transform_indices = @transform_5, window_bounds = array<i64: 1, 128>}, {transform_indices = @transform_6, window_bounds = array<i64: 512, 128>}]} {
    %c0 = arith.constant 0 : index
    %c0_0 = arith.constant 0 : index
    %0 = vector.load %arg2[%c0, %c0_0] : memref<512x128xbf16, #tpu.memory_space<vmem>>, vector<512x128xbf16>
    %1 = arith.extf %0 : vector<512x128xbf16> to vector<512x128xf32>
    %c0_1 = arith.constant 0 : index
    %c0_2 = arith.constant 0 : index
    %2 = vector.load %arg1[%c0_1, %c0_2] : memref<512x128xf32, #tpu.memory_space<vmem>>, vector<512x128xf32>
    %c0_3 = arith.constant 0 : index
    %c0_4 = arith.constant 0 : index
    %3 = vector.load %arg3[%c0_3, %c0_4] : memref<1x128xf32, #tpu.memory_space<vmem>>, vector<1x128xf32>
    %4 = vector.broadcast %3 : vector<1x128xf32> to vector<512x128xf32>
    %5 = arith.mulf %2, %4 : vector<512x128xf32>
    %c0_5 = arith.constant 0 : index
    %c0_6 = arith.constant 0 : index
    %6 = vector.load %arg4[%c0_5, %c0_6] : memref<1x128xf32, #tpu.memory_space<vmem>>, vector<1x128xf32>
    %7 = vector.broadcast %6 : vector<1x128xf32> to vector<512x128xf32>
    %8 = arith.addf %5, %7 : vector<512x128xf32>
    %c0_7 = arith.constant 0 : index
    %c0_8 = arith.constant 0 : index
    %9 = vector.load %arg5[%c0_7, %c0_8] : memref<1x128xf32, #tpu.memory_space<vmem>>, vector<1x128xf32>
    %10 = vector.broadcast %9 : vector<1x128xf32> to vector<512x128xf32>
    %11 = arith.mulf %1, %10 : vector<512x128xf32>
    %12 = arith.addf %8, %11 : vector<512x128xf32>
    %c0_9 = arith.constant 0 : index
    %c0_10 = arith.constant 0 : index
    %13 = vector.load %arg6[%c0_9, %c0_10] : memref<1x128xf32, #tpu.memory_space<vmem>>, vector<1x128xf32>
    %14 = vector.broadcast %13 : vector<1x128xf32> to vector<512x128xf32>
    %15 = arith.addf %12, %14 : vector<512x128xf32>
    %cst = arith.constant 0.000000e+00 : f32
    %16 = vector.broadcast %cst : f32 to vector<512x128xf32>
    %17 = arith.maximumf %15, %16 : vector<512x128xf32>
    %c0_11 = arith.constant 0 : index
    %c0_12 = arith.constant 0 : index
    %18 = vector.load %arg7[%c0_11, %c0_12] : memref<512x128xf32, #tpu.memory_space<vmem>>, vector<512x128xf32>
    tpu.vector_store %arg7[%c0_11, %c0_12], %17 {strides = array<i32>} : memref<512x128xf32, #tpu.memory_space<vmem>>, vector<512x128xf32>,
    return
  }
  func.func @transform_0(%arg0: i32) -> (i32, i32) {
    %c0_i32 = arith.constant 0 : i32
    %c0_i32_0 = arith.constant 0 : i32
    return %arg0, %c0_i32 : i32, i32
  }
  func.func @transform_1(%arg0: i32) -> (i32, i32) {
    %c0_i32 = arith.constant 0 : i32
    %c0_i32_0 = arith.constant 0 : i32
    return %arg0, %c0_i32 : i32, i32
  }
  func.func @transform_2(%arg0: i32) -> (i32, i32) {
    %c0_i32 = arith.constant 0 : i32
    %c0_i32_0 = arith.constant 0 : i32
    %c0_i32_1 = arith.constant 0 : i32
    return %c0_i32, %c0_i32_0 : i32, i32
  }
  func.func @transform_3(%arg0: i32) -> (i32, i32) {
    %c0_i32 = arith.constant 0 : i32
    %c0_i32_0 = arith.constant 0 : i32
    %c0_i32_1 = arith.constant 0 : i32
    return %c0_i32, %c0_i32_0 : i32, i32
  }
  func.func @transform_4(%arg0: i32) -> (i32, i32) {
    %c0_i32 = arith.constant 0 : i32
    %c0_i32_0 = arith.constant 0 : i32
    %c0_i32_1 = arith.constant 0 : i32
    return %c0_i32, %c0_i32_0 : i32, i32
  }
  func.func @transform_5(%arg0: i32) -> (i32, i32) {
    %c0_i32 = arith.constant 0 : i32
    %c0_i32_0 = arith.constant 0 : i32
    %c0_i32_1 = arith.constant 0 : i32
    return %c0_i32, %c0_i32_0 : i32, i32
  }
  func.func @transform_6(%arg0: i32) -> (i32, i32) {
    %c0_i32 = arith.constant 0 : i32
    %c0_i32_0 = arith.constant 0 : i32
    return %arg0, %c0_i32 : i32, i32
  }
}

module attributes {stable_mosaic.version = 11 : i64} {
  func.func @_conv1_kernel(%arg0: i32, %arg1: i32, %arg2: memref<1x16x16x128xbf16, #tpu.memory_space<vmem>>, %arg3: memref<1x1x16x128xbf16, #tpu.memory_space<vmem>>, %arg4: memref<1x1x16x128xbf16, #tpu.memory_space<vmem>>, %arg5: memref<3x384x128xbf16, #tpu.memory_space<vmem>>, %arg6: memref<128x128xbf16, #tpu.memory_space<vmem>>, %arg7: memref<1x16x16x128xbf16, #tpu.memory_space<vmem>>, %arg8: memref<1x1x2x128xf32, #tpu.memory_space<vmem>>, %arg9: memref<1x16x16x128xbf16, #tpu.memory_space<vmem>>, %arg10: memref<1x1x2x128xf32, #tpu.memory_space<vmem>>, %arg11: memref<18x18x128xbf16, #tpu.memory_space<vmem>>) attributes {dimension_semantics = [#tpu.dimension_semantics<parallel>, #tpu.dimension_semantics<parallel>], iteration_bounds = array<i64: 2, 1>, scalar_prefetch = 0 : i64, scratch_operands = 1 : i64, tpu.core_type = #tpu.core_type<tc>, window_params = [{transform_indices = @transform_0, window_bounds = array<i64: 1, 16, 16, 128>}, {transform_indices = @transform_1, window_bounds = array<i64: 1, 1, 16, 128>}, {transform_indices = @transform_2, window_bounds = array<i64: 1, 1, 16, 128>}, {pipeline_mode = #tpu.pipeline_mode<synchronous>, transform_indices = @transform_3, window_bounds = array<i64: 3, 384, 128>}, {pipeline_mode = #tpu.pipeline_mode<synchronous>, transform_indices = @transform_4, window_bounds = array<i64: 128, 128>}, {transform_indices = @transform_5, window_bounds = array<i64: 1, 16, 16, 128>}, {transform_indices = @transform_6, window_bounds = array<i64: 1, 1, 2, 128>}, {transform_indices = @transform_7, window_bounds = array<i64: 1, 16, 16, 128>}, {transform_indices = @transform_8, window_bounds = array<i64: 1, 1, 2, 128>}]} {
    %c0 = arith.constant 0 : index
    %c0_0 = arith.constant 0 : index
    %c0_1 = arith.constant 0 : index
    %c0_2 = arith.constant 0 : index
    %0 = vector.load %arg3[%c0, %c0_0, %c0_1, %c0_2] : memref<1x1x16x128xbf16, #tpu.memory_space<vmem>>, vector<1x1x16x128xbf16>
    %1 = vector.shape_cast %0 : vector<1x1x16x128xbf16> to vector<1x16x128xbf16>
    %c0_3 = arith.constant 0 : index
    %c0_4 = arith.constant 0 : index
    %c0_5 = arith.constant 0 : index
    %c0_6 = arith.constant 0 : index
    %2 = vector.load %arg2[%c0_3, %c0_4, %c0_5, %c0_6] : memref<1x16x16x128xbf16, #tpu.memory_space<vmem>>, vector<1x16x16x128xbf16>
    %3 = vector.shape_cast %2 : vector<1x16x16x128xbf16> to vector<16x16x128xbf16>
    %c0_7 = arith.constant 0 : index
    %c0_8 = arith.constant 0 : index
    %c0_9 = arith.constant 0 : index
    %c0_10 = arith.constant 0 : index
    %4 = vector.load %arg4[%c0_7, %c0_8, %c0_9, %c0_10] : memref<1x1x16x128xbf16, #tpu.memory_space<vmem>>, vector<1x1x16x128xbf16>
    %5 = vector.shape_cast %4 : vector<1x1x16x128xbf16> to vector<1x16x128xbf16>
    %c0_11 = arith.constant 0 : index
    %c1 = arith.constant 1 : index
    %c0_12 = arith.constant 0 : index
    %6 = vector.load %arg11[%c0_11, %c1, %c0_12] : memref<18x18x128xbf16, #tpu.memory_space<vmem>>, vector<1x16x128xbf16>
    tpu.vector_store %arg11[%c0_11, %c1, %c0_12], %1 {strides = array<i32>} : memref<18x18x128xbf16, #tpu.memory_space<vmem>>, vector<1x16x128xbf16>,
    %c1_13 = arith.constant 1 : index
    %c1_14 = arith.constant 1 : index
    %c0_15 = arith.constant 0 : index
    %7 = vector.load %arg11[%c1_13, %c1_14, %c0_15] : memref<18x18x128xbf16, #tpu.memory_space<vmem>>, vector<16x16x128xbf16>
    tpu.vector_store %arg11[%c1_13, %c1_14, %c0_15], %3 {strides = array<i32>} : memref<18x18x128xbf16, #tpu.memory_space<vmem>>, vector<16x16x128xbf16>,
    %c17 = arith.constant 17 : index
    %c1_16 = arith.constant 1 : index
    %c0_17 = arith.constant 0 : index
    %8 = vector.load %arg11[%c17, %c1_16, %c0_17] : memref<18x18x128xbf16, #tpu.memory_space<vmem>>, vector<1x16x128xbf16>
    tpu.vector_store %arg11[%c17, %c1_16, %c0_17], %5 {strides = array<i32>} : memref<18x18x128xbf16, #tpu.memory_space<vmem>>, vector<1x16x128xbf16>,
    %cst = arith.constant 0.000000e+00 : bf16
    %9 = vector.broadcast %cst : bf16 to vector<18x1x128xbf16>
    %c0_18 = arith.constant 0 : index
    %c0_19 = arith.constant 0 : index
    %c0_20 = arith.constant 0 : index
    %10 = vector.load %arg11[%c0_18, %c0_19, %c0_20] : memref<18x18x128xbf16, #tpu.memory_space<vmem>>, vector<18x1x128xbf16>
    tpu.vector_store %arg11[%c0_18, %c0_19, %c0_20], %9 {strides = array<i32>} : memref<18x18x128xbf16, #tpu.memory_space<vmem>>, vector<18x1x128xbf16>,
    %cst_21 = arith.constant 0.000000e+00 : bf16
    %11 = vector.broadcast %cst_21 : bf16 to vector<18x1x128xbf16>
    %c0_22 = arith.constant 0 : index
    %c17_23 = arith.constant 17 : index
    %c0_24 = arith.constant 0 : index
    %12 = vector.load %arg11[%c0_22, %c17_23, %c0_24] : memref<18x18x128xbf16, #tpu.memory_space<vmem>>, vector<18x1x128xbf16>
    tpu.vector_store %arg11[%c0_22, %c17_23, %c0_24], %11 {strides = array<i32>} : memref<18x18x128xbf16, #tpu.memory_space<vmem>>, vector<18x1x128xbf16>,
    %c0_i32 = arith.constant 0 : i32
    %13 = arith.cmpi eq, %arg1, %c0_i32 : i32
    %14 = arith.extui %13 : i1 to i32
    %c0_i32_25 = arith.constant 0 : i32
    %15 = arith.cmpi ne, %14, %c0_i32_25 : i32
    scf.if %15 {
      %cst_69 = arith.constant 0.000000e+00 : bf16
      %82 = vector.broadcast %cst_69 : bf16 to vector<1x18x128xbf16>
      %c0_70 = arith.constant 0 : index
      %c0_71 = arith.constant 0 : index
      %c0_72 = arith.constant 0 : index
      %83 = vector.load %arg11[%c0_70, %c0_71, %c0_72] : memref<18x18x128xbf16, #tpu.memory_space<vmem>>, vector<1x18x128xbf16>
      tpu.vector_store %arg11[%c0_70, %c0_71, %c0_72], %82 {strides = array<i32>} : memref<18x18x128xbf16, #tpu.memory_space<vmem>>, vector<1x18x128xbf16>,
    } else {
    }
    %c0_i32_26 = arith.constant 0 : i32
    %16 = arith.cmpi eq, %arg1, %c0_i32_26 : i32
    %17 = arith.extui %16 : i1 to i32
    %c0_i32_27 = arith.constant 0 : i32
    %18 = arith.cmpi ne, %17, %c0_i32_27 : i32
    scf.if %18 {
      %cst_69 = arith.constant 0.000000e+00 : bf16
      %82 = vector.broadcast %cst_69 : bf16 to vector<1x18x128xbf16>
      %c17_70 = arith.constant 17 : index
      %c0_71 = arith.constant 0 : index
      %c0_72 = arith.constant 0 : index
      %83 = vector.load %arg11[%c17_70, %c0_71, %c0_72] : memref<18x18x128xbf16, #tpu.memory_space<vmem>>, vector<1x18x128xbf16>
      tpu.vector_store %arg11[%c17_70, %c0_71, %c0_72], %82 {strides = array<i32>} : memref<18x18x128xbf16, #tpu.memory_space<vmem>>, vector<1x18x128xbf16>,
    } else {
    }
    %c0_28 = arith.constant 0 : index
    %c0_29 = arith.constant 0 : index
    %c0_30 = arith.constant 0 : index
    %19 = vector.load %arg11[%c0_28, %c0_29, %c0_30] : memref<18x18x128xbf16, #tpu.memory_space<vmem>>, vector<18x18x128xbf16>
    %20 = vector.extract_strided_slice %19 {offsets = [0, 0, 0], sizes = [18, 16, 128], strides = [1, 1, 1]} : vector<18x18x128xbf16> to vector<18x16x128xbf16>
    %21 = vector.extract_strided_slice %20 {offsets = [0, 0, 0], sizes = [16, 16, 128], strides = [1, 1, 1]} : vector<18x16x128xbf16> to vector<16x16x128xbf16>
    %22 = vector.shape_cast %21 : vector<16x16x128xbf16> to vector<256x128xbf16>
    %23 = vector.extract_strided_slice %20 {offsets = [1, 0, 0], sizes = [16, 16, 128], strides = [1, 1, 1]} : vector<18x16x128xbf16> to vector<16x16x128xbf16>
    %24 = vector.shape_cast %23 : vector<16x16x128xbf16> to vector<256x128xbf16>
    %25 = vector.extract_strided_slice %20 {offsets = [2, 0, 0], sizes = [16, 16, 128], strides = [1, 1, 1]} : vector<18x16x128xbf16> to vector<16x16x128xbf16>
    %26 = vector.shape_cast %25 : vector<16x16x128xbf16> to vector<256x128xbf16>
    %27 = tpu.concatenate %22, %24, %26 in 1 : vector<256x128xbf16>, vector<256x128xbf16>, vector<256x128xbf16> -> vector<256x384xbf16>
    %c0_31 = arith.constant 0 : index
    %c0_32 = arith.constant 0 : index
    %c0_33 = arith.constant 0 : index
    %28 = vector.load %arg5[%c0_31, %c0_32, %c0_33] : memref<3x384x128xbf16, #tpu.memory_space<vmem>>, vector<1x384x128xbf16>
    %29 = vector.shape_cast %28 : vector<1x384x128xbf16> to vector<384x128xbf16>
    %cst_34 = arith.constant dense<0.000000e+00> : vector<256x128xf32>
    %30 = tpu.matmul %27, %29, %cst_34 {dimension_numbers = #tpu.dot_dimension_numbers<[1], [0], [0], [1], [0, 0, 1, 1], [], []>} : vector<256x384xbf16>, vector<384x128xbf16>, vector<256x128xf32> -> vector<256x128xf32>
    %31 = vector.extract_strided_slice %19 {offsets = [0, 1, 0], sizes = [18, 16, 128], strides = [1, 1, 1]} : vector<18x18x128xbf16> to vector<18x16x128xbf16>
    %32 = vector.extract_strided_slice %31 {offsets = [0, 0, 0], sizes = [16, 16, 128], strides = [1, 1, 1]} : vector<18x16x128xbf16> to vector<16x16x128xbf16>
    %33 = vector.shape_cast %32 : vector<16x16x128xbf16> to vector<256x128xbf16>
    %34 = vector.extract_strided_slice %31 {offsets = [1, 0, 0], sizes = [16, 16, 128], strides = [1, 1, 1]} : vector<18x16x128xbf16> to vector<16x16x128xbf16>
    %35 = vector.shape_cast %34 : vector<16x16x128xbf16> to vector<256x128xbf16>
    %36 = vector.extract_strided_slice %31 {offsets = [2, 0, 0], sizes = [16, 16, 128], strides = [1, 1, 1]} : vector<18x16x128xbf16> to vector<16x16x128xbf16>
    %37 = vector.shape_cast %36 : vector<16x16x128xbf16> to vector<256x128xbf16>
    %38 = tpu.concatenate %33, %35, %37 in 1 : vector<256x128xbf16>, vector<256x128xbf16>, vector<256x128xbf16> -> vector<256x384xbf16>
    %c1_35 = arith.constant 1 : index
    %c0_36 = arith.constant 0 : index
    %c0_37 = arith.constant 0 : index
    %39 = vector.load %arg5[%c1_35, %c0_36, %c0_37] : memref<3x384x128xbf16, #tpu.memory_space<vmem>>, vector<1x384x128xbf16>
    %40 = vector.shape_cast %39 : vector<1x384x128xbf16> to vector<384x128xbf16>
    %cst_38 = arith.constant dense<0.000000e+00> : vector<256x128xf32>
    %41 = tpu.matmul %38, %40, %cst_38 {dimension_numbers = #tpu.dot_dimension_numbers<[1], [0], [0], [1], [0, 0, 1, 1], [], []>} : vector<256x384xbf16>, vector<384x128xbf16>, vector<256x128xf32> -> vector<256x128xf32>
    %42 = arith.addf %30, %41 : vector<256x128xf32>
    %43 = vector.extract_strided_slice %19 {offsets = [0, 2, 0], sizes = [18, 16, 128], strides = [1, 1, 1]} : vector<18x18x128xbf16> to vector<18x16x128xbf16>
    %44 = vector.extract_strided_slice %43 {offsets = [0, 0, 0], sizes = [16, 16, 128], strides = [1, 1, 1]} : vector<18x16x128xbf16> to vector<16x16x128xbf16>
    %45 = vector.shape_cast %44 : vector<16x16x128xbf16> to vector<256x128xbf16>
    %46 = vector.extract_strided_slice %43 {offsets = [1, 0, 0], sizes = [16, 16, 128], strides = [1, 1, 1]} : vector<18x16x128xbf16> to vector<16x16x128xbf16>
    %47 = vector.shape_cast %46 : vector<16x16x128xbf16> to vector<256x128xbf16>
    %48 = vector.extract_strided_slice %43 {offsets = [2, 0, 0], sizes = [16, 16, 128], strides = [1, 1, 1]} : vector<18x16x128xbf16> to vector<16x16x128xbf16>
    %49 = vector.shape_cast %48 : vector<16x16x128xbf16> to vector<256x128xbf16>
    %50 = tpu.concatenate %45, %47, %49 in 1 : vector<256x128xbf16>, vector<256x128xbf16>, vector<256x128xbf16> -> vector<256x384xbf16>
    %c2 = arith.constant 2 : index
    %c0_39 = arith.constant 0 : index
    %c0_40 = arith.constant 0 : index
    %51 = vector.load %arg5[%c2, %c0_39, %c0_40] : memref<3x384x128xbf16, #tpu.memory_space<vmem>>, vector<1x384x128xbf16>
    %52 = vector.shape_cast %51 : vector<1x384x128xbf16> to vector<384x128xbf16>
    %cst_41 = arith.constant dense<0.000000e+00> : vector<256x128xf32>
    %53 = tpu.matmul %50, %52, %cst_41 {dimension_numbers = #tpu.dot_dimension_numbers<[1], [0], [0], [1], [0, 0, 1, 1], [], []>} : vector<256x384xbf16>, vector<384x128xbf16>, vector<256x128xf32> -> vector<256x128xf32>
    %54 = arith.addf %42, %53 : vector<256x128xf32>
    %55 = vector.shape_cast %54 : vector<256x128xf32> to vector<1x16x16x128xf32>
    %56 = arith.truncf %55 : vector<1x16x16x128xf32> to vector<1x16x16x128xbf16>
    %c0_42 = arith.constant 0 : index
    %c0_43 = arith.constant 0 : index
    %c0_44 = arith.constant 0 : index
    %c0_45 = arith.constant 0 : index
    %57 = vector.load %arg7[%c0_42, %c0_43, %c0_44, %c0_45] : memref<1x16x16x128xbf16, #tpu.memory_space<vmem>>, vector<1x16x16x128xbf16>
    tpu.vector_store %arg7[%c0_42, %c0_43, %c0_44, %c0_45], %56 {strides = array<i32>} : memref<1x16x16x128xbf16, #tpu.memory_space<vmem>>, vector<1x16x16x128xbf16>,
    %cst_46 = arith.constant dense<0.000000e+00> : vector<128xf32>
    %58 = vector.multi_reduction <add>, %54, %cst_46 [0] : vector<256x128xf32> to vector<128xf32>
    %59 = vector.shape_cast %58 : vector<128xf32> to vector<1x128xf32>
    %60 = arith.mulf %54, %54 : vector<256x128xf32>
    %cst_47 = arith.constant dense<0.000000e+00> : vector<128xf32>
    %61 = vector.multi_reduction <add>, %60, %cst_47 [0] : vector<256x128xf32> to vector<128xf32>
    %62 = vector.shape_cast %61 : vector<128xf32> to vector<1x128xf32>
    %63 = tpu.concatenate %59, %62 in 0 : vector<1x128xf32>, vector<1x128xf32> -> vector<2x128xf32>
    %64 = vector.shape_cast %63 : vector<2x128xf32> to vector<1x1x2x128xf32>
    %c0_48 = arith.constant 0 : index
    %c0_49 = arith.constant 0 : index
    %c0_50 = arith.constant 0 : index
    %c0_51 = arith.constant 0 : index
    %65 = vector.load %arg8[%c0_48, %c0_49, %c0_50, %c0_51] : memref<1x1x2x128xf32, #tpu.memory_space<vmem>>, vector<1x1x2x128xf32>
    tpu.vector_store %arg8[%c0_48, %c0_49, %c0_50, %c0_51], %64 {strides = array<i32>} : memref<1x1x2x128xf32, #tpu.memory_space<vmem>>, vector<1x1x2x128xf32>,
    %c0_52 = arith.constant 0 : index
    %c0_53 = arith.constant 0 : index
    %c0_54 = arith.constant 0 : index
    %c0_55 = arith.constant 0 : index
    %66 = vector.load %arg2[%c0_52, %c0_53, %c0_54, %c0_55] : memref<1x16x16x128xbf16, #tpu.memory_space<vmem>>, vector<1x16x16x128xbf16>
    %67 = vector.shape_cast %66 : vector<1x16x16x128xbf16> to vector<16x16x128xbf16>
    %68 = vector.shape_cast %67 : vector<16x16x128xbf16> to vector<256x128xbf16>
    %c0_56 = arith.constant 0 : index
    %c0_57 = arith.constant 0 : index
    %69 = vector.load %arg6[%c0_56, %c0_57] : memref<128x128xbf16, #tpu.memory_space<vmem>>, vector<128x128xbf16>
    %cst_58 = arith.constant dense<0.000000e+00> : vector<256x128xf32>
    %70 = tpu.matmul %68, %69, %cst_58 {dimension_numbers = #tpu.dot_dimension_numbers<[1], [0], [0], [1], [0, 0, 1, 1], [], []>} : vector<256x128xbf16>, vector<128x128xbf16>, vector<256x128xf32> -> vector<256x128xf32>
    %71 = vector.shape_cast %70 : vector<256x128xf32> to vector<1x16x16x128xf32>
    %72 = arith.truncf %71 : vector<1x16x16x128xf32> to vector<1x16x16x128xbf16>
    %c0_59 = arith.constant 0 : index
    %c0_60 = arith.constant 0 : index
    %c0_61 = arith.constant 0 : index
    %c0_62 = arith.constant 0 : index
    %73 = vector.load %arg9[%c0_59, %c0_60, %c0_61, %c0_62] : memref<1x16x16x128xbf16, #tpu.memory_space<vmem>>, vector<1x16x16x128xbf16>
    tpu.vector_store %arg9[%c0_59, %c0_60, %c0_61, %c0_62], %72 {strides = array<i32>} : memref<1x16x16x128xbf16, #tpu.memory_space<vmem>>, vector<1x16x16x128xbf16>,
    %cst_63 = arith.constant dense<0.000000e+00> : vector<128xf32>
    %74 = vector.multi_reduction <add>, %70, %cst_63 [0] : vector<256x128xf32> to vector<128xf32>
    %75 = vector.shape_cast %74 : vector<128xf32> to vector<1x128xf32>
    %76 = arith.mulf %70, %70 : vector<256x128xf32>
    %cst_64 = arith.constant dense<0.000000e+00> : vector<128xf32>
    %77 = vector.multi_reduction <add>, %76, %cst_64 [0] : vector<256x128xf32> to vector<128xf32>
    %78 = vector.shape_cast %77 : vector<128xf32> to vector<1x128xf32>
    %79 = tpu.concatenate %75, %78 in 0 : vector<1x128xf32>, vector<1x128xf32> -> vector<2x128xf32>
    %80 = vector.shape_cast %79 : vector<2x128xf32> to vector<1x1x2x128xf32>
    %c0_65 = arith.constant 0 : index
    %c0_66 = arith.constant 0 : index
    %c0_67 = arith.constant 0 : index
    %c0_68 = arith.constant 0 : index
    %81 = vector.load %arg10[%c0_65, %c0_66, %c0_67, %c0_68] : memref<1x1x2x128xf32, #tpu.memory_space<vmem>>, vector<1x1x2x128xf32>
    tpu.vector_store %arg10[%c0_65, %c0_66, %c0_67, %c0_68], %80 {strides = array<i32>} : memref<1x1x2x128xf32, #tpu.memory_space<vmem>>, vector<1x1x2x128xf32>,
    return
  }
  func.func @transform_0(%arg0: i32, %arg1: i32) -> (i32, i32, i32, i32) {
    %c0_i32 = arith.constant 0 : i32
    %c0_i32_0 = arith.constant 0 : i32
    %c0_i32_1 = arith.constant 0 : i32
    return %arg0, %arg1, %c0_i32, %c0_i32_0 : i32, i32, i32, i32
  }
  func.func @transform_1(%arg0: i32, %arg1: i32) -> (i32, i32, i32, i32) {
    %c16_i32 = arith.constant 16 : i32
    %0 = arith.muli %arg1, %c16_i32 : i32
    %c1_i32 = arith.constant 1 : i32
    %1 = arith.subi %0, %c1_i32 : i32
    %c0_i32 = arith.constant 0 : i32
    %2 = arith.maxsi %1, %c0_i32 : i32
    %c0_i32_0 = arith.constant 0 : i32
    %c0_i32_1 = arith.constant 0 : i32
    %c0_i32_2 = arith.constant 0 : i32
    return %arg0, %2, %c0_i32_0, %c0_i32_1 : i32, i32, i32, i32
  }
  func.func @transform_2(%arg0: i32, %arg1: i32) -> (i32, i32, i32, i32) {
    %c1_i32 = arith.constant 1 : i32
    %0 = arith.addi %arg1, %c1_i32 : i32
    %c16_i32 = arith.constant 16 : i32
    %1 = arith.muli %0, %c16_i32 : i32
    %c15_i32 = arith.constant 15 : i32
    %2 = arith.minsi %1, %c15_i32 : i32
    %c0_i32 = arith.constant 0 : i32
    %c0_i32_0 = arith.constant 0 : i32
    %c0_i32_1 = arith.constant 0 : i32
    return %arg0, %2, %c0_i32, %c0_i32_0 : i32, i32, i32, i32
  }
  func.func @transform_3(%arg0: i32, %arg1: i32) -> (i32, i32, i32) {
    %c0_i32 = arith.constant 0 : i32
    %c0_i32_0 = arith.constant 0 : i32
    %c0_i32_1 = arith.constant 0 : i32
    %c0_i32_2 = arith.constant 0 : i32
    return %c0_i32, %c0_i32_0, %c0_i32_1 : i32, i32, i32
  }
  func.func @transform_4(%arg0: i32, %arg1: i32) -> (i32, i32) {
    %c0_i32 = arith.constant 0 : i32
    %c0_i32_0 = arith.constant 0 : i32
    %c0_i32_1 = arith.constant 0 : i32
    return %c0_i32, %c0_i32_0 : i32, i32
  }
  func.func @transform_5(%arg0: i32, %arg1: i32) -> (i32, i32, i32, i32) {
    %c0_i32 = arith.constant 0 : i32
    %c0_i32_0 = arith.constant 0 : i32
    %c0_i32_1 = arith.constant 0 : i32
    return %arg0, %arg1, %c0_i32, %c0_i32_0 : i32, i32, i32, i32
  }
  func.func @transform_6(%arg0: i32, %arg1: i32) -> (i32, i32, i32, i32) {
    %c0_i32 = arith.constant 0 : i32
    %c0_i32_0 = arith.constant 0 : i32
    %c0_i32_1 = arith.constant 0 : i32
    return %arg0, %arg1, %c0_i32, %c0_i32_0 : i32, i32, i32, i32
  }
  func.func @transform_7(%arg0: i32, %arg1: i32) -> (i32, i32, i32, i32) {
    %c0_i32 = arith.constant 0 : i32
    %c0_i32_0 = arith.constant 0 : i32
    %c0_i32_1 = arith.constant 0 : i32
    return %arg0, %arg1, %c0_i32, %c0_i32_0 : i32, i32, i32, i32
  }
  func.func @transform_8(%arg0: i32, %arg1: i32) -> (i32, i32, i32, i32) {
    %c0_i32 = arith.constant 0 : i32
    %c0_i32_0 = arith.constant 0 : i32
    %c0_i32_1 = arith.constant 0 : i32
    return %arg0, %arg1, %c0_i32, %c0_i32_0 : i32, i32, i32, i32
  }
}

module attributes {stable_mosaic.version = 11 : i64} {
  func.func @_conv2_kernel(%arg0: i32, %arg1: i32, %arg2: memref<1x16x16x128xbf16, #tpu.memory_space<vmem>>, %arg3: memref<1x1x16x128xbf16, #tpu.memory_space<vmem>>, %arg4: memref<1x1x16x128xbf16, #tpu.memory_space<vmem>>, %arg5: memref<1x128xf32, #tpu.memory_space<vmem>>, %arg6: memref<1x128xf32, #tpu.memory_space<vmem>>, %arg7: memref<3x384x128xbf16, #tpu.memory_space<vmem>>, %arg8: memref<1x16x16x128xf32, #tpu.memory_space<vmem>>, %arg9: memref<1x1x2x128xf32, #tpu.memory_space<vmem>>, %arg10: memref<18x18x128xbf16, #tpu.memory_space<vmem>>) attributes {dimension_semantics = [#tpu.dimension_semantics<parallel>, #tpu.dimension_semantics<parallel>], iteration_bounds = array<i64: 2, 1>, scalar_prefetch = 0 : i64, scratch_operands = 1 : i64, tpu.core_type = #tpu.core_type<tc>, window_params = [{transform_indices = @transform_0, window_bounds = array<i64: 1, 16, 16, 128>}, {transform_indices = @transform_1, window_bounds = array<i64: 1, 1, 16, 128>}, {transform_indices = @transform_2, window_bounds = array<i64: 1, 1, 16, 128>}, {pipeline_mode = #tpu.pipeline_mode<synchronous>, transform_indices = @transform_3, window_bounds = array<i64: 1, 128>}, {pipeline_mode = #tpu.pipeline_mode<synchronous>, transform_indices = @transform_4, window_bounds = array<i64: 1, 128>}, {pipeline_mode = #tpu.pipeline_mode<synchronous>, transform_indices = @transform_5, window_bounds = array<i64: 3, 384, 128>}, {transform_indices = @transform_6, window_bounds = array<i64: 1, 16, 16, 128>}, {transform_indices = @transform_7, window_bounds = array<i64: 1, 1, 2, 128>}]} {
    %c0 = arith.constant 0 : index
    %c0_0 = arith.constant 0 : index
    %0 = vector.load %arg5[%c0, %c0_0] : memref<1x128xf32, #tpu.memory_space<vmem>>, vector<1x128xf32>
    %1 = vector.shape_cast %0 : vector<1x128xf32> to vector<1x1x128xf32>
    %c0_1 = arith.constant 0 : index
    %c0_2 = arith.constant 0 : index
    %2 = vector.load %arg6[%c0_1, %c0_2] : memref<1x128xf32, #tpu.memory_space<vmem>>, vector<1x128xf32>
    %3 = vector.shape_cast %2 : vector<1x128xf32> to vector<1x1x128xf32>
    %c0_3 = arith.constant 0 : index
    %c0_4 = arith.constant 0 : index
    %c0_5 = arith.constant 0 : index
    %c0_6 = arith.constant 0 : index
    %4 = vector.load %arg3[%c0_3, %c0_4, %c0_5, %c0_6] : memref<1x1x16x128xbf16, #tpu.memory_space<vmem>>, vector<1x1x16x128xbf16>
    %5 = vector.shape_cast %4 : vector<1x1x16x128xbf16> to vector<1x16x128xbf16>
    %6 = arith.extf %5 : vector<1x16x128xbf16> to vector<1x16x128xf32>
    %7 = vector.broadcast %1 : vector<1x1x128xf32> to vector<1x16x128xf32>
    %8 = arith.mulf %6, %7 : vector<1x16x128xf32>
    %9 = vector.broadcast %3 : vector<1x1x128xf32> to vector<1x16x128xf32>
    %10 = arith.addf %8, %9 : vector<1x16x128xf32>
    %cst = arith.constant 0.000000e+00 : f32
    %11 = vector.broadcast %cst : f32 to vector<1x16x128xf32>
    %12 = arith.maximumf %10, %11 : vector<1x16x128xf32>
    %13 = arith.truncf %12 : vector<1x16x128xf32> to vector<1x16x128xbf16>
    %c0_7 = arith.constant 0 : index
    %c0_8 = arith.constant 0 : index
    %c0_9 = arith.constant 0 : index
    %c0_10 = arith.constant 0 : index
    %14 = vector.load %arg2[%c0_7, %c0_8, %c0_9, %c0_10] : memref<1x16x16x128xbf16, #tpu.memory_space<vmem>>, vector<1x16x16x128xbf16>
    %15 = vector.shape_cast %14 : vector<1x16x16x128xbf16> to vector<16x16x128xbf16>
    %16 = arith.extf %15 : vector<16x16x128xbf16> to vector<16x16x128xf32>
    %17 = vector.broadcast %1 : vector<1x1x128xf32> to vector<16x16x128xf32>
    %18 = arith.mulf %16, %17 : vector<16x16x128xf32>
    %19 = vector.broadcast %3 : vector<1x1x128xf32> to vector<16x16x128xf32>
    %20 = arith.addf %18, %19 : vector<16x16x128xf32>
    %cst_11 = arith.constant 0.000000e+00 : f32
    %21 = vector.broadcast %cst_11 : f32 to vector<16x16x128xf32>
    %22 = arith.maximumf %20, %21 : vector<16x16x128xf32>
    %23 = arith.truncf %22 : vector<16x16x128xf32> to vector<16x16x128xbf16>
    %c0_12 = arith.constant 0 : index
    %c0_13 = arith.constant 0 : index
    %c0_14 = arith.constant 0 : index
    %c0_15 = arith.constant 0 : index
    %24 = vector.load %arg4[%c0_12, %c0_13, %c0_14, %c0_15] : memref<1x1x16x128xbf16, #tpu.memory_space<vmem>>, vector<1x1x16x128xbf16>
    %25 = vector.shape_cast %24 : vector<1x1x16x128xbf16> to vector<1x16x128xbf16>
    %26 = arith.extf %25 : vector<1x16x128xbf16> to vector<1x16x128xf32>
    %27 = vector.broadcast %1 : vector<1x1x128xf32> to vector<1x16x128xf32>
    %28 = arith.mulf %26, %27 : vector<1x16x128xf32>
    %29 = vector.broadcast %3 : vector<1x1x128xf32> to vector<1x16x128xf32>
    %30 = arith.addf %28, %29 : vector<1x16x128xf32>
    %cst_16 = arith.constant 0.000000e+00 : f32
    %31 = vector.broadcast %cst_16 : f32 to vector<1x16x128xf32>
    %32 = arith.maximumf %30, %31 : vector<1x16x128xf32>
    %33 = arith.truncf %32 : vector<1x16x128xf32> to vector<1x16x128xbf16>
    %c0_17 = arith.constant 0 : index
    %c1 = arith.constant 1 : index
    %c0_18 = arith.constant 0 : index
    %34 = vector.load %arg10[%c0_17, %c1, %c0_18] : memref<18x18x128xbf16, #tpu.memory_space<vmem>>, vector<1x16x128xbf16>
    tpu.vector_store %arg10[%c0_17, %c1, %c0_18], %13 {strides = array<i32>} : memref<18x18x128xbf16, #tpu.memory_space<vmem>>, vector<1x16x128xbf16>,
    %c1_19 = arith.constant 1 : index
    %c1_20 = arith.constant 1 : index
    %c0_21 = arith.constant 0 : index
    %35 = vector.load %arg10[%c1_19, %c1_20, %c0_21] : memref<18x18x128xbf16, #tpu.memory_space<vmem>>, vector<16x16x128xbf16>
    tpu.vector_store %arg10[%c1_19, %c1_20, %c0_21], %23 {strides = array<i32>} : memref<18x18x128xbf16, #tpu.memory_space<vmem>>, vector<16x16x128xbf16>,
    %c17 = arith.constant 17 : index
    %c1_22 = arith.constant 1 : index
    %c0_23 = arith.constant 0 : index
    %36 = vector.load %arg10[%c17, %c1_22, %c0_23] : memref<18x18x128xbf16, #tpu.memory_space<vmem>>, vector<1x16x128xbf16>
    tpu.vector_store %arg10[%c17, %c1_22, %c0_23], %33 {strides = array<i32>} : memref<18x18x128xbf16, #tpu.memory_space<vmem>>, vector<1x16x128xbf16>,
    %cst_24 = arith.constant 0.000000e+00 : bf16
    %37 = vector.broadcast %cst_24 : bf16 to vector<18x1x128xbf16>
    %c0_25 = arith.constant 0 : index
    %c0_26 = arith.constant 0 : index
    %c0_27 = arith.constant 0 : index
    %38 = vector.load %arg10[%c0_25, %c0_26, %c0_27] : memref<18x18x128xbf16, #tpu.memory_space<vmem>>, vector<18x1x128xbf16>
    tpu.vector_store %arg10[%c0_25, %c0_26, %c0_27], %37 {strides = array<i32>} : memref<18x18x128xbf16, #tpu.memory_space<vmem>>, vector<18x1x128xbf16>,
    %cst_28 = arith.constant 0.000000e+00 : bf16
    %39 = vector.broadcast %cst_28 : bf16 to vector<18x1x128xbf16>
    %c0_29 = arith.constant 0 : index
    %c17_30 = arith.constant 17 : index
    %c0_31 = arith.constant 0 : index
    %40 = vector.load %arg10[%c0_29, %c17_30, %c0_31] : memref<18x18x128xbf16, #tpu.memory_space<vmem>>, vector<18x1x128xbf16>
    tpu.vector_store %arg10[%c0_29, %c17_30, %c0_31], %39 {strides = array<i32>} : memref<18x18x128xbf16, #tpu.memory_space<vmem>>, vector<18x1x128xbf16>,
    %c0_i32 = arith.constant 0 : i32
    %41 = arith.cmpi eq, %arg1, %c0_i32 : i32
    %42 = arith.extui %41 : i1 to i32
    %c0_i32_32 = arith.constant 0 : i32
    %43 = arith.cmpi ne, %42, %c0_i32_32 : i32
    scf.if %43 {
      %cst_59 = arith.constant 0.000000e+00 : bf16
      %93 = vector.broadcast %cst_59 : bf16 to vector<1x18x128xbf16>
      %c0_60 = arith.constant 0 : index
      %c0_61 = arith.constant 0 : index
      %c0_62 = arith.constant 0 : index
      %94 = vector.load %arg10[%c0_60, %c0_61, %c0_62] : memref<18x18x128xbf16, #tpu.memory_space<vmem>>, vector<1x18x128xbf16>
      tpu.vector_store %arg10[%c0_60, %c0_61, %c0_62], %93 {strides = array<i32>} : memref<18x18x128xbf16, #tpu.memory_space<vmem>>, vector<1x18x128xbf16>,
    } else {
    }
    %c0_i32_33 = arith.constant 0 : i32
    %44 = arith.cmpi eq, %arg1, %c0_i32_33 : i32
    %45 = arith.extui %44 : i1 to i32
    %c0_i32_34 = arith.constant 0 : i32
    %46 = arith.cmpi ne, %45, %c0_i32_34 : i32
    scf.if %46 {
      %cst_59 = arith.constant 0.000000e+00 : bf16
      %93 = vector.broadcast %cst_59 : bf16 to vector<1x18x128xbf16>
      %c17_60 = arith.constant 17 : index
      %c0_61 = arith.constant 0 : index
      %c0_62 = arith.constant 0 : index
      %94 = vector.load %arg10[%c17_60, %c0_61, %c0_62] : memref<18x18x128xbf16, #tpu.memory_space<vmem>>, vector<1x18x128xbf16>
      tpu.vector_store %arg10[%c17_60, %c0_61, %c0_62], %93 {strides = array<i32>} : memref<18x18x128xbf16, #tpu.memory_space<vmem>>, vector<1x18x128xbf16>,
    } else {
    }
    %c0_35 = arith.constant 0 : index
    %c0_36 = arith.constant 0 : index
    %c0_37 = arith.constant 0 : index
    %47 = vector.load %arg10[%c0_35, %c0_36, %c0_37] : memref<18x18x128xbf16, #tpu.memory_space<vmem>>, vector<18x18x128xbf16>
    %48 = vector.extract_strided_slice %47 {offsets = [0, 0, 0], sizes = [18, 16, 128], strides = [1, 1, 1]} : vector<18x18x128xbf16> to vector<18x16x128xbf16>
    %49 = vector.extract_strided_slice %48 {offsets = [0, 0, 0], sizes = [16, 16, 128], strides = [1, 1, 1]} : vector<18x16x128xbf16> to vector<16x16x128xbf16>
    %50 = vector.shape_cast %49 : vector<16x16x128xbf16> to vector<256x128xbf16>
    %51 = vector.extract_strided_slice %48 {offsets = [1, 0, 0], sizes = [16, 16, 128], strides = [1, 1, 1]} : vector<18x16x128xbf16> to vector<16x16x128xbf16>
    %52 = vector.shape_cast %51 : vector<16x16x128xbf16> to vector<256x128xbf16>
    %53 = vector.extract_strided_slice %48 {offsets = [2, 0, 0], sizes = [16, 16, 128], strides = [1, 1, 1]} : vector<18x16x128xbf16> to vector<16x16x128xbf16>
    %54 = vector.shape_cast %53 : vector<16x16x128xbf16> to vector<256x128xbf16>
    %55 = tpu.concatenate %50, %52, %54 in 1 : vector<256x128xbf16>, vector<256x128xbf16>, vector<256x128xbf16> -> vector<256x384xbf16>
    %c0_38 = arith.constant 0 : index
    %c0_39 = arith.constant 0 : index
    %c0_40 = arith.constant 0 : index
    %56 = vector.load %arg7[%c0_38, %c0_39, %c0_40] : memref<3x384x128xbf16, #tpu.memory_space<vmem>>, vector<1x384x128xbf16>
    %57 = vector.shape_cast %56 : vector<1x384x128xbf16> to vector<384x128xbf16>
    %cst_41 = arith.constant dense<0.000000e+00> : vector<256x128xf32>
    %58 = tpu.matmul %55, %57, %cst_41 {dimension_numbers = #tpu.dot_dimension_numbers<[1], [0], [0], [1], [0, 0, 1, 1], [], []>} : vector<256x384xbf16>, vector<384x128xbf16>, vector<256x128xf32> -> vector<256x128xf32>
    %59 = vector.extract_strided_slice %47 {offsets = [0, 1, 0], sizes = [18, 16, 128], strides = [1, 1, 1]} : vector<18x18x128xbf16> to vector<18x16x128xbf16>
    %60 = vector.extract_strided_slice %59 {offsets = [0, 0, 0], sizes = [16, 16, 128], strides = [1, 1, 1]} : vector<18x16x128xbf16> to vector<16x16x128xbf16>
    %61 = vector.shape_cast %60 : vector<16x16x128xbf16> to vector<256x128xbf16>
    %62 = vector.extract_strided_slice %59 {offsets = [1, 0, 0], sizes = [16, 16, 128], strides = [1, 1, 1]} : vector<18x16x128xbf16> to vector<16x16x128xbf16>
    %63 = vector.shape_cast %62 : vector<16x16x128xbf16> to vector<256x128xbf16>
    %64 = vector.extract_strided_slice %59 {offsets = [2, 0, 0], sizes = [16, 16, 128], strides = [1, 1, 1]} : vector<18x16x128xbf16> to vector<16x16x128xbf16>
    %65 = vector.shape_cast %64 : vector<16x16x128xbf16> to vector<256x128xbf16>
    %66 = tpu.concatenate %61, %63, %65 in 1 : vector<256x128xbf16>, vector<256x128xbf16>, vector<256x128xbf16> -> vector<256x384xbf16>
    %c1_42 = arith.constant 1 : index
    %c0_43 = arith.constant 0 : index
    %c0_44 = arith.constant 0 : index
    %67 = vector.load %arg7[%c1_42, %c0_43, %c0_44] : memref<3x384x128xbf16, #tpu.memory_space<vmem>>, vector<1x384x128xbf16>
    %68 = vector.shape_cast %67 : vector<1x384x128xbf16> to vector<384x128xbf16>
    %cst_45 = arith.constant dense<0.000000e+00> : vector<256x128xf32>
    %69 = tpu.matmul %66, %68, %cst_45 {dimension_numbers = #tpu.dot_dimension_numbers<[1], [0], [0], [1], [0, 0, 1, 1], [], []>} : vector<256x384xbf16>, vector<384x128xbf16>, vector<256x128xf32> -> vector<256x128xf32>
    %70 = arith.addf %58, %69 : vector<256x128xf32>
    %71 = vector.extract_strided_slice %47 {offsets = [0, 2, 0], sizes = [18, 16, 128], strides = [1, 1, 1]} : vector<18x18x128xbf16> to vector<18x16x128xbf16>
    %72 = vector.extract_strided_slice %71 {offsets = [0, 0, 0], sizes = [16, 16, 128], strides = [1, 1, 1]} : vector<18x16x128xbf16> to vector<16x16x128xbf16>
    %73 = vector.shape_cast %72 : vector<16x16x128xbf16> to vector<256x128xbf16>
    %74 = vector.extract_strided_slice %71 {offsets = [1, 0, 0], sizes = [16, 16, 128], strides = [1, 1, 1]} : vector<18x16x128xbf16> to vector<16x16x128xbf16>
    %75 = vector.shape_cast %74 : vector<16x16x128xbf16> to vector<256x128xbf16>
    %76 = vector.extract_strided_slice %71 {offsets = [2, 0, 0], sizes = [16, 16, 128], strides = [1, 1, 1]} : vector<18x16x128xbf16> to vector<16x16x128xbf16>
    %77 = vector.shape_cast %76 : vector<16x16x128xbf16> to vector<256x128xbf16>
    %78 = tpu.concatenate %73, %75, %77 in 1 : vector<256x128xbf16>, vector<256x128xbf16>, vector<256x128xbf16> -> vector<256x384xbf16>
    %c2 = arith.constant 2 : index
    %c0_46 = arith.constant 0 : index
    %c0_47 = arith.constant 0 : index
    %79 = vector.load %arg7[%c2, %c0_46, %c0_47] : memref<3x384x128xbf16, #tpu.memory_space<vmem>>, vector<1x384x128xbf16>
    %80 = vector.shape_cast %79 : vector<1x384x128xbf16> to vector<384x128xbf16>
    %cst_48 = arith.constant dense<0.000000e+00> : vector<256x128xf32>
    %81 = tpu.matmul %78, %80, %cst_48 {dimension_numbers = #tpu.dot_dimension_numbers<[1], [0], [0], [1], [0, 0, 1, 1], [], []>} : vector<256x384xbf16>, vector<384x128xbf16>, vector<256x128xf32> -> vector<256x128xf32>
    %82 = arith.addf %70, %81 : vector<256x128xf32>
    %83 = vector.shape_cast %82 : vector<256x128xf32> to vector<1x16x16x128xf32>
    %c0_49 = arith.constant 0 : index
    %c0_50 = arith.constant 0 : index
    %c0_51 = arith.constant 0 : index
    %c0_52 = arith.constant 0 : index
    %84 = vector.load %arg8[%c0_49, %c0_50, %c0_51, %c0_52] : memref<1x16x16x128xf32, #tpu.memory_space<vmem>>, vector<1x16x16x128xf32>
    tpu.vector_store %arg8[%c0_49, %c0_50, %c0_51, %c0_52], %83 {strides = array<i32>} : memref<1x16x16x128xf32, #tpu.memory_space<vmem>>, vector<1x16x16x128xf32>,
    %cst_53 = arith.constant dense<0.000000e+00> : vector<128xf32>
    %85 = vector.multi_reduction <add>, %82, %cst_53 [0] : vector<256x128xf32> to vector<128xf32>
    %86 = vector.shape_cast %85 : vector<128xf32> to vector<1x128xf32>
    %87 = arith.mulf %82, %82 : vector<256x128xf32>
    %cst_54 = arith.constant dense<0.000000e+00> : vector<128xf32>
    %88 = vector.multi_reduction <add>, %87, %cst_54 [0] : vector<256x128xf32> to vector<128xf32>
    %89 = vector.shape_cast %88 : vector<128xf32> to vector<1x128xf32>
    %90 = tpu.concatenate %86, %89 in 0 : vector<1x128xf32>, vector<1x128xf32> -> vector<2x128xf32>
    %91 = vector.shape_cast %90 : vector<2x128xf32> to vector<1x1x2x128xf32>
    %c0_55 = arith.constant 0 : index
    %c0_56 = arith.constant 0 : index
    %c0_57 = arith.constant 0 : index
    %c0_58 = arith.constant 0 : index
    %92 = vector.load %arg9[%c0_55, %c0_56, %c0_57, %c0_58] : memref<1x1x2x128xf32, #tpu.memory_space<vmem>>, vector<1x1x2x128xf32>
    tpu.vector_store %arg9[%c0_55, %c0_56, %c0_57, %c0_58], %91 {strides = array<i32>} : memref<1x1x2x128xf32, #tpu.memory_space<vmem>>, vector<1x1x2x128xf32>,
    return
  }
  func.func @transform_0(%arg0: i32, %arg1: i32) -> (i32, i32, i32, i32) {
    %c0_i32 = arith.constant 0 : i32
    %c0_i32_0 = arith.constant 0 : i32
    %c0_i32_1 = arith.constant 0 : i32
    return %arg0, %arg1, %c0_i32, %c0_i32_0 : i32, i32, i32, i32
  }
  func.func @transform_1(%arg0: i32, %arg1: i32) -> (i32, i32, i32, i32) {
    %c16_i32 = arith.constant 16 : i32
    %0 = arith.muli %arg1, %c16_i32 : i32
    %c1_i32 = arith.constant 1 : i32
    %1 = arith.subi %0, %c1_i32 : i32
    %c0_i32 = arith.constant 0 : i32
    %2 = arith.maxsi %1, %c0_i32 : i32
    %c0_i32_0 = arith.constant 0 : i32
    %c0_i32_1 = arith.constant 0 : i32
    %c0_i32_2 = arith.constant 0 : i32
    return %arg0, %2, %c0_i32_0, %c0_i32_1 : i32, i32, i32, i32
  }
  func.func @transform_2(%arg0: i32, %arg1: i32) -> (i32, i32, i32, i32) {
    %c1_i32 = arith.constant 1 : i32
    %0 = arith.addi %arg1, %c1_i32 : i32
    %c16_i32 = arith.constant 16 : i32
    %1 = arith.muli %0, %c16_i32 : i32
    %c15_i32 = arith.constant 15 : i32
    %2 = arith.minsi %1, %c15_i32 : i32
    %c0_i32 = arith.constant 0 : i32
    %c0_i32_0 = arith.constant 0 : i32
    %c0_i32_1 = arith.constant 0 : i32
    return %arg0, %2, %c0_i32, %c0_i32_0 : i32, i32, i32, i32
  }
  func.func @transform_3(%arg0: i32, %arg1: i32) -> (i32, i32) {
    %c0_i32 = arith.constant 0 : i32
    %c0_i32_0 = arith.constant 0 : i32
    %c0_i32_1 = arith.constant 0 : i32
    return %c0_i32, %c0_i32_0 : i32, i32
  }
  func.func @transform_4(%arg0: i32, %arg1: i32) -> (i32, i32) {
    %c0_i32 = arith.constant 0 : i32
    %c0_i32_0 = arith.constant 0 : i32
    %c0_i32_1 = arith.constant 0 : i32
    return %c0_i32, %c0_i32_0 : i32, i32
  }
  func.func @transform_5(%arg0: i32, %arg1: i32) -> (i32, i32, i32) {
    %c0_i32 = arith.constant 0 : i32
    %c0_i32_0 = arith.constant 0 : i32
    %c0_i32_1 = arith.constant 0 : i32
    %c0_i32_2 = arith.constant 0 : i32
    return %c0_i32, %c0_i32_0, %c0_i32_1 : i32, i32, i32
  }
  func.func @transform_6(%arg0: i32, %arg1: i32) -> (i32, i32, i32, i32) {
    %c0_i32 = arith.constant 0 : i32
    %c0_i32_0 = arith.constant 0 : i32
    %c0_i32_1 = arith.constant 0 : i32
    return %arg0, %arg1, %c0_i32, %c0_i32_0 : i32, i32, i32, i32
  }
  func.func @transform_7(%arg0: i32, %arg1: i32) -> (i32, i32, i32, i32) {
    %c0_i32 = arith.constant 0 : i32
    %c0_i32_0 = arith.constant 0 : i32
    %c0_i32_1 = arith.constant 0 : i32
    return %arg0, %arg1, %c0_i32, %c0_i32_0 : i32, i32, i32, i32
  }
}

</mosaic_0001>

<llo_original>
// kernel: _lambda_.5
$region0: #{_lambda_.5}
  #allocation0 [shape = 'u32[]', space=smem, size = 0x4, offset = 0x4, fixed_abs, tag = 'smem constant byte address 0x4 - core index']
  #allocation1 [shape = 'u32[72,128]{1,0:T(1,128)}', space=vmem, size = 0x9000, scoped, tag = 'internal scratch']
  %s0 = inlined_call_operand.vmem [shape: f32[512,128], index: 0, kind: input, shape index: {}]
  %s1 = inlined_call_operand.vmem [shape: bf16[512,128], index: 1, kind: input, shape index: {}]
  %s2 = inlined_call_operand.vmem [shape: f32[1,128], index: 2, kind: input, shape index: {}]
  %s3 = inlined_call_operand.vmem [shape: f32[1,128], index: 3, kind: input, shape index: {}]
  %s4 = inlined_call_operand.vmem [shape: f32[1,128], index: 4, kind: input, shape index: {}]
  %s5 = inlined_call_operand.vmem [shape: f32[1,128], index: 5, kind: input, shape index: {}]
  %s6 = inlined_call_operand.vmem [shape: f32[512,128], index: 6, kind: output, shape index: {}]
  %s7 = sld [smem:[#allocation0]]
  $region34: #{_lambda_.5} parent=0
    _
  %s9 = ssub.s32 1, %s7
  %s10 = scalar_select 0, %s9, %s7
  // Predicated region
  $region2: #{_lambda_.5} parent=0 // pred_check
    _
  $region3: #{_lambda_.5} parent=0 // pred_check_branch
    %12 = sbr.rel (0) target = $region5
  $region4: #{_lambda_.5} parent=0 // pred_region
    _
  $region5: #{_lambda_.5} parent=0 // pred_fallthru
    _
  // Predicated region
  $region6: #{_lambda_.5} parent=0 // pred_check
    _
  $region7: #{_lambda_.5} parent=0 // pred_check_branch
    %14 = sbr.rel (0) target = $region9
  $region8: #{_lambda_.5} parent=0 // pred_region
    _
  $region9: #{_lambda_.5} parent=0 // pred_fallthru
    _
  // Predicated region
  $region10: #{_lambda_.5} parent=0 // pred_check
    _
  $region11: #{_lambda_.5} parent=0 // pred_check_branch
    %16 = sbr.rel (0) target = $region13
  $region12: #{_lambda_.5} parent=0 // pred_region
    _
  $region13: #{_lambda_.5} parent=0 // pred_fallthru
    _
  // Predicated region
  $region14: #{_lambda_.5} parent=0 // pred_check
    _
  $region15: #{_lambda_.5} parent=0 // pred_check_branch
    %18 = sbr.rel (0) target = $region17
  $region16: #{_lambda_.5} parent=0 // pred_region
    _
  $region17: #{_lambda_.5} parent=0 // pred_fallthru
    _
  // Predicated region
  $region18: #{_lambda_.5} parent=0 // pred_check
    _
  $region19: #{_lambda_.5} parent=0 // pred_check_branch
    %20 = sbr.rel (0) target = $region21
  $region20: #{_lambda_.5} parent=0 // pred_region
    _
  $region21: #{_lambda_.5} parent=0 // pred_fallthru
    _
  // Predicated region
  $region22: #{_lambda_.5} parent=0 // pred_check
    _
  $region23: #{_lambda_.5} parent=0 // pred_check_branch
    %22 = sbr.rel (0) target = $region25
  $region24: #{_lambda_.5} parent=0 // pred_region
    _
  $region25: #{_lambda_.5} parent=0 // pred_fallthru
    _
  %v23 = vld [vmem:[%s1] sm:$0xf]
  %v24 = vld [vmem:[%s1 + $0x4] sm:$0xf]
  %v25 = vld [vmem:[%s1 + $0x8] sm:$0xf]
  %v26 = vld [vmem:[%s1 + $0xc] sm:$0xf]
  %v27 = vld [vmem:[%s1 + $0x10] sm:$0xf]
  %v28 = vld [vmem:[%s1 + $0x14] sm:$0xf]
  %v29 = vld [vmem:[%s1 + $0x18] sm:$0xf]
  %v30 = vld [vmem:[%s1 + $0x1c] sm:$0xf]
  %v31 = vld [vmem:[%s1 + $0x20] sm:$0xf]
  %v32 = vld [vmem:[%s1 + $0x24] sm:$0xf]
  %v33 = vld [vmem:[%s1 + $0x28] sm:$0xf]
  %v34 = vld [vmem:[%s1 + $0x2c] sm:$0xf]
  %v35 = vld [vmem:[%s1 + $0x30] sm:$0xf]
  %v36 = vld [vmem:[%s1 + $0x34] sm:$0xf]
  %v37 = vld [vmem:[%s1 + $0x38] sm:$0xf]
  %v38 = vld [vmem:[%s1 + $0x3c] sm:$0xf]
  %v39 = vld [vmem:[%s1 + $0x40] sm:$0xf]
  %v40 = vld [vmem:[%s1 + $0x44] sm:$0xf]
  %v41 = vld [vmem:[%s1 + $0x48] sm:$0xf]
  %v42 = vld [vmem:[%s1 + $0x4c] sm:$0xf]
  %v43 = vld [vmem:[%s1 + $0x50] sm:$0xf]
  %v44 = vld [vmem:[%s1 + $0x54] sm:$0xf]
  %v45 = vld [vmem:[%s1 + $0x58] sm:$0xf]
  %v46 = vld [vmem:[%s1 + $0x5c] sm:$0xf]
  %v47 = vld [vmem:[%s1 + $0x60] sm:$0xf]
  %v48 = vld [vmem:[%s1 + $0x64] sm:$0xf]
  %v49 = vld [vmem:[%s1 + $0x68] sm:$0xf]
  %v50 = vld [vmem:[%s1 + $0x6c] sm:$0xf]
  %v51 = vld [vmem:[%s1 + $0x70] sm:$0xf]
  %v52 = vld [vmem:[%s1 + $0x74] sm:$0xf]
  %v53 = vld [vmem:[%s1 + $0x78] sm:$0xf]
  %v54 = vld [vmem:[%s1 + $0x7c] sm:$0xf]
  %v55 = vld [vmem:[%s1 + $0x80] sm:$0xf]
  %v56 = vld [vmem:[%s1 + $0x84] sm:$0xf]
  %v57 = vld [vmem:[%s1 + $0x88] sm:$0xf]
  %v58 = vld [vmem:[%s1 + $0x8c] sm:$0xf]
  %v59 = vld [vmem:[%s1 + $0x90] sm:$0xf]
  %v60 = vld [vmem:[%s1 + $0x94] sm:$0xf]
  %v61 = vld [vmem:[%s1 + $0x98] sm:$0xf]
  %v62 = vld [vmem:[%s1 + $0x9c] sm:$0xf]
  %v63 = vld [vmem:[%s1 + $0xa0] sm:$0xf]
  %v64 = vld [vmem:[%s1 + $0xa4] sm:$0xf]
  %v65 = vld [vmem:[%s1 + $0xa8] sm:$0xf]
  %v66 = vld [vmem:[%s1 + $0xac] sm:$0xf]
  %v67 = vld [vmem:[%s1 + $0xb0] sm:$0xf]
  %v68 = vld [vmem:[%s1 + $0xb4] sm:$0xf]
  %v69 = vld [vmem:[%s1 + $0xb8] sm:$0xf]
  %v70 = vld [vmem:[%s1 + $0xbc] sm:$0xf]
  %v71 = vld [vmem:[%s1 + $0xc0] sm:$0xf]
  %v72 = vld [vmem:[%s1 + $0xc4] sm:$0xf]
  %v73 = vld [vmem:[%s1 + $0xc8] sm:$0xf]
  %v74 = vld [vmem:[%s1 + $0xcc] sm:$0xf]
  %v75 = vld [vmem:[%s1 + $0xd0] sm:$0xf]
  %v76 = vld [vmem:[%s1 + $0xd4] sm:$0xf]
  %v77 = vld [vmem:[%s1 + $0xd8] sm:$0xf]
  %v78 = vld [vmem:[%s1 + $0xdc] sm:$0xf]
  %v79 = vld [vmem:[%s1 + $0xe0] sm:$0xf]
  %v80 = vld [vmem:[%s1 + $0xe4] sm:$0xf]
  %v81 = vld [vmem:[%s1 + $0xe8] sm:$0xf]
  %v82 = vld [vmem:[%s1 + $0xec] sm:$0xf]
  %v83 = vld [vmem:[%s1 + $0xf0] sm:$0xf]
  %v84 = vld [vmem:[%s1 + $0xf4] sm:$0xf]
  %v85 = vld [vmem:[%s1 + $0xf8] sm:$0xf]
  %v86 = vld [vmem:[%s1 + $0xfc] sm:$0xf]
  %v87 = vunpack.c.l.bf16 %v23
  %v88 = vunpack.c.l.bf16 %v24
  %v89 = vunpack.c.l.bf16 %v25
  %v90 = vunpack.c.l.bf16 %v26
  %v91 = vunpack.c.l.bf16 %v27
  %v92 = vunpack.c.l.bf16 %v28
  %v93 = vunpack.c.l.bf16 %v29
  %v94 = vunpack.c.l.bf16 %v30
  %v95 = vunpack.c.l.bf16 %v31
  %v96 = vunpack.c.l.bf16 %v32
  %v97 = vunpack.c.l.bf16 %v33
  %v98 = vunpack.c.l.bf16 %v34
  %v99 = vunpack.c.l.bf16 %v35
  %v100 = vunpack.c.l.bf16 %v36
  %v101 = vunpack.c.l.bf16 %v37
  %v102 = vunpack.c.l.bf16 %v38
  %v103 = vunpack.c.l.bf16 %v39
  %v104 = vunpack.c.l.bf16 %v40
  %v105 = vunpack.c.l.bf16 %v41
  %v106 = vunpack.c.l.bf16 %v42
  %v107 = vunpack.c.l.bf16 %v43
  %v108 = vunpack.c.l.bf16 %v44
  %v109 = vunpack.c.l.bf16 %v45
  %v110 = vunpack.c.l.bf16 %v46
  %v111 = vunpack.c.l.bf16 %v47
  %v112 = vunpack.c.l.bf16 %v48
  %v113 = vunpack.c.l.bf16 %v49
  %v114 = vunpack.c.l.bf16 %v50
  %v115 = vunpack.c.l.bf16 %v51
  %v116 = vunpack.c.l.bf16 %v52
  %v117 = vunpack.c.l.bf16 %v53
  %v118 = vunpack.c.l.bf16 %v54
  %v119 = vunpack.c.l.bf16 %v55
  %v120 = vunpack.c.l.bf16 %v56
  %v121 = vunpack.c.l.bf16 %v57
  %v122 = vunpack.c.l.bf16 %v58
  %v123 = vunpack.c.l.bf16 %v59
  %v124 = vunpack.c.l.bf16 %v60
  %v125 = vunpack.c.l.bf16 %v61
  %v126 = vunpack.c.l.bf16 %v62
  %v127 = vunpack.c.l.bf16 %v63
  %v128 = vunpack.c.l.bf16 %v64
  %v129 = vunpack.c.l.bf16 %v65
  %v130 = vunpack.c.l.bf16 %v66
  %v131 = vunpack.c.l.bf16 %v67
  %v132 = vunpack.c.l.bf16 %v68
  %v133 = vunpack.c.l.bf16 %v69
  %v134 = vunpack.c.l.bf16 %v70
  %v135 = vunpack.c.l.bf16 %v71
  %v136 = vunpack.c.l.bf16 %v72
  %v137 = vunpack.c.l.bf16 %v73
  %v138 = vunpack.c.l.bf16 %v74
  %v139 = vunpack.c.l.bf16 %v75
  %v140 = vunpack.c.l.bf16 %v76
  %v141 = vunpack.c.l.bf16 %v77
  %v142 = vunpack.c.l.bf16 %v78
  %v143 = vunpack.c.l.bf16 %v79
  %v144 = vunpack.c.l.bf16 %v80
  %v145 = vunpack.c.l.bf16 %v81
  %v146 = vunpack.c.l.bf16 %v82
  %v147 = vunpack.c.l.bf16 %v83
  %v148 = vunpack.c.l.bf16 %v84
  %v149 = vunpack.c.l.bf16 %v85
  %v150 = vunpack.c.l.bf16 %v86
  %v151 = vld [vmem:[%s0] sm:$0xff]
  %v152 = vld [vmem:[%s0 + $0x8] sm:$0xff]
  %v153 = vld [vmem:[%s0 + $0x10] sm:$0xff]
  %v154 = vld [vmem:[%s0 + $0x18] sm:$0xff]
  %v155 = vld [vmem:[%s0 + $0x20] sm:$0xff]
  %v156 = vld [vmem:[%s0 + $0x28] sm:$0xff]
  %v157 = vld [vmem:[%s0 + $0x30] sm:$0xff]
  %v158 = vld [vmem:[%s0 + $0x38] sm:$0xff]
  %v159 = vld [vmem:[%s0 + $0x40] sm:$0xff]
  %v160 = vld [vmem:[%s0 + $0x48] sm:$0xff]
  %v161 = vld [vmem:[%s0 + $0x50] sm:$0xff]
  %v162 = vld [vmem:[%s0 + $0x58] sm:$0xff]
  %v163 = vld [vmem:[%s0 + $0x60] sm:$0xff]
  %v164 = vld [vmem:[%s0 + $0x68] sm:$0xff]
  %v165 = vld [vmem:[%s0 + $0x70] sm:$0xff]
  %v166 = vld [vmem:[%s0 + $0x78] sm:$0xff]
  %v167 = vld [vmem:[%s0 + $0x80] sm:$0xff]
  %v168 = vld [vmem:[%s0 + $0x88] sm:$0xff]
  %v169 = vld [vmem:[%s0 + $0x90] sm:$0xff]
  %v170 = vld [vmem:[%s0 + $0x98] sm:$0xff]
  %v171 = vld [vmem:[%s0 + $0xa0] sm:$0xff]
  %v172 = vld [vmem:[%s0 + $0xa8] sm:$0xff]
  %v173 = vld [vmem:[%s0 + $0xb0] sm:$0xff]
  %v174 = vld [vmem:[%s0 + $0xb8] sm:$0xff]
  %v175 = vld [vmem:[%s0 + $0xc0] sm:$0xff]
  %v176 = vld [vmem:[%s0 + $0xc8] sm:$0xff]
  %v177 = vld [vmem:[%s0 + $0xd0] sm:$0xff]
  %v178 = vld [vmem:[%s0 + $0xd8] sm:$0xff]
  %v179 = vld [vmem:[%s0 + $0xe0] sm:$0xff]
  %v180 = vld [vmem:[%s0 + $0xe8] sm:$0xff]
  %v181 = vld [vmem:[%s0 + $0xf0] sm:$0xff]
  %v182 = vld [vmem:[%s0 + $0xf8] sm:$0xff]
  %v183 = vld [vmem:[%s0 + $0x100] sm:$0xff]
  %v184 = vld [vmem:[%s0 + $0x108] sm:$0xff]
  %v185 = vld [vmem:[%s0 + $0x110] sm:$0xff]
  %v186 = vld [vmem:[%s0 + $0x118] sm:$0xff]
  %v187 = vld [vmem:[%s0 + $0x120] sm:$0xff]
  %v188 = vld [vmem:[%s0 + $0x128] sm:$0xff]
  %v189 = vld [vmem:[%s0 + $0x130] sm:$0xff]
  %v190 = vld [vmem:[%s0 + $0x138] sm:$0xff]
  %v191 = vld [vmem:[%s0 + $0x140] sm:$0xff]
  %v192 = vld [vmem:[%s0 + $0x148] sm:$0xff]
  %v193 = vld [vmem:[%s0 + $0x150] sm:$0xff]
  %v194 = vld [vmem:[%s0 + $0x158] sm:$0xff]
  %v195 = vld [vmem:[%s0 + $0x160] sm:$0xff]
  %v196 = vld [vmem:[%s0 + $0x168] sm:$0xff]
  %v197 = vld [vmem:[%s0 + $0x170] sm:$0xff]
  %v198 = vld [vmem:[%s0 + $0x178] sm:$0xff]
  %v199 = vld [vmem:[%s0 + $0x180] sm:$0xff]
  %v200 = vld [vmem:[%s0 + $0x188] sm:$0xff]
  %v201 = vld [vmem:[%s0 + $0x190] sm:$0xff]
  %v202 = vld [vmem:[%s0 + $0x198] sm:$0xff]
  %v203 = vld [vmem:[%s0 + $0x1a0] sm:$0xff]
  %v204 = vld [vmem:[%s0 + $0x1a8] sm:$0xff]
  %v205 = vld [vmem:[%s0 + $0x1b0] sm:$0xff]
  %v206 = vld [vmem:[%s0 + $0x1b8] sm:$0xff]
  %v207 = vld [vmem:[%s0 + $0x1c0] sm:$0xff]
  %v208 = vld [vmem:[%s0 + $0x1c8] sm:$0xff]
  %v209 = vld [vmem:[%s0 + $0x1d0] sm:$0xff]
  %v210 = vld [vmem:[%s0 + $0x1d8] sm:$0xff]
  %v211 = vld [vmem:[%s0 + $0x1e0] sm:$0xff]
  %v212 = vld [vmem:[%s0 + $0x1e8] sm:$0xff]
  %v213 = vld [vmem:[%s0 + $0x1f0] sm:$0xff]
  %v214 = vld [vmem:[%s0 + $0x1f8] sm:$0xff]
  %v215 = vld [vmem:[%s2] sm:$0x1]
  %v217 = vperm.slane %v215, 0
  %v219 = vmul.f32 %v151, %v217
  %v220 = vmul.f32 %v152, %v217
  %v221 = vmul.f32 %v153, %v217
  %v222 = vmul.f32 %v154, %v217
  %v223 = vmul.f32 %v155, %v217
  %v224 = vmul.f32 %v156, %v217
  %v225 = vmul.f32 %v157, %v217
  %v226 = vmul.f32 %v158, %v217
  %v227 = vmul.f32 %v159, %v217
  %v228 = vmul.f32 %v160, %v217
  %v229 = vmul.f32 %v161, %v217
  %v230 = vmul.f32 %v162, %v217
  %v231 = vmul.f32 %v163, %v217
  %v232 = vmul.f32 %v164, %v217
  %v233 = vmul.f32 %v165, %v217
  %v234 = vmul.f32 %v166, %v217
  %v235 = vmul.f32 %v167, %v217
  %v236 = vmul.f32 %v168, %v217
  %v237 = vmul.f32 %v169, %v217
  %v238 = vmul.f32 %v170, %v217
  %v239 = vmul.f32 %v171, %v217
  %v240 = vmul.f32 %v172, %v217
  %v241 = vmul.f32 %v173, %v217
  %v242 = vmul.f32 %v174, %v217
  %v243 = vmul.f32 %v175, %v217
  %v244 = vmul.f32 %v176, %v217
  %v245 = vmul.f32 %v177, %v217
  %v246 = vmul.f32 %v178, %v217
  %v247 = vmul.f32 %v179, %v217
  %v248 = vmul.f32 %v180, %v217
  %v249 = vmul.f32 %v181, %v217
  %v250 = vmul.f32 %v182, %v217
  %v251 = vmul.f32 %v183, %v217
  %v252 = vmul.f32 %v184, %v217
  %v253 = vmul.f32 %v185, %v217
  %v254 = vmul.f32 %v186, %v217
  %v255 = vmul.f32 %v187, %v217
  %v256 = vmul.f32 %v188, %v217
  %v257 = vmul.f32 %v189, %v217
  %v258 = vmul.f32 %v190, %v217
  %v259 = vmul.f32 %v191, %v217
  %v260 = vmul.f32 %v192, %v217
  %v261 = vmul.f32 %v193, %v217
  %v262 = vmul.f32 %v194, %v217
  %v263 = vmul.f32 %v195, %v217
  %v264 = vmul.f32 %v196, %v217
  %v265 = vmul.f32 %v197, %v217
  %v266 = vmul.f32 %v198, %v217
  %v267 = vmul.f32 %v199, %v217
  %v268 = vmul.f32 %v200, %v217
  %v269 = vmul.f32 %v201, %v217
  %v270 = vmul.f32 %v202, %v217
  %v271 = vmul.f32 %v203, %v217
  %v272 = vmul.f32 %v204, %v217
  %v273 = vmul.f32 %v205, %v217
  %v274 = vmul.f32 %v206, %v217
  %v275 = vmul.f32 %v207, %v217
  %v276 = vmul.f32 %v208, %v217
  %v277 = vmul.f32 %v209, %v217
  %v278 = vmul.f32 %v210, %v217
  %v279 = vmul.f32 %v211, %v217
  %v280 = vmul.f32 %v212, %v217
  %v281 = vmul.f32 %v213, %v217
  %v282 = vmul.f32 %v214, %v217
  %v283 = vld [vmem:[%s3] sm:$0x1]
  %v285 = vperm.slane %v283, 0
  %v287 = vadd.f32 %v219, %v285
  %v288 = vadd.f32 %v220, %v285
  %v289 = vadd.f32 %v221, %v285
  %v290 = vadd.f32 %v222, %v285
  %v291 = vadd.f32 %v223, %v285
  %v292 = vadd.f32 %v224, %v285
  %v293 = vadd.f32 %v225, %v285
  %v294 = vadd.f32 %v226, %v285
  %v295 = vadd.f32 %v227, %v285
  %v296 = vadd.f32 %v228, %v285
  %v297 = vadd.f32 %v229, %v285
  %v298 = vadd.f32 %v230, %v285
  %v299 = vadd.f32 %v231, %v285
  %v300 = vadd.f32 %v232, %v285
  %v301 = vadd.f32 %v233, %v285
  %v302 = vadd.f32 %v234, %v285
  %v303 = vadd.f32 %v235, %v285
  %v304 = vadd.f32 %v236, %v285
  %v305 = vadd.f32 %v237, %v285
  %v306 = vadd.f32 %v238, %v285
  %v307 = vadd.f32 %v239, %v285
  %v308 = vadd.f32 %v240, %v285
  %v309 = vadd.f32 %v241, %v285
  %v310 = vadd.f32 %v242, %v285
  %v311 = vadd.f32 %v243, %v285
  %v312 = vadd.f32 %v244, %v285
  %v313 = vadd.f32 %v245, %v285
  %v314 = vadd.f32 %v246, %v285
  %v315 = vadd.f32 %v247, %v285
  %v316 = vadd.f32 %v248, %v285
  %v317 = vadd.f32 %v249, %v285
  %v318 = vadd.f32 %v250, %v285
  %v319 = vadd.f32 %v251, %v285
  %v320 = vadd.f32 %v252, %v285
  %v321 = vadd.f32 %v253, %v285
  %v322 = vadd.f32 %v254, %v285
  %v323 = vadd.f32 %v255, %v285
  %v324 = vadd.f32 %v256, %v285
  %v325 = vadd.f32 %v257, %v285
  %v326 = vadd.f32 %v258, %v285
  %v327 = vadd.f32 %v259, %v285
  %v328 = vadd.f32 %v260, %v285
  %v329 = vadd.f32 %v261, %v285
  %v330 = vadd.f32 %v262, %v285
  %v331 = vadd.f32 %v263, %v285
  %v332 = vadd.f32 %v264, %v285
  %v333 = vadd.f32 %v265, %v285
  %v334 = vadd.f32 %v266, %v285
  %v335 = vadd.f32 %v267, %v285
  %v336 = vadd.f32 %v268, %v285
  %v337 = vadd.f32 %v269, %v285
  %v338 = vadd.f32 %v270, %v285
  %v339 = vadd.f32 %v271, %v285
  %v340 = vadd.f32 %v272, %v285
  %v341 = vadd.f32 %v273, %v285
  %v342 = vadd.f32 %v274, %v285
  %v343 = vadd.f32 %v275, %v285
  %v344 = vadd.f32 %v276, %v285
  %v345 = vadd.f32 %v277, %v285
  %v346 = vadd.f32 %v278, %v285
  %v347 = vadd.f32 %v279, %v285
  %v348 = vadd.f32 %v280, %v285
  %v349 = vadd.f32 %v281, %v285
  %v350 = vadd.f32 %v282, %v285
  %v351 = vld [vmem:[%s4] sm:$0x1]
  %v353 = vperm.slane %v351, 0
  %v355 = vmul.f32 %v87, %v353
  %v356 = vmul.f32 %v88, %v353
  %v357 = vmul.f32 %v89, %v353
  %v358 = vmul.f32 %v90, %v353
  %v359 = vmul.f32 %v91, %v353
  %v360 = vmul.f32 %v92, %v353
  %v361 = vmul.f32 %v93, %v353
  %v362 = vmul.f32 %v94, %v353
  %v363 = vmul.f32 %v95, %v353
  %v364 = vmul.f32 %v96, %v353
  %v365 = vmul.f32 %v97, %v353
  %v366 = vmul.f32 %v98, %v353
  %v367 = vmul.f32 %v99, %v353
  %v368 = vmul.f32 %v100, %v353
  %v369 = vmul.f32 %v101, %v353
  %v370 = vmul.f32 %v102, %v353
  %v371 = vmul.f32 %v103, %v353
  %v372 = vmul.f32 %v104, %v353
  %v373 = vmul.f32 %v105, %v353
  %v374 = vmul.f32 %v106, %v353
  %v375 = vmul.f32 %v107, %v353
  %v376 = vmul.f32 %v108, %v353
  %v377 = vmul.f32 %v109, %v353
  %v378 = vmul.f32 %v110, %v353
  %v379 = vmul.f32 %v111, %v353
  %v380 = vmul.f32 %v112, %v353
  %v381 = vmul.f32 %v113, %v353
  %v382 = vmul.f32 %v114, %v353
  %v383 = vmul.f32 %v115, %v353
  %v384 = vmul.f32 %v116, %v353
  %v385 = vmul.f32 %v117, %v353
  %v386 = vmul.f32 %v118, %v353
  %v387 = vmul.f32 %v119, %v353
  %v388 = vmul.f32 %v120, %v353
  %v389 = vmul.f32 %v121, %v353
  %v390 = vmul.f32 %v122, %v353
  %v391 = vmul.f32 %v123, %v353
  %v392 = vmul.f32 %v124, %v353
  %v393 = vmul.f32 %v125, %v353
  %v394 = vmul.f32 %v126, %v353
  %v395 = vmul.f32 %v127, %v353
  %v396 = vmul.f32 %v128, %v353
  %v397 = vmul.f32 %v129, %v353
  %v398 = vmul.f32 %v130, %v353
  %v399 = vmul.f32 %v131, %v353
  %v400 = vmul.f32 %v132, %v353
  %v401 = vmul.f32 %v133, %v353
  %v402 = vmul.f32 %v134, %v353
  %v403 = vmul.f32 %v135, %v353
  %v404 = vmul.f32 %v136, %v353
  %v405 = vmul.f32 %v137, %v353
  %v406 = vmul.f32 %v138, %v353
  %v407 = vmul.f32 %v139, %v353
  %v408 = vmul.f32 %v140, %v353
  %v409 = vmul.f32 %v141, %v353
  %v410 = vmul.f32 %v142, %v353
  %v411 = vmul.f32 %v143, %v353
  %v412 = vmul.f32 %v144, %v353
  %v413 = vmul.f32 %v145, %v353
  %v414 = vmul.f32 %v146, %v353
  %v415 = vmul.f32 %v147, %v353
  %v416 = vmul.f32 %v148, %v353
  %v417 = vmul.f32 %v149, %v353
  %v418 = vmul.f32 %v150, %v353
  %v419 = vadd.f32 %v287, %v355
  %v420 = vadd.f32 %v288, %v356
  %v421 = vadd.f32 %v289, %v357
  %v422 = vadd.f32 %v290, %v358
  %v423 = vadd.f32 %v291, %v359
  %v424 = vadd.f32 %v292, %v360
  %v425 = vadd.f32 %v293, %v361
  %v426 = vadd.f32 %v294, %v362
  %v427 = vadd.f32 %v295, %v363
  %v428 = vadd.f32 %v296, %v364
  %v429 = vadd.f32 %v297, %v365
  %v430 = vadd.f32 %v298, %v366
  %v431 = vadd.f32 %v299, %v367
  %v432 = vadd.f32 %v300, %v368
  %v433 = vadd.f32 %v301, %v369
  %v434 = vadd.f32 %v302, %v370
  %v435 = vadd.f32 %v303, %v371
  %v436 = vadd.f32 %v304, %v372
  %v437 = vadd.f32 %v305, %v373
  %v438 = vadd.f32 %v306, %v374
  %v439 = vadd.f32 %v307, %v375
  %v440 = vadd.f32 %v308, %v376
  %v441 = vadd.f32 %v309, %v377
  %v442 = vadd.f32 %v310, %v378
  %v443 = vadd.f32 %v311, %v379
  %v444 = vadd.f32 %v312, %v380
  %v445 = vadd.f32 %v313, %v381
  %v446 = vadd.f32 %v314, %v382
  %v447 = vadd.f32 %v315, %v383
  %v448 = vadd.f32 %v316, %v384
  %v449 = vadd.f32 %v317, %v385
  %v450 = vadd.f32 %v318, %v386
  %v451 = vadd.f32 %v319, %v387
  %v452 = vadd.f32 %v320, %v388
  %v453 = vadd.f32 %v321, %v389
  %v454 = vadd.f32 %v322, %v390
  %v455 = vadd.f32 %v323, %v391
  %v456 = vadd.f32 %v324, %v392
  %v457 = vadd.f32 %v325, %v393
  %v458 = vadd.f32 %v326, %v394
  %v459 = vadd.f32 %v327, %v395
  %v460 = vadd.f32 %v328, %v396
  %v461 = vadd.f32 %v329, %v397
  %v462 = vadd.f32 %v330, %v398
  %v463 = vadd.f32 %v331, %v399
  %v464 = vadd.f32 %v332, %v400
  %v465 = vadd.f32 %v333, %v401
  %v466 = vadd.f32 %v334, %v402
  %v467 = vadd.f32 %v335, %v403
  %v468 = vadd.f32 %v336, %v404
  %v469 = vadd.f32 %v337, %v405
  %v470 = vadd.f32 %v338, %v406
  %v471 = vadd.f32 %v339, %v407
  %v472 = vadd.f32 %v340, %v408
  %v473 = vadd.f32 %v341, %v409
  %v474 = vadd.f32 %v342, %v410
  %v475 = vadd.f32 %v343, %v411
  %v476 = vadd.f32 %v344, %v412
  %v477 = vadd.f32 %v345, %v413
  %v478 = vadd.f32 %v346, %v414
  %v479 = vadd.f32 %v347, %v415
  %v480 = vadd.f32 %v348, %v416
  %v481 = vadd.f32 %v349, %v417
  %v482 = vadd.f32 %v350, %v418
  %v483 = vld [vmem:[%s5] sm:$0x1]
  %v485 = vperm.slane %v483, 0
  %v487 = vadd.f32 %v419, %v485
  %v488 = vadd.f32 %v420, %v485
  %v489 = vadd.f32 %v421, %v485
  %v490 = vadd.f32 %v422, %v485
  %v491 = vadd.f32 %v423, %v485
  %v492 = vadd.f32 %v424, %v485
  %v493 = vadd.f32 %v425, %v485
  %v494 = vadd.f32 %v426, %v485
  %v495 = vadd.f32 %v427, %v485
  %v496 = vadd.f32 %v428, %v485
  %v497 = vadd.f32 %v429, %v485
  %v498 = vadd.f32 %v430, %v485
  %v499 = vadd.f32 %v431, %v485
  %v500 = vadd.f32 %v432, %v485
  %v501 = vadd.f32 %v433, %v485
  %v502 = vadd.f32 %v434, %v485
  %v503 = vadd.f32 %v435, %v485
  %v504 = vadd.f32 %v436, %v485
  %v505 = vadd.f32 %v437, %v485
  %v506 = vadd.f32 %v438, %v485
  %v507 = vadd.f32 %v439, %v485
  %v508 = vadd.f32 %v440, %v485
  %v509 = vadd.f32 %v441, %v485
  %v510 = vadd.f32 %v442, %v485
  %v511 = vadd.f32 %v443, %v485
  %v512 = vadd.f32 %v444, %v485
  %v513 = vadd.f32 %v445, %v485
  %v514 = vadd.f32 %v446, %v485
  %v515 = vadd.f32 %v447, %v485
  %v516 = vadd.f32 %v448, %v485
  %v517 = vadd.f32 %v449, %v485
  %v518 = vadd.f32 %v450, %v485
  %v519 = vadd.f32 %v451, %v485
  %v520 = vadd.f32 %v452, %v485
  %v521 = vadd.f32 %v453, %v485
  %v522 = vadd.f32 %v454, %v485
  %v523 = vadd.f32 %v455, %v485
  %v524 = vadd.f32 %v456, %v485
  %v525 = vadd.f32 %v457, %v485
  %v526 = vadd.f32 %v458, %v485
  %v527 = vadd.f32 %v459, %v485
  %v528 = vadd.f32 %v460, %v485
  %v529 = vadd.f32 %v461, %v485
  %v530 = vadd.f32 %v462, %v485
  %v531 = vadd.f32 %v463, %v485
  %v532 = vadd.f32 %v464, %v485
  %v533 = vadd.f32 %v465, %v485
  %v534 = vadd.f32 %v466, %v485
  %v535 = vadd.f32 %v467, %v485
  %v536 = vadd.f32 %v468, %v485
  %v537 = vadd.f32 %v469, %v485
  %v538 = vadd.f32 %v470, %v485
  %v539 = vadd.f32 %v471, %v485
  %v540 = vadd.f32 %v472, %v485
  %v541 = vadd.f32 %v473, %v485
  %v542 = vadd.f32 %v474, %v485
  %v543 = vadd.f32 %v475, %v485
  %v544 = vadd.f32 %v476, %v485
  %v545 = vadd.f32 %v477, %v485
  %v546 = vadd.f32 %v478, %v485
  %v547 = vadd.f32 %v479, %v485
  %v548 = vadd.f32 %v480, %v485
  %v549 = vadd.f32 %v481, %v485
  %v550 = vadd.f32 %v482, %v485
  %v551 = vmax.f32 %v487, 0.0
  %v552 = vmax.f32 %v488, 0.0
  %v553 = vmax.f32 %v489, 0.0
  %v554 = vmax.f32 %v490, 0.0
  %v555 = vmax.f32 %v491, 0.0
  %v556 = vmax.f32 %v492, 0.0
  %v557 = vmax.f32 %v493, 0.0
  %v558 = vmax.f32 %v494, 0.0
  %v559 = vmax.f32 %v495, 0.0
  %v560 = vmax.f32 %v496, 0.0
  %v561 = vmax.f32 %v497, 0.0
  %v562 = vmax.f32 %v498, 0.0
  %v563 = vmax.f32 %v499, 0.0
  %v564 = vmax.f32 %v500, 0.0
  %v565 = vmax.f32 %v501, 0.0
  %v566 = vmax.f32 %v502, 0.0
  %v567 = vmax.f32 %v503, 0.0
  %v568 = vmax.f32 %v504, 0.0
  %v569 = vmax.f32 %v505, 0.0
  %v570 = vmax.f32 %v506, 0.0
  %v571 = vmax.f32 %v507, 0.0
  %v572 = vmax.f32 %v508, 0.0
  %v573 = vmax.f32 %v509, 0.0
  %v574 = vmax.f32 %v510, 0.0
  %v575 = vmax.f32 %v511, 0.0
  %v576 = vmax.f32 %v512, 0.0
  %v577 = vmax.f32 %v513, 0.0
  %v578 = vmax.f32 %v514, 0.0
  %v579 = vmax.f32 %v515, 0.0
  %v580 = vmax.f32 %v516, 0.0
  %v581 = vmax.f32 %v517, 0.0
  %v582 = vmax.f32 %v518, 0.0
  %v583 = vmax.f32 %v519, 0.0
  %v584 = vmax.f32 %v520, 0.0
  %v585 = vmax.f32 %v521, 0.0
  %v586 = vmax.f32 %v522, 0.0
  %v587 = vmax.f32 %v523, 0.0
  %v588 = vmax.f32 %v524, 0.0
  %v589 = vmax.f32 %v525, 0.0
  %v590 = vmax.f32 %v526, 0.0
  %v591 = vmax.f32 %v527, 0.0
  %v592 = vmax.f32 %v528, 0.0
  %v593 = vmax.f32 %v529, 0.0
  %v594 = vmax.f32 %v530, 0.0
  %v595 = vmax.f32 %v531, 0.0
  %v596 = vmax.f32 %v532, 0.0
  %v597 = vmax.f32 %v533, 0.0
  %v598 = vmax.f32 %v534, 0.0
  %v599 = vmax.f32 %v535, 0.0
  %v600 = vmax.f32 %v536, 0.0
  %v601 = vmax.f32 %v537, 0.0
  %v602 = vmax.f32 %v538, 0.0
  %v603 = vmax.f32 %v539, 0.0
  %v604 = vmax.f32 %v540, 0.0
  %v605 = vmax.f32 %v541, 0.0
  %v606 = vmax.f32 %v542, 0.0
  %v607 = vmax.f32 %v543, 0.0
  %v608 = vmax.f32 %v544, 0.0
  %v609 = vmax.f32 %v545, 0.0
  %v610 = vmax.f32 %v546, 0.0
  %v611 = vmax.f32 %v547, 0.0
  %v612 = vmax.f32 %v548, 0.0
  %v613 = vmax.f32 %v549, 0.0
  %v614 = vmax.f32 %v550, 0.0
  %615 = vst [vmem:[%s6] sm:$0xff] %v551
  %616 = vst [vmem:[%s6 + $0x8] sm:$0xff] %v552
  %617 = vst [vmem:[%s6 + $0x10] sm:$0xff] %v553
  %618 = vst [vmem:[%s6 + $0x18] sm:$0xff] %v554
  %619 = vst [vmem:[%s6 + $0x20] sm:$0xff] %v555
  %620 = vst [vmem:[%s6 + $0x28] sm:$0xff] %v556
  %621 = vst [vmem:[%s6 + $0x30] sm:$0xff] %v557
  %622 = vst [vmem:[%s6 + $0x38] sm:$0xff] %v558
  %623 = vst [vmem:[%s6 + $0x40] sm:$0xff] %v559
  %624 = vst [vmem:[%s6 + $0x48] sm:$0xff] %v560
  %625 = vst [vmem:[%s6 + $0x50] sm:$0xff] %v561
  %626 = vst [vmem:[%s6 + $0x58] sm:$0xff] %v562
  %627 = vst [vmem:[%s6 + $0x60] sm:$0xff] %v563
  %628 = vst [vmem:[%s6 + $0x68] sm:$0xff] %v564
  %629 = vst [vmem:[%s6 + $0x70] sm:$0xff] %v565
  %630 = vst [vmem:[%s6 + $0x78] sm:$0xff] %v566
  %631 = vst [vmem:[%s6 + $0x80] sm:$0xff] %v567
  %632 = vst [vmem:[%s6 + $0x88] sm:$0xff] %v568
  %633 = vst [vmem:[%s6 + $0x90] sm:$0xff] %v569
  %634 = vst [vmem:[%s6 + $0x98] sm:$0xff] %v570
  %635 = vst [vmem:[%s6 + $0xa0] sm:$0xff] %v571
  %636 = vst [vmem:[%s6 + $0xa8] sm:$0xff] %v572
  %637 = vst [vmem:[%s6 + $0xb0] sm:$0xff] %v573
  %638 = vst [vmem:[%s6 + $0xb8] sm:$0xff] %v574
  %639 = vst [vmem:[%s6 + $0xc0] sm:$0xff] %v575
  %640 = vst [vmem:[%s6 + $0xc8] sm:$0xff] %v576
  %641 = vst [vmem:[%s6 + $0xd0] sm:$0xff] %v577
  %642 = vst [vmem:[%s6 + $0xd8] sm:$0xff] %v578
  %643 = vst [vmem:[%s6 + $0xe0] sm:$0xff] %v579
  %644 = vst [vmem:[%s6 + $0xe8] sm:$0xff] %v580
  %645 = vst [vmem:[%s6 + $0xf0] sm:$0xff] %v581
  %646 = vst [vmem:[%s6 + $0xf8] sm:$0xff] %v582
  %647 = vst [vmem:[%s6 + $0x100] sm:$0xff] %v583
  %648 = vst [vmem:[%s6 + $0x108] sm:$0xff] %v584
  %649 = vst [vmem:[%s6 + $0x110] sm:$0xff] %v585
  %650 = vst [vmem:[%s6 + $0x118] sm:$0xff] %v586
  %651 = vst [vmem:[%s6 + $0x120] sm:$0xff] %v587
  %652 = vst [vmem:[%s6 + $0x128] sm:$0xff] %v588
  %653 = vst [vmem:[%s6 + $0x130] sm:$0xff] %v589
  %654 = vst [vmem:[%s6 + $0x138] sm:$0xff] %v590
  %655 = vst [vmem:[%s6 + $0x140] sm:$0xff] %v591
  %656 = vst [vmem:[%s6 + $0x148] sm:$0xff] %v592
  %657 = vst [vmem:[%s6 + $0x150] sm:$0xff] %v593
  %658 = vst [vmem:[%s6 + $0x158] sm:$0xff] %v594
  %659 = vst [vmem:[%s6 + $0x160] sm:$0xff] %v595
  %660 = vst [vmem:[%s6 + $0x168] sm:$0xff] %v596
  %661 = vst [vmem:[%s6 + $0x170] sm:$0xff] %v597
  %662 = vst [vmem:[%s6 + $0x178] sm:$0xff] %v598
  %663 = vst [vmem:[%s6 + $0x180] sm:$0xff] %v599
  %664 = vst [vmem:[%s6 + $0x188] sm:$0xff] %v600
  %665 = vst [vmem:[%s6 + $0x190] sm:$0xff] %v601
  %666 = vst [vmem:[%s6 + $0x198] sm:$0xff] %v602
  %667 = vst [vmem:[%s6 + $0x1a0] sm:$0xff] %v603
  %668 = vst [vmem:[%s6 + $0x1a8] sm:$0xff] %v604
  %669 = vst [vmem:[%s6 + $0x1b0] sm:$0xff] %v605
  %670 = vst [vmem:[%s6 + $0x1b8] sm:$0xff] %v606
  %671 = vst [vmem:[%s6 + $0x1c0] sm:$0xff] %v607
  %672 = vst [vmem:[%s6 + $0x1c8] sm:$0xff] %v608
  %673 = vst [vmem:[%s6 + $0x1d0] sm:$0xff] %v609
  %674 = vst [vmem:[%s6 + $0x1d8] sm:$0xff] %v610
  %675 = vst [vmem:[%s6 + $0x1e0] sm:$0xff] %v611
  %676 = vst [vmem:[%s6 + $0x1e8] sm:$0xff] %v612
  %677 = vst [vmem:[%s6 + $0x1f0] sm:$0xff] %v613
  %678 = vst [vmem:[%s6 + $0x1f8] sm:$0xff] %v614
  // Predicated region
  $region26: #{_lambda_.5} parent=0 // pred_check
    _
  $region27: #{_lambda_.5} parent=0 // pred_check_branch
    %680 = sbr.rel (0) target = $region29
  $region28: #{_lambda_.5} parent=0 // pred_region
    _
  $region29: #{_lambda_.5} parent=0 // pred_fallthru
    _
  // Predicated region
  $region30: #{_lambda_.5} parent=0 // pred_check
    _
  $region31: #{_lambda_.5} parent=0 // pred_check_branch
    %682 = sbr.rel (0) target = $region33
  $region32: #{_lambda_.5} parent=0 // pred_region
    _
  $region33: #{_lambda_.5} parent=0 // pred_fallthru
    _

// kernel: _lambda_.4
$region0: #{_lambda_.4}
  #allocation0 [shape = 'u32[]', space=smem, size = 0x4, offset = 0x4, fixed_abs, tag = 'smem constant byte address 0x4 - core index']
  #allocation1 [shape = 'u32[72,128]{1,0:T(1,128)}', space=vmem, size = 0x9000, scoped, tag = 'internal scratch']
  #allocation2 [shape = 'bf16[18,18,128]{2,1,0:T(8,128)(2,1)}', space=vmem, size = 0x1b000, scoped, tag = 'scratch operand']
  %s0 = inlined_call_operand.vmem [shape: bf16[2,16,16,128], index: 0, kind: input, shape index: {}, may-alias: {0,1,2}]
  %s1 = inlined_call_operand.vmem [shape: bf16[2,16,16,128], index: 1, kind: input, shape index: {}, may-alias: {0,1,2}]
  %s2 = inlined_call_operand.vmem [shape: bf16[2,16,16,128], index: 2, kind: input, shape index: {}, may-alias: {0,1,2}]
  %s3 = inlined_call_operand.vmem [shape: f32[1,128], index: 3, kind: input, shape index: {}]
  %s4 = inlined_call_operand.vmem [shape: f32[1,128], index: 4, kind: input, shape index: {}]
  %s5 = inlined_call_operand.vmem [shape: bf16[3,384,128], index: 5, kind: input, shape index: {}]
  %s6 = inlined_call_operand.vmem [shape: f32[2,16,16,128], index: 6, kind: output, shape index: {0}]
  %s7 = inlined_call_operand.vmem [shape: f32[2,1,2,128], index: 7, kind: output, shape index: {1}]
  %8 = xla_tuple %s6, %s7
  %s9 = sld [smem:[#allocation0]]
  $region69: #{_lambda_.4} parent=0
    _
  %s11 = ssub.s32 1, %s9
  %s12 = scalar_select 0, %s11, %s9
  loop: start=0, step=1, limit=4
  $region2: #{_lambda_.4} parent=0 // loop_pre_header
    _
  $region3: #{_lambda_.4} parent=0 // loop_header
    %s14 = sphi 0, %s18
    %p15 = scmp.ge.s32.totalorder %s14, 4
    %s21 = sphi 0, %s33
    %s22 = sphi 0, %s29
    %s23 = sphi 0, %s21
    %s24 = sphi 0, %s22
    %s25 = sphi 0, %s23
    %s26 = sphi 0, %s24
    %s38 = sphi 0, %s40
    %s41 = sphi 0, %s38
    %s42 = sphi 0, %s41
    %s58 = sphi 0, %s42
    %s74 = sphi 0, %s76
    %s77 = sphi 0, %s74
    %s78 = sphi 0, %s77
    %s94 = sphi 0, %s78
    %s110 = sphi 0, %s112
    %s113 = sphi 0, %s110
    %s114 = sphi 0, %s113
    %s130 = sphi 0, %s114
    %s134 = sphi 0, %s134
    %s136 = sphi 0, %s134
    %s137 = sphi 0, %s136
    %s151 = sphi 0, %s137
    %s155 = sphi 0, %s155
    %s157 = sphi 0, %s155
    %s158 = sphi 0, %s157
    %s172 = sphi 0, %s158
    %s176 = sphi 0, %s176
    %s178 = sphi 0, %s176
    %s179 = sphi 0, %s178
    %s193 = sphi 0, %s179
    %s201 = sphi 0, %s203
    %s204 = sphi 0, %s201
    %s205 = sphi 0, %s204
    %s221 = sphi 0, %s205
    %s229 = sphi 0, %s231
    %s232 = sphi 0, %s229
    %s233 = sphi 0, %s232
    %s249 = sphi 0, %s233
  $region4: #{_lambda_.4} parent=0 // loop_header_branch
    %17 = sbr.rel (%p15) target = $region8
  $region5: #{_lambda_.4} parent=0 // loop_body
    %s19 = ssub.s32 %s14, 1
    %s20 = ssub.s32 %s14, 2
    %s27 = sadd.s32 1, %s22
    %p28 = scmp.ge.s32.totalorder %s27, 1
    %s29 = scalar_select %p28, 0, %s27
    %s30 = sadd.s32 1, %s21
    %s31 = scalar_select %p28, %s30, %s21
    %p32 = scmp.ge.s32.totalorder %s31, 2
    %s33 = scalar_select %p32, 0, %s31
    %s34 = ssub.s32 %s21, %s33
    %s35 = ssub.s32 %s22, %s29
    %s36 = sor.u32 %s34, %s35
    %p37 = scmp.eq.s32.totalorder %s36, 0
    %s39 = sadd.s32 %s38, 1
    %s40 = scalar_select %p37, %s38, %s39
    %p43 = pneg %p37
    %p44 = scmp.eq.s32.totalorder %s14, 1
    %p45 = por %p43, %p44
    %p46 = scmp.ne.s32.totalorder %s38, %s41
    %p47 = scmp.eq.s32.totalorder %s14, 0
    %p48 = por %p46, %p47
    %p49 = scmp.ne.s32.totalorder %s38, %s41
    %p50 = scmp.eq.s32.totalorder %s19, 1
    %p51 = por %p49, %p50
    %p52 = scmp.ne.s32.totalorder %s41, %s42
    %p53 = scmp.eq.s32.totalorder %s19, 0
    %p54 = por %p52, %p53
    %p55 = scmp.ne.s32.totalorder %s41, %s42
    %p56 = scmp.eq.s32.totalorder %s20, 1
    %p57 = por %p55, %p56
    %p59 = scmp.ne.s32.totalorder %s42, %s58
    %p60 = scmp.eq.s32.totalorder %s20, 0
    %p61 = por %p59, %p60
    %s62 = smul.u32 %s22, 16
    %s63 = ssub.s32 %s62, 1
    %p64 = scmp.gt.s32.totalorder %s63, 0
    %s65 = scalar_select %p64, %s63, 0
    %s66 = smul.u32 %s29, 16
    %s67 = ssub.s32 %s66, 1
    %p68 = scmp.gt.s32.totalorder %s67, 0
    %s69 = scalar_select %p68, %s67, 0
    %s70 = ssub.s32 %s21, %s33
    %s71 = ssub.s32 %s65, %s69
    %s72 = sor.u32 %s70, %s71
    %p73 = scmp.eq.s32.totalorder %s72, 0
    %s75 = sadd.s32 %s74, 1
    %s76 = scalar_select %p73, %s74, %s75
    %p79 = pneg %p73
    %p80 = scmp.eq.s32.totalorder %s14, 1
    %p81 = por %p79, %p80
    %p82 = scmp.ne.s32.totalorder %s74, %s77
    %p83 = scmp.eq.s32.totalorder %s14, 0
    %p84 = por %p82, %p83
    %p85 = scmp.ne.s32.totalorder %s74, %s77
    %p86 = scmp.eq.s32.totalorder %s19, 1
    %p87 = por %p85, %p86
    %p88 = scmp.ne.s32.totalorder %s77, %s78
    %p89 = scmp.eq.s32.totalorder %s19, 0
    %p90 = por %p88, %p89
    %p91 = scmp.ne.s32.totalorder %s77, %s78
    %p92 = scmp.eq.s32.totalorder %s20, 1
    %p93 = por %p91, %p92
    %p95 = scmp.ne.s32.totalorder %s78, %s94
    %p96 = scmp.eq.s32.totalorder %s20, 0
    %p97 = por %p95, %p96
    %s98 = sadd.s32 %s22, 1
    %s99 = smul.u32 %s98, 16
    %p100 = scmp.lt.s32.totalorder %s99, 15
    %s101 = scalar_select %p100, %s99, 15
    %s102 = sadd.s32 %s29, 1
    %s103 = smul.u32 %s102, 16
    %p104 = scmp.lt.s32.totalorder %s103, 15
    %s105 = scalar_select %p104, %s103, 15
    %s106 = ssub.s32 %s21, %s33
    %s107 = ssub.s32 %s101, %s105
    %s108 = sor.u32 %s106, %s107
    %p109 = scmp.eq.s32.totalorder %s108, 0
    %s111 = sadd.s32 %s110, 1
    %s112 = scalar_select %p109, %s110, %s111
    %p115 = pneg %p109
    %p116 = scmp.eq.s32.totalorder %s14, 1
    %p117 = por %p115, %p116
    %p118 = scmp.ne.s32.totalorder %s110, %s113
    %p119 = scmp.eq.s32.totalorder %s14, 0
    %p120 = por %p118, %p119
    %p121 = scmp.ne.s32.totalorder %s110, %s113
    %p122 = scmp.eq.s32.totalorder %s19, 1
    %p123 = por %p121, %p122
    %p124 = scmp.ne.s32.totalorder %s113, %s114
    %p125 = scmp.eq.s32.totalorder %s19, 0
    %p126 = por %p124, %p125
    %p127 = scmp.ne.s32.totalorder %s113, %s114
    %p128 = scmp.eq.s32.totalorder %s20, 1
    %p129 = por %p127, %p128
    %p131 = scmp.ne.s32.totalorder %s114, %s130
    %p132 = scmp.eq.s32.totalorder %s20, 0
    %p133 = por %p131, %p132
    %s135 = sadd.s32 %s134, 1
    %p138 = scmp.eq.s32.totalorder %s14, 1
    %p139 = scmp.ne.s32.totalorder %s134, %s136
    %p140 = scmp.eq.s32.totalorder %s14, 0
    %p141 = por %p139, %p140
    %p142 = scmp.ne.s32.totalorder %s134, %s136
    %p143 = scmp.eq.s32.totalorder %s19, 1
    %p144 = por %p142, %p143
    %p145 = scmp.ne.s32.totalorder %s136, %s137
    %p146 = scmp.eq.s32.totalorder %s19, 0
    %p147 = por %p145, %p146
    %p148 = scmp.ne.s32.totalorder %s136, %s137
    %p149 = scmp.eq.s32.totalorder %s20, 1
    %p150 = por %p148, %p149
    %p152 = scmp.ne.s32.totalorder %s137, %s151
    %p153 = scmp.eq.s32.totalorder %s20, 0
    %p154 = por %p152, %p153
    %s156 = sadd.s32 %s155, 1
    %p159 = scmp.eq.s32.totalorder %s14, 1
    %p160 = scmp.ne.s32.totalorder %s155, %s157
    %p161 = scmp.eq.s32.totalorder %s14, 0
    %p162 = por %p160, %p161
    %p163 = scmp.ne.s32.totalorder %s155, %s157
    %p164 = scmp.eq.s32.totalorder %s19, 1
    %p165 = por %p163, %p164
    %p166 = scmp.ne.s32.totalorder %s157, %s158
    %p167 = scmp.eq.s32.totalorder %s19, 0
    %p168 = por %p166, %p167
    %p169 = scmp.ne.s32.totalorder %s157, %s158
    %p170 = scmp.eq.s32.totalorder %s20, 1
    %p171 = por %p169, %p170
    %p173 = scmp.ne.s32.totalorder %s158, %s172
    %p174 = scmp.eq.s32.totalorder %s20, 0
    %p175 = por %p173, %p174
    %s177 = sadd.s32 %s176, 1
    %p180 = scmp.eq.s32.totalorder %s14, 1
    %p181 = scmp.ne.s32.totalorder %s176, %s178
    %p182 = scmp.eq.s32.totalorder %s14, 0
    %p183 = por %p181, %p182
    %p184 = scmp.ne.s32.totalorder %s176, %s178
    %p185 = scmp.eq.s32.totalorder %s19, 1
    %p186 = por %p184, %p185
    %p187 = scmp.ne.s32.totalorder %s178, %s179
    %p188 = scmp.eq.s32.totalorder %s19, 0
    %p189 = por %p187, %p188
    %p190 = scmp.ne.s32.totalorder %s178, %s179
    %p191 = scmp.eq.s32.totalorder %s20, 1
    %p192 = por %p190, %p191
    %p194 = scmp.ne.s32.totalorder %s179, %s193
    %p195 = scmp.eq.s32.totalorder %s20, 0
    %p196 = por %p194, %p195
    %s197 = ssub.s32 %s21, %s33
    %s198 = ssub.s32 %s22, %s29
    %s199 = sor.u32 %s197, %s198
    %p200 = scmp.eq.s32.totalorder %s199, 0
    %s202 = sadd.s32 %s201, 1
    %s203 = scalar_select %p200, %s201, %s202
    %p206 = pneg %p200
    %p207 = scmp.eq.s32.totalorder %s14, 1
    %p208 = por %p206, %p207
    %p209 = scmp.ne.s32.totalorder %s201, %s204
    %p210 = scmp.eq.s32.totalorder %s14, 0
    %p211 = por %p209, %p210
    %p212 = scmp.ne.s32.totalorder %s201, %s204
    %p213 = scmp.eq.s32.totalorder %s19, 1
    %p214 = por %p212, %p213
    %p215 = scmp.ne.s32.totalorder %s204, %s205
    %p216 = scmp.eq.s32.totalorder %s19, 0
    %p217 = por %p215, %p216
    %p218 = scmp.ne.s32.totalorder %s204, %s205
    %p219 = scmp.eq.s32.totalorder %s20, 1
    %p220 = por %p218, %p219
    %p222 = scmp.ne.s32.totalorder %s205, %s221
    %p223 = scmp.eq.s32.totalorder %s20, 0
    %p224 = por %p222, %p223
    %s225 = ssub.s32 %s21, %s33
    %s226 = ssub.s32 %s22, %s29
    %s227 = sor.u32 %s225, %s226
    %p228 = scmp.eq.s32.totalorder %s227, 0
    %s230 = sadd.s32 %s229, 1
    %s231 = scalar_select %p228, %s229, %s230
    %p234 = pneg %p228
    %p235 = scmp.eq.s32.totalorder %s14, 1
    %p236 = por %p234, %p235
    %p237 = scmp.ne.s32.totalorder %s229, %s232
    %p238 = scmp.eq.s32.totalorder %s14, 0
    %p239 = por %p237, %p238
    %p240 = scmp.ne.s32.totalorder %s229, %s232
    %p241 = scmp.eq.s32.totalorder %s19, 1
    %p242 = por %p240, %p241
    %p243 = scmp.ne.s32.totalorder %s232, %s233
    %p244 = scmp.eq.s32.totalorder %s19, 0
    %p245 = por %p243, %p244
    %p246 = scmp.ne.s32.totalorder %s232, %s233
    %p247 = scmp.eq.s32.totalorder %s20, 1
    %p248 = por %p246, %p247
    %p250 = scmp.ne.s32.totalorder %s233, %s249
    %p251 = scmp.eq.s32.totalorder %s20, 0
    %p252 = por %p250, %p251
    %p253 = scmp.le.s32.totalorder 1, %s14
    %p254 = scmp.lt.s32.totalorder %s14, 3
    %p255 = pnand %p253, %p254
    %p256 = pneg %p255
    // Predicated region
    $region9: #{_lambda_.4} parent=5 // pred_check
      _
    $region10: #{_lambda_.4} parent=5 // pred_check_branch
      %258 = sbr.rel (%p255) target = $region12
    $region11: #{_lambda_.4} parent=5 // pred_region
      %s259 = ssub.s32 %s14, 1
      // Predicated region
      $region13: #{_lambda_.4} parent=11 // pred_check
        %p260 = pneg %p147
      $region14: #{_lambda_.4} parent=11 // pred_check_branch
        %262 = sbr.rel (%p260) target = $region16
      $region15: #{_lambda_.4} parent=11 // pred_region
        _
      $region16: #{_lambda_.4} parent=11 // pred_fallthru
        _
      // Predicated region
      $region17: #{_lambda_.4} parent=11 // pred_check
        %p263 = pneg %p168
      $region18: #{_lambda_.4} parent=11 // pred_check_branch
        %265 = sbr.rel (%p263) target = $region20
      $region19: #{_lambda_.4} parent=11 // pred_region
        _
      $region20: #{_lambda_.4} parent=11 // pred_fallthru
        _
      // Predicated region
      $region21: #{_lambda_.4} parent=11 // pred_check
        %p266 = pneg %p189
      $region22: #{_lambda_.4} parent=11 // pred_check_branch
        %268 = sbr.rel (%p266) target = $region24
      $region23: #{_lambda_.4} parent=11 // pred_region
        _
      $region24: #{_lambda_.4} parent=11 // pred_fallthru
        _
    $region12: #{_lambda_.4} parent=5 // pred_fallthru
      _
    %p269 = scmp.lt.s32.totalorder %s14, 2
    // Predicated region
    $region25: #{_lambda_.4} parent=5 // pred_check
      %p270 = pneg %p269
    $region26: #{_lambda_.4} parent=5 // pred_check_branch
      %272 = sbr.rel (%p270) target = $region28
    $region27: #{_lambda_.4} parent=5 // pred_region
      // Predicated region
      $region29: #{_lambda_.4} parent=27 // pred_check
        %p273 = pneg %p48
      $region30: #{_lambda_.4} parent=27 // pred_check_branch
        %275 = sbr.rel (%p273) target = $region32
      $region31: #{_lambda_.4} parent=27 // pred_region
        %s276 = smul.u32 16, %s22
        %p277 = scmp.lt.s32.totalorder %s21, 1
        %s278 = scalar_select %p277, %s21, 1
        %p279 = scmp.lt.s32.totalorder %s276, 15
        %s280 = scalar_select %p279, %s276, 15
        %s281 = smul.addr %s280, 2
        %s282 = smul.addr %s278, 32
        %s283 = sadd.s32 %s281, %s282
        %s284 = smul.addr %s283, 4
        %s285 = scalar_lea.vmem %s0, %s284
        %s286 = smul.u32 16, %s22
      $region32: #{_lambda_.4} parent=27 // pred_fallthru
        _
      // Predicated region
      $region33: #{_lambda_.4} parent=27 // pred_check
        %p287 = pneg %p84
      $region34: #{_lambda_.4} parent=27 // pred_check_branch
        %289 = sbr.rel (%p287) target = $region36
      $region35: #{_lambda_.4} parent=27 // pred_region
        %s290 = smul.u32 %s22, 16
        %s291 = ssub.s32 %s290, 1
        %p292 = scmp.gt.s32.totalorder %s291, 0
        %s293 = scalar_select %p292, %s291, 0
        %p294 = scmp.lt.s32.totalorder %s21, 1
        %s295 = scalar_select %p294, %s21, 1
        %p296 = scmp.lt.s32.totalorder %s293, 15
        %s297 = scalar_select %p296, %s293, 15
        %s298 = smul.addr %s297, 2
        %s299 = smul.addr %s295, 32
        %s300 = sadd.s32 %s298, %s299
        %s301 = smul.addr %s300, 4
        %s302 = scalar_lea.vmem %s1, %s301
        %s303 = smul.u32 %s22, 16
        %s304 = ssub.s32 %s303, 1
        %p305 = scmp.gt.s32.totalorder %s304, 0
        %s306 = scalar_select %p305, %s304, 0
      $region36: #{_lambda_.4} parent=27 // pred_fallthru
        _
      // Predicated region
      $region37: #{_lambda_.4} parent=27 // pred_check
        %p307 = pneg %p120
      $region38: #{_lambda_.4} parent=27 // pred_check_branch
        %309 = sbr.rel (%p307) target = $region40
      $region39: #{_lambda_.4} parent=27 // pred_region
        %s310 = sadd.s32 %s22, 1
        %s311 = smul.u32 %s310, 16
        %p312 = scmp.lt.s32.totalorder %s311, 15
        %s313 = scalar_select %p312, %s311, 15
        %p314 = scmp.lt.s32.totalorder %s21, 1
        %s315 = scalar_select %p314, %s21, 1
        %p316 = scmp.lt.s32.totalorder %s313, 15
        %s317 = scalar_select %p316, %s313, 15
        %s318 = smul.addr %s317, 2
        %s319 = smul.addr %s315, 32
        %s320 = sadd.s32 %s318, %s319
        %s321 = smul.addr %s320, 4
        %s322 = scalar_lea.vmem %s2, %s321
        %s323 = sadd.s32 %s22, 1
        %s324 = smul.u32 %s323, 16
        %p325 = scmp.lt.s32.totalorder %s324, 15
        %s326 = scalar_select %p325, %s324, 15
      $region40: #{_lambda_.4} parent=27 // pred_fallthru
        _
    $region28: #{_lambda_.4} parent=5 // pred_fallthru
      _
    %p327 = scmp.le.s32.totalorder 1, %s14
    %p328 = scmp.lt.s32.totalorder %s14, 3
    %p329 = pnand %p327, %p328
    %p330 = pneg %p329
    // Predicated region
    $region41: #{_lambda_.4} parent=5 // pred_check
      _
    $region42: #{_lambda_.4} parent=5 // pred_check_branch
      %332 = sbr.rel (%p329) target = $region44
    $region43: #{_lambda_.4} parent=5 // pred_region
      %s333 = ssub.s32 %s14, 1
      %s334 = smul.u32 16, %s24
      %p335 = scmp.lt.s32.totalorder %s23, 1
      %s336 = scalar_select %p335, %s23, 1
      %p337 = scmp.lt.s32.totalorder %s334, 15
      %s338 = scalar_select %p337, %s334, 15
      %s339 = smul.addr %s338, 2
      %s340 = smul.addr %s336, 32
      %s341 = sadd.s32 %s339, %s340
      %s342 = smul.addr %s341, 4
      %s343 = scalar_lea.vmem %s0, %s342
      %p344 = pneg %p54
      %p345 = pneg %p51
      %s346 = smul.u32 %s24, 16
      %s347 = ssub.s32 %s346, 1
      %p348 = scmp.gt.s32.totalorder %s347, 0
      %s349 = scalar_select %p348, %s347, 0
      %p350 = scmp.lt.s32.totalorder %s23, 1
      %s351 = scalar_select %p350, %s23, 1
      %p352 = scmp.lt.s32.totalorder %s349, 15
      %s353 = scalar_select %p352, %s349, 15
      %s354 = smul.addr %s353, 2
      %s355 = smul.addr %s351, 32
      %s356 = sadd.s32 %s354, %s355
      %s357 = smul.addr %s356, 4
      %s358 = scalar_lea.vmem %s1, %s357
      %p359 = pneg %p90
      %p360 = pneg %p87
      %s361 = sadd.s32 %s24, 1
      %s362 = smul.u32 %s361, 16
      %p363 = scmp.lt.s32.totalorder %s362, 15
      %s364 = scalar_select %p363, %s362, 15
      %p365 = scmp.lt.s32.totalorder %s23, 1
      %s366 = scalar_select %p365, %s23, 1
      %p367 = scmp.lt.s32.totalorder %s364, 15
      %s368 = scalar_select %p367, %s364, 15
      %s369 = smul.addr %s368, 2
      %s370 = smul.addr %s366, 32
      %s371 = sadd.s32 %s369, %s370
      %s372 = smul.addr %s371, 4
      %s373 = scalar_lea.vmem %s2, %s372
      %p374 = pneg %p126
      %p375 = pneg %p123
      %p376 = pneg %p147
      %p377 = pneg %p144
      %p378 = pneg %p168
      %p379 = pneg %p165
      %p380 = pneg %p189
      %p381 = pneg %p186
      %p382 = pneg %p217
      %p383 = pneg %p214
      %s384 = smul.u32 16, %s24
      %p385 = scmp.lt.s32.totalorder %s23, 1
      %s386 = scalar_select %p385, %s23, 1
      %p387 = scmp.lt.s32.totalorder %s384, 15
      %s388 = scalar_select %p387, %s384, 15
      %s389 = smul.addr %s388, 2
      %s390 = smul.addr %s386, 32
      %s391 = sadd.s32 %s389, %s390
      %s392 = smul.addr %s391, 8
      %s393 = scalar_lea.vmem %s6, %s392
      %p394 = pneg %p245
      %p395 = pneg %p242
      %p396 = scmp.lt.s32.totalorder %s23, 1
      %s397 = scalar_select %p396, %s23, 1
      %p398 = scmp.lt.s32.totalorder %s24, 0
      %s399 = scalar_select %p398, %s24, 0
      %s400 = sadd.s32 %s399, %s397
      %s401 = smul.addr %s400, 2
      %s402 = scalar_lea.vmem %s7, %s401
      %s403 = smul.u32 16, %s24
      %p404 = scmp.lt.s32.totalorder %s23, 1
      %s405 = scalar_select %p404, %s23, 1
      %p406 = scmp.lt.s32.totalorder %s403, 15
      %s407 = scalar_select %p406, %s403, 15
      %s408 = smul.addr %s407, 2
      %s409 = smul.addr %s405, 32
      %s410 = sadd.s32 %s408, %s409
      %s411 = smul.addr %s410, 4
      %s412 = scalar_lea.vmem %s0, %s411
      %s413 = smul.u32 16, %s24
      %s414 = smul.u32 %s24, 16
      %s415 = ssub.s32 %s414, 1
      %p416 = scmp.gt.s32.totalorder %s415, 0
      %s417 = scalar_select %p416, %s415, 0
      %p418 = scmp.lt.s32.totalorder %s23, 1
      %s419 = scalar_select %p418, %s23, 1
      %p420 = scmp.lt.s32.totalorder %s417, 15
      %s421 = scalar_select %p420, %s417, 15
      %s422 = smul.addr %s421, 2
      %s423 = smul.addr %s419, 32
      %s424 = sadd.s32 %s422, %s423
      %s425 = smul.addr %s424, 4
      %s426 = scalar_lea.vmem %s1, %s425
      %s427 = smul.u32 %s24, 16
      %s428 = ssub.s32 %s427, 1
      %p429 = scmp.gt.s32.totalorder %s428, 0
      %s430 = scalar_select %p429, %s428, 0
      %s431 = sadd.s32 %s24, 1
      %s432 = smul.u32 %s431, 16
      %p433 = scmp.lt.s32.totalorder %s432, 15
      %s434 = scalar_select %p433, %s432, 15
      %p435 = scmp.lt.s32.totalorder %s23, 1
      %s436 = scalar_select %p435, %s23, 1
      %p437 = scmp.lt.s32.totalorder %s434, 15
      %s438 = scalar_select %p437, %s434, 15
      %s439 = smul.addr %s438, 2
      %s440 = smul.addr %s436, 32
      %s441 = sadd.s32 %s439, %s440
      %s442 = smul.addr %s441, 4
      %s443 = scalar_lea.vmem %s2, %s442
      %s444 = sadd.s32 %s24, 1
      %s445 = smul.u32 %s444, 16
      %p446 = scmp.lt.s32.totalorder %s445, 15
      %s447 = scalar_select %p446, %s445, 15
      %s448 = smul.u32 16, %s24
      %p449 = scmp.lt.s32.totalorder %s23, 1
      %s450 = scalar_select %p449, %s23, 1
      %p451 = scmp.lt.s32.totalorder %s448, 15
      %s452 = scalar_select %p451, %s448, 15
      %s453 = smul.addr %s452, 2
      %s454 = smul.addr %s450, 32
      %s455 = sadd.s32 %s453, %s454
      %s456 = smul.addr %s455, 8
      %s457 = scalar_lea.vmem %s6, %s456
      %s458 = smul.u32 16, %s24
      %p459 = scmp.lt.s32.totalorder %s23, 1
      %s460 = scalar_select %p459, %s23, 1
      %p461 = scmp.lt.s32.totalorder %s24, 0
      %s462 = scalar_select %p461, %s24, 0
      %s463 = sadd.s32 %s462, %s460
      %s464 = smul.addr %s463, 2
      %s465 = scalar_lea.vmem %s7, %s464
      %v467 = vld [vmem:[%s3] sm:$0x1]
      %v468 = vld [vmem:[%s4] sm:$0x1]
      %v469 = vld [vmem:[%s426] sm:$0xf]
      %v470 = vld [vmem:[%s426 + $0x4] sm:$0xf]
      %v471 = vunpack.c.l.bf16 %v469
      %v472 = vunpack.c.l.bf16 %v470
      %v474 = vperm.slane %v467, 0
      %v476 = vmul.f32 %v471, %v474
      %v477 = vmul.f32 %v472, %v474
      %v479 = vperm.slane %v468, 0
      %v481 = vadd.f32 %v476, %v479
      %v482 = vadd.f32 %v477, %v479
      %v483 = vmax.f32 %v481, 0.0
      %v484 = vmax.f32 %v482, 0.0
      %v485 = vpack.c.bf16 %v483, %v483
      %v486 = vpack.c.bf16 %v484, %v484
      %v487 = vld [vmem:[%s412] sm:$0xf]
      %v488 = vld [vmem:[%s412 + $0x4] sm:$0xf]
      %v489 = vld [vmem:[%s412 + $0x8] sm:$0xf]
      %v490 = vld [vmem:[%s412 + $0xc] sm:$0xf]
      %v491 = vld [vmem:[%s412 + $0x10] sm:$0xf]
      %v492 = vld [vmem:[%s412 + $0x14] sm:$0xf]
      %v493 = vld [vmem:[%s412 + $0x18] sm:$0xf]
      %v494 = vld [vmem:[%s412 + $0x1c] sm:$0xf]
      %v495 = vld [vmem:[%s412 + $0x20] sm:$0xf]
      %v496 = vld [vmem:[%s412 + $0x24] sm:$0xf]
      %v497 = vld [vmem:[%s412 + $0x28] sm:$0xf]
      %v498 = vld [vmem:[%s412 + $0x2c] sm:$0xf]
      %v499 = vld [vmem:[%s412 + $0x30] sm:$0xf]
      %v500 = vld [vmem:[%s412 + $0x34] sm:$0xf]
      %v501 = vld [vmem:[%s412 + $0x38] sm:$0xf]
      %v502 = vld [vmem:[%s412 + $0x3c] sm:$0xf]
      %v503 = vld [vmem:[%s412 + $0x40] sm:$0xf]
      %v504 = vld [vmem:[%s412 + $0x44] sm:$0xf]
      %v505 = vld [vmem:[%s412 + $0x48] sm:$0xf]
      %v506 = vld [vmem:[%s412 + $0x4c] sm:$0xf]
      %v507 = vld [vmem:[%s412 + $0x50] sm:$0xf]
      %v508 = vld [vmem:[%s412 + $0x54] sm:$0xf]
      %v509 = vld [vmem:[%s412 + $0x58] sm:$0xf]
      %v510 = vld [vmem:[%s412 + $0x5c] sm:$0xf]
      %v511 = vld [vmem:[%s412 + $0x60] sm:$0xf]
      %v512 = vld [vmem:[%s412 + $0x64] sm:$0xf]
      %v513 = vld [vmem:[%s412 + $0x68] sm:$0xf]
      %v514 = vld [vmem:[%s412 + $0x6c] sm:$0xf]
      %v515 = vld [vmem:[%s412 + $0x70] sm:$0xf]
      %v516 = vld [vmem:[%s412 + $0x74] sm:$0xf]
      %v517 = vld [vmem:[%s412 + $0x78] sm:$0xf]
      %v518 = vld [vmem:[%s412 + $0x7c] sm:$0xf]
      %v519 = vunpack.c.l.bf16 %v487
      %v520 = vunpack.c.l.bf16 %v488
      %v521 = vunpack.c.l.bf16 %v489
      %v522 = vunpack.c.l.bf16 %v490
      %v523 = vunpack.c.l.bf16 %v491
      %v524 = vunpack.c.l.bf16 %v492
      %v525 = vunpack.c.l.bf16 %v493
      %v526 = vunpack.c.l.bf16 %v494
      %v527 = vunpack.c.l.bf16 %v495
      %v528 = vunpack.c.l.bf16 %v496
      %v529 = vunpack.c.l.bf16 %v497
      %v530 = vunpack.c.l.bf16 %v498
      %v531 = vunpack.c.l.bf16 %v499
      %v532 = vunpack.c.l.bf16 %v500
      %v533 = vunpack.c.l.bf16 %v501
      %v534 = vunpack.c.l.bf16 %v502
      %v535 = vunpack.c.l.bf16 %v503
      %v536 = vunpack.c.l.bf16 %v504
      %v537 = vunpack.c.l.bf16 %v505
      %v538 = vunpack.c.l.bf16 %v506
      %v539 = vunpack.c.l.bf16 %v507
      %v540 = vunpack.c.l.bf16 %v508
      %v541 = vunpack.c.l.bf16 %v509
      %v542 = vunpack.c.l.bf16 %v510
      %v543 = vunpack.c.l.bf16 %v511
      %v544 = vunpack.c.l.bf16 %v512
      %v545 = vunpack.c.l.bf16 %v513
      %v546 = vunpack.c.l.bf16 %v514
      %v547 = vunpack.c.l.bf16 %v515
      %v548 = vunpack.c.l.bf16 %v516
      %v549 = vunpack.c.l.bf16 %v517
      %v550 = vunpack.c.l.bf16 %v518
      %v551 = vmul.f32 %v519, %v474
      %v552 = vmul.f32 %v520, %v474
      %v553 = vmul.f32 %v521, %v474
      %v554 = vmul.f32 %v522, %v474
      %v555 = vmul.f32 %v523, %v474
      %v556 = vmul.f32 %v524, %v474
      %v557 = vmul.f32 %v525, %v474
      %v558 = vmul.f32 %v526, %v474
      %v559 = vmul.f32 %v527, %v474
      %v560 = vmul.f32 %v528, %v474
      %v561 = vmul.f32 %v529, %v474
      %v562 = vmul.f32 %v530, %v474
      %v563 = vmul.f32 %v531, %v474
      %v564 = vmul.f32 %v532, %v474
      %v565 = vmul.f32 %v533, %v474
      %v566 = vmul.f32 %v534, %v474
      %v567 = vmul.f32 %v535, %v474
      %v568 = vmul.f32 %v536, %v474
      %v569 = vmul.f32 %v537, %v474
      %v570 = vmul.f32 %v538, %v474
      %v571 = vmul.f32 %v539, %v474
      %v572 = vmul.f32 %v540, %v474
      %v573 = vmul.f32 %v541, %v474
      %v574 = vmul.f32 %v542, %v474
      %v575 = vmul.f32 %v543, %v474
      %v576 = vmul.f32 %v544, %v474
      %v577 = vmul.f32 %v545, %v474
      %v578 = vmul.f32 %v546, %v474
      %v579 = vmul.f32 %v547, %v474
      %v580 = vmul.f32 %v548, %v474
      %v581 = vmul.f32 %v549, %v474
      %v582 = vmul.f32 %v550, %v474
      %v583 = vadd.f32 %v551, %v479
      %v584 = vadd.f32 %v552, %v479
      %v585 = vadd.f32 %v553, %v479
      %v586 = vadd.f32 %v554, %v479
      %v587 = vadd.f32 %v555, %v479
      %v588 = vadd.f32 %v556, %v479
      %v589 = vadd.f32 %v557, %v479
      %v590 = vadd.f32 %v558, %v479
      %v591 = vadd.f32 %v559, %v479
      %v592 = vadd.f32 %v560, %v479
      %v593 = vadd.f32 %v561, %v479
      %v594 = vadd.f32 %v562, %v479
      %v595 = vadd.f32 %v563, %v479
      %v596 = vadd.f32 %v564, %v479
      %v597 = vadd.f32 %v565, %v479
      %v598 = vadd.f32 %v566, %v479
      %v599 = vadd.f32 %v567, %v479
      %v600 = vadd.f32 %v568, %v479
      %v601 = vadd.f32 %v569, %v479
      %v602 = vadd.f32 %v570, %v479
      %v603 = vadd.f32 %v571, %v479
      %v604 = vadd.f32 %v572, %v479
      %v605 = vadd.f32 %v573, %v479
      %v606 = vadd.f32 %v574, %v479
      %v607 = vadd.f32 %v575, %v479
      %v608 = vadd.f32 %v576, %v479
      %v609 = vadd.f32 %v577, %v479
      %v610 = vadd.f32 %v578, %v479
      %v611 = vadd.f32 %v579, %v479
      %v612 = vadd.f32 %v580, %v479
      %v613 = vadd.f32 %v581, %v479
      %v614 = vadd.f32 %v582, %v479
      %v615 = vmax.f32 %v583, 0.0
      %v616 = vmax.f32 %v584, 0.0
      %v617 = vmax.f32 %v585, 0.0
      %v618 = vmax.f32 %v586, 0.0
      %v619 = vmax.f32 %v587, 0.0
      %v620 = vmax.f32 %v588, 0.0
      %v621 = vmax.f32 %v589, 0.0
      %v622 = vmax.f32 %v590, 0.0
      %v623 = vmax.f32 %v591, 0.0
      %v624 = vmax.f32 %v592, 0.0
      %v625 = vmax.f32 %v593, 0.0
      %v626 = vmax.f32 %v594, 0.0
      %v627 = vmax.f32 %v595, 0.0
      %v628 = vmax.f32 %v596, 0.0
      %v629 = vmax.f32 %v597, 0.0
      %v630 = vmax.f32 %v598, 0.0
      %v631 = vmax.f32 %v599, 0.0
      %v632 = vmax.f32 %v600, 0.0
      %v633 = vmax.f32 %v601, 0.0
      %v634 = vmax.f32 %v602, 0.0
      %v635 = vmax.f32 %v603, 0.0
      %v636 = vmax.f32 %v604, 0.0
      %v637 = vmax.f32 %v605, 0.0
      %v638 = vmax.f32 %v606, 0.0
      %v639 = vmax.f32 %v607, 0.0
      %v640 = vmax.f32 %v608, 0.0
      %v641 = vmax.f32 %v609, 0.0
      %v642 = vmax.f32 %v610, 0.0
      %v643 = vmax.f32 %v611, 0.0
      %v644 = vmax.f32 %v612, 0.0
      %v645 = vmax.f32 %v613, 0.0
      %v646 = vmax.f32 %v614, 0.0
      %v647 = vpack.c.bf16 %v615, %v615
      %v648 = vpack.c.bf16 %v616, %v616
      %v649 = vpack.c.bf16 %v617, %v617
      %v650 = vpack.c.bf16 %v618, %v618
      %v651 = vpack.c.bf16 %v619, %v619
      %v652 = vpack.c.bf16 %v620, %v620
      %v653 = vpack.c.bf16 %v621, %v621
      %v654 = vpack.c.bf16 %v622, %v622
      %v655 = vpack.c.bf16 %v623, %v623
      %v656 = vpack.c.bf16 %v624, %v624
      %v657 = vpack.c.bf16 %v625, %v625
      %v658 = vpack.c.bf16 %v626, %v626
      %v659 = vpack.c.bf16 %v627, %v627
      %v660 = vpack.c.bf16 %v628, %v628
      %v661 = vpack.c.bf16 %v629, %v629
      %v662 = vpack.c.bf16 %v630, %v630
      %v663 = vpack.c.bf16 %v631, %v631
      %v664 = vpack.c.bf16 %v632, %v632
      %v665 = vpack.c.bf16 %v633, %v633
      %v666 = vpack.c.bf16 %v634, %v634
      %v667 = vpack.c.bf16 %v635, %v635
      %v668 = vpack.c.bf16 %v636, %v636
      %v669 = vpack.c.bf16 %v637, %v637
      %v670 = vpack.c.bf16 %v638, %v638
      %v671 = vpack.c.bf16 %v639, %v639
      %v672 = vpack.c.bf16 %v640, %v640
      %v673 = vpack.c.bf16 %v641, %v641
      %v674 = vpack.c.bf16 %v642, %v642
      %v675 = vpack.c.bf16 %v643, %v643
      %v676 = vpack.c.bf16 %v644, %v644
      %v677 = vpack.c.bf16 %v645, %v645
      %v678 = vpack.c.bf16 %v646, %v646
      %v679 = vld [vmem:[%s443] sm:$0xf]
      %v680 = vld [vmem:[%s443 + $0x4] sm:$0xf]
      %v681 = vunpack.c.l.bf16 %v679
      %v682 = vunpack.c.l.bf16 %v680
      %v683 = vmul.f32 %v681, %v474
      %v684 = vmul.f32 %v682, %v474
      %v685 = vadd.f32 %v683, %v479
      %v686 = vadd.f32 %v684, %v479
      %v687 = vmax.f32 %v685, 0.0
      %v688 = vmax.f32 %v686, 0.0
      %v689 = vpack.c.bf16 %v687, %v687
      %v690 = vpack.c.bf16 %v688, %v688
      %vm691 = vsmask.f32 256
      %vm692 = vsmask.f32 4368
      %vm693 = vmor %vm691, %vm692
      %v695 = vshrl.u32 %v485, 16
      %v697 = vrot.slane %v695, 7
      %v698 = vshll.u32 %v485, 16
      %v700 = vor.u32 %v697, %v698
      %v701 = vrot.slane %v697, 4
      %v703 = vshrl.u32 %v486, 16
      %v705 = vrot.slane %v703, 7
      %v706 = vshll.u32 %v486, 16
      %v708 = vor.u32 %v705, %v706
      %v709 = vsel %vm693, %v701, %v708
      %v710 = vrot.slane %v705, 4
      %vm714 = vcmask 1043456
      %vm715 = vsmask.f32 7938
      %vm716 = vmand %vm714, %vm715
      %v717 = vld [vmem:[#allocation2] sm:$0xf]
      %v718 = vsel %vm716, %v700, %v717
      %719 = vst [vmem:[#allocation2] sm:$0xf] %v718
      %720 = vst [vmem:[#allocation2 + $0x4] sm:$0xf] %v709
      %vm721 = vcmask 1040384
      %vm722 = vmand %vm721, %vm691
      %v723 = vld [vmem:[#allocation2 + $0x8] sm:$0x1]
      %v724 = vsel %vm722, %v710, %v723
      %725 = vst [vmem:[#allocation2 + $0x8] sm:$0x1] %v724
      %v727 = vshrl.u32 %v647, 16
      %v729 = vrot.slane %v727, 7
      %v730 = vshll.u32 %v647, 16
      %v732 = vor.u32 %v729, %v730
      %v733 = vrot.slane %v729, 4
      %v735 = vshrl.u32 %v648, 16
      %v737 = vrot.slane %v735, 7
      %v738 = vshll.u32 %v648, 16
      %v740 = vor.u32 %v737, %v738
      %v741 = vsel %vm693, %v733, %v740
      %v742 = vrot.slane %v737, 4
      %v744 = vshrl.u32 %v649, 16
      %v746 = vrot.slane %v744, 7
      %v747 = vshll.u32 %v649, 16
      %v749 = vor.u32 %v746, %v747
      %v750 = vrot.slane %v746, 4
      %v752 = vshrl.u32 %v650, 16
      %v754 = vrot.slane %v752, 7
      %v755 = vshll.u32 %v650, 16
      %v757 = vor.u32 %v754, %v755
      %v758 = vsel %vm693, %v750, %v757
      %v759 = vrot.slane %v754, 4
      %v761 = vshrl.u32 %v651, 16
      %v763 = vrot.slane %v761, 7
      %v764 = vshll.u32 %v651, 16
      %v766 = vor.u32 %v763, %v764
      %v767 = vrot.slane %v763, 4
      %v769 = vshrl.u32 %v652, 16
      %v771 = vrot.slane %v769, 7
      %v772 = vshll.u32 %v652, 16
      %v774 = vor.u32 %v771, %v772
      %v775 = vsel %vm693, %v767, %v774
      %v776 = vrot.slane %v771, 4
      %v778 = vshrl.u32 %v653, 16
      %v780 = vrot.slane %v778, 7
      %v781 = vshll.u32 %v653, 16
      %v783 = vor.u32 %v780, %v781
      %v784 = vrot.slane %v780, 4
      %v786 = vshrl.u32 %v654, 16
      %v788 = vrot.slane %v786, 7
      %v789 = vshll.u32 %v654, 16
      %v791 = vor.u32 %v788, %v789
      %v792 = vsel %vm693, %v784, %v791
      %v793 = vrot.slane %v788, 4
      %v795 = vshrl.u32 %v655, 16
      %v797 = vrot.slane %v795, 7
      %v798 = vshll.u32 %v655, 16
      %v800 = vor.u32 %v797, %v798
      %v801 = vrot.slane %v797, 4
      %v803 = vshrl.u32 %v656, 16
      %v805 = vrot.slane %v803, 7
      %v806 = vshll.u32 %v656, 16
      %v808 = vor.u32 %v805, %v806
      %v809 = vsel %vm693, %v801, %v808
      %v810 = vrot.slane %v805, 4
      %v812 = vshrl.u32 %v657, 16
      %v814 = vrot.slane %v812, 7
      %v815 = vshll.u32 %v657, 16
      %v817 = vor.u32 %v814, %v815
      %v818 = vrot.slane %v814, 4
      %v820 = vshrl.u32 %v658, 16
      %v822 = vrot.slane %v820, 7
      %v823 = vshll.u32 %v658, 16
      %v825 = vor.u32 %v822, %v823
      %v826 = vsel %vm693, %v818, %v825
      %v827 = vrot.slane %v822, 4
      %v829 = vshrl.u32 %v659, 16
      %v831 = vrot.slane %v829, 7
      %v832 = vshll.u32 %v659, 16
      %v834 = vor.u32 %v831, %v832
      %v835 = vrot.slane %v831, 4
      %v837 = vshrl.u32 %v660, 16
      %v839 = vrot.slane %v837, 7
      %v840 = vshll.u32 %v660, 16
      %v842 = vor.u32 %v839, %v840
      %v843 = vsel %vm693, %v835, %v842
      %v844 = vrot.slane %v839, 4
      %v846 = vshrl.u32 %v661, 16
      %v848 = vrot.slane %v846, 7
      %v849 = vshll.u32 %v661, 16
      %v851 = vor.u32 %v848, %v849
      %v852 = vrot.slane %v848, 4
      %v854 = vshrl.u32 %v662, 16
      %v856 = vrot.slane %v854, 7
      %v857 = vshll.u32 %v662, 16
      %v859 = vor.u32 %v856, %v857
      %v860 = vsel %vm693, %v852, %v859
      %v861 = vrot.slane %v856, 4
      %v863 = vshrl.u32 %v663, 16
      %v865 = vrot.slane %v863, 7
      %v866 = vshll.u32 %v663, 16
      %v868 = vor.u32 %v865, %v866
      %v869 = vrot.slane %v865, 4
      %v871 = vshrl.u32 %v664, 16
      %v873 = vrot.slane %v871, 7
      %v874 = vshll.u32 %v664, 16
      %v876 = vor.u32 %v873, %v874
      %v877 = vsel %vm693, %v869, %v876
      %v878 = vrot.slane %v873, 4
      %v880 = vshrl.u32 %v665, 16
      %v882 = vrot.slane %v880, 7
      %v883 = vshll.u32 %v665, 16
      %v885 = vor.u32 %v882, %v883
      %v886 = vrot.slane %v882, 4
      %v888 = vshrl.u32 %v666, 16
      %v890 = vrot.slane %v888, 7
      %v891 = vshll.u32 %v666, 16
      %v893 = vor.u32 %v890, %v891
      %v894 = vsel %vm693, %v886, %v893
      %v895 = vrot.slane %v890, 4
      %v897 = vshrl.u32 %v667, 16
      %v899 = vrot.slane %v897, 7
      %v900 = vshll.u32 %v667, 16
      %v902 = vor.u32 %v899, %v900
      %v903 = vrot.slane %v899, 4
      %v905 = vshrl.u32 %v668, 16
      %v907 = vrot.slane %v905, 7
      %v908 = vshll.u32 %v668, 16
      %v910 = vor.u32 %v907, %v908
      %v911 = vsel %vm693, %v903, %v910
      %v912 = vrot.slane %v907, 4
      %v914 = vshrl.u32 %v669, 16
      %v916 = vrot.slane %v914, 7
      %v917 = vshll.u32 %v669, 16
      %v919 = vor.u32 %v916, %v917
      %v920 = vrot.slane %v916, 4
      %v922 = vshrl.u32 %v670, 16
      %v924 = vrot.slane %v922, 7
      %v925 = vshll.u32 %v670, 16
      %v927 = vor.u32 %v924, %v925
      %v928 = vsel %vm693, %v920, %v927
      %v929 = vrot.slane %v924, 4
      %v931 = vshrl.u32 %v671, 16
      %v933 = vrot.slane %v931, 7
      %v934 = vshll.u32 %v671, 16
      %v936 = vor.u32 %v933, %v934
      %v937 = vrot.slane %v933, 4
      %v939 = vshrl.u32 %v672, 16
      %v941 = vrot.slane %v939, 7
      %v942 = vshll.u32 %v672, 16
      %v944 = vor.u32 %v941, %v942
      %v945 = vsel %vm693, %v937, %v944
      %v946 = vrot.slane %v941, 4
      %v948 = vshrl.u32 %v673, 16
      %v950 = vrot.slane %v948, 7
      %v951 = vshll.u32 %v673, 16
      %v953 = vor.u32 %v950, %v951
      %v954 = vrot.slane %v950, 4
      %v956 = vshrl.u32 %v674, 16
      %v958 = vrot.slane %v956, 7
      %v959 = vshll.u32 %v674, 16
      %v961 = vor.u32 %v958, %v959
      %v962 = vsel %vm693, %v954, %v961
      %v963 = vrot.slane %v958, 4
      %v965 = vshrl.u32 %v675, 16
      %v967 = vrot.slane %v965, 7
      %v968 = vshll.u32 %v675, 16
      %v970 = vor.u32 %v967, %v968
      %v971 = vrot.slane %v967, 4
      %v973 = vshrl.u32 %v676, 16
      %v975 = vrot.slane %v973, 7
      %v976 = vshll.u32 %v676, 16
      %v978 = vor.u32 %v975, %v976
      %v979 = vsel %vm693, %v971, %v978
      %v980 = vrot.slane %v975, 4
      %v982 = vshrl.u32 %v677, 16
      %v984 = vrot.slane %v982, 7
      %v985 = vshll.u32 %v677, 16
      %v987 = vor.u32 %v984, %v985
      %v988 = vrot.slane %v984, 4
      %v990 = vshrl.u32 %v678, 16
      %v992 = vrot.slane %v990, 7
      %v993 = vshll.u32 %v678, 16
      %v995 = vor.u32 %v992, %v993
      %v996 = vsel %vm693, %v988, %v995
      %v997 = vrot.slane %v992, 4
      %s1046 = scalar_lea.vmem [#allocation2], 12
      %v1047 = vld [vmem:[%s1046] sm:$0xf]
      %v1048 = vsel %vm716, %v732, %v1047
      %1049 = vst [vmem:[%s1046] sm:$0xf] %v1048
      %1050 = vst [vmem:[%s1046 + $0x4] sm:$0xf] %v741
      %v1051 = vld [vmem:[%s1046 + $0x8] sm:$0x1]
      %v1052 = vsel %vm722, %v742, %v1051
      %1053 = vst [vmem:[%s1046 + $0x8] sm:$0x1] %v1052
      %v1054 = vld [vmem:[%s1046 + $0xc] sm:$0xf]
      %v1055 = vsel %vm716, %v749, %v1054
      %1056 = vst [vmem:[%s1046 + $0xc] sm:$0xf] %v1055
      %1057 = vst [vmem:[%s1046 + $0x10] sm:$0xf] %v758
      %v1058 = vld [vmem:[%s1046 + $0x14] sm:$0x1]
      %v1059 = vsel %vm722, %v759, %v1058
      %1060 = vst [vmem:[%s1046 + $0x14] sm:$0x1] %v1059
      %v1061 = vld [vmem:[%s1046 + $0x18] sm:$0xf]
      %v1062 = vsel %vm716, %v766, %v1061
      %1063 = vst [vmem:[%s1046 + $0x18] sm:$0xf] %v1062
      %1064 = vst [vmem:[%s1046 + $0x1c] sm:$0xf] %v775
      %v1065 = vld [vmem:[%s1046 + $0x20] sm:$0x1]
      %v1066 = vsel %vm722, %v776, %v1065
      %1067 = vst [vmem:[%s1046 + $0x20] sm:$0x1] %v1066
      %v1068 = vld [vmem:[%s1046 + $0x24] sm:$0xf]
      %v1069 = vsel %vm716, %v783, %v1068
      %1070 = vst [vmem:[%s1046 + $0x24] sm:$0xf] %v1069
      %1071 = vst [vmem:[%s1046 + $0x28] sm:$0xf] %v792
      %v1072 = vld [vmem:[%s1046 + $0x2c] sm:$0x1]
      %v1073 = vsel %vm722, %v793, %v1072
      %1074 = vst [vmem:[%s1046 + $0x2c] sm:$0x1] %v1073
      %v1075 = vld [vmem:[%s1046 + $0x30] sm:$0xf]
      %v1076 = vsel %vm716, %v800, %v1075
      %1077 = vst [vmem:[%s1046 + $0x30] sm:$0xf] %v1076
      %1078 = vst [vmem:[%s1046 + $0x34] sm:$0xf] %v809
      %v1079 = vld [vmem:[%s1046 + $0x38] sm:$0x1]
      %v1080 = vsel %vm722, %v810, %v1079
      %1081 = vst [vmem:[%s1046 + $0x38] sm:$0x1] %v1080
      %v1082 = vld [vmem:[%s1046 + $0x3c] sm:$0xf]
      %v1083 = vsel %vm716, %v817, %v1082
      %1084 = vst [vmem:[%s1046 + $0x3c] sm:$0xf] %v1083
      %1085 = vst [vmem:[%s1046 + $0x40] sm:$0xf] %v826
      %v1086 = vld [vmem:[%s1046 + $0x44] sm:$0x1]
      %v1087 = vsel %vm722, %v827, %v1086
      %1088 = vst [vmem:[%s1046 + $0x44] sm:$0x1] %v1087
      %v1089 = vld [vmem:[%s1046 + $0x48] sm:$0xf]
      %v1090 = vsel %vm716, %v834, %v1089
      %1091 = vst [vmem:[%s1046 + $0x48] sm:$0xf] %v1090
      %1092 = vst [vmem:[%s1046 + $0x4c] sm:$0xf] %v843
      %v1093 = vld [vmem:[%s1046 + $0x50] sm:$0x1]
      %v1094 = vsel %vm722, %v844, %v1093
      %1095 = vst [vmem:[%s1046 + $0x50] sm:$0x1] %v1094
      %v1096 = vld [vmem:[%s1046 + $0x54] sm:$0xf]
      %v1097 = vsel %vm716, %v851, %v1096
      %1098 = vst [vmem:[%s1046 + $0x54] sm:$0xf] %v1097
      %1099 = vst [vmem:[%s1046 + $0x58] sm:$0xf] %v860
      %v1100 = vld [vmem:[%s1046 + $0x5c] sm:$0x1]
      %v1101 = vsel %vm722, %v861, %v1100
      %1102 = vst [vmem:[%s1046 + $0x5c] sm:$0x1] %v1101
      %v1103 = vld [vmem:[%s1046 + $0x60] sm:$0xf]
      %v1104 = vsel %vm716, %v868, %v1103
      %1105 = vst [vmem:[%s1046 + $0x60] sm:$0xf] %v1104
      %1106 = vst [vmem:[%s1046 + $0x64] sm:$0xf] %v877
      %v1107 = vld [vmem:[%s1046 + $0x68] sm:$0x1]
      %v1108 = vsel %vm722, %v878, %v1107
      %1109 = vst [vmem:[%s1046 + $0x68] sm:$0x1] %v1108
      %v1110 = vld [vmem:[%s1046 + $0x6c] sm:$0xf]
      %v1111 = vsel %vm716, %v885, %v1110
      %1112 = vst [vmem:[%s1046 + $0x6c] sm:$0xf] %v1111
      %1113 = vst [vmem:[%s1046 + $0x70] sm:$0xf] %v894
      %v1114 = vld [vmem:[%s1046 + $0x74] sm:$0x1]
      %v1115 = vsel %vm722, %v895, %v1114
      %1116 = vst [vmem:[%s1046 + $0x74] sm:$0x1] %v1115
      %v1117 = vld [vmem:[%s1046 + $0x78] sm:$0xf]
      %v1118 = vsel %vm716, %v902, %v1117
      %1119 = vst [vmem:[%s1046 + $0x78] sm:$0xf] %v1118
      %1120 = vst [vmem:[%s1046 + $0x7c] sm:$0xf] %v911
      %v1121 = vld [vmem:[%s1046 + $0x80] sm:$0x1]
      %v1122 = vsel %vm722, %v912, %v1121
      %1123 = vst [vmem:[%s1046 + $0x80] sm:$0x1] %v1122
      %v1124 = vld [vmem:[%s1046 + $0x84] sm:$0xf]
      %v1125 = vsel %vm716, %v919, %v1124
      %1126 = vst [vmem:[%s1046 + $0x84] sm:$0xf] %v1125
      %1127 = vst [vmem:[%s1046 + $0x88] sm:$0xf] %v928
      %v1128 = vld [vmem:[%s1046 + $0x8c] sm:$0x1]
      %v1129 = vsel %vm722, %v929, %v1128
      %1130 = vst [vmem:[%s1046 + $0x8c] sm:$0x1] %v1129
      %v1131 = vld [vmem:[%s1046 + $0x90] sm:$0xf]
      %v1132 = vsel %vm716, %v936, %v1131
      %1133 = vst [vmem:[%s1046 + $0x90] sm:$0xf] %v1132
      %1134 = vst [vmem:[%s1046 + $0x94] sm:$0xf] %v945
      %v1135 = vld [vmem:[%s1046 + $0x98] sm:$0x1]
      %v1136 = vsel %vm722, %v946, %v1135
      %1137 = vst [vmem:[%s1046 + $0x98] sm:$0x1] %v1136
      %v1138 = vld [vmem:[%s1046 + $0x9c] sm:$0xf]
      %v1139 = vsel %vm716, %v953, %v1138
      %1140 = vst [vmem:[%s1046 + $0x9c] sm:$0xf] %v1139
      %1141 = vst [vmem:[%s1046 + $0xa0] sm:$0xf] %v962
      %v1142 = vld [vmem:[%s1046 + $0xa4] sm:$0x1]
      %v1143 = vsel %vm722, %v963, %v1142
      %1144 = vst [vmem:[%s1046 + $0xa4] sm:$0x1] %v1143
      %v1145 = vld [vmem:[%s1046 + $0xa8] sm:$0xf]
      %v1146 = vsel %vm716, %v970, %v1145
      %1147 = vst [vmem:[%s1046 + $0xa8] sm:$0xf] %v1146
      %1148 = vst [vmem:[%s1046 + $0xac] sm:$0xf] %v979
      %v1149 = vld [vmem:[%s1046 + $0xb0] sm:$0x1]
      %v1150 = vsel %vm722, %v980, %v1149
      %1151 = vst [vmem:[%s1046 + $0xb0] sm:$0x1] %v1150
      %v1152 = vld [vmem:[%s1046 + $0xb4] sm:$0xf]
      %v1153 = vsel %vm716, %v987, %v1152
      %1154 = vst [vmem:[%s1046 + $0xb4] sm:$0xf] %v1153
      %1155 = vst [vmem:[%s1046 + $0xb8] sm:$0xf] %v996
      %v1156 = vld [vmem:[%s1046 + $0xbc] sm:$0x1]
      %v1157 = vsel %vm722, %v997, %v1156
      %1158 = vst [vmem:[%s1046 + $0xbc] sm:$0x1] %v1157
      %v1160 = vshrl.u32 %v689, 16
      %v1162 = vrot.slane %v1160, 7
      %v1163 = vshll.u32 %v689, 16
      %v1165 = vor.u32 %v1162, %v1163
      %v1166 = vrot.slane %v1162, 4
      %v1168 = vshrl.u32 %v690, 16
      %v1170 = vrot.slane %v1168, 7
      %v1171 = vshll.u32 %v690, 16
      %v1173 = vor.u32 %v1170, %v1171
      %v1174 = vsel %vm693, %v1166, %v1173
      %v1175 = vrot.slane %v1170, 4
      %s1179 = scalar_lea.vmem [#allocation2], 204
      %v1180 = vld [vmem:[%s1179] sm:$0xf]
      %v1181 = vsel %vm716, %v1165, %v1180
      %1182 = vst [vmem:[%s1179] sm:$0xf] %v1181
      %1183 = vst [vmem:[%s1179 + $0x4] sm:$0xf] %v1174
      %v1184 = vld [vmem:[%s1179 + $0x8] sm:$0x1]
      %v1185 = vsel %vm722, %v1175, %v1184
      %1186 = vst [vmem:[%s1179 + $0x8] sm:$0x1] %v1185
      %v1187 = vld [vmem:[#allocation2] sm:$0x1]
      %v1188 = vsel %vm722, 0, %v1187
      %1189 = vst [vmem:[#allocation2] sm:$0x1] %v1188
      %v1190 = vld [vmem:[#allocation2 + $0xc] sm:$0x1]
      %v1191 = vsel %vm722, 0, %v1190
      %1192 = vst [vmem:[#allocation2 + $0xc] sm:$0x1] %v1191
      %v1193 = vld [vmem:[#allocation2 + $0x18] sm:$0x1]
      %v1194 = vsel %vm722, 0, %v1193
      %1195 = vst [vmem:[#allocation2 + $0x18] sm:$0x1] %v1194
      %v1196 = vld [vmem:[#allocation2 + $0x24] sm:$0x1]
      %v1197 = vsel %vm722, 0, %v1196
      %1198 = vst [vmem:[#allocation2 + $0x24] sm:$0x1] %v1197
      %v1199 = vld [vmem:[#allocation2 + $0x30] sm:$0x1]
      %v1200 = vsel %vm722, 0, %v1199
      %1201 = vst [vmem:[#allocation2 + $0x30] sm:$0x1] %v1200
      %v1202 = vld [vmem:[#allocation2 + $0x3c] sm:$0x1]
      %v1203 = vsel %vm722, 0, %v1202
      %1204 = vst [vmem:[#allocation2 + $0x3c] sm:$0x1] %v1203
      %v1205 = vld [vmem:[#allocation2 + $0x48] sm:$0x1]
      %v1206 = vsel %vm722, 0, %v1205
      %1207 = vst [vmem:[#allocation2 + $0x48] sm:$0x1] %v1206
      %v1208 = vld [vmem:[#allocation2 + $0x54] sm:$0x1]
      %v1209 = vsel %vm722, 0, %v1208
      %1210 = vst [vmem:[#allocation2 + $0x54] sm:$0x1] %v1209
      %v1211 = vld [vmem:[#allocation2 + $0x60] sm:$0x1]
      %v1212 = vsel %vm722, 0, %v1211
      %1213 = vst [vmem:[#allocation2 + $0x60] sm:$0x1] %v1212
      %v1214 = vld [vmem:[#allocation2 + $0x6c] sm:$0x1]
      %v1215 = vsel %vm722, 0, %v1214
      %1216 = vst [vmem:[#allocation2 + $0x6c] sm:$0x1] %v1215
      %v1217 = vld [vmem:[#allocation2 + $0x78] sm:$0x1]
      %v1218 = vsel %vm722, 0, %v1217
      %1219 = vst [vmem:[#allocation2 + $0x78] sm:$0x1] %v1218
      %v1220 = vld [vmem:[#allocation2 + $0x84] sm:$0x1]
      %v1221 = vsel %vm722, 0, %v1220
      %1222 = vst [vmem:[#allocation2 + $0x84] sm:$0x1] %v1221
      %v1223 = vld [vmem:[#allocation2 + $0x90] sm:$0x1]
      %v1224 = vsel %vm722, 0, %v1223
      %1225 = vst [vmem:[#allocation2 + $0x90] sm:$0x1] %v1224
      %v1226 = vld [vmem:[#allocation2 + $0x9c] sm:$0x1]
      %v1227 = vsel %vm722, 0, %v1226
      %1228 = vst [vmem:[#allocation2 + $0x9c] sm:$0x1] %v1227
      %v1229 = vld [vmem:[#allocation2 + $0xa8] sm:$0x1]
      %v1230 = vsel %vm722, 0, %v1229
      %1231 = vst [vmem:[#allocation2 + $0xa8] sm:$0x1] %v1230
      %v1232 = vld [vmem:[#allocation2 + $0xb4] sm:$0x1]
      %v1233 = vsel %vm722, 0, %v1232
      %1234 = vst [vmem:[#allocation2 + $0xb4] sm:$0x1] %v1233
      %v1235 = vld [vmem:[#allocation2 + $0xc0] sm:$0x1]
      %v1236 = vsel %vm722, 0, %v1235
      %1237 = vst [vmem:[#allocation2 + $0xc0] sm:$0x1] %v1236
      %v1238 = vld [vmem:[#allocation2 + $0xcc] sm:$0x1]
      %v1239 = vsel %vm722, 0, %v1238
      %1240 = vst [vmem:[#allocation2 + $0xcc] sm:$0x1] %v1239
      %vm1241 = vmand %vm721, %vm715
      %v1242 = vld [vmem:[#allocation2 + $0x8] sm:$0x1]
      %v1243 = vsel %vm1241, 0, %v1242
      %1244 = vst [vmem:[#allocation2 + $0x8] sm:$0x1] %v1243
      %v1245 = vld [vmem:[#allocation2 + $0x14] sm:$0x1]
      %v1246 = vsel %vm1241, 0, %v1245
      %1247 = vst [vmem:[#allocation2 + $0x14] sm:$0x1] %v1246
      %v1248 = vld [vmem:[#allocation2 + $0x20] sm:$0x1]
      %v1249 = vsel %vm1241, 0, %v1248
      %1250 = vst [vmem:[#allocation2 + $0x20] sm:$0x1] %v1249
      %v1251 = vld [vmem:[#allocation2 + $0x2c] sm:$0x1]
      %v1252 = vsel %vm1241, 0, %v1251
      %1253 = vst [vmem:[#allocation2 + $0x2c] sm:$0x1] %v1252
      %v1254 = vld [vmem:[#allocation2 + $0x38] sm:$0x1]
      %v1255 = vsel %vm1241, 0, %v1254
      %1256 = vst [vmem:[#allocation2 + $0x38] sm:$0x1] %v1255
      %v1257 = vld [vmem:[#allocation2 + $0x44] sm:$0x1]
      %v1258 = vsel %vm1241, 0, %v1257
      %1259 = vst [vmem:[#allocation2 + $0x44] sm:$0x1] %v1258
      %v1260 = vld [vmem:[#allocation2 + $0x50] sm:$0x1]
      %v1261 = vsel %vm1241, 0, %v1260
      %1262 = vst [vmem:[#allocation2 + $0x50] sm:$0x1] %v1261
      %v1263 = vld [vmem:[#allocation2 + $0x5c] sm:$0x1]
      %v1264 = vsel %vm1241, 0, %v1263
      %1265 = vst [vmem:[#allocation2 + $0x5c] sm:$0x1] %v1264
      %v1266 = vld [vmem:[#allocation2 + $0x68] sm:$0x1]
      %v1267 = vsel %vm1241, 0, %v1266
      %1268 = vst [vmem:[#allocation2 + $0x68] sm:$0x1] %v1267
      %v1269 = vld [vmem:[#allocation2 + $0x74] sm:$0x1]
      %v1270 = vsel %vm1241, 0, %v1269
      %1271 = vst [vmem:[#allocation2 + $0x74] sm:$0x1] %v1270
      %v1272 = vld [vmem:[#allocation2 + $0x80] sm:$0x1]
      %v1273 = vsel %vm1241, 0, %v1272
      %1274 = vst [vmem:[#allocation2 + $0x80] sm:$0x1] %v1273
      %v1275 = vld [vmem:[#allocation2 + $0x8c] sm:$0x1]
      %v1276 = vsel %vm1241, 0, %v1275
      %1277 = vst [vmem:[#allocation2 + $0x8c] sm:$0x1] %v1276
      %v1278 = vld [vmem:[#allocation2 + $0x98] sm:$0x1]
      %v1279 = vsel %vm1241, 0, %v1278
      %1280 = vst [vmem:[#allocation2 + $0x98] sm:$0x1] %v1279
      %v1281 = vld [vmem:[#allocation2 + $0xa4] sm:$0x1]
      %v1282 = vsel %vm1241, 0, %v1281
      %1283 = vst [vmem:[#allocation2 + $0xa4] sm:$0x1] %v1282
      %v1284 = vld [vmem:[#allocation2 + $0xb0] sm:$0x1]
      %v1285 = vsel %vm1241, 0, %v1284
      %1286 = vst [vmem:[#allocation2 + $0xb0] sm:$0x1] %v1285
      %v1287 = vld [vmem:[#allocation2 + $0xbc] sm:$0x1]
      %v1288 = vsel %vm1241, 0, %v1287
      %1289 = vst [vmem:[#allocation2 + $0xbc] sm:$0x1] %v1288
      %v1290 = vld [vmem:[#allocation2 + $0xc8] sm:$0x1]
      %v1291 = vsel %vm1241, 0, %v1290
      %1292 = vst [vmem:[#allocation2 + $0xc8] sm:$0x1] %v1291
      %v1293 = vld [vmem:[#allocation2 + $0xd4] sm:$0x1]
      %v1294 = vsel %vm1241, 0, %v1293
      %1295 = vst [vmem:[#allocation2 + $0xd4] sm:$0x1] %v1294
      %p1296 = scmp.eq.s32.totalorder %s24, 0
      // Predicated region
      $region45: #{_lambda_.4} parent=43 // pred_check
        %p1297 = pneg %p1296
      $region46: #{_lambda_.4} parent=43 // pred_check_branch
        %1299 = sbr.rel (%p1297) target = $region48
      $region47: #{_lambda_.4} parent=43 // pred_region
        %1300 = vst [vmem:[#allocation2] sm:$0xf] 0
        %1301 = vst [vmem:[#allocation2 + $0x4] sm:$0xf] 0
        %1302 = vst [vmem:[#allocation2 + $0x8] sm:$0x1] 0
        %1303 = vst [vmem:[%s1179] sm:$0xf] 0
        %1304 = vst [vmem:[%s1179 + $0x4] sm:$0xf] 0
        %1305 = vst [vmem:[%s1179 + $0x8] sm:$0x1] 0
      $region48: #{_lambda_.4} parent=43 // pred_fallthru
        _
      %v1306 = vld [vmem:[#allocation2] sm:$0xf]
      %v1307 = vld [vmem:[#allocation2 + $0x4] sm:$0xf]
      %v1308 = vld [vmem:[#allocation2 + $0x8] sm:$0x1]
      %v1309 = vld [vmem:[#allocation2 + $0xc] sm:$0xf]
      %v1310 = vld [vmem:[#allocation2 + $0x10] sm:$0xf]
      %v1311 = vld [vmem:[#allocation2 + $0x14] sm:$0x1]
      %v1312 = vld [vmem:[#allocation2 + $0x18] sm:$0xf]
      %v1313 = vld [vmem:[#allocation2 + $0x1c] sm:$0xf]
      %v1314 = vld [vmem:[#allocation2 + $0x20] sm:$0x1]
      %v1315 = vld [vmem:[#allocation2 + $0x24] sm:$0xf]
      %v1316 = vld [vmem:[#allocation2 + $0x28] sm:$0xf]
      %v1317 = vld [vmem:[#allocation2 + $0x2c] sm:$0x1]
      %v1318 = vld [vmem:[#allocation2 + $0x30] sm:$0xf]
      %v1319 = vld [vmem:[#allocation2 + $0x34] sm:$0xf]
      %v1320 = vld [vmem:[#allocation2 + $0x38] sm:$0x1]
      %v1321 = vld [vmem:[#allocation2 + $0x3c] sm:$0xf]
      %v1322 = vld [vmem:[#allocation2 + $0x40] sm:$0xf]
      %v1323 = vld [vmem:[#allocation2 + $0x44] sm:$0x1]
      %v1324 = vld [vmem:[#allocation2 + $0x48] sm:$0xf]
      %v1325 = vld [vmem:[#allocation2 + $0x4c] sm:$0xf]
      %v1326 = vld [vmem:[#allocation2 + $0x50] sm:$0x1]
      %v1327 = vld [vmem:[#allocation2 + $0x54] sm:$0xf]
      %v1328 = vld [vmem:[#allocation2 + $0x58] sm:$0xf]
      %v1329 = vld [vmem:[#allocation2 + $0x5c] sm:$0x1]
      %v1330 = vld [vmem:[#allocation2 + $0x60] sm:$0xf]
      %v1331 = vld [vmem:[#allocation2 + $0x64] sm:$0xf]
      %v1332 = vld [vmem:[#allocation2 + $0x68] sm:$0x1]
      %v1333 = vld [vmem:[#allocation2 + $0x6c] sm:$0xf]
      %v1334 = vld [vmem:[#allocation2 + $0x70] sm:$0xf]
      %v1335 = vld [vmem:[#allocation2 + $0x74] sm:$0x1]
      %v1336 = vld [vmem:[#allocation2 + $0x78] sm:$0xf]
      %v1337 = vld [vmem:[#allocation2 + $0x7c] sm:$0xf]
      %v1338 = vld [vmem:[#allocation2 + $0x80] sm:$0x1]
      %v1339 = vld [vmem:[#allocation2 + $0x84] sm:$0xf]
      %v1340 = vld [vmem:[#allocation2 + $0x88] sm:$0xf]
      %v1341 = vld [vmem:[#allocation2 + $0x8c] sm:$0x1]
      %v1342 = vld [vmem:[#allocation2 + $0x90] sm:$0xf]
      %v1343 = vld [vmem:[#allocation2 + $0x94] sm:$0xf]
      %v1344 = vld [vmem:[#allocation2 + $0x98] sm:$0x1]
      %v1345 = vld [vmem:[#allocation2 + $0x9c] sm:$0xf]
      %v1346 = vld [vmem:[#allocation2 + $0xa0] sm:$0xf]
      %v1347 = vld [vmem:[#allocation2 + $0xa4] sm:$0x1]
      %v1348 = vld [vmem:[#allocation2 + $0xa8] sm:$0xf]
      %v1349 = vld [vmem:[#allocation2 + $0xac] sm:$0xf]
      %v1350 = vld [vmem:[#allocation2 + $0xb0] sm:$0x1]
      %v1351 = vld [vmem:[#allocation2 + $0xb4] sm:$0xf]
      %v1352 = vld [vmem:[#allocation2 + $0xb8] sm:$0xf]
      %v1353 = vld [vmem:[#allocation2 + $0xbc] sm:$0x1]
      %v1354 = vld [vmem:[#allocation2 + $0xc0] sm:$0xf]
      %v1355 = vld [vmem:[#allocation2 + $0xc4] sm:$0xf]
      %v1356 = vld [vmem:[#allocation2 + $0xc8] sm:$0x1]
      %v1357 = vld [vmem:[#allocation2 + $0xcc] sm:$0xf]
      %v1358 = vld [vmem:[#allocation2 + $0xd0] sm:$0xf]
      %v1359 = vld [vmem:[#allocation2 + $0xd4] sm:$0x1]
      %v1392 = vunpack.c.l.b16 %v1306
      %v1393 = vunpack.c.l.b16 %v1307
      %v1394 = vunpack.c.l.b16 %v1309
      %v1395 = vunpack.c.l.b16 %v1310
      %v1396 = vunpack.c.l.b16 %v1312
      %v1397 = vunpack.c.l.b16 %v1313
      %v1398 = vunpack.c.l.b16 %v1315
      %v1399 = vunpack.c.l.b16 %v1316
      %v1400 = vunpack.c.l.b16 %v1318
      %v1401 = vunpack.c.l.b16 %v1319
      %v1402 = vunpack.c.l.b16 %v1321
      %v1403 = vunpack.c.l.b16 %v1322
      %v1404 = vunpack.c.l.b16 %v1324
      %v1405 = vunpack.c.l.b16 %v1325
      %v1406 = vunpack.c.l.b16 %v1327
      %v1407 = vunpack.c.l.b16 %v1328
      %v1408 = vunpack.c.l.b16 %v1330
      %v1409 = vunpack.c.l.b16 %v1331
      %v1410 = vunpack.c.l.b16 %v1333
      %v1411 = vunpack.c.l.b16 %v1334
      %v1412 = vunpack.c.l.b16 %v1336
      %v1413 = vunpack.c.l.b16 %v1337
      %v1414 = vunpack.c.l.b16 %v1339
      %v1415 = vunpack.c.l.b16 %v1340
      %v1416 = vunpack.c.l.b16 %v1342
      %v1417 = vunpack.c.l.b16 %v1343
      %v1418 = vunpack.c.l.b16 %v1345
      %v1419 = vunpack.c.l.b16 %v1346
      %v1420 = vunpack.c.l.b16 %v1348
      %v1421 = vunpack.c.l.b16 %v1349
      %v1422 = vunpack.c.l.b16 %v1351
      %v1423 = vunpack.c.l.b16 %v1352
      %v1424 = vpack.c.b16 %v1393, %v1392
      %v1425 = vpack.c.b16 %v1395, %v1394
      %v1426 = vpack.c.b16 %v1397, %v1396
      %v1427 = vpack.c.b16 %v1399, %v1398
      %v1428 = vpack.c.b16 %v1401, %v1400
      %v1429 = vpack.c.b16 %v1403, %v1402
      %v1430 = vpack.c.b16 %v1405, %v1404
      %v1431 = vpack.c.b16 %v1407, %v1406
      %v1432 = vpack.c.b16 %v1409, %v1408
      %v1433 = vpack.c.b16 %v1411, %v1410
      %v1434 = vpack.c.b16 %v1413, %v1412
      %v1435 = vpack.c.b16 %v1415, %v1414
      %v1436 = vpack.c.b16 %v1417, %v1416
      %v1437 = vpack.c.b16 %v1419, %v1418
      %v1438 = vpack.c.b16 %v1421, %v1420
      %v1439 = vpack.c.b16 %v1423, %v1422
      %v1458 = vunpack.c.l.b16 %v1354
      %v1459 = vunpack.c.l.b16 %v1355
      %v1460 = vpack.c.b16 %v1459, %v1458
      %v1464 = vunpack.c.l.b16 %v1357
      %v1465 = vunpack.c.l.b16 %v1358
      %v1466 = vpack.c.b16 %v1465, %v1464
      %v1468 = vld [vmem:[%s5] sm:$0xf]
      %v1469 = vld [vmem:[%s5 + $0x4] sm:$0xf]
      %v1470 = vld [vmem:[%s5 + $0x8] sm:$0xf]
      %v1471 = vld [vmem:[%s5 + $0xc] sm:$0xf]
      %v1472 = vld [vmem:[%s5 + $0x10] sm:$0xf]
      %v1473 = vld [vmem:[%s5 + $0x14] sm:$0xf]
      %v1474 = vld [vmem:[%s5 + $0x18] sm:$0xf]
      %v1475 = vld [vmem:[%s5 + $0x1c] sm:$0xf]
      %v1476 = vld [vmem:[%s5 + $0x20] sm:$0xf]
      %v1477 = vld [vmem:[%s5 + $0x24] sm:$0xf]
      %v1478 = vld [vmem:[%s5 + $0x28] sm:$0xf]
      %v1479 = vld [vmem:[%s5 + $0x2c] sm:$0xf]
      %v1480 = vld [vmem:[%s5 + $0x30] sm:$0xf]
      %v1481 = vld [vmem:[%s5 + $0x34] sm:$0xf]
      %v1482 = vld [vmem:[%s5 + $0x38] sm:$0xf]
      %v1483 = vld [vmem:[%s5 + $0x3c] sm:$0xf]
      %v1484 = vld [vmem:[%s5 + $0x40] sm:$0xf]
      %v1485 = vld [vmem:[%s5 + $0x44] sm:$0xf]
      %v1486 = vld [vmem:[%s5 + $0x48] sm:$0xf]
      %v1487 = vld [vmem:[%s5 + $0x4c] sm:$0xf]
      %v1488 = vld [vmem:[%s5 + $0x50] sm:$0xf]
      %v1489 = vld [vmem:[%s5 + $0x54] sm:$0xf]
      %v1490 = vld [vmem:[%s5 + $0x58] sm:$0xf]
      %v1491 = vld [vmem:[%s5 + $0x5c] sm:$0xf]
      %v1492 = vld [vmem:[%s5 + $0x60] sm:$0xf]
      %v1493 = vld [vmem:[%s5 + $0x64] sm:$0xf]
      %v1494 = vld [vmem:[%s5 + $0x68] sm:$0xf]
      %v1495 = vld [vmem:[%s5 + $0x6c] sm:$0xf]
      %v1496 = vld [vmem:[%s5 + $0x70] sm:$0xf]
      %v1497 = vld [vmem:[%s5 + $0x74] sm:$0xf]
      %v1498 = vld [vmem:[%s5 + $0x78] sm:$0xf]
      %v1499 = vld [vmem:[%s5 + $0x7c] sm:$0xf]
      %v1500 = vld [vmem:[%s5 + $0x80] sm:$0xf]
      %v1501 = vld [vmem:[%s5 + $0x84] sm:$0xf]
      %v1502 = vld [vmem:[%s5 + $0x88] sm:$0xf]
      %v1503 = vld [vmem:[%s5 + $0x8c] sm:$0xf]
      %v1504 = vld [vmem:[%s5 + $0x90] sm:$0xf]
      %v1505 = vld [vmem:[%s5 + $0x94] sm:$0xf]
      %v1506 = vld [vmem:[%s5 + $0x98] sm:$0xf]
      %v1507 = vld [vmem:[%s5 + $0x9c] sm:$0xf]
      %v1508 = vld [vmem:[%s5 + $0xa0] sm:$0xf]
      %v1509 = vld [vmem:[%s5 + $0xa4] sm:$0xf]
      %v1510 = vld [vmem:[%s5 + $0xa8] sm:$0xf]
      %v1511 = vld [vmem:[%s5 + $0xac] sm:$0xf]
      %v1512 = vld [vmem:[%s5 + $0xb0] sm:$0xf]
      %v1513 = vld [vmem:[%s5 + $0xb4] sm:$0xf]
      %v1514 = vld [vmem:[%s5 + $0xb8] sm:$0xf]
      %v1515 = vld [vmem:[%s5 + $0xbc] sm:$0xf]
      %vm1516 = vsmask.f32 3328
      %vm1517 = vsmask.f32 7440
      %vm1518 = vmor %vm1516, %vm1517
      %v1520 = vshrl.u32 %v1306, 16
      %v1522 = vrot.slane %v1520, 4
      %v1523 = vshll.u32 %v1306, 16
      %v1525 = vrot.slane %v1523, 5
      %v1526 = vor.u32 %v1522, %v1525
      %v1527 = vrot.slane %v1526, 4
      %v1529 = vshll.u32 %v1307, 16
      %v1531 = vrot.slane %v1529, 5
      %v1532 = vsel %vm1518, %v1527, %v1531
      %v1533 = vshrl.u32 %v1307, 16
      %v1535 = vrot.slane %v1533, 4
      %v1536 = vor.u32 %v1535, %v1531
      %v1537 = vrot.slane %v1536, 4
      %v1539 = vshll.u32 %v1308, 16
      %v1541 = vrot.slane %v1539, 5
      %v1542 = vsel %vm1518, %v1537, %v1541
      %v1544 = vshrl.u32 %v1309, 16
      %v1546 = vrot.slane %v1544, 4
      %v1547 = vshll.u32 %v1309, 16
      %v1549 = vrot.slane %v1547, 5
      %v1550 = vor.u32 %v1546, %v1549
      %v1551 = vrot.slane %v1550, 4
      %v1553 = vshll.u32 %v1310, 16
      %v1555 = vrot.slane %v1553, 5
      %v1556 = vsel %vm1518, %v1551, %v1555
      %v1557 = vshrl.u32 %v1310, 16
      %v1559 = vrot.slane %v1557, 4
      %v1560 = vor.u32 %v1559, %v1555
      %v1561 = vrot.slane %v1560, 4
      %v1563 = vshll.u32 %v1311, 16
      %v1565 = vrot.slane %v1563, 5
      %v1566 = vsel %vm1518, %v1561, %v1565
      %v1568 = vshrl.u32 %v1312, 16
      %v1570 = vrot.slane %v1568, 4
      %v1571 = vshll.u32 %v1312, 16
      %v1573 = vrot.slane %v1571, 5
      %v1574 = vor.u32 %v1570, %v1573
      %v1575 = vrot.slane %v1574, 4
      %v1577 = vshll.u32 %v1313, 16
      %v1579 = vrot.slane %v1577, 5
      %v1580 = vsel %vm1518, %v1575, %v1579
      %v1581 = vshrl.u32 %v1313, 16
      %v1583 = vrot.slane %v1581, 4
      %v1584 = vor.u32 %v1583, %v1579
      %v1585 = vrot.slane %v1584, 4
      %v1587 = vshll.u32 %v1314, 16
      %v1589 = vrot.slane %v1587, 5
      %v1590 = vsel %vm1518, %v1585, %v1589
      %v1592 = vshrl.u32 %v1315, 16
      %v1594 = vrot.slane %v1592, 4
      %v1595 = vshll.u32 %v1315, 16
      %v1597 = vrot.slane %v1595, 5
      %v1598 = vor.u32 %v1594, %v1597
      %v1599 = vrot.slane %v1598, 4
      %v1601 = vshll.u32 %v1316, 16
      %v1603 = vrot.slane %v1601, 5
      %v1604 = vsel %vm1518, %v1599, %v1603
      %v1605 = vshrl.u32 %v1316, 16
      %v1607 = vrot.slane %v1605, 4
      %v1608 = vor.u32 %v1607, %v1603
      %v1609 = vrot.slane %v1608, 4
      %v1611 = vshll.u32 %v1317, 16
      %v1613 = vrot.slane %v1611, 5
      %v1614 = vsel %vm1518, %v1609, %v1613
      %v1616 = vshrl.u32 %v1318, 16
      %v1618 = vrot.slane %v1616, 4
      %v1619 = vshll.u32 %v1318, 16
      %v1621 = vrot.slane %v1619, 5
      %v1622 = vor.u32 %v1618, %v1621
      %v1623 = vrot.slane %v1622, 4
      %v1625 = vshll.u32 %v1319, 16
      %v1627 = vrot.slane %v1625, 5
      %v1628 = vsel %vm1518, %v1623, %v1627
      %v1629 = vshrl.u32 %v1319, 16
      %v1631 = vrot.slane %v1629, 4
      %v1632 = vor.u32 %v1631, %v1627
      %v1633 = vrot.slane %v1632, 4
      %v1635 = vshll.u32 %v1320, 16
      %v1637 = vrot.slane %v1635, 5
      %v1638 = vsel %vm1518, %v1633, %v1637
      %v1640 = vshrl.u32 %v1321, 16
      %v1642 = vrot.slane %v1640, 4
      %v1643 = vshll.u32 %v1321, 16
      %v1645 = vrot.slane %v1643, 5
      %v1646 = vor.u32 %v1642, %v1645
      %v1647 = vrot.slane %v1646, 4
      %v1649 = vshll.u32 %v1322, 16
      %v1651 = vrot.slane %v1649, 5
      %v1652 = vsel %vm1518, %v1647, %v1651
      %v1653 = vshrl.u32 %v1322, 16
      %v1655 = vrot.slane %v1653, 4
      %v1656 = vor.u32 %v1655, %v1651
      %v1657 = vrot.slane %v1656, 4
      %v1659 = vshll.u32 %v1323, 16
      %v1661 = vrot.slane %v1659, 5
      %v1662 = vsel %vm1518, %v1657, %v1661
      %v1664 = vshrl.u32 %v1324, 16
      %v1666 = vrot.slane %v1664, 4
      %v1667 = vshll.u32 %v1324, 16
      %v1669 = vrot.slane %v1667, 5
      %v1670 = vor.u32 %v1666, %v1669
      %v1671 = vrot.slane %v1670, 4
      %v1673 = vshll.u32 %v1325, 16
      %v1675 = vrot.slane %v1673, 5
      %v1676 = vsel %vm1518, %v1671, %v1675
      %v1677 = vshrl.u32 %v1325, 16
      %v1679 = vrot.slane %v1677, 4
      %v1680 = vor.u32 %v1679, %v1675
      %v1681 = vrot.slane %v1680, 4
      %v1683 = vshll.u32 %v1326, 16
      %v1685 = vrot.slane %v1683, 5
      %v1686 = vsel %vm1518, %v1681, %v1685
      %v1688 = vshrl.u32 %v1327, 16
      %v1690 = vrot.slane %v1688, 4
      %v1691 = vshll.u32 %v1327, 16
      %v1693 = vrot.slane %v1691, 5
      %v1694 = vor.u32 %v1690, %v1693
      %v1695 = vrot.slane %v1694, 4
      %v1697 = vshll.u32 %v1328, 16
      %v1699 = vrot.slane %v1697, 5
      %v1700 = vsel %vm1518, %v1695, %v1699
      %v1701 = vshrl.u32 %v1328, 16
      %v1703 = vrot.slane %v1701, 4
      %v1704 = vor.u32 %v1703, %v1699
      %v1705 = vrot.slane %v1704, 4
      %v1707 = vshll.u32 %v1329, 16
      %v1709 = vrot.slane %v1707, 5
      %v1710 = vsel %vm1518, %v1705, %v1709
      %v1712 = vshrl.u32 %v1330, 16
      %v1714 = vrot.slane %v1712, 4
      %v1715 = vshll.u32 %v1330, 16
      %v1717 = vrot.slane %v1715, 5
      %v1718 = vor.u32 %v1714, %v1717
      %v1719 = vrot.slane %v1718, 4
      %v1721 = vshll.u32 %v1331, 16
      %v1723 = vrot.slane %v1721, 5
      %v1724 = vsel %vm1518, %v1719, %v1723
      %v1725 = vshrl.u32 %v1331, 16
      %v1727 = vrot.slane %v1725, 4
      %v1728 = vor.u32 %v1727, %v1723
      %v1729 = vrot.slane %v1728, 4
      %v1731 = vshll.u32 %v1332, 16
      %v1733 = vrot.slane %v1731, 5
      %v1734 = vsel %vm1518, %v1729, %v1733
      %v1736 = vshrl.u32 %v1333, 16
      %v1738 = vrot.slane %v1736, 4
      %v1739 = vshll.u32 %v1333, 16
      %v1741 = vrot.slane %v1739, 5
      %v1742 = vor.u32 %v1738, %v1741
      %v1743 = vrot.slane %v1742, 4
      %v1745 = vshll.u32 %v1334, 16
      %v1747 = vrot.slane %v1745, 5
      %v1748 = vsel %vm1518, %v1743, %v1747
      %v1749 = vshrl.u32 %v1334, 16
      %v1751 = vrot.slane %v1749, 4
      %v1752 = vor.u32 %v1751, %v1747
      %v1753 = vrot.slane %v1752, 4
      %v1755 = vshll.u32 %v1335, 16
      %v1757 = vrot.slane %v1755, 5
      %v1758 = vsel %vm1518, %v1753, %v1757
      %v1760 = vshrl.u32 %v1336, 16
      %v1762 = vrot.slane %v1760, 4
      %v1763 = vshll.u32 %v1336, 16
      %v1765 = vrot.slane %v1763, 5
      %v1766 = vor.u32 %v1762, %v1765
      %v1767 = vrot.slane %v1766, 4
      %v1769 = vshll.u32 %v1337, 16
      %v1771 = vrot.slane %v1769, 5
      %v1772 = vsel %vm1518, %v1767, %v1771
      %v1773 = vshrl.u32 %v1337, 16
      %v1775 = vrot.slane %v1773, 4
      %v1776 = vor.u32 %v1775, %v1771
      %v1777 = vrot.slane %v1776, 4
      %v1779 = vshll.u32 %v1338, 16
      %v1781 = vrot.slane %v1779, 5
      %v1782 = vsel %vm1518, %v1777, %v1781
      %v1784 = vshrl.u32 %v1339, 16
      %v1786 = vrot.slane %v1784, 4
      %v1787 = vshll.u32 %v1339, 16
      %v1789 = vrot.slane %v1787, 5
      %v1790 = vor.u32 %v1786, %v1789
      %v1791 = vrot.slane %v1790, 4
      %v1793 = vshll.u32 %v1340, 16
      %v1795 = vrot.slane %v1793, 5
      %v1796 = vsel %vm1518, %v1791, %v1795
      %v1797 = vshrl.u32 %v1340, 16
      %v1799 = vrot.slane %v1797, 4
      %v1800 = vor.u32 %v1799, %v1795
      %v1801 = vrot.slane %v1800, 4
      %v1803 = vshll.u32 %v1341, 16
      %v1805 = vrot.slane %v1803, 5
      %v1806 = vsel %vm1518, %v1801, %v1805
      %v1808 = vshrl.u32 %v1342, 16
      %v1810 = vrot.slane %v1808, 4
      %v1811 = vshll.u32 %v1342, 16
      %v1813 = vrot.slane %v1811, 5
      %v1814 = vor.u32 %v1810, %v1813
      %v1815 = vrot.slane %v1814, 4
      %v1817 = vshll.u32 %v1343, 16
      %v1819 = vrot.slane %v1817, 5
      %v1820 = vsel %vm1518, %v1815, %v1819
      %v1821 = vshrl.u32 %v1343, 16
      %v1823 = vrot.slane %v1821, 4
      %v1824 = vor.u32 %v1823, %v1819
      %v1825 = vrot.slane %v1824, 4
      %v1827 = vshll.u32 %v1344, 16
      %v1829 = vrot.slane %v1827, 5
      %v1830 = vsel %vm1518, %v1825, %v1829
      %v1832 = vshrl.u32 %v1345, 16
      %v1834 = vrot.slane %v1832, 4
      %v1835 = vshll.u32 %v1345, 16
      %v1837 = vrot.slane %v1835, 5
      %v1838 = vor.u32 %v1834, %v1837
      %v1839 = vrot.slane %v1838, 4
      %v1841 = vshll.u32 %v1346, 16
      %v1843 = vrot.slane %v1841, 5
      %v1844 = vsel %vm1518, %v1839, %v1843
      %v1845 = vshrl.u32 %v1346, 16
      %v1847 = vrot.slane %v1845, 4
      %v1848 = vor.u32 %v1847, %v1843
      %v1849 = vrot.slane %v1848, 4
      %v1851 = vshll.u32 %v1347, 16
      %v1853 = vrot.slane %v1851, 5
      %v1854 = vsel %vm1518, %v1849, %v1853
      %v1856 = vshrl.u32 %v1348, 16
      %v1858 = vrot.slane %v1856, 4
      %v1859 = vshll.u32 %v1348, 16
      %v1861 = vrot.slane %v1859, 5
      %v1862 = vor.u32 %v1858, %v1861
      %v1863 = vrot.slane %v1862, 4
      %v1865 = vshll.u32 %v1349, 16
      %v1867 = vrot.slane %v1865, 5
      %v1868 = vsel %vm1518, %v1863, %v1867
      %v1869 = vshrl.u32 %v1349, 16
      %v1871 = vrot.slane %v1869, 4
      %v1872 = vor.u32 %v1871, %v1867
      %v1873 = vrot.slane %v1872, 4
      %v1875 = vshll.u32 %v1350, 16
      %v1877 = vrot.slane %v1875, 5
      %v1878 = vsel %vm1518, %v1873, %v1877
      %v1880 = vshrl.u32 %v1351, 16
      %v1882 = vrot.slane %v1880, 4
      %v1883 = vshll.u32 %v1351, 16
      %v1885 = vrot.slane %v1883, 5
      %v1886 = vor.u32 %v1882, %v1885
      %v1887 = vrot.slane %v1886, 4
      %v1889 = vshll.u32 %v1352, 16
      %v1891 = vrot.slane %v1889, 5
      %v1892 = vsel %vm1518, %v1887, %v1891
      %v1893 = vshrl.u32 %v1352, 16
      %v1895 = vrot.slane %v1893, 4
      %v1896 = vor.u32 %v1895, %v1891
      %v1897 = vrot.slane %v1896, 4
      %v1899 = vshll.u32 %v1353, 16
      %v1901 = vrot.slane %v1899, 5
      %v1902 = vsel %vm1518, %v1897, %v1901
      %v1904 = vshrl.u32 %v1354, 16
      %v1906 = vrot.slane %v1904, 4
      %v1907 = vshll.u32 %v1354, 16
      %v1909 = vrot.slane %v1907, 5
      %v1910 = vor.u32 %v1906, %v1909
      %v1911 = vrot.slane %v1910, 4
      %v1913 = vshll.u32 %v1355, 16
      %v1915 = vrot.slane %v1913, 5
      %v1916 = vsel %vm1518, %v1911, %v1915
      %v1917 = vshrl.u32 %v1355, 16
      %v1919 = vrot.slane %v1917, 4
      %v1920 = vor.u32 %v1919, %v1915
      %v1921 = vrot.slane %v1920, 4
      %v1923 = vshll.u32 %v1356, 16
      %v1925 = vrot.slane %v1923, 5
      %v1926 = vsel %vm1518, %v1921, %v1925
      %v1928 = vshrl.u32 %v1357, 16
      %v1930 = vrot.slane %v1928, 4
      %v1931 = vshll.u32 %v1357, 16
      %v1933 = vrot.slane %v1931, 5
      %v1934 = vor.u32 %v1930, %v1933
      %v1935 = vrot.slane %v1934, 4
      %v1937 = vshll.u32 %v1358, 16
      %v1939 = vrot.slane %v1937, 5
      %v1940 = vsel %vm1518, %v1935, %v1939
      %v1941 = vshrl.u32 %v1358, 16
      %v1943 = vrot.slane %v1941, 4
      %v1944 = vor.u32 %v1943, %v1939
      %v1945 = vrot.slane %v1944, 4
      %v1947 = vshll.u32 %v1359, 16
      %v1949 = vrot.slane %v1947, 5
      %v1950 = vsel %vm1518, %v1945, %v1949
      %v1951 = vunpack.c.l.b16 %v1532
      %v1952 = vunpack.c.l.b16 %v1542
      %v1953 = vunpack.c.l.b16 %v1556
      %v1954 = vunpack.c.l.b16 %v1566
      %v1955 = vunpack.c.l.b16 %v1580
      %v1956 = vunpack.c.l.b16 %v1590
      %v1957 = vunpack.c.l.b16 %v1604
      %v1958 = vunpack.c.l.b16 %v1614
      %v1959 = vunpack.c.l.b16 %v1628
      %v1960 = vunpack.c.l.b16 %v1638
      %v1961 = vunpack.c.l.b16 %v1652
      %v1962 = vunpack.c.l.b16 %v1662
      %v1963 = vunpack.c.l.b16 %v1676
      %v1964 = vunpack.c.l.b16 %v1686
      %v1965 = vunpack.c.l.b16 %v1700
      %v1966 = vunpack.c.l.b16 %v1710
      %v1967 = vunpack.c.l.b16 %v1724
      %v1968 = vunpack.c.l.b16 %v1734
      %v1969 = vunpack.c.l.b16 %v1748
      %v1970 = vunpack.c.l.b16 %v1758
      %v1971 = vunpack.c.l.b16 %v1772
      %v1972 = vunpack.c.l.b16 %v1782
      %v1973 = vunpack.c.l.b16 %v1796
      %v1974 = vunpack.c.l.b16 %v1806
      %v1975 = vunpack.c.l.b16 %v1820
      %v1976 = vunpack.c.l.b16 %v1830
      %v1977 = vunpack.c.l.b16 %v1844
      %v1978 = vunpack.c.l.b16 %v1854
      %v1979 = vunpack.c.l.b16 %v1868
      %v1980 = vunpack.c.l.b16 %v1878
      %v1981 = vunpack.c.l.b16 %v1892
      %v1982 = vunpack.c.l.b16 %v1902
      %v1983 = vpack.c.b16 %v1952, %v1951
      %v1984 = vpack.c.b16 %v1954, %v1953
      %v1985 = vpack.c.b16 %v1956, %v1955
      %v1986 = vpack.c.b16 %v1958, %v1957
      %v1987 = vpack.c.b16 %v1960, %v1959
      %v1988 = vpack.c.b16 %v1962, %v1961
      %v1989 = vpack.c.b16 %v1964, %v1963
      %v1990 = vpack.c.b16 %v1966, %v1965
      %v1991 = vpack.c.b16 %v1968, %v1967
      %v1992 = vpack.c.b16 %v1970, %v1969
      %v1993 = vpack.c.b16 %v1972, %v1971
      %v1994 = vpack.c.b16 %v1974, %v1973
      %v1995 = vpack.c.b16 %v1976, %v1975
      %v1996 = vpack.c.b16 %v1978, %v1977
      %v1997 = vpack.c.b16 %v1980, %v1979
      %v1998 = vpack.c.b16 %v1982, %v1981
      %v2015 = vunpack.c.l.b16 %v1916
      %v2016 = vunpack.c.l.b16 %v1926
      %v2017 = vpack.c.b16 %v2016, %v2015
      %v2019 = vunpack.c.l.b16 %v1940
      %v2020 = vunpack.c.l.b16 %v1950
      %v2021 = vpack.c.b16 %v2020, %v2019
      %s2023 = scalar_lea.vmem %s5, 192
      %v2024 = vld [vmem:[%s2023] sm:$0xf]
      %v2025 = vld [vmem:[%s2023 + $0x4] sm:$0xf]
      %v2026 = vld [vmem:[%s2023 + $0x8] sm:$0xf]
      %v2027 = vld [vmem:[%s2023 + $0xc] sm:$0xf]
      %v2028 = vld [vmem:[%s2023 + $0x10] sm:$0xf]
      %v2029 = vld [vmem:[%s2023 + $0x14] sm:$0xf]
      %v2030 = vld [vmem:[%s2023 + $0x18] sm:$0xf]
      %v2031 = vld [vmem:[%s2023 + $0x1c] sm:$0xf]
      %v2032 = vld [vmem:[%s2023 + $0x20] sm:$0xf]
      %v2033 = vld [vmem:[%s2023 + $0x24] sm:$0xf]
      %v2034 = vld [vmem:[%s2023 + $0x28] sm:$0xf]
      %v2035 = vld [vmem:[%s2023 + $0x2c] sm:$0xf]
      %v2036 = vld [vmem:[%s2023 + $0x30] sm:$0xf]
      %v2037 = vld [vmem:[%s2023 + $0x34] sm:$0xf]
      %v2038 = vld [vmem:[%s2023 + $0x38] sm:$0xf]
      %v2039 = vld [vmem:[%s2023 + $0x3c] sm:$0xf]
      %v2040 = vld [vmem:[%s2023 + $0x40] sm:$0xf]
      %v2041 = vld [vmem:[%s2023 + $0x44] sm:$0xf]
      %v2042 = vld [vmem:[%s2023 + $0x48] sm:$0xf]
      %v2043 = vld [vmem:[%s2023 + $0x4c] sm:$0xf]
      %v2044 = vld [vmem:[%s2023 + $0x50] sm:$0xf]
      %v2045 = vld [vmem:[%s2023 + $0x54] sm:$0xf]
      %v2046 = vld [vmem:[%s2023 + $0x58] sm:$0xf]
      %v2047 = vld [vmem:[%s2023 + $0x5c] sm:$0xf]
      %v2048 = vld [vmem:[%s2023 + $0x60] sm:$0xf]
      %v2049 = vld [vmem:[%s2023 + $0x64] sm:$0xf]
      %v2050 = vld [vmem:[%s2023 + $0x68] sm:$0xf]
      %v2051 = vld [vmem:[%s2023 + $0x6c] sm:$0xf]
      %v2052 = vld [vmem:[%s2023 + $0x70] sm:$0xf]
      %v2053 = vld [vmem:[%s2023 + $0x74] sm:$0xf]
      %v2054 = vld [vmem:[%s2023 + $0x78] sm:$0xf]
      %v2055 = vld [vmem:[%s2023 + $0x7c] sm:$0xf]
      %v2056 = vld [vmem:[%s2023 + $0x80] sm:$0xf]
      %v2057 = vld [vmem:[%s2023 + $0x84] sm:$0xf]
      %v2058 = vld [vmem:[%s2023 + $0x88] sm:$0xf]
      %v2059 = vld [vmem:[%s2023 + $0x8c] sm:$0xf]
      %v2060 = vld [vmem:[%s2023 + $0x90] sm:$0xf]
      %v2061 = vld [vmem:[%s2023 + $0x94] sm:$0xf]
      %v2062 = vld [vmem:[%s2023 + $0x98] sm:$0xf]
      %v2063 = vld [vmem:[%s2023 + $0x9c] sm:$0xf]
      %v2064 = vld [vmem:[%s2023 + $0xa0] sm:$0xf]
      %v2065 = vld [vmem:[%s2023 + $0xa4] sm:$0xf]
      %v2066 = vld [vmem:[%s2023 + $0xa8] sm:$0xf]
      %v2067 = vld [vmem:[%s2023 + $0xac] sm:$0xf]
      %v2068 = vld [vmem:[%s2023 + $0xb0] sm:$0xf]
      %v2069 = vld [vmem:[%s2023 + $0xb4] sm:$0xf]
      %v2070 = vld [vmem:[%s2023 + $0xb8] sm:$0xf]
      %v2071 = vld [vmem:[%s2023 + $0xbc] sm:$0xf]
      %v2120 = vunpack.c.l.b16 %v2024
      %v2121 = vunpack.c.l.b16 %v2025
      %v2122 = vunpack.c.l.b16 %v2026
      %v2123 = vunpack.c.l.b16 %v2027
      %v2124 = vunpack.c.l.b16 %v2028
      %v2125 = vunpack.c.l.b16 %v2029
      %v2126 = vunpack.c.l.b16 %v2030
      %v2127 = vunpack.c.l.b16 %v2031
      %v2128 = vunpack.c.l.b16 %v2032
      %v2129 = vunpack.c.l.b16 %v2033
      %v2130 = vunpack.c.l.b16 %v2034
      %v2131 = vunpack.c.l.b16 %v2035
      %v2132 = vunpack.c.l.b16 %v2036
      %v2133 = vunpack.c.l.b16 %v2037
      %v2134 = vunpack.c.l.b16 %v2038
      %v2135 = vunpack.c.l.b16 %v2039
      %v2136 = vunpack.c.l.b16 %v2040
      %v2137 = vunpack.c.l.b16 %v2041
      %v2138 = vunpack.c.l.b16 %v2042
      %v2139 = vunpack.c.l.b16 %v2043
      %v2140 = vunpack.c.l.b16 %v2044
      %v2141 = vunpack.c.l.b16 %v2045
      %v2142 = vunpack.c.l.b16 %v2046
      %v2143 = vunpack.c.l.b16 %v2047
      %v2144 = vunpack.c.l.b16 %v2048
      %v2145 = vunpack.c.l.b16 %v2049
      %v2146 = vunpack.c.l.b16 %v2050
      %v2147 = vunpack.c.l.b16 %v2051
      %v2148 = vunpack.c.l.b16 %v2052
      %v2149 = vunpack.c.l.b16 %v2053
      %v2150 = vunpack.c.l.b16 %v2054
      %v2151 = vunpack.c.l.b16 %v2055
      %v2152 = vunpack.c.l.b16 %v2056
      %v2153 = vunpack.c.l.b16 %v2057
      %v2154 = vunpack.c.l.b16 %v2058
      %v2155 = vunpack.c.l.b16 %v2059
      %v2156 = vunpack.c.l.b16 %v2060
      %v2157 = vunpack.c.l.b16 %v2061
      %v2158 = vunpack.c.l.b16 %v2062
      %v2159 = vunpack.c.l.b16 %v2063
      %v2160 = vunpack.c.l.b16 %v2064
      %v2161 = vunpack.c.l.b16 %v2065
      %v2162 = vunpack.c.l.b16 %v2066
      %v2163 = vunpack.c.l.b16 %v2067
      %v2164 = vunpack.c.l.b16 %v2068
      %v2165 = vunpack.c.l.b16 %v2069
      %v2166 = vunpack.c.l.b16 %v2070
      %v2167 = vunpack.c.l.b16 %v2071
      %v2168 = vpack.c.b16 %v2121, %v2120
      %v2169 = vpack.c.b16 %v2123, %v2122
      %v2170 = vpack.c.b16 %v2125, %v2124
      %v2171 = vpack.c.b16 %v2127, %v2126
      %v2172 = vpack.c.b16 %v2129, %v2128
      %v2173 = vpack.c.b16 %v2131, %v2130
      %v2174 = vpack.c.b16 %v2133, %v2132
      %v2175 = vpack.c.b16 %v2135, %v2134
      %v2176 = vpack.c.b16 %v2137, %v2136
      %v2177 = vpack.c.b16 %v2139, %v2138
      %v2178 = vpack.c.b16 %v2141, %v2140
      %v2179 = vpack.c.b16 %v2143, %v2142
      %v2180 = vpack.c.b16 %v2145, %v2144
      %v2181 = vpack.c.b16 %v2147, %v2146
      %v2182 = vpack.c.b16 %v2149, %v2148
      %v2183 = vpack.c.b16 %v2151, %v2150
      %v2184 = vpack.c.b16 %v2153, %v2152
      %v2185 = vpack.c.b16 %v2155, %v2154
      %v2186 = vpack.c.b16 %v2157, %v2156
      %v2187 = vpack.c.b16 %v2159, %v2158
      %v2188 = vpack.c.b16 %v2161, %v2160
      %v2189 = vpack.c.b16 %v2163, %v2162
      %v2190 = vpack.c.b16 %v2165, %v2164
      %v2191 = vpack.c.b16 %v2167, %v2166
      %2216 = vmatpush.bf16.msra.mxu0 %v2175
      %2217 = vmatpush.bf16.msra.mxu0 %v2174
      %2218 = vmatpush.bf16.msra.mxu0 %v2173
      %2219 = vmatpush.bf16.msra.mxu0 %v2172
      %2220 = vmatpush.bf16.msra.mxu0 %v2171
      %2221 = vmatpush.bf16.msra.mxu0 %v2170
      %2222 = vmatpush.bf16.msra.mxu0 %v2169
      %2223 = vmatpush.bf16.msra.mxu0 %v2168
      %2224 = vmatmul.bf16.gmra.mxu0 %v1983
      %v2225 = vpop.f32.mrf.mxu0
      %v2226 = vadd.f32 0.0, %v2225
      %v2227 = vpop.f32.mrf.mxu0
      %v2228 = vadd.f32 0.0, %v2227
      %2229 = vmatmul.bf16.gmra.mxu0 %v1984
      %v2230 = vpop.f32.mrf.mxu0
      %v2231 = vadd.f32 0.0, %v2230
      %v2232 = vpop.f32.mrf.mxu0
      %v2233 = vadd.f32 0.0, %v2232
      %2234 = vmatmul.bf16.gmra.mxu0 %v1985
      %v2235 = vpop.f32.mrf.mxu0
      %v2236 = vadd.f32 0.0, %v2235
      %v2237 = vpop.f32.mrf.mxu0
      %v2238 = vadd.f32 0.0, %v2237
      %2239 = vmatmul.bf16.gmra.mxu0 %v1986
      %v2240 = vpop.f32.mrf.mxu0
      %v2241 = vadd.f32 0.0, %v2240
      %v2242 = vpop.f32.mrf.mxu0
      %v2243 = vadd.f32 0.0, %v2242
      %2244 = vmatmul.bf16.gmra.mxu0 %v1987
      %v2245 = vpop.f32.mrf.mxu0
      %v2246 = vadd.f32 0.0, %v2245
      %v2247 = vpop.f32.mrf.mxu0
      %v2248 = vadd.f32 0.0, %v2247
      %2249 = vmatmul.bf16.gmra.mxu0 %v1988
      %v2250 = vpop.f32.mrf.mxu0
      %v2251 = vadd.f32 0.0, %v2250
      %v2252 = vpop.f32.mrf.mxu0
      %v2253 = vadd.f32 0.0, %v2252
      %2254 = vmatmul.bf16.gmra.mxu0 %v1989
      %v2255 = vpop.f32.mrf.mxu0
      %v2256 = vadd.f32 0.0, %v2255
      %v2257 = vpop.f32.mrf.mxu0
      %v2258 = vadd.f32 0.0, %v2257
      %2259 = vmatmul.bf16.gmra.mxu0 %v1990
      %v2260 = vpop.f32.mrf.mxu0
      %v2261 = vadd.f32 0.0, %v2260
      %v2262 = vpop.f32.mrf.mxu0
      %v2263 = vadd.f32 0.0, %v2262
      %2264 = vmatmul.bf16.gmra.mxu0 %v1991
      %v2265 = vpop.f32.mrf.mxu0
      %v2266 = vadd.f32 0.0, %v2265
      %v2267 = vpop.f32.mrf.mxu0
      %v2268 = vadd.f32 0.0, %v2267
      %2269 = vmatmul.bf16.gmra.mxu0 %v1992
      %v2270 = vpop.f32.mrf.mxu0
      %v2271 = vadd.f32 0.0, %v2270
      %v2272 = vpop.f32.mrf.mxu0
      %v2273 = vadd.f32 0.0, %v2272
      %2274 = vmatmul.bf16.gmra.mxu0 %v1993
      %v2275 = vpop.f32.mrf.mxu0
      %v2276 = vadd.f32 0.0, %v2275
      %v2277 = vpop.f32.mrf.mxu0
      %v2278 = vadd.f32 0.0, %v2277
      %2279 = vmatmul.bf16.gmra.mxu0 %v1994
      %v2280 = vpop.f32.mrf.mxu0
      %v2281 = vadd.f32 0.0, %v2280
      %v2282 = vpop.f32.mrf.mxu0
      %v2283 = vadd.f32 0.0, %v2282
      %2284 = vmatmul.bf16.gmra.mxu0 %v1995
      %v2285 = vpop.f32.mrf.mxu0
      %v2286 = vadd.f32 0.0, %v2285
      %v2287 = vpop.f32.mrf.mxu0
      %v2288 = vadd.f32 0.0, %v2287
      %2289 = vmatmul.bf16.gmra.mxu0 %v1996
      %v2290 = vpop.f32.mrf.mxu0
      %v2291 = vadd.f32 0.0, %v2290
      %v2292 = vpop.f32.mrf.mxu0
      %v2293 = vadd.f32 0.0, %v2292
      %2294 = vmatmul.bf16.gmra.mxu0 %v1997
      %v2295 = vpop.f32.mrf.mxu0
      %v2296 = vadd.f32 0.0, %v2295
      %v2297 = vpop.f32.mrf.mxu0
      %v2298 = vadd.f32 0.0, %v2297
      %2299 = vmatmul.bf16.gmra.mxu0 %v1998
      %v2300 = vpop.f32.mrf.mxu0
      %v2301 = vadd.f32 0.0, %v2300
      %v2302 = vpop.f32.mrf.mxu0
      %v2303 = vadd.f32 0.0, %v2302
      %2304 = vdwg.mxu0
      %2305 = vmatpush.bf16.msra.mxu0 %v2183
      %2306 = vmatpush.bf16.msra.mxu0 %v2182
      %2307 = vmatpush.bf16.msra.mxu0 %v2181
      %2308 = vmatpush.bf16.msra.mxu0 %v2180
      %2309 = vmatpush.bf16.msra.mxu0 %v2179
      %2310 = vmatpush.bf16.msra.mxu0 %v2178
      %2311 = vmatpush.bf16.msra.mxu0 %v2177
      %2312 = vmatpush.bf16.msra.mxu0 %v2176
      %2313 = vmatmul.bf16.gmra.mxu0 %v1984
      %v2314 = vpop.f32.mrf.mxu0
      %v2315 = vadd.f32 %v2226, %v2314
      %v2316 = vpop.f32.mrf.mxu0
      %v2317 = vadd.f32 %v2228, %v2316
      %2318 = vmatmul.bf16.gmra.mxu0 %v1985
      %v2319 = vpop.f32.mrf.mxu0
      %v2320 = vadd.f32 %v2231, %v2319
      %v2321 = vpop.f32.mrf.mxu0
      %v2322 = vadd.f32 %v2233, %v2321
      %2323 = vmatmul.bf16.gmra.mxu0 %v1986
      %v2324 = vpop.f32.mrf.mxu0
      %v2325 = vadd.f32 %v2236, %v2324
      %v2326 = vpop.f32.mrf.mxu0
      %v2327 = vadd.f32 %v2238, %v2326
      %2328 = vmatmul.bf16.gmra.mxu0 %v1987
      %v2329 = vpop.f32.mrf.mxu0
      %v2330 = vadd.f32 %v2241, %v2329
      %v2331 = vpop.f32.mrf.mxu0
      %v2332 = vadd.f32 %v2243, %v2331
      %2333 = vmatmul.bf16.gmra.mxu0 %v1988
      %v2334 = vpop.f32.mrf.mxu0
      %v2335 = vadd.f32 %v2246, %v2334
      %v2336 = vpop.f32.mrf.mxu0
      %v2337 = vadd.f32 %v2248, %v2336
      %2338 = vmatmul.bf16.gmra.mxu0 %v1989
      %v2339 = vpop.f32.mrf.mxu0
      %v2340 = vadd.f32 %v2251, %v2339
      %v2341 = vpop.f32.mrf.mxu0
      %v2342 = vadd.f32 %v2253, %v2341
      %2343 = vmatmul.bf16.gmra.mxu0 %v1990
      %v2344 = vpop.f32.mrf.mxu0
      %v2345 = vadd.f32 %v2256, %v2344
      %v2346 = vpop.f32.mrf.mxu0
      %v2347 = vadd.f32 %v2258, %v2346
      %2348 = vmatmul.bf16.gmra.mxu0 %v1991
      %v2349 = vpop.f32.mrf.mxu0
      %v2350 = vadd.f32 %v2261, %v2349
      %v2351 = vpop.f32.mrf.mxu0
      %v2352 = vadd.f32 %v2263, %v2351
      %2353 = vmatmul.bf16.gmra.mxu0 %v1992
      %v2354 = vpop.f32.mrf.mxu0
      %v2355 = vadd.f32 %v2266, %v2354
      %v2356 = vpop.f32.mrf.mxu0
      %v2357 = vadd.f32 %v2268, %v2356
      %2358 = vmatmul.bf16.gmra.mxu0 %v1993
      %v2359 = vpop.f32.mrf.mxu0
      %v2360 = vadd.f32 %v2271, %v2359
      %v2361 = vpop.f32.mrf.mxu0
      %v2362 = vadd.f32 %v2273, %v2361
      %2363 = vmatmul.bf16.gmra.mxu0 %v1994
      %v2364 = vpop.f32.mrf.mxu0
      %v2365 = vadd.f32 %v2276, %v2364
      %v2366 = vpop.f32.mrf.mxu0
      %v2367 = vadd.f32 %v2278, %v2366
      %2368 = vmatmul.bf16.gmra.mxu0 %v1995
      %v2369 = vpop.f32.mrf.mxu0
      %v2370 = vadd.f32 %v2281, %v2369
      %v2371 = vpop.f32.mrf.mxu0
      %v2372 = vadd.f32 %v2283, %v2371
      %2373 = vmatmul.bf16.gmra.mxu0 %v1996
      %v2374 = vpop.f32.mrf.mxu0
      %v2375 = vadd.f32 %v2286, %v2374
      %v2376 = vpop.f32.mrf.mxu0
      %v2377 = vadd.f32 %v2288, %v2376
      %2378 = vmatmul.bf16.gmra.mxu0 %v1997
      %v2379 = vpop.f32.mrf.mxu0
      %v2380 = vadd.f32 %v2291, %v2379
      %v2381 = vpop.f32.mrf.mxu0
      %v2382 = vadd.f32 %v2293, %v2381
      %2383 = vmatmul.bf16.gmra.mxu0 %v1998
      %v2384 = vpop.f32.mrf.mxu0
      %v2385 = vadd.f32 %v2296, %v2384
      %v2386 = vpop.f32.mrf.mxu0
      %v2387 = vadd.f32 %v2298, %v2386
      %2388 = vmatmul.bf16.gmra.mxu0 %v2017
      %v2389 = vpop.f32.mrf.mxu0
      %v2390 = vadd.f32 %v2301, %v2389
      %v2391 = vpop.f32.mrf.mxu0
      %v2392 = vadd.f32 %v2303, %v2391
      %2393 = vdwg.mxu0
      %2394 = vmatpush.bf16.msra.mxu0 %v2191
      %2395 = vmatpush.bf16.msra.mxu0 %v2190
      %2396 = vmatpush.bf16.msra.mxu0 %v2189
      %2397 = vmatpush.bf16.msra.mxu0 %v2188
      %2398 = vmatpush.bf16.msra.mxu0 %v2187
      %2399 = vmatpush.bf16.msra.mxu0 %v2186
      %2400 = vmatpush.bf16.msra.mxu0 %v2185
      %2401 = vmatpush.bf16.msra.mxu0 %v2184
      %2402 = vmatmul.bf16.gmra.mxu0 %v1985
      %v2403 = vpop.f32.mrf.mxu0
      %v2404 = vadd.f32 %v2315, %v2403
      %v2405 = vpop.f32.mrf.mxu0
      %v2406 = vadd.f32 %v2317, %v2405
      %2407 = vmatmul.bf16.gmra.mxu0 %v1986
      %v2408 = vpop.f32.mrf.mxu0
      %v2409 = vadd.f32 %v2320, %v2408
      %v2410 = vpop.f32.mrf.mxu0
      %v2411 = vadd.f32 %v2322, %v2410
      %2412 = vmatmul.bf16.gmra.mxu0 %v1987
      %v2413 = vpop.f32.mrf.mxu0
      %v2414 = vadd.f32 %v2325, %v2413
      %v2415 = vpop.f32.mrf.mxu0
      %v2416 = vadd.f32 %v2327, %v2415
      %2417 = vmatmul.bf16.gmra.mxu0 %v1988
      %v2418 = vpop.f32.mrf.mxu0
      %v2419 = vadd.f32 %v2330, %v2418
      %v2420 = vpop.f32.mrf.mxu0
      %v2421 = vadd.f32 %v2332, %v2420
      %2422 = vmatmul.bf16.gmra.mxu0 %v1989
      %v2423 = vpop.f32.mrf.mxu0
      %v2424 = vadd.f32 %v2335, %v2423
      %v2425 = vpop.f32.mrf.mxu0
      %v2426 = vadd.f32 %v2337, %v2425
      %2427 = vmatmul.bf16.gmra.mxu0 %v1990
      %v2428 = vpop.f32.mrf.mxu0
      %v2429 = vadd.f32 %v2340, %v2428
      %v2430 = vpop.f32.mrf.mxu0
      %v2431 = vadd.f32 %v2342, %v2430
      %2432 = vmatmul.bf16.gmra.mxu0 %v1991
      %v2433 = vpop.f32.mrf.mxu0
      %v2434 = vadd.f32 %v2345, %v2433
      %v2435 = vpop.f32.mrf.mxu0
      %v2436 = vadd.f32 %v2347, %v2435
      %2437 = vmatmul.bf16.gmra.mxu0 %v1992
      %v2438 = vpop.f32.mrf.mxu0
      %v2439 = vadd.f32 %v2350, %v2438
      %v2440 = vpop.f32.mrf.mxu0
      %v2441 = vadd.f32 %v2352, %v2440
      %2442 = vmatmul.bf16.gmra.mxu0 %v1993
      %v2443 = vpop.f32.mrf.mxu0
      %v2444 = vadd.f32 %v2355, %v2443
      %v2445 = vpop.f32.mrf.mxu0
      %v2446 = vadd.f32 %v2357, %v2445
      %2447 = vmatmul.bf16.gmra.mxu0 %v1994
      %v2448 = vpop.f32.mrf.mxu0
      %v2449 = vadd.f32 %v2360, %v2448
      %v2450 = vpop.f32.mrf.mxu0
      %v2451 = vadd.f32 %v2362, %v2450
      %2452 = vmatmul.bf16.gmra.mxu0 %v1995
      %v2453 = vpop.f32.mrf.mxu0
      %v2454 = vadd.f32 %v2365, %v2453
      %v2455 = vpop.f32.mrf.mxu0
      %v2456 = vadd.f32 %v2367, %v2455
      %2457 = vmatmul.bf16.gmra.mxu0 %v1996
      %v2458 = vpop.f32.mrf.mxu0
      %v2459 = vadd.f32 %v2370, %v2458
      %v2460 = vpop.f32.mrf.mxu0
      %v2461 = vadd.f32 %v2372, %v2460
      %2462 = vmatmul.bf16.gmra.mxu0 %v1997
      %v2463 = vpop.f32.mrf.mxu0
      %v2464 = vadd.f32 %v2375, %v2463
      %v2465 = vpop.f32.mrf.mxu0
      %v2466 = vadd.f32 %v2377, %v2465
      %2467 = vmatmul.bf16.gmra.mxu0 %v1998
      %v2468 = vpop.f32.mrf.mxu0
      %v2469 = vadd.f32 %v2380, %v2468
      %v2470 = vpop.f32.mrf.mxu0
      %v2471 = vadd.f32 %v2382, %v2470
      %2472 = vmatmul.bf16.gmra.mxu0 %v2017
      %v2473 = vpop.f32.mrf.mxu0
      %v2474 = vadd.f32 %v2385, %v2473
      %v2475 = vpop.f32.mrf.mxu0
      %v2476 = vadd.f32 %v2387, %v2475
      %2477 = vmatmul.bf16.gmra.mxu0 %v2021
      %v2478 = vpop.f32.mrf.mxu0
      %v2479 = vadd.f32 %v2390, %v2478
      %v2480 = vpop.f32.mrf.mxu0
      %v2481 = vadd.f32 %v2392, %v2480
      %2482 = vdwg.mxu0
      %v2531 = vunpack.c.l.b16 %v1468
      %v2532 = vunpack.c.l.b16 %v1469
      %v2533 = vunpack.c.l.b16 %v1470
      %v2534 = vunpack.c.l.b16 %v1471
      %v2535 = vunpack.c.l.b16 %v1472
      %v2536 = vunpack.c.l.b16 %v1473
      %v2537 = vunpack.c.l.b16 %v1474
      %v2538 = vunpack.c.l.b16 %v1475
      %v2539 = vunpack.c.l.b16 %v1476
      %v2540 = vunpack.c.l.b16 %v1477
      %v2541 = vunpack.c.l.b16 %v1478
      %v2542 = vunpack.c.l.b16 %v1479
      %v2543 = vunpack.c.l.b16 %v1480
      %v2544 = vunpack.c.l.b16 %v1481
      %v2545 = vunpack.c.l.b16 %v1482
      %v2546 = vunpack.c.l.b16 %v1483
      %v2547 = vunpack.c.l.b16 %v1484
      %v2548 = vunpack.c.l.b16 %v1485
      %v2549 = vunpack.c.l.b16 %v1486
      %v2550 = vunpack.c.l.b16 %v1487
      %v2551 = vunpack.c.l.b16 %v1488
      %v2552 = vunpack.c.l.b16 %v1489
      %v2553 = vunpack.c.l.b16 %v1490
      %v2554 = vunpack.c.l.b16 %v1491
      %v2555 = vunpack.c.l.b16 %v1492
      %v2556 = vunpack.c.l.b16 %v1493
      %v2557 = vunpack.c.l.b16 %v1494
      %v2558 = vunpack.c.l.b16 %v1495
      %v2559 = vunpack.c.l.b16 %v1496
      %v2560 = vunpack.c.l.b16 %v1497
      %v2561 = vunpack.c.l.b16 %v1498
      %v2562 = vunpack.c.l.b16 %v1499
      %v2563 = vunpack.c.l.b16 %v1500
      %v2564 = vunpack.c.l.b16 %v1501
      %v2565 = vunpack.c.l.b16 %v1502
      %v2566 = vunpack.c.l.b16 %v1503
      %v2567 = vunpack.c.l.b16 %v1504
      %v2568 = vunpack.c.l.b16 %v1505
      %v2569 = vunpack.c.l.b16 %v1506
      %v2570 = vunpack.c.l.b16 %v1507
      %v2571 = vunpack.c.l.b16 %v1508
      %v2572 = vunpack.c.l.b16 %v1509
      %v2573 = vunpack.c.l.b16 %v1510
      %v2574 = vunpack.c.l.b16 %v1511
      %v2575 = vunpack.c.l.b16 %v1512
      %v2576 = vunpack.c.l.b16 %v1513
      %v2577 = vunpack.c.l.b16 %v1514
      %v2578 = vunpack.c.l.b16 %v1515
      %v2579 = vpack.c.b16 %v2532, %v2531
      %v2580 = vpack.c.b16 %v2534, %v2533
      %v2581 = vpack.c.b16 %v2536, %v2535
      %v2582 = vpack.c.b16 %v2538, %v2537
      %v2583 = vpack.c.b16 %v2540, %v2539
      %v2584 = vpack.c.b16 %v2542, %v2541
      %v2585 = vpack.c.b16 %v2544, %v2543
      %v2586 = vpack.c.b16 %v2546, %v2545
      %v2587 = vpack.c.b16 %v2548, %v2547
      %v2588 = vpack.c.b16 %v2550, %v2549
      %v2589 = vpack.c.b16 %v2552, %v2551
      %v2590 = vpack.c.b16 %v2554, %v2553
      %v2591 = vpack.c.b16 %v2556, %v2555
      %v2592 = vpack.c.b16 %v2558, %v2557
      %v2593 = vpack.c.b16 %v2560, %v2559
      %v2594 = vpack.c.b16 %v2562, %v2561
      %v2595 = vpack.c.b16 %v2564, %v2563
      %v2596 = vpack.c.b16 %v2566, %v2565
      %v2597 = vpack.c.b16 %v2568, %v2567
      %v2598 = vpack.c.b16 %v2570, %v2569
      %v2599 = vpack.c.b16 %v2572, %v2571
      %v2600 = vpack.c.b16 %v2574, %v2573
      %v2601 = vpack.c.b16 %v2576, %v2575
      %v2602 = vpack.c.b16 %v2578, %v2577
      %2627 = vmatpush.bf16.msra.mxu0 %v2586
      %2628 = vmatpush.bf16.msra.mxu0 %v2585
      %2629 = vmatpush.bf16.msra.mxu0 %v2584
      %2630 = vmatpush.bf16.msra.mxu0 %v2583
      %2631 = vmatpush.bf16.msra.mxu0 %v2582
      %2632 = vmatpush.bf16.msra.mxu0 %v2581
      %2633 = vmatpush.bf16.msra.mxu0 %v2580
      %2634 = vmatpush.bf16.msra.mxu0 %v2579
      %2635 = vmatmul.bf16.gmra.mxu0 %v1424
      %v2636 = vpop.f32.mrf.mxu0
      %v2637 = vadd.f32 %v2404, %v2636
      %v2638 = vpop.f32.mrf.mxu0
      %v2639 = vadd.f32 %v2406, %v2638
      %2640 = vmatmul.bf16.gmra.mxu0 %v1425
      %v2641 = vpop.f32.mrf.mxu0
      %v2642 = vadd.f32 %v2409, %v2641
      %v2643 = vpop.f32.mrf.mxu0
      %v2644 = vadd.f32 %v2411, %v2643
      %2645 = vmatmul.bf16.gmra.mxu0 %v1426
      %v2646 = vpop.f32.mrf.mxu0
      %v2647 = vadd.f32 %v2414, %v2646
      %v2648 = vpop.f32.mrf.mxu0
      %v2649 = vadd.f32 %v2416, %v2648
      %2650 = vmatmul.bf16.gmra.mxu0 %v1427
      %v2651 = vpop.f32.mrf.mxu0
      %v2652 = vadd.f32 %v2419, %v2651
      %v2653 = vpop.f32.mrf.mxu0
      %v2654 = vadd.f32 %v2421, %v2653
      %2655 = vmatmul.bf16.gmra.mxu0 %v1428
      %v2656 = vpop.f32.mrf.mxu0
      %v2657 = vadd.f32 %v2424, %v2656
      %v2658 = vpop.f32.mrf.mxu0
      %v2659 = vadd.f32 %v2426, %v2658
      %2660 = vmatmul.bf16.gmra.mxu0 %v1429
      %v2661 = vpop.f32.mrf.mxu0
      %v2662 = vadd.f32 %v2429, %v2661
      %v2663 = vpop.f32.mrf.mxu0
      %v2664 = vadd.f32 %v2431, %v2663
      %2665 = vmatmul.bf16.gmra.mxu0 %v1430
      %v2666 = vpop.f32.mrf.mxu0
      %v2667 = vadd.f32 %v2434, %v2666
      %v2668 = vpop.f32.mrf.mxu0
      %v2669 = vadd.f32 %v2436, %v2668
      %2670 = vmatmul.bf16.gmra.mxu0 %v1431
      %v2671 = vpop.f32.mrf.mxu0
      %v2672 = vadd.f32 %v2439, %v2671
      %v2673 = vpop.f32.mrf.mxu0
      %v2674 = vadd.f32 %v2441, %v2673
      %2675 = vmatmul.bf16.gmra.mxu0 %v1432
      %v2676 = vpop.f32.mrf.mxu0
      %v2677 = vadd.f32 %v2444, %v2676
      %v2678 = vpop.f32.mrf.mxu0
      %v2679 = vadd.f32 %v2446, %v2678
      %2680 = vmatmul.bf16.gmra.mxu0 %v1433
      %v2681 = vpop.f32.mrf.mxu0
      %v2682 = vadd.f32 %v2449, %v2681
      %v2683 = vpop.f32.mrf.mxu0
      %v2684 = vadd.f32 %v2451, %v2683
      %2685 = vmatmul.bf16.gmra.mxu0 %v1434
      %v2686 = vpop.f32.mrf.mxu0
      %v2687 = vadd.f32 %v2454, %v2686
      %v2688 = vpop.f32.mrf.mxu0
      %v2689 = vadd.f32 %v2456, %v2688
      %2690 = vmatmul.bf16.gmra.mxu0 %v1435
      %v2691 = vpop.f32.mrf.mxu0
      %v2692 = vadd.f32 %v2459, %v2691
      %v2693 = vpop.f32.mrf.mxu0
      %v2694 = vadd.f32 %v2461, %v2693
      %2695 = vmatmul.bf16.gmra.mxu0 %v1436
      %v2696 = vpop.f32.mrf.mxu0
      %v2697 = vadd.f32 %v2464, %v2696
      %v2698 = vpop.f32.mrf.mxu0
      %v2699 = vadd.f32 %v2466, %v2698
      %2700 = vmatmul.bf16.gmra.mxu0 %v1437
      %v2701 = vpop.f32.mrf.mxu0
      %v2702 = vadd.f32 %v2469, %v2701
      %v2703 = vpop.f32.mrf.mxu0
      %v2704 = vadd.f32 %v2471, %v2703
      %2705 = vmatmul.bf16.gmra.mxu0 %v1438
      %v2706 = vpop.f32.mrf.mxu0
      %v2707 = vadd.f32 %v2474, %v2706
      %v2708 = vpop.f32.mrf.mxu0
      %v2709 = vadd.f32 %v2476, %v2708
      %2710 = vmatmul.bf16.gmra.mxu0 %v1439
      %v2711 = vpop.f32.mrf.mxu0
      %v2712 = vadd.f32 %v2479, %v2711
      %v2713 = vpop.f32.mrf.mxu0
      %v2714 = vadd.f32 %v2481, %v2713
      %2715 = vdwg.mxu0
      %2716 = vmatpush.bf16.msra.mxu0 %v2594
      %2717 = vmatpush.bf16.msra.mxu0 %v2593
      %2718 = vmatpush.bf16.msra.mxu0 %v2592
      %2719 = vmatpush.bf16.msra.mxu0 %v2591
      %2720 = vmatpush.bf16.msra.mxu0 %v2590
      %2721 = vmatpush.bf16.msra.mxu0 %v2589
      %2722 = vmatpush.bf16.msra.mxu0 %v2588
      %2723 = vmatpush.bf16.msra.mxu0 %v2587
      %2724 = vmatmul.bf16.gmra.mxu0 %v1425
      %v2725 = vpop.f32.mrf.mxu0
      %v2726 = vadd.f32 %v2637, %v2725
      %v2727 = vpop.f32.mrf.mxu0
      %v2728 = vadd.f32 %v2639, %v2727
      %2729 = vmatmul.bf16.gmra.mxu0 %v1426
      %v2730 = vpop.f32.mrf.mxu0
      %v2731 = vadd.f32 %v2642, %v2730
      %v2732 = vpop.f32.mrf.mxu0
      %v2733 = vadd.f32 %v2644, %v2732
      %2734 = vmatmul.bf16.gmra.mxu0 %v1427
      %v2735 = vpop.f32.mrf.mxu0
      %v2736 = vadd.f32 %v2647, %v2735
      %v2737 = vpop.f32.mrf.mxu0
      %v2738 = vadd.f32 %v2649, %v2737
      %2739 = vmatmul.bf16.gmra.mxu0 %v1428
      %v2740 = vpop.f32.mrf.mxu0
      %v2741 = vadd.f32 %v2652, %v2740
      %v2742 = vpop.f32.mrf.mxu0
      %v2743 = vadd.f32 %v2654, %v2742
      %2744 = vmatmul.bf16.gmra.mxu0 %v1429
      %v2745 = vpop.f32.mrf.mxu0
      %v2746 = vadd.f32 %v2657, %v2745
      %v2747 = vpop.f32.mrf.mxu0
      %v2748 = vadd.f32 %v2659, %v2747
      %2749 = vmatmul.bf16.gmra.mxu0 %v1430
      %v2750 = vpop.f32.mrf.mxu0
      %v2751 = vadd.f32 %v2662, %v2750
      %v2752 = vpop.f32.mrf.mxu0
      %v2753 = vadd.f32 %v2664, %v2752
      %2754 = vmatmul.bf16.gmra.mxu0 %v1431
      %v2755 = vpop.f32.mrf.mxu0
      %v2756 = vadd.f32 %v2667, %v2755
      %v2757 = vpop.f32.mrf.mxu0
      %v2758 = vadd.f32 %v2669, %v2757
      %2759 = vmatmul.bf16.gmra.mxu0 %v1432
      %v2760 = vpop.f32.mrf.mxu0
      %v2761 = vadd.f32 %v2672, %v2760
      %v2762 = vpop.f32.mrf.mxu0
      %v2763 = vadd.f32 %v2674, %v2762
      %2764 = vmatmul.bf16.gmra.mxu0 %v1433
      %v2765 = vpop.f32.mrf.mxu0
      %v2766 = vadd.f32 %v2677, %v2765
      %v2767 = vpop.f32.mrf.mxu0
      %v2768 = vadd.f32 %v2679, %v2767
      %2769 = vmatmul.bf16.gmra.mxu0 %v1434
      %v2770 = vpop.f32.mrf.mxu0
      %v2771 = vadd.f32 %v2682, %v2770
      %v2772 = vpop.f32.mrf.mxu0
      %v2773 = vadd.f32 %v2684, %v2772
      %2774 = vmatmul.bf16.gmra.mxu0 %v1435
      %v2775 = vpop.f32.mrf.mxu0
      %v2776 = vadd.f32 %v2687, %v2775
      %v2777 = vpop.f32.mrf.mxu0
      %v2778 = vadd.f32 %v2689, %v2777
      %2779 = vmatmul.bf16.gmra.mxu0 %v1436
      %v2780 = vpop.f32.mrf.mxu0
      %v2781 = vadd.f32 %v2692, %v2780
      %v2782 = vpop.f32.mrf.mxu0
      %v2783 = vadd.f32 %v2694, %v2782
      %2784 = vmatmul.bf16.gmra.mxu0 %v1437
      %v2785 = vpop.f32.mrf.mxu0
      %v2786 = vadd.f32 %v2697, %v2785
      %v2787 = vpop.f32.mrf.mxu0
      %v2788 = vadd.f32 %v2699, %v2787
      %2789 = vmatmul.bf16.gmra.mxu0 %v1438
      %v2790 = vpop.f32.mrf.mxu0
      %v2791 = vadd.f32 %v2702, %v2790
      %v2792 = vpop.f32.mrf.mxu0
      %v2793 = vadd.f32 %v2704, %v2792
      %2794 = vmatmul.bf16.gmra.mxu0 %v1439
      %v2795 = vpop.f32.mrf.mxu0
      %v2796 = vadd.f32 %v2707, %v2795
      %v2797 = vpop.f32.mrf.mxu0
      %v2798 = vadd.f32 %v2709, %v2797
      %2799 = vmatmul.bf16.gmra.mxu0 %v1460
      %v2800 = vpop.f32.mrf.mxu0
      %v2801 = vadd.f32 %v2712, %v2800
      %v2802 = vpop.f32.mrf.mxu0
      %v2803 = vadd.f32 %v2714, %v2802
      %2804 = vdwg.mxu0
      %2805 = vmatpush.bf16.msra.mxu0 %v2602
      %2806 = vmatpush.bf16.msra.mxu0 %v2601
      %2807 = vmatpush.bf16.msra.mxu0 %v2600
      %2808 = vmatpush.bf16.msra.mxu0 %v2599
      %2809 = vmatpush.bf16.msra.mxu0 %v2598
      %2810 = vmatpush.bf16.msra.mxu0 %v2597
      %2811 = vmatpush.bf16.msra.mxu0 %v2596
      %2812 = vmatpush.bf16.msra.mxu0 %v2595
      %2813 = vmatmul.bf16.gmra.mxu0 %v1426
      %v2814 = vpop.f32.mrf.mxu0
      %v2815 = vadd.f32 %v2726, %v2814
      %v2816 = vpop.f32.mrf.mxu0
      %v2817 = vadd.f32 %v2728, %v2816
      %2818 = vmatmul.bf16.gmra.mxu0 %v1427
      %v2819 = vpop.f32.mrf.mxu0
      %v2820 = vadd.f32 %v2731, %v2819
      %v2821 = vpop.f32.mrf.mxu0
      %v2822 = vadd.f32 %v2733, %v2821
      %2823 = vmatmul.bf16.gmra.mxu0 %v1428
      %v2824 = vpop.f32.mrf.mxu0
      %v2825 = vadd.f32 %v2736, %v2824
      %v2826 = vpop.f32.mrf.mxu0
      %v2827 = vadd.f32 %v2738, %v2826
      %2828 = vmatmul.bf16.gmra.mxu0 %v1429
      %v2829 = vpop.f32.mrf.mxu0
      %v2830 = vadd.f32 %v2741, %v2829
      %v2831 = vpop.f32.mrf.mxu0
      %v2832 = vadd.f32 %v2743, %v2831
      %2833 = vmatmul.bf16.gmra.mxu0 %v1430
      %v2834 = vpop.f32.mrf.mxu0
      %v2835 = vadd.f32 %v2746, %v2834
      %v2836 = vpop.f32.mrf.mxu0
      %v2837 = vadd.f32 %v2748, %v2836
      %2838 = vmatmul.bf16.gmra.mxu0 %v1431
      %v2839 = vpop.f32.mrf.mxu0
      %v2840 = vadd.f32 %v2751, %v2839
      %v2841 = vpop.f32.mrf.mxu0
      %v2842 = vadd.f32 %v2753, %v2841
      %2843 = vmatmul.bf16.gmra.mxu0 %v1432
      %v2844 = vpop.f32.mrf.mxu0
      %v2845 = vadd.f32 %v2756, %v2844
      %v2846 = vpop.f32.mrf.mxu0
      %v2847 = vadd.f32 %v2758, %v2846
      %2848 = vmatmul.bf16.gmra.mxu0 %v1433
      %v2849 = vpop.f32.mrf.mxu0
      %v2850 = vadd.f32 %v2761, %v2849
      %v2851 = vpop.f32.mrf.mxu0
      %v2852 = vadd.f32 %v2763, %v2851
      %2853 = vmatmul.bf16.gmra.mxu0 %v1434
      %v2854 = vpop.f32.mrf.mxu0
      %v2855 = vadd.f32 %v2766, %v2854
      %v2856 = vpop.f32.mrf.mxu0
      %v2857 = vadd.f32 %v2768, %v2856
      %2858 = vmatmul.bf16.gmra.mxu0 %v1435
      %v2859 = vpop.f32.mrf.mxu0
      %v2860 = vadd.f32 %v2771, %v2859
      %v2861 = vpop.f32.mrf.mxu0
      %v2862 = vadd.f32 %v2773, %v2861
      %2863 = vmatmul.bf16.gmra.mxu0 %v1436
      %v2864 = vpop.f32.mrf.mxu0
      %v2865 = vadd.f32 %v2776, %v2864
      %v2866 = vpop.f32.mrf.mxu0
      %v2867 = vadd.f32 %v2778, %v2866
      %2868 = vmatmul.bf16.gmra.mxu0 %v1437
      %v2869 = vpop.f32.mrf.mxu0
      %v2870 = vadd.f32 %v2781, %v2869
      %v2871 = vpop.f32.mrf.mxu0
      %v2872 = vadd.f32 %v2783, %v2871
      %2873 = vmatmul.bf16.gmra.mxu0 %v1438
      %v2874 = vpop.f32.mrf.mxu0
      %v2875 = vadd.f32 %v2786, %v2874
      %v2876 = vpop.f32.mrf.mxu0
      %v2877 = vadd.f32 %v2788, %v2876
      %2878 = vmatmul.bf16.gmra.mxu0 %v1439
      %v2879 = vpop.f32.mrf.mxu0
      %v2880 = vadd.f32 %v2791, %v2879
      %v2881 = vpop.f32.mrf.mxu0
      %v2882 = vadd.f32 %v2793, %v2881
      %2883 = vmatmul.bf16.gmra.mxu0 %v1460
      %v2884 = vpop.f32.mrf.mxu0
      %v2885 = vadd.f32 %v2796, %v2884
      %v2886 = vpop.f32.mrf.mxu0
      %v2887 = vadd.f32 %v2798, %v2886
      %2888 = vmatmul.bf16.gmra.mxu0 %v1466
      %v2889 = vpop.f32.mrf.mxu0
      %v2890 = vadd.f32 %v2801, %v2889
      %v2891 = vpop.f32.mrf.mxu0
      %v2892 = vadd.f32 %v2803, %v2891
      %2893 = vdwg.mxu0
      %vm2910 = vcmask 1042432
      %vm2911 = vcmask 1046532
      %vm2912 = vmor %vm2910, %vm2911
      %v2913 = vrot.slane %v1306, 5
      %v2914 = vrot.slane %v2913, 4
      %v2915 = vrot.slane %v1307, 5
      %v2916 = vsel %vm2912, %v2914, %v2915
      %v2917 = vrot.slane %v2915, 4
      %v2918 = vrot.slane %v1308, 5
      %v2919 = vsel %vm2912, %v2917, %v2918
      %v2920 = vrot.slane %v1309, 5
      %v2921 = vrot.slane %v2920, 4
      %v2922 = vrot.slane %v1310, 5
      %v2923 = vsel %vm2912, %v2921, %v2922
      %v2924 = vrot.slane %v2922, 4
      %v2925 = vrot.slane %v1311, 5
      %v2926 = vsel %vm2912, %v2924, %v2925
      %v2927 = vrot.slane %v1312, 5
      %v2928 = vrot.slane %v2927, 4
      %v2929 = vrot.slane %v1313, 5
      %v2930 = vsel %vm2912, %v2928, %v2929
      %v2931 = vrot.slane %v2929, 4
      %v2932 = vrot.slane %v1314, 5
      %v2933 = vsel %vm2912, %v2931, %v2932
      %v2934 = vrot.slane %v1315, 5
      %v2935 = vrot.slane %v2934, 4
      %v2936 = vrot.slane %v1316, 5
      %v2937 = vsel %vm2912, %v2935, %v2936
      %v2938 = vrot.slane %v2936, 4
      %v2939 = vrot.slane %v1317, 5
      %v2940 = vsel %vm2912, %v2938, %v2939
      %v2941 = vrot.slane %v1318, 5
      %v2942 = vrot.slane %v2941, 4
      %v2943 = vrot.slane %v1319, 5
      %v2944 = vsel %vm2912, %v2942, %v2943
      %v2945 = vrot.slane %v2943, 4
      %v2946 = vrot.slane %v1320, 5
      %v2947 = vsel %vm2912, %v2945, %v2946
      %v2948 = vrot.slane %v1321, 5
      %v2949 = vrot.slane %v2948, 4
      %v2950 = vrot.slane %v1322, 5
      %v2951 = vsel %vm2912, %v2949, %v2950
      %v2952 = vrot.slane %v2950, 4
      %v2953 = vrot.slane %v1323, 5
      %v2954 = vsel %vm2912, %v2952, %v2953
      %v2955 = vrot.slane %v1324, 5
      %v2956 = vrot.slane %v2955, 4
      %v2957 = vrot.slane %v1325, 5
      %v2958 = vsel %vm2912, %v2956, %v2957
      %v2959 = vrot.slane %v2957, 4
      %v2960 = vrot.slane %v1326, 5
      %v2961 = vsel %vm2912, %v2959, %v2960
      %v2962 = vrot.slane %v1327, 5
      %v2963 = vrot.slane %v2962, 4
      %v2964 = vrot.slane %v1328, 5
      %v2965 = vsel %vm2912, %v2963, %v2964
      %v2966 = vrot.slane %v2964, 4
      %v2967 = vrot.slane %v1329, 5
      %v2968 = vsel %vm2912, %v2966, %v2967
      %v2969 = vrot.slane %v1330, 5
      %v2970 = vrot.slane %v2969, 4
      %v2971 = vrot.slane %v1331, 5
      %v2972 = vsel %vm2912, %v2970, %v2971
      %v2973 = vrot.slane %v2971, 4
      %v2974 = vrot.slane %v1332, 5
      %v2975 = vsel %vm2912, %v2973, %v2974
      %v2976 = vrot.slane %v1333, 5
      %v2977 = vrot.slane %v2976, 4
      %v2978 = vrot.slane %v1334, 5
      %v2979 = vsel %vm2912, %v2977, %v2978
      %v2980 = vrot.slane %v2978, 4
      %v2981 = vrot.slane %v1335, 5
      %v2982 = vsel %vm2912, %v2980, %v2981
      %v2983 = vrot.slane %v1336, 5
      %v2984 = vrot.slane %v2983, 4
      %v2985 = vrot.slane %v1337, 5
      %v2986 = vsel %vm2912, %v2984, %v2985
      %v2987 = vrot.slane %v2985, 4
      %v2988 = vrot.slane %v1338, 5
      %v2989 = vsel %vm2912, %v2987, %v2988
      %v2990 = vrot.slane %v1339, 5
      %v2991 = vrot.slane %v2990, 4
      %v2992 = vrot.slane %v1340, 5
      %v2993 = vsel %vm2912, %v2991, %v2992
      %v2994 = vrot.slane %v2992, 4
      %v2995 = vrot.slane %v1341, 5
      %v2996 = vsel %vm2912, %v2994, %v2995
      %v2997 = vrot.slane %v1342, 5
      %v2998 = vrot.slane %v2997, 4
      %v2999 = vrot.slane %v1343, 5
      %v3000 = vsel %vm2912, %v2998, %v2999
      %v3001 = vrot.slane %v2999, 4
      %v3002 = vrot.slane %v1344, 5
      %v3003 = vsel %vm2912, %v3001, %v3002
      %v3004 = vrot.slane %v1345, 5
      %v3005 = vrot.slane %v3004, 4
      %v3006 = vrot.slane %v1346, 5
      %v3007 = vsel %vm2912, %v3005, %v3006
      %v3008 = vrot.slane %v3006, 4
      %v3009 = vrot.slane %v1347, 5
      %v3010 = vsel %vm2912, %v3008, %v3009
      %v3011 = vrot.slane %v1348, 5
      %v3012 = vrot.slane %v3011, 4
      %v3013 = vrot.slane %v1349, 5
      %v3014 = vsel %vm2912, %v3012, %v3013
      %v3015 = vrot.slane %v3013, 4
      %v3016 = vrot.slane %v1350, 5
      %v3017 = vsel %vm2912, %v3015, %v3016
      %v3018 = vrot.slane %v1351, 5
      %v3019 = vrot.slane %v3018, 4
      %v3020 = vrot.slane %v1352, 5
      %v3021 = vsel %vm2912, %v3019, %v3020
      %v3022 = vrot.slane %v3020, 4
      %v3023 = vrot.slane %v1353, 5
      %v3024 = vsel %vm2912, %v3022, %v3023
      %v3026 = vrot.slane %v1354, 5
      %v3027 = vrot.slane %v3026, 4
      %v3028 = vrot.slane %v1355, 5
      %v3029 = vsel %vm2912, %v3027, %v3028
      %v3030 = vrot.slane %v3028, 4
      %v3031 = vrot.slane %v1356, 5
      %v3032 = vsel %vm2912, %v3030, %v3031
      %v3034 = vrot.slane %v1357, 5
      %v3035 = vrot.slane %v3034, 4
      %v3036 = vrot.slane %v1358, 5
      %v3037 = vsel %vm2912, %v3035, %v3036
      %v3038 = vrot.slane %v3036, 4
      %v3039 = vrot.slane %v1359, 5
      %v3040 = vsel %vm2912, %v3038, %v3039
      %v3041 = vunpack.c.l.b16 %v2916
      %v3042 = vunpack.c.l.b16 %v2919
      %v3043 = vunpack.c.l.b16 %v2923
      %v3044 = vunpack.c.l.b16 %v2926
      %v3045 = vunpack.c.l.b16 %v2930
      %v3046 = vunpack.c.l.b16 %v2933
      %v3047 = vunpack.c.l.b16 %v2937
      %v3048 = vunpack.c.l.b16 %v2940
      %v3049 = vunpack.c.l.b16 %v2944
      %v3050 = vunpack.c.l.b16 %v2947
      %v3051 = vunpack.c.l.b16 %v2951
      %v3052 = vunpack.c.l.b16 %v2954
      %v3053 = vunpack.c.l.b16 %v2958
      %v3054 = vunpack.c.l.b16 %v2961
      %v3055 = vunpack.c.l.b16 %v2965
      %v3056 = vunpack.c.l.b16 %v2968
      %v3057 = vunpack.c.l.b16 %v2972
      %v3058 = vunpack.c.l.b16 %v2975
      %v3059 = vunpack.c.l.b16 %v2979
      %v3060 = vunpack.c.l.b16 %v2982
      %v3061 = vunpack.c.l.b16 %v2986
      %v3062 = vunpack.c.l.b16 %v2989
      %v3063 = vunpack.c.l.b16 %v2993
      %v3064 = vunpack.c.l.b16 %v2996
      %v3065 = vunpack.c.l.b16 %v3000
      %v3066 = vunpack.c.l.b16 %v3003
      %v3067 = vunpack.c.l.b16 %v3007
      %v3068 = vunpack.c.l.b16 %v3010
      %v3069 = vunpack.c.l.b16 %v3014
      %v3070 = vunpack.c.l.b16 %v3017
      %v3071 = vunpack.c.l.b16 %v3021
      %v3072 = vunpack.c.l.b16 %v3024
      %v3073 = vpack.c.b16 %v3042, %v3041
      %v3074 = vpack.c.b16 %v3044, %v3043
      %v3075 = vpack.c.b16 %v3046, %v3045
      %v3076 = vpack.c.b16 %v3048, %v3047
      %v3077 = vpack.c.b16 %v3050, %v3049
      %v3078 = vpack.c.b16 %v3052, %v3051
      %v3079 = vpack.c.b16 %v3054, %v3053
      %v3080 = vpack.c.b16 %v3056, %v3055
      %v3081 = vpack.c.b16 %v3058, %v3057
      %v3082 = vpack.c.b16 %v3060, %v3059
      %v3083 = vpack.c.b16 %v3062, %v3061
      %v3084 = vpack.c.b16 %v3064, %v3063
      %v3085 = vpack.c.b16 %v3066, %v3065
      %v3086 = vpack.c.b16 %v3068, %v3067
      %v3087 = vpack.c.b16 %v3070, %v3069
      %v3088 = vpack.c.b16 %v3072, %v3071
      %v3105 = vunpack.c.l.b16 %v3029
      %v3106 = vunpack.c.l.b16 %v3032
      %v3107 = vpack.c.b16 %v3106, %v3105
      %v3109 = vunpack.c.l.b16 %v3037
      %v3110 = vunpack.c.l.b16 %v3040
      %v3111 = vpack.c.b16 %v3110, %v3109
      %s3113 = scalar_lea.vmem %s5, 384
      %v3114 = vld [vmem:[%s3113] sm:$0xf]
      %v3115 = vld [vmem:[%s3113 + $0x4] sm:$0xf]
      %v3116 = vld [vmem:[%s3113 + $0x8] sm:$0xf]
      %v3117 = vld [vmem:[%s3113 + $0xc] sm:$0xf]
      %v3118 = vld [vmem:[%s3113 + $0x10] sm:$0xf]
      %v3119 = vld [vmem:[%s3113 + $0x14] sm:$0xf]
      %v3120 = vld [vmem:[%s3113 + $0x18] sm:$0xf]
      %v3121 = vld [vmem:[%s3113 + $0x1c] sm:$0xf]
      %v3122 = vld [vmem:[%s3113 + $0x20] sm:$0xf]
      %v3123 = vld [vmem:[%s3113 + $0x24] sm:$0xf]
      %v3124 = vld [vmem:[%s3113 + $0x28] sm:$0xf]
      %v3125 = vld [vmem:[%s3113 + $0x2c] sm:$0xf]
      %v3126 = vld [vmem:[%s3113 + $0x30] sm:$0xf]
      %v3127 = vld [vmem:[%s3113 + $0x34] sm:$0xf]
      %v3128 = vld [vmem:[%s3113 + $0x38] sm:$0xf]
      %v3129 = vld [vmem:[%s3113 + $0x3c] sm:$0xf]
      %v3130 = vld [vmem:[%s3113 + $0x40] sm:$0xf]
      %v3131 = vld [vmem:[%s3113 + $0x44] sm:$0xf]
      %v3132 = vld [vmem:[%s3113 + $0x48] sm:$0xf]
      %v3133 = vld [vmem:[%s3113 + $0x4c] sm:$0xf]
      %v3134 = vld [vmem:[%s3113 + $0x50] sm:$0xf]
      %v3135 = vld [vmem:[%s3113 + $0x54] sm:$0xf]
      %v3136 = vld [vmem:[%s3113 + $0x58] sm:$0xf]
      %v3137 = vld [vmem:[%s3113 + $0x5c] sm:$0xf]
      %v3138 = vld [vmem:[%s3113 + $0x60] sm:$0xf]
      %v3139 = vld [vmem:[%s3113 + $0x64] sm:$0xf]
      %v3140 = vld [vmem:[%s3113 + $0x68] sm:$0xf]
      %v3141 = vld [vmem:[%s3113 + $0x6c] sm:$0xf]
      %v3142 = vld [vmem:[%s3113 + $0x70] sm:$0xf]
      %v3143 = vld [vmem:[%s3113 + $0x74] sm:$0xf]
      %v3144 = vld [vmem:[%s3113 + $0x78] sm:$0xf]
      %v3145 = vld [vmem:[%s3113 + $0x7c] sm:$0xf]
      %v3146 = vld [vmem:[%s3113 + $0x80] sm:$0xf]
      %v3147 = vld [vmem:[%s3113 + $0x84] sm:$0xf]
      %v3148 = vld [vmem:[%s3113 + $0x88] sm:$0xf]
      %v3149 = vld [vmem:[%s3113 + $0x8c] sm:$0xf]
      %v3150 = vld [vmem:[%s3113 + $0x90] sm:$0xf]
      %v3151 = vld [vmem:[%s3113 + $0x94] sm:$0xf]
      %v3152 = vld [vmem:[%s3113 + $0x98] sm:$0xf]
      %v3153 = vld [vmem:[%s3113 + $0x9c] sm:$0xf]
      %v3154 = vld [vmem:[%s3113 + $0xa0] sm:$0xf]
      %v3155 = vld [vmem:[%s3113 + $0xa4] sm:$0xf]
      %v3156 = vld [vmem:[%s3113 + $0xa8] sm:$0xf]
      %v3157 = vld [vmem:[%s3113 + $0xac] sm:$0xf]
      %v3158 = vld [vmem:[%s3113 + $0xb0] sm:$0xf]
      %v3159 = vld [vmem:[%s3113 + $0xb4] sm:$0xf]
      %v3160 = vld [vmem:[%s3113 + $0xb8] sm:$0xf]
      %v3161 = vld [vmem:[%s3113 + $0xbc] sm:$0xf]
      %v3210 = vunpack.c.l.b16 %v3114
      %v3211 = vunpack.c.l.b16 %v3115
      %v3212 = vunpack.c.l.b16 %v3116
      %v3213 = vunpack.c.l.b16 %v3117
      %v3214 = vunpack.c.l.b16 %v3118
      %v3215 = vunpack.c.l.b16 %v3119
      %v3216 = vunpack.c.l.b16 %v3120
      %v3217 = vunpack.c.l.b16 %v3121
      %v3218 = vunpack.c.l.b16 %v3122
      %v3219 = vunpack.c.l.b16 %v3123
      %v3220 = vunpack.c.l.b16 %v3124
      %v3221 = vunpack.c.l.b16 %v3125
      %v3222 = vunpack.c.l.b16 %v3126
      %v3223 = vunpack.c.l.b16 %v3127
      %v3224 = vunpack.c.l.b16 %v3128
      %v3225 = vunpack.c.l.b16 %v3129
      %v3226 = vunpack.c.l.b16 %v3130
      %v3227 = vunpack.c.l.b16 %v3131
      %v3228 = vunpack.c.l.b16 %v3132
      %v3229 = vunpack.c.l.b16 %v3133
      %v3230 = vunpack.c.l.b16 %v3134
      %v3231 = vunpack.c.l.b16 %v3135
      %v3232 = vunpack.c.l.b16 %v3136
      %v3233 = vunpack.c.l.b16 %v3137
      %v3234 = vunpack.c.l.b16 %v3138
      %v3235 = vunpack.c.l.b16 %v3139
      %v3236 = vunpack.c.l.b16 %v3140
      %v3237 = vunpack.c.l.b16 %v3141
      %v3238 = vunpack.c.l.b16 %v3142
      %v3239 = vunpack.c.l.b16 %v3143
      %v3240 = vunpack.c.l.b16 %v3144
      %v3241 = vunpack.c.l.b16 %v3145
      %v3242 = vunpack.c.l.b16 %v3146
      %v3243 = vunpack.c.l.b16 %v3147
      %v3244 = vunpack.c.l.b16 %v3148
      %v3245 = vunpack.c.l.b16 %v3149
      %v3246 = vunpack.c.l.b16 %v3150
      %v3247 = vunpack.c.l.b16 %v3151
      %v3248 = vunpack.c.l.b16 %v3152
      %v3249 = vunpack.c.l.b16 %v3153
      %v3250 = vunpack.c.l.b16 %v3154
      %v3251 = vunpack.c.l.b16 %v3155
      %v3252 = vunpack.c.l.b16 %v3156
      %v3253 = vunpack.c.l.b16 %v3157
      %v3254 = vunpack.c.l.b16 %v3158
      %v3255 = vunpack.c.l.b16 %v3159
      %v3256 = vunpack.c.l.b16 %v3160
      %v3257 = vunpack.c.l.b16 %v3161
      %v3258 = vpack.c.b16 %v3211, %v3210
      %v3259 = vpack.c.b16 %v3213, %v3212
      %v3260 = vpack.c.b16 %v3215, %v3214
      %v3261 = vpack.c.b16 %v3217, %v3216
      %v3262 = vpack.c.b16 %v3219, %v3218
      %v3263 = vpack.c.b16 %v3221, %v3220
      %v3264 = vpack.c.b16 %v3223, %v3222
      %v3265 = vpack.c.b16 %v3225, %v3224
      %v3266 = vpack.c.b16 %v3227, %v3226
      %v3267 = vpack.c.b16 %v3229, %v3228
      %v3268 = vpack.c.b16 %v3231, %v3230
      %v3269 = vpack.c.b16 %v3233, %v3232
      %v3270 = vpack.c.b16 %v3235, %v3234
      %v3271 = vpack.c.b16 %v3237, %v3236
      %v3272 = vpack.c.b16 %v3239, %v3238
      %v3273 = vpack.c.b16 %v3241, %v3240
      %v3274 = vpack.c.b16 %v3243, %v3242
      %v3275 = vpack.c.b16 %v3245, %v3244
      %v3276 = vpack.c.b16 %v3247, %v3246
      %v3277 = vpack.c.b16 %v3249, %v3248
      %v3278 = vpack.c.b16 %v3251, %v3250
      %v3279 = vpack.c.b16 %v3253, %v3252
      %v3280 = vpack.c.b16 %v3255, %v3254
      %v3281 = vpack.c.b16 %v3257, %v3256
      %3306 = vmatpush.bf16.msra.mxu0 %v3265
      %3307 = vmatpush.bf16.msra.mxu0 %v3264
      %3308 = vmatpush.bf16.msra.mxu0 %v3263
      %3309 = vmatpush.bf16.msra.mxu0 %v3262
      %3310 = vmatpush.bf16.msra.mxu0 %v3261
      %3311 = vmatpush.bf16.msra.mxu0 %v3260
      %3312 = vmatpush.bf16.msra.mxu0 %v3259
      %3313 = vmatpush.bf16.msra.mxu0 %v3258
      %3314 = vmatmul.bf16.gmra.mxu0 %v3073
      %v3315 = vpop.f32.mrf.mxu0
      %v3316 = vadd.f32 0.0, %v3315
      %v3317 = vpop.f32.mrf.mxu0
      %v3318 = vadd.f32 0.0, %v3317
      %3319 = vmatmul.bf16.gmra.mxu0 %v3074
      %v3320 = vpop.f32.mrf.mxu0
      %v3321 = vadd.f32 0.0, %v3320
      %v3322 = vpop.f32.mrf.mxu0
      %v3323 = vadd.f32 0.0, %v3322
      %3324 = vmatmul.bf16.gmra.mxu0 %v3075
      %v3325 = vpop.f32.mrf.mxu0
      %v3326 = vadd.f32 0.0, %v3325
      %v3327 = vpop.f32.mrf.mxu0
      %v3328 = vadd.f32 0.0, %v3327
      %3329 = vmatmul.bf16.gmra.mxu0 %v3076
      %v3330 = vpop.f32.mrf.mxu0
      %v3331 = vadd.f32 0.0, %v3330
      %v3332 = vpop.f32.mrf.mxu0
      %v3333 = vadd.f32 0.0, %v3332
      %3334 = vmatmul.bf16.gmra.mxu0 %v3077
      %v3335 = vpop.f32.mrf.mxu0
      %v3336 = vadd.f32 0.0, %v3335
      %v3337 = vpop.f32.mrf.mxu0
      %v3338 = vadd.f32 0.0, %v3337
      %3339 = vmatmul.bf16.gmra.mxu0 %v3078
      %v3340 = vpop.f32.mrf.mxu0
      %v3341 = vadd.f32 0.0, %v3340
      %v3342 = vpop.f32.mrf.mxu0
      %v3343 = vadd.f32 0.0, %v3342
      %3344 = vmatmul.bf16.gmra.mxu0 %v3079
      %v3345 = vpop.f32.mrf.mxu0
      %v3346 = vadd.f32 0.0, %v3345
      %v3347 = vpop.f32.mrf.mxu0
      %v3348 = vadd.f32 0.0, %v3347
      %3349 = vmatmul.bf16.gmra.mxu0 %v3080
      %v3350 = vpop.f32.mrf.mxu0
      %v3351 = vadd.f32 0.0, %v3350
      %v3352 = vpop.f32.mrf.mxu0
      %v3353 = vadd.f32 0.0, %v3352
      %3354 = vmatmul.bf16.gmra.mxu0 %v3081
      %v3355 = vpop.f32.mrf.mxu0
      %v3356 = vadd.f32 0.0, %v3355
      %v3357 = vpop.f32.mrf.mxu0
      %v3358 = vadd.f32 0.0, %v3357
      %3359 = vmatmul.bf16.gmra.mxu0 %v3082
      %v3360 = vpop.f32.mrf.mxu0
      %v3361 = vadd.f32 0.0, %v3360
      %v3362 = vpop.f32.mrf.mxu0
      %v3363 = vadd.f32 0.0, %v3362
      %3364 = vmatmul.bf16.gmra.mxu0 %v3083
      %v3365 = vpop.f32.mrf.mxu0
      %v3366 = vadd.f32 0.0, %v3365
      %v3367 = vpop.f32.mrf.mxu0
      %v3368 = vadd.f32 0.0, %v3367
      %3369 = vmatmul.bf16.gmra.mxu0 %v3084
      %v3370 = vpop.f32.mrf.mxu0
      %v3371 = vadd.f32 0.0, %v3370
      %v3372 = vpop.f32.mrf.mxu0
      %v3373 = vadd.f32 0.0, %v3372
      %3374 = vmatmul.bf16.gmra.mxu0 %v3085
      %v3375 = vpop.f32.mrf.mxu0
      %v3376 = vadd.f32 0.0, %v3375
      %v3377 = vpop.f32.mrf.mxu0
      %v3378 = vadd.f32 0.0, %v3377
      %3379 = vmatmul.bf16.gmra.mxu0 %v3086
      %v3380 = vpop.f32.mrf.mxu0
      %v3381 = vadd.f32 0.0, %v3380
      %v3382 = vpop.f32.mrf.mxu0
      %v3383 = vadd.f32 0.0, %v3382
      %3384 = vmatmul.bf16.gmra.mxu0 %v3087
      %v3385 = vpop.f32.mrf.mxu0
      %v3386 = vadd.f32 0.0, %v3385
      %v3387 = vpop.f32.mrf.mxu0
      %v3388 = vadd.f32 0.0, %v3387
      %3389 = vmatmul.bf16.gmra.mxu0 %v3088
      %v3390 = vpop.f32.mrf.mxu0
      %v3391 = vadd.f32 0.0, %v3390
      %v3392 = vpop.f32.mrf.mxu0
      %v3393 = vadd.f32 0.0, %v3392
      %3394 = vdwg.mxu0
      %3395 = vmatpush.bf16.msra.mxu0 %v3273
      %3396 = vmatpush.bf16.msra.mxu0 %v3272
      %3397 = vmatpush.bf16.msra.mxu0 %v3271
      %3398 = vmatpush.bf16.msra.mxu0 %v3270
      %3399 = vmatpush.bf16.msra.mxu0 %v3269
      %3400 = vmatpush.bf16.msra.mxu0 %v3268
      %3401 = vmatpush.bf16.msra.mxu0 %v3267
      %3402 = vmatpush.bf16.msra.mxu0 %v3266
      %3403 = vmatmul.bf16.gmra.mxu0 %v3074
      %v3404 = vpop.f32.mrf.mxu0
      %v3405 = vadd.f32 %v3316, %v3404
      %v3406 = vpop.f32.mrf.mxu0
      %v3407 = vadd.f32 %v3318, %v3406
      %3408 = vmatmul.bf16.gmra.mxu0 %v3075
      %v3409 = vpop.f32.mrf.mxu0
      %v3410 = vadd.f32 %v3321, %v3409
      %v3411 = vpop.f32.mrf.mxu0
      %v3412 = vadd.f32 %v3323, %v3411
      %3413 = vmatmul.bf16.gmra.mxu0 %v3076
      %v3414 = vpop.f32.mrf.mxu0
      %v3415 = vadd.f32 %v3326, %v3414
      %v3416 = vpop.f32.mrf.mxu0
      %v3417 = vadd.f32 %v3328, %v3416
      %3418 = vmatmul.bf16.gmra.mxu0 %v3077
      %v3419 = vpop.f32.mrf.mxu0
      %v3420 = vadd.f32 %v3331, %v3419
      %v3421 = vpop.f32.mrf.mxu0
      %v3422 = vadd.f32 %v3333, %v3421
      %3423 = vmatmul.bf16.gmra.mxu0 %v3078
      %v3424 = vpop.f32.mrf.mxu0
      %v3425 = vadd.f32 %v3336, %v3424
      %v3426 = vpop.f32.mrf.mxu0
      %v3427 = vadd.f32 %v3338, %v3426
      %3428 = vmatmul.bf16.gmra.mxu0 %v3079
      %v3429 = vpop.f32.mrf.mxu0
      %v3430 = vadd.f32 %v3341, %v3429
      %v3431 = vpop.f32.mrf.mxu0
      %v3432 = vadd.f32 %v3343, %v3431
      %3433 = vmatmul.bf16.gmra.mxu0 %v3080
      %v3434 = vpop.f32.mrf.mxu0
      %v3435 = vadd.f32 %v3346, %v3434
      %v3436 = vpop.f32.mrf.mxu0
      %v3437 = vadd.f32 %v3348, %v3436
      %3438 = vmatmul.bf16.gmra.mxu0 %v3081
      %v3439 = vpop.f32.mrf.mxu0
      %v3440 = vadd.f32 %v3351, %v3439
      %v3441 = vpop.f32.mrf.mxu0
      %v3442 = vadd.f32 %v3353, %v3441
      %3443 = vmatmul.bf16.gmra.mxu0 %v3082
      %v3444 = vpop.f32.mrf.mxu0
      %v3445 = vadd.f32 %v3356, %v3444
      %v3446 = vpop.f32.mrf.mxu0
      %v3447 = vadd.f32 %v3358, %v3446
      %3448 = vmatmul.bf16.gmra.mxu0 %v3083
      %v3449 = vpop.f32.mrf.mxu0
      %v3450 = vadd.f32 %v3361, %v3449
      %v3451 = vpop.f32.mrf.mxu0
      %v3452 = vadd.f32 %v3363, %v3451
      %3453 = vmatmul.bf16.gmra.mxu0 %v3084
      %v3454 = vpop.f32.mrf.mxu0
      %v3455 = vadd.f32 %v3366, %v3454
      %v3456 = vpop.f32.mrf.mxu0
      %v3457 = vadd.f32 %v3368, %v3456
      %3458 = vmatmul.bf16.gmra.mxu0 %v3085
      %v3459 = vpop.f32.mrf.mxu0
      %v3460 = vadd.f32 %v3371, %v3459
      %v3461 = vpop.f32.mrf.mxu0
      %v3462 = vadd.f32 %v3373, %v3461
      %3463 = vmatmul.bf16.gmra.mxu0 %v3086
      %v3464 = vpop.f32.mrf.mxu0
      %v3465 = vadd.f32 %v3376, %v3464
      %v3466 = vpop.f32.mrf.mxu0
      %v3467 = vadd.f32 %v3378, %v3466
      %3468 = vmatmul.bf16.gmra.mxu0 %v3087
      %v3469 = vpop.f32.mrf.mxu0
      %v3470 = vadd.f32 %v3381, %v3469
      %v3471 = vpop.f32.mrf.mxu0
      %v3472 = vadd.f32 %v3383, %v3471
      %3473 = vmatmul.bf16.gmra.mxu0 %v3088
      %v3474 = vpop.f32.mrf.mxu0
      %v3475 = vadd.f32 %v3386, %v3474
      %v3476 = vpop.f32.mrf.mxu0
      %v3477 = vadd.f32 %v3388, %v3476
      %3478 = vmatmul.bf16.gmra.mxu0 %v3107
      %v3479 = vpop.f32.mrf.mxu0
      %v3480 = vadd.f32 %v3391, %v3479
      %v3481 = vpop.f32.mrf.mxu0
      %v3482 = vadd.f32 %v3393, %v3481
      %3483 = vdwg.mxu0
      %3484 = vmatpush.bf16.msra.mxu0 %v3281
      %3485 = vmatpush.bf16.msra.mxu0 %v3280
      %3486 = vmatpush.bf16.msra.mxu0 %v3279
      %3487 = vmatpush.bf16.msra.mxu0 %v3278
      %3488 = vmatpush.bf16.msra.mxu0 %v3277
      %3489 = vmatpush.bf16.msra.mxu0 %v3276
      %3490 = vmatpush.bf16.msra.mxu0 %v3275
      %3491 = vmatpush.bf16.msra.mxu0 %v3274
      %3492 = vmatmul.bf16.gmra.mxu0 %v3075
      %v3493 = vpop.f32.mrf.mxu0
      %v3494 = vadd.f32 %v3405, %v3493
      %v3495 = vpop.f32.mrf.mxu0
      %v3496 = vadd.f32 %v3407, %v3495
      %3497 = vmatmul.bf16.gmra.mxu0 %v3076
      %v3498 = vpop.f32.mrf.mxu0
      %v3499 = vadd.f32 %v3410, %v3498
      %v3500 = vpop.f32.mrf.mxu0
      %v3501 = vadd.f32 %v3412, %v3500
      %3502 = vmatmul.bf16.gmra.mxu0 %v3077
      %v3503 = vpop.f32.mrf.mxu0
      %v3504 = vadd.f32 %v3415, %v3503
      %v3505 = vpop.f32.mrf.mxu0
      %v3506 = vadd.f32 %v3417, %v3505
      %3507 = vmatmul.bf16.gmra.mxu0 %v3078
      %v3508 = vpop.f32.mrf.mxu0
      %v3509 = vadd.f32 %v3420, %v3508
      %v3510 = vpop.f32.mrf.mxu0
      %v3511 = vadd.f32 %v3422, %v3510
      %3512 = vmatmul.bf16.gmra.mxu0 %v3079
      %v3513 = vpop.f32.mrf.mxu0
      %v3514 = vadd.f32 %v3425, %v3513
      %v3515 = vpop.f32.mrf.mxu0
      %v3516 = vadd.f32 %v3427, %v3515
      %3517 = vmatmul.bf16.gmra.mxu0 %v3080
      %v3518 = vpop.f32.mrf.mxu0
      %v3519 = vadd.f32 %v3430, %v3518
      %v3520 = vpop.f32.mrf.mxu0
      %v3521 = vadd.f32 %v3432, %v3520
      %3522 = vmatmul.bf16.gmra.mxu0 %v3081
      %v3523 = vpop.f32.mrf.mxu0
      %v3524 = vadd.f32 %v3435, %v3523
      %v3525 = vpop.f32.mrf.mxu0
      %v3526 = vadd.f32 %v3437, %v3525
      %3527 = vmatmul.bf16.gmra.mxu0 %v3082
      %v3528 = vpop.f32.mrf.mxu0
      %v3529 = vadd.f32 %v3440, %v3528
      %v3530 = vpop.f32.mrf.mxu0
      %v3531 = vadd.f32 %v3442, %v3530
      %3532 = vmatmul.bf16.gmra.mxu0 %v3083
      %v3533 = vpop.f32.mrf.mxu0
      %v3534 = vadd.f32 %v3445, %v3533
      %v3535 = vpop.f32.mrf.mxu0
      %v3536 = vadd.f32 %v3447, %v3535
      %3537 = vmatmul.bf16.gmra.mxu0 %v3084
      %v3538 = vpop.f32.mrf.mxu0
      %v3539 = vadd.f32 %v3450, %v3538
      %v3540 = vpop.f32.mrf.mxu0
      %v3541 = vadd.f32 %v3452, %v3540
      %3542 = vmatmul.bf16.gmra.mxu0 %v3085
      %v3543 = vpop.f32.mrf.mxu0
      %v3544 = vadd.f32 %v3455, %v3543
      %v3545 = vpop.f32.mrf.mxu0
      %v3546 = vadd.f32 %v3457, %v3545
      %3547 = vmatmul.bf16.gmra.mxu0 %v3086
      %v3548 = vpop.f32.mrf.mxu0
      %v3549 = vadd.f32 %v3460, %v3548
      %v3550 = vpop.f32.mrf.mxu0
      %v3551 = vadd.f32 %v3462, %v3550
      %3552 = vmatmul.bf16.gmra.mxu0 %v3087
      %v3553 = vpop.f32.mrf.mxu0
      %v3554 = vadd.f32 %v3465, %v3553
      %v3555 = vpop.f32.mrf.mxu0
      %v3556 = vadd.f32 %v3467, %v3555
      %3557 = vmatmul.bf16.gmra.mxu0 %v3088
      %v3558 = vpop.f32.mrf.mxu0
      %v3559 = vadd.f32 %v3470, %v3558
      %v3560 = vpop.f32.mrf.mxu0
      %v3561 = vadd.f32 %v3472, %v3560
      %3562 = vmatmul.bf16.gmra.mxu0 %v3107
      %v3563 = vpop.f32.mrf.mxu0
      %v3564 = vadd.f32 %v3475, %v3563
      %v3565 = vpop.f32.mrf.mxu0
      %v3566 = vadd.f32 %v3477, %v3565
      %3567 = vmatmul.bf16.gmra.mxu0 %v3111
      %v3568 = vpop.f32.mrf.mxu0
      %v3569 = vadd.f32 %v3480, %v3568
      %v3570 = vpop.f32.mrf.mxu0
      %v3571 = vadd.f32 %v3482, %v3570
      %3572 = vdwg.mxu0
      %v3573 = vadd.f32 %v2815, %v3494
      %v3574 = vadd.f32 %v2817, %v3496
      %v3575 = vadd.f32 %v2820, %v3499
      %v3576 = vadd.f32 %v2822, %v3501
      %v3577 = vadd.f32 %v2825, %v3504
      %v3578 = vadd.f32 %v2827, %v3506
      %v3579 = vadd.f32 %v2830, %v3509
      %v3580 = vadd.f32 %v2832, %v3511
      %v3581 = vadd.f32 %v2835, %v3514
      %v3582 = vadd.f32 %v2837, %v3516
      %v3583 = vadd.f32 %v2840, %v3519
      %v3584 = vadd.f32 %v2842, %v3521
      %v3585 = vadd.f32 %v2845, %v3524
      %v3586 = vadd.f32 %v2847, %v3526
      %v3587 = vadd.f32 %v2850, %v3529
      %v3588 = vadd.f32 %v2852, %v3531
      %v3589 = vadd.f32 %v2855, %v3534
      %v3590 = vadd.f32 %v2857, %v3536
      %v3591 = vadd.f32 %v2860, %v3539
      %v3592 = vadd.f32 %v2862, %v3541
      %v3593 = vadd.f32 %v2865, %v3544
      %v3594 = vadd.f32 %v2867, %v3546
      %v3595 = vadd.f32 %v2870, %v3549
      %v3596 = vadd.f32 %v2872, %v3551
      %v3597 = vadd.f32 %v2875, %v3554
      %v3598 = vadd.f32 %v2877, %v3556
      %v3599 = vadd.f32 %v2880, %v3559
      %v3600 = vadd.f32 %v2882, %v3561
      %v3601 = vadd.f32 %v2885, %v3564
      %v3602 = vadd.f32 %v2887, %v3566
      %v3603 = vadd.f32 %v2890, %v3569
      %v3604 = vadd.f32 %v2892, %v3571
      %3605 = vst [vmem:[%s457] sm:$0xff] %v3573
      %3606 = vst [vmem:[%s457 + $0x8] sm:$0xff] %v3574
      %3607 = vst [vmem:[%s457 + $0x10] sm:$0xff] %v3575
      %3608 = vst [vmem:[%s457 + $0x18] sm:$0xff] %v3576
      %3609 = vst [vmem:[%s457 + $0x20] sm:$0xff] %v3577
      %3610 = vst [vmem:[%s457 + $0x28] sm:$0xff] %v3578
      %3611 = vst [vmem:[%s457 + $0x30] sm:$0xff] %v3579
      %3612 = vst [vmem:[%s457 + $0x38] sm:$0xff] %v3580
      %3613 = vst [vmem:[%s457 + $0x40] sm:$0xff] %v3581
      %3614 = vst [vmem:[%s457 + $0x48] sm:$0xff] %v3582
      %3615 = vst [vmem:[%s457 + $0x50] sm:$0xff] %v3583
      %3616 = vst [vmem:[%s457 + $0x58] sm:$0xff] %v3584
      %3617 = vst [vmem:[%s457 + $0x60] sm:$0xff] %v3585
      %3618 = vst [vmem:[%s457 + $0x68] sm:$0xff] %v3586
      %3619 = vst [vmem:[%s457 + $0x70] sm:$0xff] %v3587
      %3620 = vst [vmem:[%s457 + $0x78] sm:$0xff] %v3588
      %3621 = vst [vmem:[%s457 + $0x80] sm:$0xff] %v3589
      %3622 = vst [vmem:[%s457 + $0x88] sm:$0xff] %v3590
      %3623 = vst [vmem:[%s457 + $0x90] sm:$0xff] %v3591
      %3624 = vst [vmem:[%s457 + $0x98] sm:$0xff] %v3592
      %3625 = vst [vmem:[%s457 + $0xa0] sm:$0xff] %v3593
      %3626 = vst [vmem:[%s457 + $0xa8] sm:$0xff] %v3594
      %3627 = vst [vmem:[%s457 + $0xb0] sm:$0xff] %v3595
      %3628 = vst [vmem:[%s457 + $0xb8] sm:$0xff] %v3596
      %3629 = vst [vmem:[%s457 + $0xc0] sm:$0xff] %v3597
      %3630 = vst [vmem:[%s457 + $0xc8] sm:$0xff] %v3598
      %3631 = vst [vmem:[%s457 + $0xd0] sm:$0xff] %v3599
      %3632 = vst [vmem:[%s457 + $0xd8] sm:$0xff] %v3600
      %3633 = vst [vmem:[%s457 + $0xe0] sm:$0xff] %v3601
      %3634 = vst [vmem:[%s457 + $0xe8] sm:$0xff] %v3602
      %3635 = vst [vmem:[%s457 + $0xf0] sm:$0xff] %v3603
      %3636 = vst [vmem:[%s457 + $0xf8] sm:$0xff] %v3604
      %v3637 = vadd.f32 %v3573, %v3574
      %v3638 = vadd.f32 %v3637, %v3575
      %v3639 = vadd.f32 %v3638, %v3576
      %v3640 = vadd.f32 %v3639, %v3577
      %v3641 = vadd.f32 %v3640, %v3578
      %v3642 = vadd.f32 %v3641, %v3579
      %v3643 = vadd.f32 %v3642, %v3580
      %v3644 = vadd.f32 %v3643, %v3581
      %v3645 = vadd.f32 %v3644, %v3582
      %v3646 = vadd.f32 %v3645, %v3583
      %v3647 = vadd.f32 %v3646, %v3584
      %v3648 = vadd.f32 %v3647, %v3585
      %v3649 = vadd.f32 %v3648, %v3586
      %v3650 = vadd.f32 %v3649, %v3587
      %v3651 = vadd.f32 %v3650, %v3588
      %v3652 = vadd.f32 %v3651, %v3589
      %v3653 = vadd.f32 %v3652, %v3590
      %v3654 = vadd.f32 %v3653, %v3591
      %v3655 = vadd.f32 %v3654, %v3592
      %v3656 = vadd.f32 %v3655, %v3593
      %v3657 = vadd.f32 %v3656, %v3594
      %v3658 = vadd.f32 %v3657, %v3595
      %v3659 = vadd.f32 %v3658, %v3596
      %v3660 = vadd.f32 %v3659, %v3597
      %v3661 = vadd.f32 %v3660, %v3598
      %v3662 = vadd.f32 %v3661, %v3599
      %v3663 = vadd.f32 %v3662, %v3600
      %v3664 = vadd.f32 %v3663, %v3601
      %v3665 = vadd.f32 %v3664, %v3602
      %v3666 = vadd.f32 %v3665, %v3603
      %v3667 = vadd.f32 %v3666, %v3604
      %v3668 = vrot.slane %v3667, 4
      %v3669 = vadd.f32 %v3667, %v3668
      %v3670 = vrot.slane %v3669, 2
      %v3671 = vadd.f32 %v3669, %v3670
      %v3672 = vrot.slane %v3671, 1
      %v3673 = vadd.f32 %v3671, %v3672
      %v3674 = vmul.f32 %v3573, %v3573
      %v3675 = vmul.f32 %v3574, %v3574
      %v3676 = vmul.f32 %v3575, %v3575
      %v3677 = vmul.f32 %v3576, %v3576
      %v3678 = vmul.f32 %v3577, %v3577
      %v3679 = vmul.f32 %v3578, %v3578
      %v3680 = vmul.f32 %v3579, %v3579
      %v3681 = vmul.f32 %v3580, %v3580
      %v3682 = vmul.f32 %v3581, %v3581
      %v3683 = vmul.f32 %v3582, %v3582
      %v3684 = vmul.f32 %v3583, %v3583
      %v3685 = vmul.f32 %v3584, %v3584
      %v3686 = vmul.f32 %v3585, %v3585
      %v3687 = vmul.f32 %v3586, %v3586
      %v3688 = vmul.f32 %v3587, %v3587
      %v3689 = vmul.f32 %v3588, %v3588
      %v3690 = vmul.f32 %v3589, %v3589
      %v3691 = vmul.f32 %v3590, %v3590
      %v3692 = vmul.f32 %v3591, %v3591
      %v3693 = vmul.f32 %v3592, %v3592
      %v3694 = vmul.f32 %v3593, %v3593
      %v3695 = vmul.f32 %v3594, %v3594
      %v3696 = vmul.f32 %v3595, %v3595
      %v3697 = vmul.f32 %v3596, %v3596
      %v3698 = vmul.f32 %v3597, %v3597
      %v3699 = vmul.f32 %v3598, %v3598
      %v3700 = vmul.f32 %v3599, %v3599
      %v3701 = vmul.f32 %v3600, %v3600
      %v3702 = vmul.f32 %v3601, %v3601
      %v3703 = vmul.f32 %v3602, %v3602
      %v3704 = vmul.f32 %v3603, %v3603
      %v3705 = vmul.f32 %v3604, %v3604
      %v3706 = vadd.f32 %v3674, %v3675
      %v3707 = vadd.f32 %v3706, %v3676
      %v3708 = vadd.f32 %v3707, %v3677
      %v3709 = vadd.f32 %v3708, %v3678
      %v3710 = vadd.f32 %v3709, %v3679
      %v3711 = vadd.f32 %v3710, %v3680
      %v3712 = vadd.f32 %v3711, %v3681
      %v3713 = vadd.f32 %v3712, %v3682
      %v3714 = vadd.f32 %v3713, %v3683
      %v3715 = vadd.f32 %v3714, %v3684
      %v3716 = vadd.f32 %v3715, %v3685
      %v3717 = vadd.f32 %v3716, %v3686
      %v3718 = vadd.f32 %v3717, %v3687
      %v3719 = vadd.f32 %v3718, %v3688
      %v3720 = vadd.f32 %v3719, %v3689
      %v3721 = vadd.f32 %v3720, %v3690
      %v3722 = vadd.f32 %v3721, %v3691
      %v3723 = vadd.f32 %v3722, %v3692
      %v3724 = vadd.f32 %v3723, %v3693
      %v3725 = vadd.f32 %v3724, %v3694
      %v3726 = vadd.f32 %v3725, %v3695
      %v3727 = vadd.f32 %v3726, %v3696
      %v3728 = vadd.f32 %v3727, %v3697
      %v3729 = vadd.f32 %v3728, %v3698
      %v3730 = vadd.f32 %v3729, %v3699
      %v3731 = vadd.f32 %v3730, %v3700
      %v3732 = vadd.f32 %v3731, %v3701
      %v3733 = vadd.f32 %v3732, %v3702
      %v3734 = vadd.f32 %v3733, %v3703
      %v3735 = vadd.f32 %v3734, %v3704
      %v3736 = vadd.f32 %v3735, %v3705
      %v3737 = vrot.slane %v3736, 4
      %v3738 = vadd.f32 %v3736, %v3737
      %v3739 = vrot.slane %v3738, 2
      %v3740 = vadd.f32 %v3738, %v3739
      %v3741 = vrot.slane %v3740, 1
      %v3742 = vadd.f32 %v3740, %v3741
      %vm3743 = vcmask 1040384
      %v3744 = vsel %vm3743, %v3673, %v3742
      %3745 = vst [vmem:[%s465] sm:$0x3] %v3744
      %s3746 = smul.u32 16, %s24
      %p3747 = scmp.lt.s32.totalorder %s23, 1
      %s3748 = scalar_select %p3747, %s23, 1
      %p3749 = scmp.lt.s32.totalorder %s3746, 15
      %s3750 = scalar_select %p3749, %s3746, 15
      %s3751 = smul.addr %s3750, 2
      %s3752 = smul.addr %s3748, 32
      %s3753 = sadd.s32 %s3751, %s3752
      %s3754 = smul.addr %s3753, 8
      %s3755 = scalar_lea.vmem %s6, %s3754
      %p3756 = scmp.lt.s32.totalorder %s23, 1
      %s3757 = scalar_select %p3756, %s23, 1
      %p3758 = scmp.lt.s32.totalorder %s24, 0
      %s3759 = scalar_select %p3758, %s24, 0
      %s3760 = sadd.s32 %s3759, %s3757
      %s3761 = smul.addr %s3760, 2
      %s3762 = scalar_lea.vmem %s7, %s3761
      // Predicated region
      $region49: #{_lambda_.4} parent=43 // pred_check
        %p3763 = pneg %p214
      $region50: #{_lambda_.4} parent=43 // pred_check_branch
        %3765 = sbr.rel (%p3763) target = $region52
      $region51: #{_lambda_.4} parent=43 // pred_region
        %s3766 = smul.u32 16, %s24
      $region52: #{_lambda_.4} parent=43 // pred_fallthru
        _
      // Predicated region
      $region53: #{_lambda_.4} parent=43 // pred_check
        %p3767 = pneg %p242
      $region54: #{_lambda_.4} parent=43 // pred_check_branch
        %3769 = sbr.rel (%p3767) target = $region56
      $region55: #{_lambda_.4} parent=43 // pred_region
        _
      $region56: #{_lambda_.4} parent=43 // pred_fallthru
        _
    $region44: #{_lambda_.4} parent=5 // pred_fallthru
      _
    %p3770 = scmp.le.s32.totalorder 2, %s14
    // Predicated region
    $region57: #{_lambda_.4} parent=5 // pred_check
      %p3771 = pneg %p3770
    $region58: #{_lambda_.4} parent=5 // pred_check_branch
      %3773 = sbr.rel (%p3771) target = $region60
    $region59: #{_lambda_.4} parent=5 // pred_region
      %s3774 = ssub.s32 %s14, 2
      // Predicated region
      $region61: #{_lambda_.4} parent=59 // pred_check
        %p3775 = pneg %p220
      $region62: #{_lambda_.4} parent=59 // pred_check_branch
        %3777 = sbr.rel (%p3775) target = $region64
      $region63: #{_lambda_.4} parent=59 // pred_region
        %s3778 = smul.u32 16, %s26
        %p3779 = scmp.lt.s32.totalorder %s25, 1
        %s3780 = scalar_select %p3779, %s25, 1
        %p3781 = scmp.lt.s32.totalorder %s3778, 15
        %s3782 = scalar_select %p3781, %s3778, 15
        %s3783 = smul.addr %s3782, 2
        %s3784 = smul.addr %s3780, 32
        %s3785 = sadd.s32 %s3783, %s3784
        %s3786 = smul.addr %s3785, 8
        %s3787 = scalar_lea.vmem %s6, %s3786
      $region64: #{_lambda_.4} parent=59 // pred_fallthru
        _
      // Predicated region
      $region65: #{_lambda_.4} parent=59 // pred_check
        %p3788 = pneg %p248
      $region66: #{_lambda_.4} parent=59 // pred_check_branch
        %3790 = sbr.rel (%p3788) target = $region68
      $region67: #{_lambda_.4} parent=59 // pred_region
        %p3791 = scmp.lt.s32.totalorder %s25, 1
        %s3792 = scalar_select %p3791, %s25, 1
        %p3793 = scmp.lt.s32.totalorder %s26, 0
        %s3794 = scalar_select %p3793, %s26, 0
        %s3795 = sadd.s32 %s3794, %s3792
        %s3796 = smul.addr %s3795, 2
        %s3797 = scalar_lea.vmem %s7, %s3796
      $region68: #{_lambda_.4} parent=59 // pred_fallthru
        _
    $region60: #{_lambda_.4} parent=5 // pred_fallthru
      _
  $region6: #{_lambda_.4} parent=0 // loop_footer
    %s18 = sadd.s32 1, %s14
  $region7: #{_lambda_.4} parent=0 // loop_footer_branch
    %13 = sbr.rel target = $region3
  $region8: #{_lambda_.4} parent=0 // loop_exit
    _

// kernel: _lambda_.3
$region0: #{_lambda_.3}
  #allocation0 [shape = 'u32[]', space=smem, size = 0x4, offset = 0x4, fixed_abs, tag = 'smem constant byte address 0x4 - core index']
  #allocation1 [shape = 'u32[72,128]{1,0:T(1,128)}', space=vmem, size = 0x9000, scoped, tag = 'internal scratch']
  #allocation2 [shape = 'bf16[18,18,128]{2,1,0:T(8,128)(2,1)}', space=vmem, size = 0x1b000, scoped, tag = 'scratch operand']
  %s0 = inlined_call_operand.vmem [shape: bf16[2,16,16,128], index: 0, kind: input, shape index: {}, may-alias: {0,1,2}]
  %s1 = inlined_call_operand.vmem [shape: bf16[2,16,16,128], index: 1, kind: input, shape index: {}, may-alias: {0,1,2}]
  %s2 = inlined_call_operand.vmem [shape: bf16[2,16,16,128], index: 2, kind: input, shape index: {}, may-alias: {0,1,2}]
  %s3 = inlined_call_operand.vmem [shape: bf16[3,384,128], index: 3, kind: input, shape index: {}]
  %s4 = inlined_call_operand.vmem [shape: bf16[128,128], index: 4, kind: input, shape index: {}]
  %s5 = inlined_call_operand.vmem [shape: bf16[2,16,16,128], index: 5, kind: output, shape index: {0}]
  %s6 = inlined_call_operand.vmem [shape: f32[2,1,2,128], index: 6, kind: output, shape index: {1}]
  %s7 = inlined_call_operand.vmem [shape: bf16[2,16,16,128], index: 7, kind: output, shape index: {2}]
  %s8 = inlined_call_operand.vmem [shape: f32[2,1,2,128], index: 8, kind: output, shape index: {3}]
  %9 = xla_tuple %s5, %s6, %s7, %s8
  %s10 = sld [smem:[#allocation0]]
  $region81: #{_lambda_.3} parent=0
    _
  %s12 = ssub.s32 1, %s10
  %s13 = scalar_select 0, %s12, %s10
  loop: start=0, step=1, limit=4
  $region2: #{_lambda_.3} parent=0 // loop_pre_header
    _
  $region3: #{_lambda_.3} parent=0 // loop_header
    %s15 = sphi 0, %s19
    %p16 = scmp.ge.s32.totalorder %s15, 4
    %s22 = sphi 0, %s34
    %s23 = sphi 0, %s30
    %s24 = sphi 0, %s22
    %s25 = sphi 0, %s23
    %s26 = sphi 0, %s24
    %s27 = sphi 0, %s25
    %s39 = sphi 0, %s41
    %s42 = sphi 0, %s39
    %s43 = sphi 0, %s42
    %s59 = sphi 0, %s43
    %s75 = sphi 0, %s77
    %s78 = sphi 0, %s75
    %s79 = sphi 0, %s78
    %s95 = sphi 0, %s79
    %s111 = sphi 0, %s113
    %s114 = sphi 0, %s111
    %s115 = sphi 0, %s114
    %s131 = sphi 0, %s115
    %s135 = sphi 0, %s135
    %s137 = sphi 0, %s135
    %s138 = sphi 0, %s137
    %s152 = sphi 0, %s138
    %s156 = sphi 0, %s156
    %s158 = sphi 0, %s156
    %s159 = sphi 0, %s158
    %s173 = sphi 0, %s159
    %s181 = sphi 0, %s183
    %s184 = sphi 0, %s181
    %s185 = sphi 0, %s184
    %s201 = sphi 0, %s185
    %s209 = sphi 0, %s211
    %s212 = sphi 0, %s209
    %s213 = sphi 0, %s212
    %s229 = sphi 0, %s213
    %s237 = sphi 0, %s239
    %s240 = sphi 0, %s237
    %s241 = sphi 0, %s240
    %s257 = sphi 0, %s241
    %s265 = sphi 0, %s267
    %s268 = sphi 0, %s265
    %s269 = sphi 0, %s268
    %s285 = sphi 0, %s269
  $region4: #{_lambda_.3} parent=0 // loop_header_branch
    %18 = sbr.rel (%p16) target = $region8
  $region5: #{_lambda_.3} parent=0 // loop_body
    %s20 = ssub.s32 %s15, 1
    %s21 = ssub.s32 %s15, 2
    %s28 = sadd.s32 1, %s23
    %p29 = scmp.ge.s32.totalorder %s28, 1
    %s30 = scalar_select %p29, 0, %s28
    %s31 = sadd.s32 1, %s22
    %s32 = scalar_select %p29, %s31, %s22
    %p33 = scmp.ge.s32.totalorder %s32, 2
    %s34 = scalar_select %p33, 0, %s32
    %s35 = ssub.s32 %s22, %s34
    %s36 = ssub.s32 %s23, %s30
    %s37 = sor.u32 %s35, %s36
    %p38 = scmp.eq.s32.totalorder %s37, 0
    %s40 = sadd.s32 %s39, 1
    %s41 = scalar_select %p38, %s39, %s40
    %p44 = pneg %p38
    %p45 = scmp.eq.s32.totalorder %s15, 1
    %p46 = por %p44, %p45
    %p47 = scmp.ne.s32.totalorder %s39, %s42
    %p48 = scmp.eq.s32.totalorder %s15, 0
    %p49 = por %p47, %p48
    %p50 = scmp.ne.s32.totalorder %s39, %s42
    %p51 = scmp.eq.s32.totalorder %s20, 1
    %p52 = por %p50, %p51
    %p53 = scmp.ne.s32.totalorder %s42, %s43
    %p54 = scmp.eq.s32.totalorder %s20, 0
    %p55 = por %p53, %p54
    %p56 = scmp.ne.s32.totalorder %s42, %s43
    %p57 = scmp.eq.s32.totalorder %s21, 1
    %p58 = por %p56, %p57
    %p60 = scmp.ne.s32.totalorder %s43, %s59
    %p61 = scmp.eq.s32.totalorder %s21, 0
    %p62 = por %p60, %p61
    %s63 = smul.u32 %s23, 16
    %s64 = ssub.s32 %s63, 1
    %p65 = scmp.gt.s32.totalorder %s64, 0
    %s66 = scalar_select %p65, %s64, 0
    %s67 = smul.u32 %s30, 16
    %s68 = ssub.s32 %s67, 1
    %p69 = scmp.gt.s32.totalorder %s68, 0
    %s70 = scalar_select %p69, %s68, 0
    %s71 = ssub.s32 %s22, %s34
    %s72 = ssub.s32 %s66, %s70
    %s73 = sor.u32 %s71, %s72
    %p74 = scmp.eq.s32.totalorder %s73, 0
    %s76 = sadd.s32 %s75, 1
    %s77 = scalar_select %p74, %s75, %s76
    %p80 = pneg %p74
    %p81 = scmp.eq.s32.totalorder %s15, 1
    %p82 = por %p80, %p81
    %p83 = scmp.ne.s32.totalorder %s75, %s78
    %p84 = scmp.eq.s32.totalorder %s15, 0
    %p85 = por %p83, %p84
    %p86 = scmp.ne.s32.totalorder %s75, %s78
    %p87 = scmp.eq.s32.totalorder %s20, 1
    %p88 = por %p86, %p87
    %p89 = scmp.ne.s32.totalorder %s78, %s79
    %p90 = scmp.eq.s32.totalorder %s20, 0
    %p91 = por %p89, %p90
    %p92 = scmp.ne.s32.totalorder %s78, %s79
    %p93 = scmp.eq.s32.totalorder %s21, 1
    %p94 = por %p92, %p93
    %p96 = scmp.ne.s32.totalorder %s79, %s95
    %p97 = scmp.eq.s32.totalorder %s21, 0
    %p98 = por %p96, %p97
    %s99 = sadd.s32 %s23, 1
    %s100 = smul.u32 %s99, 16
    %p101 = scmp.lt.s32.totalorder %s100, 15
    %s102 = scalar_select %p101, %s100, 15
    %s103 = sadd.s32 %s30, 1
    %s104 = smul.u32 %s103, 16
    %p105 = scmp.lt.s32.totalorder %s104, 15
    %s106 = scalar_select %p105, %s104, 15
    %s107 = ssub.s32 %s22, %s34
    %s108 = ssub.s32 %s102, %s106
    %s109 = sor.u32 %s107, %s108
    %p110 = scmp.eq.s32.totalorder %s109, 0
    %s112 = sadd.s32 %s111, 1
    %s113 = scalar_select %p110, %s111, %s112
    %p116 = pneg %p110
    %p117 = scmp.eq.s32.totalorder %s15, 1
    %p118 = por %p116, %p117
    %p119 = scmp.ne.s32.totalorder %s111, %s114
    %p120 = scmp.eq.s32.totalorder %s15, 0
    %p121 = por %p119, %p120
    %p122 = scmp.ne.s32.totalorder %s111, %s114
    %p123 = scmp.eq.s32.totalorder %s20, 1
    %p124 = por %p122, %p123
    %p125 = scmp.ne.s32.totalorder %s114, %s115
    %p126 = scmp.eq.s32.totalorder %s20, 0
    %p127 = por %p125, %p126
    %p128 = scmp.ne.s32.totalorder %s114, %s115
    %p129 = scmp.eq.s32.totalorder %s21, 1
    %p130 = por %p128, %p129
    %p132 = scmp.ne.s32.totalorder %s115, %s131
    %p133 = scmp.eq.s32.totalorder %s21, 0
    %p134 = por %p132, %p133
    %s136 = sadd.s32 %s135, 1
    %p139 = scmp.eq.s32.totalorder %s15, 1
    %p140 = scmp.ne.s32.totalorder %s135, %s137
    %p141 = scmp.eq.s32.totalorder %s15, 0
    %p142 = por %p140, %p141
    %p143 = scmp.ne.s32.totalorder %s135, %s137
    %p144 = scmp.eq.s32.totalorder %s20, 1
    %p145 = por %p143, %p144
    %p146 = scmp.ne.s32.totalorder %s137, %s138
    %p147 = scmp.eq.s32.totalorder %s20, 0
    %p148 = por %p146, %p147
    %p149 = scmp.ne.s32.totalorder %s137, %s138
    %p150 = scmp.eq.s32.totalorder %s21, 1
    %p151 = por %p149, %p150
    %p153 = scmp.ne.s32.totalorder %s138, %s152
    %p154 = scmp.eq.s32.totalorder %s21, 0
    %p155 = por %p153, %p154
    %s157 = sadd.s32 %s156, 1
    %p160 = scmp.eq.s32.totalorder %s15, 1
    %p161 = scmp.ne.s32.totalorder %s156, %s158
    %p162 = scmp.eq.s32.totalorder %s15, 0
    %p163 = por %p161, %p162
    %p164 = scmp.ne.s32.totalorder %s156, %s158
    %p165 = scmp.eq.s32.totalorder %s20, 1
    %p166 = por %p164, %p165
    %p167 = scmp.ne.s32.totalorder %s158, %s159
    %p168 = scmp.eq.s32.totalorder %s20, 0
    %p169 = por %p167, %p168
    %p170 = scmp.ne.s32.totalorder %s158, %s159
    %p171 = scmp.eq.s32.totalorder %s21, 1
    %p172 = por %p170, %p171
    %p174 = scmp.ne.s32.totalorder %s159, %s173
    %p175 = scmp.eq.s32.totalorder %s21, 0
    %p176 = por %p174, %p175
    %s177 = ssub.s32 %s22, %s34
    %s178 = ssub.s32 %s23, %s30
    %s179 = sor.u32 %s177, %s178
    %p180 = scmp.eq.s32.totalorder %s179, 0
    %s182 = sadd.s32 %s181, 1
    %s183 = scalar_select %p180, %s181, %s182
    %p186 = pneg %p180
    %p187 = scmp.eq.s32.totalorder %s15, 1
    %p188 = por %p186, %p187
    %p189 = scmp.ne.s32.totalorder %s181, %s184
    %p190 = scmp.eq.s32.totalorder %s15, 0
    %p191 = por %p189, %p190
    %p192 = scmp.ne.s32.totalorder %s181, %s184
    %p193 = scmp.eq.s32.totalorder %s20, 1
    %p194 = por %p192, %p193
    %p195 = scmp.ne.s32.totalorder %s184, %s185
    %p196 = scmp.eq.s32.totalorder %s20, 0
    %p197 = por %p195, %p196
    %p198 = scmp.ne.s32.totalorder %s184, %s185
    %p199 = scmp.eq.s32.totalorder %s21, 1
    %p200 = por %p198, %p199
    %p202 = scmp.ne.s32.totalorder %s185, %s201
    %p203 = scmp.eq.s32.totalorder %s21, 0
    %p204 = por %p202, %p203
    %s205 = ssub.s32 %s22, %s34
    %s206 = ssub.s32 %s23, %s30
    %s207 = sor.u32 %s205, %s206
    %p208 = scmp.eq.s32.totalorder %s207, 0
    %s210 = sadd.s32 %s209, 1
    %s211 = scalar_select %p208, %s209, %s210
    %p214 = pneg %p208
    %p215 = scmp.eq.s32.totalorder %s15, 1
    %p216 = por %p214, %p215
    %p217 = scmp.ne.s32.totalorder %s209, %s212
    %p218 = scmp.eq.s32.totalorder %s15, 0
    %p219 = por %p217, %p218
    %p220 = scmp.ne.s32.totalorder %s209, %s212
    %p221 = scmp.eq.s32.totalorder %s20, 1
    %p222 = por %p220, %p221
    %p223 = scmp.ne.s32.totalorder %s212, %s213
    %p224 = scmp.eq.s32.totalorder %s20, 0
    %p225 = por %p223, %p224
    %p226 = scmp.ne.s32.totalorder %s212, %s213
    %p227 = scmp.eq.s32.totalorder %s21, 1
    %p228 = por %p226, %p227
    %p230 = scmp.ne.s32.totalorder %s213, %s229
    %p231 = scmp.eq.s32.totalorder %s21, 0
    %p232 = por %p230, %p231
    %s233 = ssub.s32 %s22, %s34
    %s234 = ssub.s32 %s23, %s30
    %s235 = sor.u32 %s233, %s234
    %p236 = scmp.eq.s32.totalorder %s235, 0
    %s238 = sadd.s32 %s237, 1
    %s239 = scalar_select %p236, %s237, %s238
    %p242 = pneg %p236
    %p243 = scmp.eq.s32.totalorder %s15, 1
    %p244 = por %p242, %p243
    %p245 = scmp.ne.s32.totalorder %s237, %s240
    %p246 = scmp.eq.s32.totalorder %s15, 0
    %p247 = por %p245, %p246
    %p248 = scmp.ne.s32.totalorder %s237, %s240
    %p249 = scmp.eq.s32.totalorder %s20, 1
    %p250 = por %p248, %p249
    %p251 = scmp.ne.s32.totalorder %s240, %s241
    %p252 = scmp.eq.s32.totalorder %s20, 0
    %p253 = por %p251, %p252
    %p254 = scmp.ne.s32.totalorder %s240, %s241
    %p255 = scmp.eq.s32.totalorder %s21, 1
    %p256 = por %p254, %p255
    %p258 = scmp.ne.s32.totalorder %s241, %s257
    %p259 = scmp.eq.s32.totalorder %s21, 0
    %p260 = por %p258, %p259
    %s261 = ssub.s32 %s22, %s34
    %s262 = ssub.s32 %s23, %s30
    %s263 = sor.u32 %s261, %s262
    %p264 = scmp.eq.s32.totalorder %s263, 0
    %s266 = sadd.s32 %s265, 1
    %s267 = scalar_select %p264, %s265, %s266
    %p270 = pneg %p264
    %p271 = scmp.eq.s32.totalorder %s15, 1
    %p272 = por %p270, %p271
    %p273 = scmp.ne.s32.totalorder %s265, %s268
    %p274 = scmp.eq.s32.totalorder %s15, 0
    %p275 = por %p273, %p274
    %p276 = scmp.ne.s32.totalorder %s265, %s268
    %p277 = scmp.eq.s32.totalorder %s20, 1
    %p278 = por %p276, %p277
    %p279 = scmp.ne.s32.totalorder %s268, %s269
    %p280 = scmp.eq.s32.totalorder %s20, 0
    %p281 = por %p279, %p280
    %p282 = scmp.ne.s32.totalorder %s268, %s269
    %p283 = scmp.eq.s32.totalorder %s21, 1
    %p284 = por %p282, %p283
    %p286 = scmp.ne.s32.totalorder %s269, %s285
    %p287 = scmp.eq.s32.totalorder %s21, 0
    %p288 = por %p286, %p287
    %p289 = scmp.le.s32.totalorder 1, %s15
    %p290 = scmp.lt.s32.totalorder %s15, 3
    %p291 = pnand %p289, %p290
    %p292 = pneg %p291
    // Predicated region
    $region9: #{_lambda_.3} parent=5 // pred_check
      _
    $region10: #{_lambda_.3} parent=5 // pred_check_branch
      %294 = sbr.rel (%p291) target = $region12
    $region11: #{_lambda_.3} parent=5 // pred_region
      %s295 = ssub.s32 %s15, 1
      // Predicated region
      $region13: #{_lambda_.3} parent=11 // pred_check
        %p296 = pneg %p148
      $region14: #{_lambda_.3} parent=11 // pred_check_branch
        %298 = sbr.rel (%p296) target = $region16
      $region15: #{_lambda_.3} parent=11 // pred_region
        _
      $region16: #{_lambda_.3} parent=11 // pred_fallthru
        _
      // Predicated region
      $region17: #{_lambda_.3} parent=11 // pred_check
        %p299 = pneg %p169
      $region18: #{_lambda_.3} parent=11 // pred_check_branch
        %301 = sbr.rel (%p299) target = $region20
      $region19: #{_lambda_.3} parent=11 // pred_region
        _
      $region20: #{_lambda_.3} parent=11 // pred_fallthru
        _
    $region12: #{_lambda_.3} parent=5 // pred_fallthru
      _
    %p302 = scmp.lt.s32.totalorder %s15, 2
    // Predicated region
    $region21: #{_lambda_.3} parent=5 // pred_check
      %p303 = pneg %p302
    $region22: #{_lambda_.3} parent=5 // pred_check_branch
      %305 = sbr.rel (%p303) target = $region24
    $region23: #{_lambda_.3} parent=5 // pred_region
      // Predicated region
      $region25: #{_lambda_.3} parent=23 // pred_check
        %p306 = pneg %p49
      $region26: #{_lambda_.3} parent=23 // pred_check_branch
        %308 = sbr.rel (%p306) target = $region28
      $region27: #{_lambda_.3} parent=23 // pred_region
        %s309 = smul.u32 16, %s23
        %p310 = scmp.lt.s32.totalorder %s22, 1
        %s311 = scalar_select %p310, %s22, 1
        %p312 = scmp.lt.s32.totalorder %s309, 15
        %s313 = scalar_select %p312, %s309, 15
        %s314 = smul.addr %s313, 2
        %s315 = smul.addr %s311, 32
        %s316 = sadd.s32 %s314, %s315
        %s317 = smul.addr %s316, 4
        %s318 = scalar_lea.vmem %s0, %s317
        %s319 = smul.u32 16, %s23
      $region28: #{_lambda_.3} parent=23 // pred_fallthru
        _
      // Predicated region
      $region29: #{_lambda_.3} parent=23 // pred_check
        %p320 = pneg %p85
      $region30: #{_lambda_.3} parent=23 // pred_check_branch
        %322 = sbr.rel (%p320) target = $region32
      $region31: #{_lambda_.3} parent=23 // pred_region
        %s323 = smul.u32 %s23, 16
        %s324 = ssub.s32 %s323, 1
        %p325 = scmp.gt.s32.totalorder %s324, 0
        %s326 = scalar_select %p325, %s324, 0
        %p327 = scmp.lt.s32.totalorder %s22, 1
        %s328 = scalar_select %p327, %s22, 1
        %p329 = scmp.lt.s32.totalorder %s326, 15
        %s330 = scalar_select %p329, %s326, 15
        %s331 = smul.addr %s330, 2
        %s332 = smul.addr %s328, 32
        %s333 = sadd.s32 %s331, %s332
        %s334 = smul.addr %s333, 4
        %s335 = scalar_lea.vmem %s1, %s334
        %s336 = smul.u32 %s23, 16
        %s337 = ssub.s32 %s336, 1
        %p338 = scmp.gt.s32.totalorder %s337, 0
        %s339 = scalar_select %p338, %s337, 0
      $region32: #{_lambda_.3} parent=23 // pred_fallthru
        _
      // Predicated region
      $region33: #{_lambda_.3} parent=23 // pred_check
        %p340 = pneg %p121
      $region34: #{_lambda_.3} parent=23 // pred_check_branch
        %342 = sbr.rel (%p340) target = $region36
      $region35: #{_lambda_.3} parent=23 // pred_region
        %s343 = sadd.s32 %s23, 1
        %s344 = smul.u32 %s343, 16
        %p345 = scmp.lt.s32.totalorder %s344, 15
        %s346 = scalar_select %p345, %s344, 15
        %p347 = scmp.lt.s32.totalorder %s22, 1
        %s348 = scalar_select %p347, %s22, 1
        %p349 = scmp.lt.s32.totalorder %s346, 15
        %s350 = scalar_select %p349, %s346, 15
        %s351 = smul.addr %s350, 2
        %s352 = smul.addr %s348, 32
        %s353 = sadd.s32 %s351, %s352
        %s354 = smul.addr %s353, 4
        %s355 = scalar_lea.vmem %s2, %s354
        %s356 = sadd.s32 %s23, 1
        %s357 = smul.u32 %s356, 16
        %p358 = scmp.lt.s32.totalorder %s357, 15
        %s359 = scalar_select %p358, %s357, 15
      $region36: #{_lambda_.3} parent=23 // pred_fallthru
        _
    $region24: #{_lambda_.3} parent=5 // pred_fallthru
      _
    %p360 = scmp.le.s32.totalorder 1, %s15
    %p361 = scmp.lt.s32.totalorder %s15, 3
    %p362 = pnand %p360, %p361
    %p363 = pneg %p362
    // Predicated region
    $region37: #{_lambda_.3} parent=5 // pred_check
      _
    $region38: #{_lambda_.3} parent=5 // pred_check_branch
      %365 = sbr.rel (%p362) target = $region40
    $region39: #{_lambda_.3} parent=5 // pred_region
      %s366 = ssub.s32 %s15, 1
      %s367 = smul.u32 16, %s25
      %p368 = scmp.lt.s32.totalorder %s24, 1
      %s369 = scalar_select %p368, %s24, 1
      %p370 = scmp.lt.s32.totalorder %s367, 15
      %s371 = scalar_select %p370, %s367, 15
      %s372 = smul.addr %s371, 2
      %s373 = smul.addr %s369, 32
      %s374 = sadd.s32 %s372, %s373
      %s375 = smul.addr %s374, 4
      %s376 = scalar_lea.vmem %s0, %s375
      %p377 = pneg %p55
      %p378 = pneg %p52
      %s379 = smul.u32 %s25, 16
      %s380 = ssub.s32 %s379, 1
      %p381 = scmp.gt.s32.totalorder %s380, 0
      %s382 = scalar_select %p381, %s380, 0
      %p383 = scmp.lt.s32.totalorder %s24, 1
      %s384 = scalar_select %p383, %s24, 1
      %p385 = scmp.lt.s32.totalorder %s382, 15
      %s386 = scalar_select %p385, %s382, 15
      %s387 = smul.addr %s386, 2
      %s388 = smul.addr %s384, 32
      %s389 = sadd.s32 %s387, %s388
      %s390 = smul.addr %s389, 4
      %s391 = scalar_lea.vmem %s1, %s390
      %p392 = pneg %p91
      %p393 = pneg %p88
      %s394 = sadd.s32 %s25, 1
      %s395 = smul.u32 %s394, 16
      %p396 = scmp.lt.s32.totalorder %s395, 15
      %s397 = scalar_select %p396, %s395, 15
      %p398 = scmp.lt.s32.totalorder %s24, 1
      %s399 = scalar_select %p398, %s24, 1
      %p400 = scmp.lt.s32.totalorder %s397, 15
      %s401 = scalar_select %p400, %s397, 15
      %s402 = smul.addr %s401, 2
      %s403 = smul.addr %s399, 32
      %s404 = sadd.s32 %s402, %s403
      %s405 = smul.addr %s404, 4
      %s406 = scalar_lea.vmem %s2, %s405
      %p407 = pneg %p127
      %p408 = pneg %p124
      %p409 = pneg %p148
      %p410 = pneg %p145
      %p411 = pneg %p169
      %p412 = pneg %p166
      %p413 = pneg %p197
      %p414 = pneg %p194
      %s415 = smul.u32 16, %s25
      %p416 = scmp.lt.s32.totalorder %s24, 1
      %s417 = scalar_select %p416, %s24, 1
      %p418 = scmp.lt.s32.totalorder %s415, 15
      %s419 = scalar_select %p418, %s415, 15
      %s420 = smul.addr %s419, 2
      %s421 = smul.addr %s417, 32
      %s422 = sadd.s32 %s420, %s421
      %s423 = smul.addr %s422, 4
      %s424 = scalar_lea.vmem %s5, %s423
      %p425 = pneg %p225
      %p426 = pneg %p222
      %p427 = scmp.lt.s32.totalorder %s24, 1
      %s428 = scalar_select %p427, %s24, 1
      %p429 = scmp.lt.s32.totalorder %s25, 0
      %s430 = scalar_select %p429, %s25, 0
      %s431 = sadd.s32 %s430, %s428
      %s432 = smul.addr %s431, 2
      %s433 = scalar_lea.vmem %s6, %s432
      %p434 = pneg %p253
      %p435 = pneg %p250
      %s436 = smul.u32 16, %s25
      %p437 = scmp.lt.s32.totalorder %s24, 1
      %s438 = scalar_select %p437, %s24, 1
      %p439 = scmp.lt.s32.totalorder %s436, 15
      %s440 = scalar_select %p439, %s436, 15
      %s441 = smul.addr %s440, 2
      %s442 = smul.addr %s438, 32
      %s443 = sadd.s32 %s441, %s442
      %s444 = smul.addr %s443, 4
      %s445 = scalar_lea.vmem %s7, %s444
      %p446 = pneg %p281
      %p447 = pneg %p278
      %p448 = scmp.lt.s32.totalorder %s24, 1
      %s449 = scalar_select %p448, %s24, 1
      %p450 = scmp.lt.s32.totalorder %s25, 0
      %s451 = scalar_select %p450, %s25, 0
      %s452 = sadd.s32 %s451, %s449
      %s453 = smul.addr %s452, 2
      %s454 = scalar_lea.vmem %s8, %s453
      %s455 = smul.u32 16, %s25
      %p456 = scmp.lt.s32.totalorder %s24, 1
      %s457 = scalar_select %p456, %s24, 1
      %p458 = scmp.lt.s32.totalorder %s455, 15
      %s459 = scalar_select %p458, %s455, 15
      %s460 = smul.addr %s459, 2
      %s461 = smul.addr %s457, 32
      %s462 = sadd.s32 %s460, %s461
      %s463 = smul.addr %s462, 4
      %s464 = scalar_lea.vmem %s0, %s463
      %s465 = smul.u32 16, %s25
      %s466 = smul.u32 %s25, 16
      %s467 = ssub.s32 %s466, 1
      %p468 = scmp.gt.s32.totalorder %s467, 0
      %s469 = scalar_select %p468, %s467, 0
      %p470 = scmp.lt.s32.totalorder %s24, 1
      %s471 = scalar_select %p470, %s24, 1
      %p472 = scmp.lt.s32.totalorder %s469, 15
      %s473 = scalar_select %p472, %s469, 15
      %s474 = smul.addr %s473, 2
      %s475 = smul.addr %s471, 32
      %s476 = sadd.s32 %s474, %s475
      %s477 = smul.addr %s476, 4
      %s478 = scalar_lea.vmem %s1, %s477
      %s479 = smul.u32 %s25, 16
      %s480 = ssub.s32 %s479, 1
      %p481 = scmp.gt.s32.totalorder %s480, 0
      %s482 = scalar_select %p481, %s480, 0
      %s483 = sadd.s32 %s25, 1
      %s484 = smul.u32 %s483, 16
      %p485 = scmp.lt.s32.totalorder %s484, 15
      %s486 = scalar_select %p485, %s484, 15
      %p487 = scmp.lt.s32.totalorder %s24, 1
      %s488 = scalar_select %p487, %s24, 1
      %p489 = scmp.lt.s32.totalorder %s486, 15
      %s490 = scalar_select %p489, %s486, 15
      %s491 = smul.addr %s490, 2
      %s492 = smul.addr %s488, 32
      %s493 = sadd.s32 %s491, %s492
      %s494 = smul.addr %s493, 4
      %s495 = scalar_lea.vmem %s2, %s494
      %s496 = sadd.s32 %s25, 1
      %s497 = smul.u32 %s496, 16
      %p498 = scmp.lt.s32.totalorder %s497, 15
      %s499 = scalar_select %p498, %s497, 15
      %s500 = smul.u32 16, %s25
      %p501 = scmp.lt.s32.totalorder %s24, 1
      %s502 = scalar_select %p501, %s24, 1
      %p503 = scmp.lt.s32.totalorder %s500, 15
      %s504 = scalar_select %p503, %s500, 15
      %s505 = smul.addr %s504, 2
      %s506 = smul.addr %s502, 32
      %s507 = sadd.s32 %s505, %s506
      %s508 = smul.addr %s507, 4
      %s509 = scalar_lea.vmem %s5, %s508
      %s510 = smul.u32 16, %s25
      %p511 = scmp.lt.s32.totalorder %s24, 1
      %s512 = scalar_select %p511, %s24, 1
      %p513 = scmp.lt.s32.totalorder %s25, 0
      %s514 = scalar_select %p513, %s25, 0
      %s515 = sadd.s32 %s514, %s512
      %s516 = smul.addr %s515, 2
      %s517 = scalar_lea.vmem %s6, %s516
      %s518 = smul.u32 16, %s25
      %p519 = scmp.lt.s32.totalorder %s24, 1
      %s520 = scalar_select %p519, %s24, 1
      %p521 = scmp.lt.s32.totalorder %s518, 15
      %s522 = scalar_select %p521, %s518, 15
      %s523 = smul.addr %s522, 2
      %s524 = smul.addr %s520, 32
      %s525 = sadd.s32 %s523, %s524
      %s526 = smul.addr %s525, 4
      %s527 = scalar_lea.vmem %s7, %s526
      %s528 = smul.u32 16, %s25
      %p529 = scmp.lt.s32.totalorder %s24, 1
      %s530 = scalar_select %p529, %s24, 1
      %p531 = scmp.lt.s32.totalorder %s25, 0
      %s532 = scalar_select %p531, %s25, 0
      %s533 = sadd.s32 %s532, %s530
      %s534 = smul.addr %s533, 2
      %s535 = scalar_lea.vmem %s8, %s534
      %v537 = vld [vmem:[%s478] sm:$0xf]
      %v538 = vld [vmem:[%s478 + $0x4] sm:$0xf]
      %v539 = vld [vmem:[%s464] sm:$0xf]
      %v540 = vld [vmem:[%s464 + $0x4] sm:$0xf]
      %v541 = vld [vmem:[%s464 + $0x8] sm:$0xf]
      %v542 = vld [vmem:[%s464 + $0xc] sm:$0xf]
      %v543 = vld [vmem:[%s464 + $0x10] sm:$0xf]
      %v544 = vld [vmem:[%s464 + $0x14] sm:$0xf]
      %v545 = vld [vmem:[%s464 + $0x18] sm:$0xf]
      %v546 = vld [vmem:[%s464 + $0x1c] sm:$0xf]
      %v547 = vld [vmem:[%s464 + $0x20] sm:$0xf]
      %v548 = vld [vmem:[%s464 + $0x24] sm:$0xf]
      %v549 = vld [vmem:[%s464 + $0x28] sm:$0xf]
      %v550 = vld [vmem:[%s464 + $0x2c] sm:$0xf]
      %v551 = vld [vmem:[%s464 + $0x30] sm:$0xf]
      %v552 = vld [vmem:[%s464 + $0x34] sm:$0xf]
      %v553 = vld [vmem:[%s464 + $0x38] sm:$0xf]
      %v554 = vld [vmem:[%s464 + $0x3c] sm:$0xf]
      %v555 = vld [vmem:[%s464 + $0x40] sm:$0xf]
      %v556 = vld [vmem:[%s464 + $0x44] sm:$0xf]
      %v557 = vld [vmem:[%s464 + $0x48] sm:$0xf]
      %v558 = vld [vmem:[%s464 + $0x4c] sm:$0xf]
      %v559 = vld [vmem:[%s464 + $0x50] sm:$0xf]
      %v560 = vld [vmem:[%s464 + $0x54] sm:$0xf]
      %v561 = vld [vmem:[%s464 + $0x58] sm:$0xf]
      %v562 = vld [vmem:[%s464 + $0x5c] sm:$0xf]
      %v563 = vld [vmem:[%s464 + $0x60] sm:$0xf]
      %v564 = vld [vmem:[%s464 + $0x64] sm:$0xf]
      %v565 = vld [vmem:[%s464 + $0x68] sm:$0xf]
      %v566 = vld [vmem:[%s464 + $0x6c] sm:$0xf]
      %v567 = vld [vmem:[%s464 + $0x70] sm:$0xf]
      %v568 = vld [vmem:[%s464 + $0x74] sm:$0xf]
      %v569 = vld [vmem:[%s464 + $0x78] sm:$0xf]
      %v570 = vld [vmem:[%s464 + $0x7c] sm:$0xf]
      %v571 = vld [vmem:[%s495] sm:$0xf]
      %v572 = vld [vmem:[%s495 + $0x4] sm:$0xf]
      %vm573 = vsmask.f32 256
      %vm574 = vsmask.f32 4368
      %vm575 = vmor %vm573, %vm574
      %v577 = vshrl.u32 %v537, 16
      %v579 = vrot.slane %v577, 7
      %v580 = vshll.u32 %v537, 16
      %v582 = vor.u32 %v579, %v580
      %v583 = vrot.slane %v579, 4
      %v585 = vshrl.u32 %v538, 16
      %v587 = vrot.slane %v585, 7
      %v588 = vshll.u32 %v538, 16
      %v590 = vor.u32 %v587, %v588
      %v591 = vsel %vm575, %v583, %v590
      %v592 = vrot.slane %v587, 4
      %vm596 = vcmask 1043456
      %vm597 = vsmask.f32 7938
      %vm598 = vmand %vm596, %vm597
      %v599 = vld [vmem:[#allocation2] sm:$0xf]
      %v600 = vsel %vm598, %v582, %v599
      %601 = vst [vmem:[#allocation2] sm:$0xf] %v600
      %602 = vst [vmem:[#allocation2 + $0x4] sm:$0xf] %v591
      %vm603 = vcmask 1040384
      %vm604 = vmand %vm603, %vm573
      %v605 = vld [vmem:[#allocation2 + $0x8] sm:$0x1]
      %v606 = vsel %vm604, %v592, %v605
      %607 = vst [vmem:[#allocation2 + $0x8] sm:$0x1] %v606
      %v609 = vshrl.u32 %v539, 16
      %v611 = vrot.slane %v609, 7
      %v612 = vshll.u32 %v539, 16
      %v614 = vor.u32 %v611, %v612
      %v615 = vrot.slane %v611, 4
      %v617 = vshrl.u32 %v540, 16
      %v619 = vrot.slane %v617, 7
      %v620 = vshll.u32 %v540, 16
      %v622 = vor.u32 %v619, %v620
      %v623 = vsel %vm575, %v615, %v622
      %v624 = vrot.slane %v619, 4
      %v626 = vshrl.u32 %v541, 16
      %v628 = vrot.slane %v626, 7
      %v629 = vshll.u32 %v541, 16
      %v631 = vor.u32 %v628, %v629
      %v632 = vrot.slane %v628, 4
      %v634 = vshrl.u32 %v542, 16
      %v636 = vrot.slane %v634, 7
      %v637 = vshll.u32 %v542, 16
      %v639 = vor.u32 %v636, %v637
      %v640 = vsel %vm575, %v632, %v639
      %v641 = vrot.slane %v636, 4
      %v643 = vshrl.u32 %v543, 16
      %v645 = vrot.slane %v643, 7
      %v646 = vshll.u32 %v543, 16
      %v648 = vor.u32 %v645, %v646
      %v649 = vrot.slane %v645, 4
      %v651 = vshrl.u32 %v544, 16
      %v653 = vrot.slane %v651, 7
      %v654 = vshll.u32 %v544, 16
      %v656 = vor.u32 %v653, %v654
      %v657 = vsel %vm575, %v649, %v656
      %v658 = vrot.slane %v653, 4
      %v660 = vshrl.u32 %v545, 16
      %v662 = vrot.slane %v660, 7
      %v663 = vshll.u32 %v545, 16
      %v665 = vor.u32 %v662, %v663
      %v666 = vrot.slane %v662, 4
      %v668 = vshrl.u32 %v546, 16
      %v670 = vrot.slane %v668, 7
      %v671 = vshll.u32 %v546, 16
      %v673 = vor.u32 %v670, %v671
      %v674 = vsel %vm575, %v666, %v673
      %v675 = vrot.slane %v670, 4
      %v677 = vshrl.u32 %v547, 16
      %v679 = vrot.slane %v677, 7
      %v680 = vshll.u32 %v547, 16
      %v682 = vor.u32 %v679, %v680
      %v683 = vrot.slane %v679, 4
      %v685 = vshrl.u32 %v548, 16
      %v687 = vrot.slane %v685, 7
      %v688 = vshll.u32 %v548, 16
      %v690 = vor.u32 %v687, %v688
      %v691 = vsel %vm575, %v683, %v690
      %v692 = vrot.slane %v687, 4
      %v694 = vshrl.u32 %v549, 16
      %v696 = vrot.slane %v694, 7
      %v697 = vshll.u32 %v549, 16
      %v699 = vor.u32 %v696, %v697
      %v700 = vrot.slane %v696, 4
      %v702 = vshrl.u32 %v550, 16
      %v704 = vrot.slane %v702, 7
      %v705 = vshll.u32 %v550, 16
      %v707 = vor.u32 %v704, %v705
      %v708 = vsel %vm575, %v700, %v707
      %v709 = vrot.slane %v704, 4
      %v711 = vshrl.u32 %v551, 16
      %v713 = vrot.slane %v711, 7
      %v714 = vshll.u32 %v551, 16
      %v716 = vor.u32 %v713, %v714
      %v717 = vrot.slane %v713, 4
      %v719 = vshrl.u32 %v552, 16
      %v721 = vrot.slane %v719, 7
      %v722 = vshll.u32 %v552, 16
      %v724 = vor.u32 %v721, %v722
      %v725 = vsel %vm575, %v717, %v724
      %v726 = vrot.slane %v721, 4
      %v728 = vshrl.u32 %v553, 16
      %v730 = vrot.slane %v728, 7
      %v731 = vshll.u32 %v553, 16
      %v733 = vor.u32 %v730, %v731
      %v734 = vrot.slane %v730, 4
      %v736 = vshrl.u32 %v554, 16
      %v738 = vrot.slane %v736, 7
      %v739 = vshll.u32 %v554, 16
      %v741 = vor.u32 %v738, %v739
      %v742 = vsel %vm575, %v734, %v741
      %v743 = vrot.slane %v738, 4
      %v745 = vshrl.u32 %v555, 16
      %v747 = vrot.slane %v745, 7
      %v748 = vshll.u32 %v555, 16
      %v750 = vor.u32 %v747, %v748
      %v751 = vrot.slane %v747, 4
      %v753 = vshrl.u32 %v556, 16
      %v755 = vrot.slane %v753, 7
      %v756 = vshll.u32 %v556, 16
      %v758 = vor.u32 %v755, %v756
      %v759 = vsel %vm575, %v751, %v758
      %v760 = vrot.slane %v755, 4
      %v762 = vshrl.u32 %v557, 16
      %v764 = vrot.slane %v762, 7
      %v765 = vshll.u32 %v557, 16
      %v767 = vor.u32 %v764, %v765
      %v768 = vrot.slane %v764, 4
      %v770 = vshrl.u32 %v558, 16
      %v772 = vrot.slane %v770, 7
      %v773 = vshll.u32 %v558, 16
      %v775 = vor.u32 %v772, %v773
      %v776 = vsel %vm575, %v768, %v775
      %v777 = vrot.slane %v772, 4
      %v779 = vshrl.u32 %v559, 16
      %v781 = vrot.slane %v779, 7
      %v782 = vshll.u32 %v559, 16
      %v784 = vor.u32 %v781, %v782
      %v785 = vrot.slane %v781, 4
      %v787 = vshrl.u32 %v560, 16
      %v789 = vrot.slane %v787, 7
      %v790 = vshll.u32 %v560, 16
      %v792 = vor.u32 %v789, %v790
      %v793 = vsel %vm575, %v785, %v792
      %v794 = vrot.slane %v789, 4
      %v796 = vshrl.u32 %v561, 16
      %v798 = vrot.slane %v796, 7
      %v799 = vshll.u32 %v561, 16
      %v801 = vor.u32 %v798, %v799
      %v802 = vrot.slane %v798, 4
      %v804 = vshrl.u32 %v562, 16
      %v806 = vrot.slane %v804, 7
      %v807 = vshll.u32 %v562, 16
      %v809 = vor.u32 %v806, %v807
      %v810 = vsel %vm575, %v802, %v809
      %v811 = vrot.slane %v806, 4
      %v813 = vshrl.u32 %v563, 16
      %v815 = vrot.slane %v813, 7
      %v816 = vshll.u32 %v563, 16
      %v818 = vor.u32 %v815, %v816
      %v819 = vrot.slane %v815, 4
      %v821 = vshrl.u32 %v564, 16
      %v823 = vrot.slane %v821, 7
      %v824 = vshll.u32 %v564, 16
      %v826 = vor.u32 %v823, %v824
      %v827 = vsel %vm575, %v819, %v826
      %v828 = vrot.slane %v823, 4
      %v830 = vshrl.u32 %v565, 16
      %v832 = vrot.slane %v830, 7
      %v833 = vshll.u32 %v565, 16
      %v835 = vor.u32 %v832, %v833
      %v836 = vrot.slane %v832, 4
      %v838 = vshrl.u32 %v566, 16
      %v840 = vrot.slane %v838, 7
      %v841 = vshll.u32 %v566, 16
      %v843 = vor.u32 %v840, %v841
      %v844 = vsel %vm575, %v836, %v843
      %v845 = vrot.slane %v840, 4
      %v847 = vshrl.u32 %v567, 16
      %v849 = vrot.slane %v847, 7
      %v850 = vshll.u32 %v567, 16
      %v852 = vor.u32 %v849, %v850
      %v853 = vrot.slane %v849, 4
      %v855 = vshrl.u32 %v568, 16
      %v857 = vrot.slane %v855, 7
      %v858 = vshll.u32 %v568, 16
      %v860 = vor.u32 %v857, %v858
      %v861 = vsel %vm575, %v853, %v860
      %v862 = vrot.slane %v857, 4
      %v864 = vshrl.u32 %v569, 16
      %v866 = vrot.slane %v864, 7
      %v867 = vshll.u32 %v569, 16
      %v869 = vor.u32 %v866, %v867
      %v870 = vrot.slane %v866, 4
      %v872 = vshrl.u32 %v570, 16
      %v874 = vrot.slane %v872, 7
      %v875 = vshll.u32 %v570, 16
      %v877 = vor.u32 %v874, %v875
      %v878 = vsel %vm575, %v870, %v877
      %v879 = vrot.slane %v874, 4
      %s928 = scalar_lea.vmem [#allocation2], 12
      %v929 = vld [vmem:[%s928] sm:$0xf]
      %v930 = vsel %vm598, %v614, %v929
      %931 = vst [vmem:[%s928] sm:$0xf] %v930
      %932 = vst [vmem:[%s928 + $0x4] sm:$0xf] %v623
      %v933 = vld [vmem:[%s928 + $0x8] sm:$0x1]
      %v934 = vsel %vm604, %v624, %v933
      %935 = vst [vmem:[%s928 + $0x8] sm:$0x1] %v934
      %v936 = vld [vmem:[%s928 + $0xc] sm:$0xf]
      %v937 = vsel %vm598, %v631, %v936
      %938 = vst [vmem:[%s928 + $0xc] sm:$0xf] %v937
      %939 = vst [vmem:[%s928 + $0x10] sm:$0xf] %v640
      %v940 = vld [vmem:[%s928 + $0x14] sm:$0x1]
      %v941 = vsel %vm604, %v641, %v940
      %942 = vst [vmem:[%s928 + $0x14] sm:$0x1] %v941
      %v943 = vld [vmem:[%s928 + $0x18] sm:$0xf]
      %v944 = vsel %vm598, %v648, %v943
      %945 = vst [vmem:[%s928 + $0x18] sm:$0xf] %v944
      %946 = vst [vmem:[%s928 + $0x1c] sm:$0xf] %v657
      %v947 = vld [vmem:[%s928 + $0x20] sm:$0x1]
      %v948 = vsel %vm604, %v658, %v947
      %949 = vst [vmem:[%s928 + $0x20] sm:$0x1] %v948
      %v950 = vld [vmem:[%s928 + $0x24] sm:$0xf]
      %v951 = vsel %vm598, %v665, %v950
      %952 = vst [vmem:[%s928 + $0x24] sm:$0xf] %v951
      %953 = vst [vmem:[%s928 + $0x28] sm:$0xf] %v674
      %v954 = vld [vmem:[%s928 + $0x2c] sm:$0x1]
      %v955 = vsel %vm604, %v675, %v954
      %956 = vst [vmem:[%s928 + $0x2c] sm:$0x1] %v955
      %v957 = vld [vmem:[%s928 + $0x30] sm:$0xf]
      %v958 = vsel %vm598, %v682, %v957
      %959 = vst [vmem:[%s928 + $0x30] sm:$0xf] %v958
      %960 = vst [vmem:[%s928 + $0x34] sm:$0xf] %v691
      %v961 = vld [vmem:[%s928 + $0x38] sm:$0x1]
      %v962 = vsel %vm604, %v692, %v961
      %963 = vst [vmem:[%s928 + $0x38] sm:$0x1] %v962
      %v964 = vld [vmem:[%s928 + $0x3c] sm:$0xf]
      %v965 = vsel %vm598, %v699, %v964
      %966 = vst [vmem:[%s928 + $0x3c] sm:$0xf] %v965
      %967 = vst [vmem:[%s928 + $0x40] sm:$0xf] %v708
      %v968 = vld [vmem:[%s928 + $0x44] sm:$0x1]
      %v969 = vsel %vm604, %v709, %v968
      %970 = vst [vmem:[%s928 + $0x44] sm:$0x1] %v969
      %v971 = vld [vmem:[%s928 + $0x48] sm:$0xf]
      %v972 = vsel %vm598, %v716, %v971
      %973 = vst [vmem:[%s928 + $0x48] sm:$0xf] %v972
      %974 = vst [vmem:[%s928 + $0x4c] sm:$0xf] %v725
      %v975 = vld [vmem:[%s928 + $0x50] sm:$0x1]
      %v976 = vsel %vm604, %v726, %v975
      %977 = vst [vmem:[%s928 + $0x50] sm:$0x1] %v976
      %v978 = vld [vmem:[%s928 + $0x54] sm:$0xf]
      %v979 = vsel %vm598, %v733, %v978
      %980 = vst [vmem:[%s928 + $0x54] sm:$0xf] %v979
      %981 = vst [vmem:[%s928 + $0x58] sm:$0xf] %v742
      %v982 = vld [vmem:[%s928 + $0x5c] sm:$0x1]
      %v983 = vsel %vm604, %v743, %v982
      %984 = vst [vmem:[%s928 + $0x5c] sm:$0x1] %v983
      %v985 = vld [vmem:[%s928 + $0x60] sm:$0xf]
      %v986 = vsel %vm598, %v750, %v985
      %987 = vst [vmem:[%s928 + $0x60] sm:$0xf] %v986
      %988 = vst [vmem:[%s928 + $0x64] sm:$0xf] %v759
      %v989 = vld [vmem:[%s928 + $0x68] sm:$0x1]
      %v990 = vsel %vm604, %v760, %v989
      %991 = vst [vmem:[%s928 + $0x68] sm:$0x1] %v990
      %v992 = vld [vmem:[%s928 + $0x6c] sm:$0xf]
      %v993 = vsel %vm598, %v767, %v992
      %994 = vst [vmem:[%s928 + $0x6c] sm:$0xf] %v993
      %995 = vst [vmem:[%s928 + $0x70] sm:$0xf] %v776
      %v996 = vld [vmem:[%s928 + $0x74] sm:$0x1]
      %v997 = vsel %vm604, %v777, %v996
      %998 = vst [vmem:[%s928 + $0x74] sm:$0x1] %v997
      %v999 = vld [vmem:[%s928 + $0x78] sm:$0xf]
      %v1000 = vsel %vm598, %v784, %v999
      %1001 = vst [vmem:[%s928 + $0x78] sm:$0xf] %v1000
      %1002 = vst [vmem:[%s928 + $0x7c] sm:$0xf] %v793
      %v1003 = vld [vmem:[%s928 + $0x80] sm:$0x1]
      %v1004 = vsel %vm604, %v794, %v1003
      %1005 = vst [vmem:[%s928 + $0x80] sm:$0x1] %v1004
      %v1006 = vld [vmem:[%s928 + $0x84] sm:$0xf]
      %v1007 = vsel %vm598, %v801, %v1006
      %1008 = vst [vmem:[%s928 + $0x84] sm:$0xf] %v1007
      %1009 = vst [vmem:[%s928 + $0x88] sm:$0xf] %v810
      %v1010 = vld [vmem:[%s928 + $0x8c] sm:$0x1]
      %v1011 = vsel %vm604, %v811, %v1010
      %1012 = vst [vmem:[%s928 + $0x8c] sm:$0x1] %v1011
      %v1013 = vld [vmem:[%s928 + $0x90] sm:$0xf]
      %v1014 = vsel %vm598, %v818, %v1013
      %1015 = vst [vmem:[%s928 + $0x90] sm:$0xf] %v1014
      %1016 = vst [vmem:[%s928 + $0x94] sm:$0xf] %v827
      %v1017 = vld [vmem:[%s928 + $0x98] sm:$0x1]
      %v1018 = vsel %vm604, %v828, %v1017
      %1019 = vst [vmem:[%s928 + $0x98] sm:$0x1] %v1018
      %v1020 = vld [vmem:[%s928 + $0x9c] sm:$0xf]
      %v1021 = vsel %vm598, %v835, %v1020
      %1022 = vst [vmem:[%s928 + $0x9c] sm:$0xf] %v1021
      %1023 = vst [vmem:[%s928 + $0xa0] sm:$0xf] %v844
      %v1024 = vld [vmem:[%s928 + $0xa4] sm:$0x1]
      %v1025 = vsel %vm604, %v845, %v1024
      %1026 = vst [vmem:[%s928 + $0xa4] sm:$0x1] %v1025
      %v1027 = vld [vmem:[%s928 + $0xa8] sm:$0xf]
      %v1028 = vsel %vm598, %v852, %v1027
      %1029 = vst [vmem:[%s928 + $0xa8] sm:$0xf] %v1028
      %1030 = vst [vmem:[%s928 + $0xac] sm:$0xf] %v861
      %v1031 = vld [vmem:[%s928 + $0xb0] sm:$0x1]
      %v1032 = vsel %vm604, %v862, %v1031
      %1033 = vst [vmem:[%s928 + $0xb0] sm:$0x1] %v1032
      %v1034 = vld [vmem:[%s928 + $0xb4] sm:$0xf]
      %v1035 = vsel %vm598, %v869, %v1034
      %1036 = vst [vmem:[%s928 + $0xb4] sm:$0xf] %v1035
      %1037 = vst [vmem:[%s928 + $0xb8] sm:$0xf] %v878
      %v1038 = vld [vmem:[%s928 + $0xbc] sm:$0x1]
      %v1039 = vsel %vm604, %v879, %v1038
      %1040 = vst [vmem:[%s928 + $0xbc] sm:$0x1] %v1039
      %v1042 = vshrl.u32 %v571, 16
      %v1044 = vrot.slane %v1042, 7
      %v1045 = vshll.u32 %v571, 16
      %v1047 = vor.u32 %v1044, %v1045
      %v1048 = vrot.slane %v1044, 4
      %v1050 = vshrl.u32 %v572, 16
      %v1052 = vrot.slane %v1050, 7
      %v1053 = vshll.u32 %v572, 16
      %v1055 = vor.u32 %v1052, %v1053
      %v1056 = vsel %vm575, %v1048, %v1055
      %v1057 = vrot.slane %v1052, 4
      %s1061 = scalar_lea.vmem [#allocation2], 204
      %v1062 = vld [vmem:[%s1061] sm:$0xf]
      %v1063 = vsel %vm598, %v1047, %v1062
      %1064 = vst [vmem:[%s1061] sm:$0xf] %v1063
      %1065 = vst [vmem:[%s1061 + $0x4] sm:$0xf] %v1056
      %v1066 = vld [vmem:[%s1061 + $0x8] sm:$0x1]
      %v1067 = vsel %vm604, %v1057, %v1066
      %1068 = vst [vmem:[%s1061 + $0x8] sm:$0x1] %v1067
      %v1069 = vld [vmem:[#allocation2] sm:$0x1]
      %v1070 = vsel %vm604, 0, %v1069
      %1071 = vst [vmem:[#allocation2] sm:$0x1] %v1070
      %v1072 = vld [vmem:[#allocation2 + $0xc] sm:$0x1]
      %v1073 = vsel %vm604, 0, %v1072
      %1074 = vst [vmem:[#allocation2 + $0xc] sm:$0x1] %v1073
      %v1075 = vld [vmem:[#allocation2 + $0x18] sm:$0x1]
      %v1076 = vsel %vm604, 0, %v1075
      %1077 = vst [vmem:[#allocation2 + $0x18] sm:$0x1] %v1076
      %v1078 = vld [vmem:[#allocation2 + $0x24] sm:$0x1]
      %v1079 = vsel %vm604, 0, %v1078
      %1080 = vst [vmem:[#allocation2 + $0x24] sm:$0x1] %v1079
      %v1081 = vld [vmem:[#allocation2 + $0x30] sm:$0x1]
      %v1082 = vsel %vm604, 0, %v1081
      %1083 = vst [vmem:[#allocation2 + $0x30] sm:$0x1] %v1082
      %v1084 = vld [vmem:[#allocation2 + $0x3c] sm:$0x1]
      %v1085 = vsel %vm604, 0, %v1084
      %1086 = vst [vmem:[#allocation2 + $0x3c] sm:$0x1] %v1085
      %v1087 = vld [vmem:[#allocation2 + $0x48] sm:$0x1]
      %v1088 = vsel %vm604, 0, %v1087
      %1089 = vst [vmem:[#allocation2 + $0x48] sm:$0x1] %v1088
      %v1090 = vld [vmem:[#allocation2 + $0x54] sm:$0x1]
      %v1091 = vsel %vm604, 0, %v1090
      %1092 = vst [vmem:[#allocation2 + $0x54] sm:$0x1] %v1091
      %v1093 = vld [vmem:[#allocation2 + $0x60] sm:$0x1]
      %v1094 = vsel %vm604, 0, %v1093
      %1095 = vst [vmem:[#allocation2 + $0x60] sm:$0x1] %v1094
      %v1096 = vld [vmem:[#allocation2 + $0x6c] sm:$0x1]
      %v1097 = vsel %vm604, 0, %v1096
      %1098 = vst [vmem:[#allocation2 + $0x6c] sm:$0x1] %v1097
      %v1099 = vld [vmem:[#allocation2 + $0x78] sm:$0x1]
      %v1100 = vsel %vm604, 0, %v1099
      %1101 = vst [vmem:[#allocation2 + $0x78] sm:$0x1] %v1100
      %v1102 = vld [vmem:[#allocation2 + $0x84] sm:$0x1]
      %v1103 = vsel %vm604, 0, %v1102
      %1104 = vst [vmem:[#allocation2 + $0x84] sm:$0x1] %v1103
      %v1105 = vld [vmem:[#allocation2 + $0x90] sm:$0x1]
      %v1106 = vsel %vm604, 0, %v1105
      %1107 = vst [vmem:[#allocation2 + $0x90] sm:$0x1] %v1106
      %v1108 = vld [vmem:[#allocation2 + $0x9c] sm:$0x1]
      %v1109 = vsel %vm604, 0, %v1108
      %1110 = vst [vmem:[#allocation2 + $0x9c] sm:$0x1] %v1109
      %v1111 = vld [vmem:[#allocation2 + $0xa8] sm:$0x1]
      %v1112 = vsel %vm604, 0, %v1111
      %1113 = vst [vmem:[#allocation2 + $0xa8] sm:$0x1] %v1112
      %v1114 = vld [vmem:[#allocation2 + $0xb4] sm:$0x1]
      %v1115 = vsel %vm604, 0, %v1114
      %1116 = vst [vmem:[#allocation2 + $0xb4] sm:$0x1] %v1115
      %v1117 = vld [vmem:[#allocation2 + $0xc0] sm:$0x1]
      %v1118 = vsel %vm604, 0, %v1117
      %1119 = vst [vmem:[#allocation2 + $0xc0] sm:$0x1] %v1118
      %v1120 = vld [vmem:[#allocation2 + $0xcc] sm:$0x1]
      %v1121 = vsel %vm604, 0, %v1120
      %1122 = vst [vmem:[#allocation2 + $0xcc] sm:$0x1] %v1121
      %vm1123 = vmand %vm603, %vm597
      %v1124 = vld [vmem:[#allocation2 + $0x8] sm:$0x1]
      %v1125 = vsel %vm1123, 0, %v1124
      %1126 = vst [vmem:[#allocation2 + $0x8] sm:$0x1] %v1125
      %v1127 = vld [vmem:[#allocation2 + $0x14] sm:$0x1]
      %v1128 = vsel %vm1123, 0, %v1127
      %1129 = vst [vmem:[#allocation2 + $0x14] sm:$0x1] %v1128
      %v1130 = vld [vmem:[#allocation2 + $0x20] sm:$0x1]
      %v1131 = vsel %vm1123, 0, %v1130
      %1132 = vst [vmem:[#allocation2 + $0x20] sm:$0x1] %v1131
      %v1133 = vld [vmem:[#allocation2 + $0x2c] sm:$0x1]
      %v1134 = vsel %vm1123, 0, %v1133
      %1135 = vst [vmem:[#allocation2 + $0x2c] sm:$0x1] %v1134
      %v1136 = vld [vmem:[#allocation2 + $0x38] sm:$0x1]
      %v1137 = vsel %vm1123, 0, %v1136
      %1138 = vst [vmem:[#allocation2 + $0x38] sm:$0x1] %v1137
      %v1139 = vld [vmem:[#allocation2 + $0x44] sm:$0x1]
      %v1140 = vsel %vm1123, 0, %v1139
      %1141 = vst [vmem:[#allocation2 + $0x44] sm:$0x1] %v1140
      %v1142 = vld [vmem:[#allocation2 + $0x50] sm:$0x1]
      %v1143 = vsel %vm1123, 0, %v1142
      %1144 = vst [vmem:[#allocation2 + $0x50] sm:$0x1] %v1143
      %v1145 = vld [vmem:[#allocation2 + $0x5c] sm:$0x1]
      %v1146 = vsel %vm1123, 0, %v1145
      %1147 = vst [vmem:[#allocation2 + $0x5c] sm:$0x1] %v1146
      %v1148 = vld [vmem:[#allocation2 + $0x68] sm:$0x1]
      %v1149 = vsel %vm1123, 0, %v1148
      %1150 = vst [vmem:[#allocation2 + $0x68] sm:$0x1] %v1149
      %v1151 = vld [vmem:[#allocation2 + $0x74] sm:$0x1]
      %v1152 = vsel %vm1123, 0, %v1151
      %1153 = vst [vmem:[#allocation2 + $0x74] sm:$0x1] %v1152
      %v1154 = vld [vmem:[#allocation2 + $0x80] sm:$0x1]
      %v1155 = vsel %vm1123, 0, %v1154
      %1156 = vst [vmem:[#allocation2 + $0x80] sm:$0x1] %v1155
      %v1157 = vld [vmem:[#allocation2 + $0x8c] sm:$0x1]
      %v1158 = vsel %vm1123, 0, %v1157
      %1159 = vst [vmem:[#allocation2 + $0x8c] sm:$0x1] %v1158
      %v1160 = vld [vmem:[#allocation2 + $0x98] sm:$0x1]
      %v1161 = vsel %vm1123, 0, %v1160
      %1162 = vst [vmem:[#allocation2 + $0x98] sm:$0x1] %v1161
      %v1163 = vld [vmem:[#allocation2 + $0xa4] sm:$0x1]
      %v1164 = vsel %vm1123, 0, %v1163
      %1165 = vst [vmem:[#allocation2 + $0xa4] sm:$0x1] %v1164
      %v1166 = vld [vmem:[#allocation2 + $0xb0] sm:$0x1]
      %v1167 = vsel %vm1123, 0, %v1166
      %1168 = vst [vmem:[#allocation2 + $0xb0] sm:$0x1] %v1167
      %v1169 = vld [vmem:[#allocation2 + $0xbc] sm:$0x1]
      %v1170 = vsel %vm1123, 0, %v1169
      %1171 = vst [vmem:[#allocation2 + $0xbc] sm:$0x1] %v1170
      %v1172 = vld [vmem:[#allocation2 + $0xc8] sm:$0x1]
      %v1173 = vsel %vm1123, 0, %v1172
      %1174 = vst [vmem:[#allocation2 + $0xc8] sm:$0x1] %v1173
      %v1175 = vld [vmem:[#allocation2 + $0xd4] sm:$0x1]
      %v1176 = vsel %vm1123, 0, %v1175
      %1177 = vst [vmem:[#allocation2 + $0xd4] sm:$0x1] %v1176
      %p1178 = scmp.eq.s32.totalorder %s25, 0
      // Predicated region
      $region41: #{_lambda_.3} parent=39 // pred_check
        %p1179 = pneg %p1178
      $region42: #{_lambda_.3} parent=39 // pred_check_branch
        %1181 = sbr.rel (%p1179) target = $region44
      $region43: #{_lambda_.3} parent=39 // pred_region
        %1182 = vst [vmem:[#allocation2] sm:$0xf] 0
        %1183 = vst [vmem:[#allocation2 + $0x4] sm:$0xf] 0
        %1184 = vst [vmem:[#allocation2 + $0x8] sm:$0x1] 0
        %1185 = vst [vmem:[%s1061] sm:$0xf] 0
        %1186 = vst [vmem:[%s1061 + $0x4] sm:$0xf] 0
        %1187 = vst [vmem:[%s1061 + $0x8] sm:$0x1] 0
      $region44: #{_lambda_.3} parent=39 // pred_fallthru
        _
      %v1188 = vld [vmem:[#allocation2] sm:$0xf]
      %v1189 = vld [vmem:[#allocation2 + $0x4] sm:$0xf]
      %v1190 = vld [vmem:[#allocation2 + $0x8] sm:$0x1]
      %v1191 = vld [vmem:[#allocation2 + $0xc] sm:$0xf]
      %v1192 = vld [vmem:[#allocation2 + $0x10] sm:$0xf]
      %v1193 = vld [vmem:[#allocation2 + $0x14] sm:$0x1]
      %v1194 = vld [vmem:[#allocation2 + $0x18] sm:$0xf]
      %v1195 = vld [vmem:[#allocation2 + $0x1c] sm:$0xf]
      %v1196 = vld [vmem:[#allocation2 + $0x20] sm:$0x1]
      %v1197 = vld [vmem:[#allocation2 + $0x24] sm:$0xf]
      %v1198 = vld [vmem:[#allocation2 + $0x28] sm:$0xf]
      %v1199 = vld [vmem:[#allocation2 + $0x2c] sm:$0x1]
      %v1200 = vld [vmem:[#allocation2 + $0x30] sm:$0xf]
      %v1201 = vld [vmem:[#allocation2 + $0x34] sm:$0xf]
      %v1202 = vld [vmem:[#allocation2 + $0x38] sm:$0x1]
      %v1203 = vld [vmem:[#allocation2 + $0x3c] sm:$0xf]
      %v1204 = vld [vmem:[#allocation2 + $0x40] sm:$0xf]
      %v1205 = vld [vmem:[#allocation2 + $0x44] sm:$0x1]
      %v1206 = vld [vmem:[#allocation2 + $0x48] sm:$0xf]
      %v1207 = vld [vmem:[#allocation2 + $0x4c] sm:$0xf]
      %v1208 = vld [vmem:[#allocation2 + $0x50] sm:$0x1]
      %v1209 = vld [vmem:[#allocation2 + $0x54] sm:$0xf]
      %v1210 = vld [vmem:[#allocation2 + $0x58] sm:$0xf]
      %v1211 = vld [vmem:[#allocation2 + $0x5c] sm:$0x1]
      %v1212 = vld [vmem:[#allocation2 + $0x60] sm:$0xf]
      %v1213 = vld [vmem:[#allocation2 + $0x64] sm:$0xf]
      %v1214 = vld [vmem:[#allocation2 + $0x68] sm:$0x1]
      %v1215 = vld [vmem:[#allocation2 + $0x6c] sm:$0xf]
      %v1216 = vld [vmem:[#allocation2 + $0x70] sm:$0xf]
      %v1217 = vld [vmem:[#allocation2 + $0x74] sm:$0x1]
      %v1218 = vld [vmem:[#allocation2 + $0x78] sm:$0xf]
      %v1219 = vld [vmem:[#allocation2 + $0x7c] sm:$0xf]
      %v1220 = vld [vmem:[#allocation2 + $0x80] sm:$0x1]
      %v1221 = vld [vmem:[#allocation2 + $0x84] sm:$0xf]
      %v1222 = vld [vmem:[#allocation2 + $0x88] sm:$0xf]
      %v1223 = vld [vmem:[#allocation2 + $0x8c] sm:$0x1]
      %v1224 = vld [vmem:[#allocation2 + $0x90] sm:$0xf]
      %v1225 = vld [vmem:[#allocation2 + $0x94] sm:$0xf]
      %v1226 = vld [vmem:[#allocation2 + $0x98] sm:$0x1]
      %v1227 = vld [vmem:[#allocation2 + $0x9c] sm:$0xf]
      %v1228 = vld [vmem:[#allocation2 + $0xa0] sm:$0xf]
      %v1229 = vld [vmem:[#allocation2 + $0xa4] sm:$0x1]
      %v1230 = vld [vmem:[#allocation2 + $0xa8] sm:$0xf]
      %v1231 = vld [vmem:[#allocation2 + $0xac] sm:$0xf]
      %v1232 = vld [vmem:[#allocation2 + $0xb0] sm:$0x1]
      %v1233 = vld [vmem:[#allocation2 + $0xb4] sm:$0xf]
      %v1234 = vld [vmem:[#allocation2 + $0xb8] sm:$0xf]
      %v1235 = vld [vmem:[#allocation2 + $0xbc] sm:$0x1]
      %v1236 = vld [vmem:[#allocation2 + $0xc0] sm:$0xf]
      %v1237 = vld [vmem:[#allocation2 + $0xc4] sm:$0xf]
      %v1238 = vld [vmem:[#allocation2 + $0xc8] sm:$0x1]
      %v1239 = vld [vmem:[#allocation2 + $0xcc] sm:$0xf]
      %v1240 = vld [vmem:[#allocation2 + $0xd0] sm:$0xf]
      %v1241 = vld [vmem:[#allocation2 + $0xd4] sm:$0x1]
      %v1274 = vunpack.c.l.b16 %v1188
      %v1275 = vunpack.c.l.b16 %v1189
      %v1276 = vunpack.c.l.b16 %v1191
      %v1277 = vunpack.c.l.b16 %v1192
      %v1278 = vunpack.c.l.b16 %v1194
      %v1279 = vunpack.c.l.b16 %v1195
      %v1280 = vunpack.c.l.b16 %v1197
      %v1281 = vunpack.c.l.b16 %v1198
      %v1282 = vunpack.c.l.b16 %v1200
      %v1283 = vunpack.c.l.b16 %v1201
      %v1284 = vunpack.c.l.b16 %v1203
      %v1285 = vunpack.c.l.b16 %v1204
      %v1286 = vunpack.c.l.b16 %v1206
      %v1287 = vunpack.c.l.b16 %v1207
      %v1288 = vunpack.c.l.b16 %v1209
      %v1289 = vunpack.c.l.b16 %v1210
      %v1290 = vunpack.c.l.b16 %v1212
      %v1291 = vunpack.c.l.b16 %v1213
      %v1292 = vunpack.c.l.b16 %v1215
      %v1293 = vunpack.c.l.b16 %v1216
      %v1294 = vunpack.c.l.b16 %v1218
      %v1295 = vunpack.c.l.b16 %v1219
      %v1296 = vunpack.c.l.b16 %v1221
      %v1297 = vunpack.c.l.b16 %v1222
      %v1298 = vunpack.c.l.b16 %v1224
      %v1299 = vunpack.c.l.b16 %v1225
      %v1300 = vunpack.c.l.b16 %v1227
      %v1301 = vunpack.c.l.b16 %v1228
      %v1302 = vunpack.c.l.b16 %v1230
      %v1303 = vunpack.c.l.b16 %v1231
      %v1304 = vunpack.c.l.b16 %v1233
      %v1305 = vunpack.c.l.b16 %v1234
      %v1306 = vpack.c.b16 %v1275, %v1274
      %v1307 = vpack.c.b16 %v1277, %v1276
      %v1308 = vpack.c.b16 %v1279, %v1278
      %v1309 = vpack.c.b16 %v1281, %v1280
      %v1310 = vpack.c.b16 %v1283, %v1282
      %v1311 = vpack.c.b16 %v1285, %v1284
      %v1312 = vpack.c.b16 %v1287, %v1286
      %v1313 = vpack.c.b16 %v1289, %v1288
      %v1314 = vpack.c.b16 %v1291, %v1290
      %v1315 = vpack.c.b16 %v1293, %v1292
      %v1316 = vpack.c.b16 %v1295, %v1294
      %v1317 = vpack.c.b16 %v1297, %v1296
      %v1318 = vpack.c.b16 %v1299, %v1298
      %v1319 = vpack.c.b16 %v1301, %v1300
      %v1320 = vpack.c.b16 %v1303, %v1302
      %v1321 = vpack.c.b16 %v1305, %v1304
      %v1340 = vunpack.c.l.b16 %v1236
      %v1341 = vunpack.c.l.b16 %v1237
      %v1342 = vpack.c.b16 %v1341, %v1340
      %v1346 = vunpack.c.l.b16 %v1239
      %v1347 = vunpack.c.l.b16 %v1240
      %v1348 = vpack.c.b16 %v1347, %v1346
      %v1350 = vld [vmem:[%s3] sm:$0xf]
      %v1351 = vld [vmem:[%s3 + $0x4] sm:$0xf]
      %v1352 = vld [vmem:[%s3 + $0x8] sm:$0xf]
      %v1353 = vld [vmem:[%s3 + $0xc] sm:$0xf]
      %v1354 = vld [vmem:[%s3 + $0x10] sm:$0xf]
      %v1355 = vld [vmem:[%s3 + $0x14] sm:$0xf]
      %v1356 = vld [vmem:[%s3 + $0x18] sm:$0xf]
      %v1357 = vld [vmem:[%s3 + $0x1c] sm:$0xf]
      %v1358 = vld [vmem:[%s3 + $0x20] sm:$0xf]
      %v1359 = vld [vmem:[%s3 + $0x24] sm:$0xf]
      %v1360 = vld [vmem:[%s3 + $0x28] sm:$0xf]
      %v1361 = vld [vmem:[%s3 + $0x2c] sm:$0xf]
      %v1362 = vld [vmem:[%s3 + $0x30] sm:$0xf]
      %v1363 = vld [vmem:[%s3 + $0x34] sm:$0xf]
      %v1364 = vld [vmem:[%s3 + $0x38] sm:$0xf]
      %v1365 = vld [vmem:[%s3 + $0x3c] sm:$0xf]
      %v1366 = vld [vmem:[%s3 + $0x40] sm:$0xf]
      %v1367 = vld [vmem:[%s3 + $0x44] sm:$0xf]
      %v1368 = vld [vmem:[%s3 + $0x48] sm:$0xf]
      %v1369 = vld [vmem:[%s3 + $0x4c] sm:$0xf]
      %v1370 = vld [vmem:[%s3 + $0x50] sm:$0xf]
      %v1371 = vld [vmem:[%s3 + $0x54] sm:$0xf]
      %v1372 = vld [vmem:[%s3 + $0x58] sm:$0xf]
      %v1373 = vld [vmem:[%s3 + $0x5c] sm:$0xf]
      %v1374 = vld [vmem:[%s3 + $0x60] sm:$0xf]
      %v1375 = vld [vmem:[%s3 + $0x64] sm:$0xf]
      %v1376 = vld [vmem:[%s3 + $0x68] sm:$0xf]
      %v1377 = vld [vmem:[%s3 + $0x6c] sm:$0xf]
      %v1378 = vld [vmem:[%s3 + $0x70] sm:$0xf]
      %v1379 = vld [vmem:[%s3 + $0x74] sm:$0xf]
      %v1380 = vld [vmem:[%s3 + $0x78] sm:$0xf]
      %v1381 = vld [vmem:[%s3 + $0x7c] sm:$0xf]
      %v1382 = vld [vmem:[%s3 + $0x80] sm:$0xf]
      %v1383 = vld [vmem:[%s3 + $0x84] sm:$0xf]
      %v1384 = vld [vmem:[%s3 + $0x88] sm:$0xf]
      %v1385 = vld [vmem:[%s3 + $0x8c] sm:$0xf]
      %v1386 = vld [vmem:[%s3 + $0x90] sm:$0xf]
      %v1387 = vld [vmem:[%s3 + $0x94] sm:$0xf]
      %v1388 = vld [vmem:[%s3 + $0x98] sm:$0xf]
      %v1389 = vld [vmem:[%s3 + $0x9c] sm:$0xf]
      %v1390 = vld [vmem:[%s3 + $0xa0] sm:$0xf]
      %v1391 = vld [vmem:[%s3 + $0xa4] sm:$0xf]
      %v1392 = vld [vmem:[%s3 + $0xa8] sm:$0xf]
      %v1393 = vld [vmem:[%s3 + $0xac] sm:$0xf]
      %v1394 = vld [vmem:[%s3 + $0xb0] sm:$0xf]
      %v1395 = vld [vmem:[%s3 + $0xb4] sm:$0xf]
      %v1396 = vld [vmem:[%s3 + $0xb8] sm:$0xf]
      %v1397 = vld [vmem:[%s3 + $0xbc] sm:$0xf]
      %vm1398 = vsmask.f32 3328
      %vm1399 = vsmask.f32 7440
      %vm1400 = vmor %vm1398, %vm1399
      %v1402 = vshrl.u32 %v1188, 16
      %v1404 = vrot.slane %v1402, 4
      %v1405 = vshll.u32 %v1188, 16
      %v1407 = vrot.slane %v1405, 5
      %v1408 = vor.u32 %v1404, %v1407
      %v1409 = vrot.slane %v1408, 4
      %v1411 = vshll.u32 %v1189, 16
      %v1413 = vrot.slane %v1411, 5
      %v1414 = vsel %vm1400, %v1409, %v1413
      %v1415 = vshrl.u32 %v1189, 16
      %v1417 = vrot.slane %v1415, 4
      %v1418 = vor.u32 %v1417, %v1413
      %v1419 = vrot.slane %v1418, 4
      %v1421 = vshll.u32 %v1190, 16
      %v1423 = vrot.slane %v1421, 5
      %v1424 = vsel %vm1400, %v1419, %v1423
      %v1426 = vshrl.u32 %v1191, 16
      %v1428 = vrot.slane %v1426, 4
      %v1429 = vshll.u32 %v1191, 16
      %v1431 = vrot.slane %v1429, 5
      %v1432 = vor.u32 %v1428, %v1431
      %v1433 = vrot.slane %v1432, 4
      %v1435 = vshll.u32 %v1192, 16
      %v1437 = vrot.slane %v1435, 5
      %v1438 = vsel %vm1400, %v1433, %v1437
      %v1439 = vshrl.u32 %v1192, 16
      %v1441 = vrot.slane %v1439, 4
      %v1442 = vor.u32 %v1441, %v1437
      %v1443 = vrot.slane %v1442, 4
      %v1445 = vshll.u32 %v1193, 16
      %v1447 = vrot.slane %v1445, 5
      %v1448 = vsel %vm1400, %v1443, %v1447
      %v1450 = vshrl.u32 %v1194, 16
      %v1452 = vrot.slane %v1450, 4
      %v1453 = vshll.u32 %v1194, 16
      %v1455 = vrot.slane %v1453, 5
      %v1456 = vor.u32 %v1452, %v1455
      %v1457 = vrot.slane %v1456, 4
      %v1459 = vshll.u32 %v1195, 16
      %v1461 = vrot.slane %v1459, 5
      %v1462 = vsel %vm1400, %v1457, %v1461
      %v1463 = vshrl.u32 %v1195, 16
      %v1465 = vrot.slane %v1463, 4
      %v1466 = vor.u32 %v1465, %v1461
      %v1467 = vrot.slane %v1466, 4
      %v1469 = vshll.u32 %v1196, 16
      %v1471 = vrot.slane %v1469, 5
      %v1472 = vsel %vm1400, %v1467, %v1471
      %v1474 = vshrl.u32 %v1197, 16
      %v1476 = vrot.slane %v1474, 4
      %v1477 = vshll.u32 %v1197, 16
      %v1479 = vrot.slane %v1477, 5
      %v1480 = vor.u32 %v1476, %v1479
      %v1481 = vrot.slane %v1480, 4
      %v1483 = vshll.u32 %v1198, 16
      %v1485 = vrot.slane %v1483, 5
      %v1486 = vsel %vm1400, %v1481, %v1485
      %v1487 = vshrl.u32 %v1198, 16
      %v1489 = vrot.slane %v1487, 4
      %v1490 = vor.u32 %v1489, %v1485
      %v1491 = vrot.slane %v1490, 4
      %v1493 = vshll.u32 %v1199, 16
      %v1495 = vrot.slane %v1493, 5
      %v1496 = vsel %vm1400, %v1491, %v1495
      %v1498 = vshrl.u32 %v1200, 16
      %v1500 = vrot.slane %v1498, 4
      %v1501 = vshll.u32 %v1200, 16
      %v1503 = vrot.slane %v1501, 5
      %v1504 = vor.u32 %v1500, %v1503
      %v1505 = vrot.slane %v1504, 4
      %v1507 = vshll.u32 %v1201, 16
      %v1509 = vrot.slane %v1507, 5
      %v1510 = vsel %vm1400, %v1505, %v1509
      %v1511 = vshrl.u32 %v1201, 16
      %v1513 = vrot.slane %v1511, 4
      %v1514 = vor.u32 %v1513, %v1509
      %v1515 = vrot.slane %v1514, 4
      %v1517 = vshll.u32 %v1202, 16
      %v1519 = vrot.slane %v1517, 5
      %v1520 = vsel %vm1400, %v1515, %v1519
      %v1522 = vshrl.u32 %v1203, 16
      %v1524 = vrot.slane %v1522, 4
      %v1525 = vshll.u32 %v1203, 16
      %v1527 = vrot.slane %v1525, 5
      %v1528 = vor.u32 %v1524, %v1527
      %v1529 = vrot.slane %v1528, 4
      %v1531 = vshll.u32 %v1204, 16
      %v1533 = vrot.slane %v1531, 5
      %v1534 = vsel %vm1400, %v1529, %v1533
      %v1535 = vshrl.u32 %v1204, 16
      %v1537 = vrot.slane %v1535, 4
      %v1538 = vor.u32 %v1537, %v1533
      %v1539 = vrot.slane %v1538, 4
      %v1541 = vshll.u32 %v1205, 16
      %v1543 = vrot.slane %v1541, 5
      %v1544 = vsel %vm1400, %v1539, %v1543
      %v1546 = vshrl.u32 %v1206, 16
      %v1548 = vrot.slane %v1546, 4
      %v1549 = vshll.u32 %v1206, 16
      %v1551 = vrot.slane %v1549, 5
      %v1552 = vor.u32 %v1548, %v1551
      %v1553 = vrot.slane %v1552, 4
      %v1555 = vshll.u32 %v1207, 16
      %v1557 = vrot.slane %v1555, 5
      %v1558 = vsel %vm1400, %v1553, %v1557
      %v1559 = vshrl.u32 %v1207, 16
      %v1561 = vrot.slane %v1559, 4
      %v1562 = vor.u32 %v1561, %v1557
      %v1563 = vrot.slane %v1562, 4
      %v1565 = vshll.u32 %v1208, 16
      %v1567 = vrot.slane %v1565, 5
      %v1568 = vsel %vm1400, %v1563, %v1567
      %v1570 = vshrl.u32 %v1209, 16
      %v1572 = vrot.slane %v1570, 4
      %v1573 = vshll.u32 %v1209, 16
      %v1575 = vrot.slane %v1573, 5
      %v1576 = vor.u32 %v1572, %v1575
      %v1577 = vrot.slane %v1576, 4
      %v1579 = vshll.u32 %v1210, 16
      %v1581 = vrot.slane %v1579, 5
      %v1582 = vsel %vm1400, %v1577, %v1581
      %v1583 = vshrl.u32 %v1210, 16
      %v1585 = vrot.slane %v1583, 4
      %v1586 = vor.u32 %v1585, %v1581
      %v1587 = vrot.slane %v1586, 4
      %v1589 = vshll.u32 %v1211, 16
      %v1591 = vrot.slane %v1589, 5
      %v1592 = vsel %vm1400, %v1587, %v1591
      %v1594 = vshrl.u32 %v1212, 16
      %v1596 = vrot.slane %v1594, 4
      %v1597 = vshll.u32 %v1212, 16
      %v1599 = vrot.slane %v1597, 5
      %v1600 = vor.u32 %v1596, %v1599
      %v1601 = vrot.slane %v1600, 4
      %v1603 = vshll.u32 %v1213, 16
      %v1605 = vrot.slane %v1603, 5
      %v1606 = vsel %vm1400, %v1601, %v1605
      %v1607 = vshrl.u32 %v1213, 16
      %v1609 = vrot.slane %v1607, 4
      %v1610 = vor.u32 %v1609, %v1605
      %v1611 = vrot.slane %v1610, 4
      %v1613 = vshll.u32 %v1214, 16
      %v1615 = vrot.slane %v1613, 5
      %v1616 = vsel %vm1400, %v1611, %v1615
      %v1618 = vshrl.u32 %v1215, 16
      %v1620 = vrot.slane %v1618, 4
      %v1621 = vshll.u32 %v1215, 16
      %v1623 = vrot.slane %v1621, 5
      %v1624 = vor.u32 %v1620, %v1623
      %v1625 = vrot.slane %v1624, 4
      %v1627 = vshll.u32 %v1216, 16
      %v1629 = vrot.slane %v1627, 5
      %v1630 = vsel %vm1400, %v1625, %v1629
      %v1631 = vshrl.u32 %v1216, 16
      %v1633 = vrot.slane %v1631, 4
      %v1634 = vor.u32 %v1633, %v1629
      %v1635 = vrot.slane %v1634, 4
      %v1637 = vshll.u32 %v1217, 16
      %v1639 = vrot.slane %v1637, 5
      %v1640 = vsel %vm1400, %v1635, %v1639
      %v1642 = vshrl.u32 %v1218, 16
      %v1644 = vrot.slane %v1642, 4
      %v1645 = vshll.u32 %v1218, 16
      %v1647 = vrot.slane %v1645, 5
      %v1648 = vor.u32 %v1644, %v1647
      %v1649 = vrot.slane %v1648, 4
      %v1651 = vshll.u32 %v1219, 16
      %v1653 = vrot.slane %v1651, 5
      %v1654 = vsel %vm1400, %v1649, %v1653
      %v1655 = vshrl.u32 %v1219, 16
      %v1657 = vrot.slane %v1655, 4
      %v1658 = vor.u32 %v1657, %v1653
      %v1659 = vrot.slane %v1658, 4
      %v1661 = vshll.u32 %v1220, 16
      %v1663 = vrot.slane %v1661, 5
      %v1664 = vsel %vm1400, %v1659, %v1663
      %v1666 = vshrl.u32 %v1221, 16
      %v1668 = vrot.slane %v1666, 4
      %v1669 = vshll.u32 %v1221, 16
      %v1671 = vrot.slane %v1669, 5
      %v1672 = vor.u32 %v1668, %v1671
      %v1673 = vrot.slane %v1672, 4
      %v1675 = vshll.u32 %v1222, 16
      %v1677 = vrot.slane %v1675, 5
      %v1678 = vsel %vm1400, %v1673, %v1677
      %v1679 = vshrl.u32 %v1222, 16
      %v1681 = vrot.slane %v1679, 4
      %v1682 = vor.u32 %v1681, %v1677
      %v1683 = vrot.slane %v1682, 4
      %v1685 = vshll.u32 %v1223, 16
      %v1687 = vrot.slane %v1685, 5
      %v1688 = vsel %vm1400, %v1683, %v1687
      %v1690 = vshrl.u32 %v1224, 16
      %v1692 = vrot.slane %v1690, 4
      %v1693 = vshll.u32 %v1224, 16
      %v1695 = vrot.slane %v1693, 5
      %v1696 = vor.u32 %v1692, %v1695
      %v1697 = vrot.slane %v1696, 4
      %v1699 = vshll.u32 %v1225, 16
      %v1701 = vrot.slane %v1699, 5
      %v1702 = vsel %vm1400, %v1697, %v1701
      %v1703 = vshrl.u32 %v1225, 16
      %v1705 = vrot.slane %v1703, 4
      %v1706 = vor.u32 %v1705, %v1701
      %v1707 = vrot.slane %v1706, 4
      %v1709 = vshll.u32 %v1226, 16
      %v1711 = vrot.slane %v1709, 5
      %v1712 = vsel %vm1400, %v1707, %v1711
      %v1714 = vshrl.u32 %v1227, 16
      %v1716 = vrot.slane %v1714, 4
      %v1717 = vshll.u32 %v1227, 16
      %v1719 = vrot.slane %v1717, 5
      %v1720 = vor.u32 %v1716, %v1719
      %v1721 = vrot.slane %v1720, 4
      %v1723 = vshll.u32 %v1228, 16
      %v1725 = vrot.slane %v1723, 5
      %v1726 = vsel %vm1400, %v1721, %v1725
      %v1727 = vshrl.u32 %v1228, 16
      %v1729 = vrot.slane %v1727, 4
      %v1730 = vor.u32 %v1729, %v1725
      %v1731 = vrot.slane %v1730, 4
      %v1733 = vshll.u32 %v1229, 16
      %v1735 = vrot.slane %v1733, 5
      %v1736 = vsel %vm1400, %v1731, %v1735
      %v1738 = vshrl.u32 %v1230, 16
      %v1740 = vrot.slane %v1738, 4
      %v1741 = vshll.u32 %v1230, 16
      %v1743 = vrot.slane %v1741, 5
      %v1744 = vor.u32 %v1740, %v1743
      %v1745 = vrot.slane %v1744, 4
      %v1747 = vshll.u32 %v1231, 16
      %v1749 = vrot.slane %v1747, 5
      %v1750 = vsel %vm1400, %v1745, %v1749
      %v1751 = vshrl.u32 %v1231, 16
      %v1753 = vrot.slane %v1751, 4
      %v1754 = vor.u32 %v1753, %v1749
      %v1755 = vrot.slane %v1754, 4
      %v1757 = vshll.u32 %v1232, 16
      %v1759 = vrot.slane %v1757, 5
      %v1760 = vsel %vm1400, %v1755, %v1759
      %v1762 = vshrl.u32 %v1233, 16
      %v1764 = vrot.slane %v1762, 4
      %v1765 = vshll.u32 %v1233, 16
      %v1767 = vrot.slane %v1765, 5
      %v1768 = vor.u32 %v1764, %v1767
      %v1769 = vrot.slane %v1768, 4
      %v1771 = vshll.u32 %v1234, 16
      %v1773 = vrot.slane %v1771, 5
      %v1774 = vsel %vm1400, %v1769, %v1773
      %v1775 = vshrl.u32 %v1234, 16
      %v1777 = vrot.slane %v1775, 4
      %v1778 = vor.u32 %v1777, %v1773
      %v1779 = vrot.slane %v1778, 4
      %v1781 = vshll.u32 %v1235, 16
      %v1783 = vrot.slane %v1781, 5
      %v1784 = vsel %vm1400, %v1779, %v1783
      %v1786 = vshrl.u32 %v1236, 16
      %v1788 = vrot.slane %v1786, 4
      %v1789 = vshll.u32 %v1236, 16
      %v1791 = vrot.slane %v1789, 5
      %v1792 = vor.u32 %v1788, %v1791
      %v1793 = vrot.slane %v1792, 4
      %v1795 = vshll.u32 %v1237, 16
      %v1797 = vrot.slane %v1795, 5
      %v1798 = vsel %vm1400, %v1793, %v1797
      %v1799 = vshrl.u32 %v1237, 16
      %v1801 = vrot.slane %v1799, 4
      %v1802 = vor.u32 %v1801, %v1797
      %v1803 = vrot.slane %v1802, 4
      %v1805 = vshll.u32 %v1238, 16
      %v1807 = vrot.slane %v1805, 5
      %v1808 = vsel %vm1400, %v1803, %v1807
      %v1810 = vshrl.u32 %v1239, 16
      %v1812 = vrot.slane %v1810, 4
      %v1813 = vshll.u32 %v1239, 16
      %v1815 = vrot.slane %v1813, 5
      %v1816 = vor.u32 %v1812, %v1815
      %v1817 = vrot.slane %v1816, 4
      %v1819 = vshll.u32 %v1240, 16
      %v1821 = vrot.slane %v1819, 5
      %v1822 = vsel %vm1400, %v1817, %v1821
      %v1823 = vshrl.u32 %v1240, 16
      %v1825 = vrot.slane %v1823, 4
      %v1826 = vor.u32 %v1825, %v1821
      %v1827 = vrot.slane %v1826, 4
      %v1829 = vshll.u32 %v1241, 16
      %v1831 = vrot.slane %v1829, 5
      %v1832 = vsel %vm1400, %v1827, %v1831
      %v1833 = vunpack.c.l.b16 %v1414
      %v1834 = vunpack.c.l.b16 %v1424
      %v1835 = vunpack.c.l.b16 %v1438
      %v1836 = vunpack.c.l.b16 %v1448
      %v1837 = vunpack.c.l.b16 %v1462
      %v1838 = vunpack.c.l.b16 %v1472
      %v1839 = vunpack.c.l.b16 %v1486
      %v1840 = vunpack.c.l.b16 %v1496
      %v1841 = vunpack.c.l.b16 %v1510
      %v1842 = vunpack.c.l.b16 %v1520
      %v1843 = vunpack.c.l.b16 %v1534
      %v1844 = vunpack.c.l.b16 %v1544
      %v1845 = vunpack.c.l.b16 %v1558
      %v1846 = vunpack.c.l.b16 %v1568
      %v1847 = vunpack.c.l.b16 %v1582
      %v1848 = vunpack.c.l.b16 %v1592
      %v1849 = vunpack.c.l.b16 %v1606
      %v1850 = vunpack.c.l.b16 %v1616
      %v1851 = vunpack.c.l.b16 %v1630
      %v1852 = vunpack.c.l.b16 %v1640
      %v1853 = vunpack.c.l.b16 %v1654
      %v1854 = vunpack.c.l.b16 %v1664
      %v1855 = vunpack.c.l.b16 %v1678
      %v1856 = vunpack.c.l.b16 %v1688
      %v1857 = vunpack.c.l.b16 %v1702
      %v1858 = vunpack.c.l.b16 %v1712
      %v1859 = vunpack.c.l.b16 %v1726
      %v1860 = vunpack.c.l.b16 %v1736
      %v1861 = vunpack.c.l.b16 %v1750
      %v1862 = vunpack.c.l.b16 %v1760
      %v1863 = vunpack.c.l.b16 %v1774
      %v1864 = vunpack.c.l.b16 %v1784
      %v1865 = vpack.c.b16 %v1834, %v1833
      %v1866 = vpack.c.b16 %v1836, %v1835
      %v1867 = vpack.c.b16 %v1838, %v1837
      %v1868 = vpack.c.b16 %v1840, %v1839
      %v1869 = vpack.c.b16 %v1842, %v1841
      %v1870 = vpack.c.b16 %v1844, %v1843
      %v1871 = vpack.c.b16 %v1846, %v1845
      %v1872 = vpack.c.b16 %v1848, %v1847
      %v1873 = vpack.c.b16 %v1850, %v1849
      %v1874 = vpack.c.b16 %v1852, %v1851
      %v1875 = vpack.c.b16 %v1854, %v1853
      %v1876 = vpack.c.b16 %v1856, %v1855
      %v1877 = vpack.c.b16 %v1858, %v1857
      %v1878 = vpack.c.b16 %v1860, %v1859
      %v1879 = vpack.c.b16 %v1862, %v1861
      %v1880 = vpack.c.b16 %v1864, %v1863
      %v1897 = vunpack.c.l.b16 %v1798
      %v1898 = vunpack.c.l.b16 %v1808
      %v1899 = vpack.c.b16 %v1898, %v1897
      %v1901 = vunpack.c.l.b16 %v1822
      %v1902 = vunpack.c.l.b16 %v1832
      %v1903 = vpack.c.b16 %v1902, %v1901
      %s1905 = scalar_lea.vmem %s3, 192
      %v1906 = vld [vmem:[%s1905] sm:$0xf]
      %v1907 = vld [vmem:[%s1905 + $0x4] sm:$0xf]
      %v1908 = vld [vmem:[%s1905 + $0x8] sm:$0xf]
      %v1909 = vld [vmem:[%s1905 + $0xc] sm:$0xf]
      %v1910 = vld [vmem:[%s1905 + $0x10] sm:$0xf]
      %v1911 = vld [vmem:[%s1905 + $0x14] sm:$0xf]
      %v1912 = vld [vmem:[%s1905 + $0x18] sm:$0xf]
      %v1913 = vld [vmem:[%s1905 + $0x1c] sm:$0xf]
      %v1914 = vld [vmem:[%s1905 + $0x20] sm:$0xf]
      %v1915 = vld [vmem:[%s1905 + $0x24] sm:$0xf]
      %v1916 = vld [vmem:[%s1905 + $0x28] sm:$0xf]
      %v1917 = vld [vmem:[%s1905 + $0x2c] sm:$0xf]
      %v1918 = vld [vmem:[%s1905 + $0x30] sm:$0xf]
      %v1919 = vld [vmem:[%s1905 + $0x34] sm:$0xf]
      %v1920 = vld [vmem:[%s1905 + $0x38] sm:$0xf]
      %v1921 = vld [vmem:[%s1905 + $0x3c] sm:$0xf]
      %v1922 = vld [vmem:[%s1905 + $0x40] sm:$0xf]
      %v1923 = vld [vmem:[%s1905 + $0x44] sm:$0xf]
      %v1924 = vld [vmem:[%s1905 + $0x48] sm:$0xf]
      %v1925 = vld [vmem:[%s1905 + $0x4c] sm:$0xf]
      %v1926 = vld [vmem:[%s1905 + $0x50] sm:$0xf]
      %v1927 = vld [vmem:[%s1905 + $0x54] sm:$0xf]
      %v1928 = vld [vmem:[%s1905 + $0x58] sm:$0xf]
      %v1929 = vld [vmem:[%s1905 + $0x5c] sm:$0xf]
      %v1930 = vld [vmem:[%s1905 + $0x60] sm:$0xf]
      %v1931 = vld [vmem:[%s1905 + $0x64] sm:$0xf]
      %v1932 = vld [vmem:[%s1905 + $0x68] sm:$0xf]
      %v1933 = vld [vmem:[%s1905 + $0x6c] sm:$0xf]
      %v1934 = vld [vmem:[%s1905 + $0x70] sm:$0xf]
      %v1935 = vld [vmem:[%s1905 + $0x74] sm:$0xf]
      %v1936 = vld [vmem:[%s1905 + $0x78] sm:$0xf]
      %v1937 = vld [vmem:[%s1905 + $0x7c] sm:$0xf]
      %v1938 = vld [vmem:[%s1905 + $0x80] sm:$0xf]
      %v1939 = vld [vmem:[%s1905 + $0x84] sm:$0xf]
      %v1940 = vld [vmem:[%s1905 + $0x88] sm:$0xf]
      %v1941 = vld [vmem:[%s1905 + $0x8c] sm:$0xf]
      %v1942 = vld [vmem:[%s1905 + $0x90] sm:$0xf]
      %v1943 = vld [vmem:[%s1905 + $0x94] sm:$0xf]
      %v1944 = vld [vmem:[%s1905 + $0x98] sm:$0xf]
      %v1945 = vld [vmem:[%s1905 + $0x9c] sm:$0xf]
      %v1946 = vld [vmem:[%s1905 + $0xa0] sm:$0xf]
      %v1947 = vld [vmem:[%s1905 + $0xa4] sm:$0xf]
      %v1948 = vld [vmem:[%s1905 + $0xa8] sm:$0xf]
      %v1949 = vld [vmem:[%s1905 + $0xac] sm:$0xf]
      %v1950 = vld [vmem:[%s1905 + $0xb0] sm:$0xf]
      %v1951 = vld [vmem:[%s1905 + $0xb4] sm:$0xf]
      %v1952 = vld [vmem:[%s1905 + $0xb8] sm:$0xf]
      %v1953 = vld [vmem:[%s1905 + $0xbc] sm:$0xf]
      %v2002 = vunpack.c.l.b16 %v1906
      %v2003 = vunpack.c.l.b16 %v1907
      %v2004 = vunpack.c.l.b16 %v1908
      %v2005 = vunpack.c.l.b16 %v1909
      %v2006 = vunpack.c.l.b16 %v1910
      %v2007 = vunpack.c.l.b16 %v1911
      %v2008 = vunpack.c.l.b16 %v1912
      %v2009 = vunpack.c.l.b16 %v1913
      %v2010 = vunpack.c.l.b16 %v1914
      %v2011 = vunpack.c.l.b16 %v1915
      %v2012 = vunpack.c.l.b16 %v1916
      %v2013 = vunpack.c.l.b16 %v1917
      %v2014 = vunpack.c.l.b16 %v1918
      %v2015 = vunpack.c.l.b16 %v1919
      %v2016 = vunpack.c.l.b16 %v1920
      %v2017 = vunpack.c.l.b16 %v1921
      %v2018 = vunpack.c.l.b16 %v1922
      %v2019 = vunpack.c.l.b16 %v1923
      %v2020 = vunpack.c.l.b16 %v1924
      %v2021 = vunpack.c.l.b16 %v1925
      %v2022 = vunpack.c.l.b16 %v1926
      %v2023 = vunpack.c.l.b16 %v1927
      %v2024 = vunpack.c.l.b16 %v1928
      %v2025 = vunpack.c.l.b16 %v1929
      %v2026 = vunpack.c.l.b16 %v1930
      %v2027 = vunpack.c.l.b16 %v1931
      %v2028 = vunpack.c.l.b16 %v1932
      %v2029 = vunpack.c.l.b16 %v1933
      %v2030 = vunpack.c.l.b16 %v1934
      %v2031 = vunpack.c.l.b16 %v1935
      %v2032 = vunpack.c.l.b16 %v1936
      %v2033 = vunpack.c.l.b16 %v1937
      %v2034 = vunpack.c.l.b16 %v1938
      %v2035 = vunpack.c.l.b16 %v1939
      %v2036 = vunpack.c.l.b16 %v1940
      %v2037 = vunpack.c.l.b16 %v1941
      %v2038 = vunpack.c.l.b16 %v1942
      %v2039 = vunpack.c.l.b16 %v1943
      %v2040 = vunpack.c.l.b16 %v1944
      %v2041 = vunpack.c.l.b16 %v1945
      %v2042 = vunpack.c.l.b16 %v1946
      %v2043 = vunpack.c.l.b16 %v1947
      %v2044 = vunpack.c.l.b16 %v1948
      %v2045 = vunpack.c.l.b16 %v1949
      %v2046 = vunpack.c.l.b16 %v1950
      %v2047 = vunpack.c.l.b16 %v1951
      %v2048 = vunpack.c.l.b16 %v1952
      %v2049 = vunpack.c.l.b16 %v1953
      %v2050 = vpack.c.b16 %v2003, %v2002
      %v2051 = vpack.c.b16 %v2005, %v2004
      %v2052 = vpack.c.b16 %v2007, %v2006
      %v2053 = vpack.c.b16 %v2009, %v2008
      %v2054 = vpack.c.b16 %v2011, %v2010
      %v2055 = vpack.c.b16 %v2013, %v2012
      %v2056 = vpack.c.b16 %v2015, %v2014
      %v2057 = vpack.c.b16 %v2017, %v2016
      %v2058 = vpack.c.b16 %v2019, %v2018
      %v2059 = vpack.c.b16 %v2021, %v2020
      %v2060 = vpack.c.b16 %v2023, %v2022
      %v2061 = vpack.c.b16 %v2025, %v2024
      %v2062 = vpack.c.b16 %v2027, %v2026
      %v2063 = vpack.c.b16 %v2029, %v2028
      %v2064 = vpack.c.b16 %v2031, %v2030
      %v2065 = vpack.c.b16 %v2033, %v2032
      %v2066 = vpack.c.b16 %v2035, %v2034
      %v2067 = vpack.c.b16 %v2037, %v2036
      %v2068 = vpack.c.b16 %v2039, %v2038
      %v2069 = vpack.c.b16 %v2041, %v2040
      %v2070 = vpack.c.b16 %v2043, %v2042
      %v2071 = vpack.c.b16 %v2045, %v2044
      %v2072 = vpack.c.b16 %v2047, %v2046
      %v2073 = vpack.c.b16 %v2049, %v2048
      %2098 = vmatpush.bf16.msra.mxu0 %v2057
      %2099 = vmatpush.bf16.msra.mxu0 %v2056
      %2100 = vmatpush.bf16.msra.mxu0 %v2055
      %2101 = vmatpush.bf16.msra.mxu0 %v2054
      %2102 = vmatpush.bf16.msra.mxu0 %v2053
      %2103 = vmatpush.bf16.msra.mxu0 %v2052
      %2104 = vmatpush.bf16.msra.mxu0 %v2051
      %2105 = vmatpush.bf16.msra.mxu0 %v2050
      %2106 = vmatmul.bf16.gmra.mxu0 %v1865
      %v2107 = vpop.f32.mrf.mxu0
      %v2108 = vadd.f32 0.0, %v2107
      %v2109 = vpop.f32.mrf.mxu0
      %v2110 = vadd.f32 0.0, %v2109
      %2111 = vmatmul.bf16.gmra.mxu0 %v1866
      %v2112 = vpop.f32.mrf.mxu0
      %v2113 = vadd.f32 0.0, %v2112
      %v2114 = vpop.f32.mrf.mxu0
      %v2115 = vadd.f32 0.0, %v2114
      %2116 = vmatmul.bf16.gmra.mxu0 %v1867
      %v2117 = vpop.f32.mrf.mxu0
      %v2118 = vadd.f32 0.0, %v2117
      %v2119 = vpop.f32.mrf.mxu0
      %v2120 = vadd.f32 0.0, %v2119
      %2121 = vmatmul.bf16.gmra.mxu0 %v1868
      %v2122 = vpop.f32.mrf.mxu0
      %v2123 = vadd.f32 0.0, %v2122
      %v2124 = vpop.f32.mrf.mxu0
      %v2125 = vadd.f32 0.0, %v2124
      %2126 = vmatmul.bf16.gmra.mxu0 %v1869
      %v2127 = vpop.f32.mrf.mxu0
      %v2128 = vadd.f32 0.0, %v2127
      %v2129 = vpop.f32.mrf.mxu0
      %v2130 = vadd.f32 0.0, %v2129
      %2131 = vmatmul.bf16.gmra.mxu0 %v1870
      %v2132 = vpop.f32.mrf.mxu0
      %v2133 = vadd.f32 0.0, %v2132
      %v2134 = vpop.f32.mrf.mxu0
      %v2135 = vadd.f32 0.0, %v2134
      %2136 = vmatmul.bf16.gmra.mxu0 %v1871
      %v2137 = vpop.f32.mrf.mxu0
      %v2138 = vadd.f32 0.0, %v2137
      %v2139 = vpop.f32.mrf.mxu0
      %v2140 = vadd.f32 0.0, %v2139
      %2141 = vmatmul.bf16.gmra.mxu0 %v1872
      %v2142 = vpop.f32.mrf.mxu0
      %v2143 = vadd.f32 0.0, %v2142
      %v2144 = vpop.f32.mrf.mxu0
      %v2145 = vadd.f32 0.0, %v2144
      %2146 = vmatmul.bf16.gmra.mxu0 %v1873
      %v2147 = vpop.f32.mrf.mxu0
      %v2148 = vadd.f32 0.0, %v2147
      %v2149 = vpop.f32.mrf.mxu0
      %v2150 = vadd.f32 0.0, %v2149
      %2151 = vmatmul.bf16.gmra.mxu0 %v1874
      %v2152 = vpop.f32.mrf.mxu0
      %v2153 = vadd.f32 0.0, %v2152
      %v2154 = vpop.f32.mrf.mxu0
      %v2155 = vadd.f32 0.0, %v2154
      %2156 = vmatmul.bf16.gmra.mxu0 %v1875
      %v2157 = vpop.f32.mrf.mxu0
      %v2158 = vadd.f32 0.0, %v2157
      %v2159 = vpop.f32.mrf.mxu0
      %v2160 = vadd.f32 0.0, %v2159
      %2161 = vmatmul.bf16.gmra.mxu0 %v1876
      %v2162 = vpop.f32.mrf.mxu0
      %v2163 = vadd.f32 0.0, %v2162
      %v2164 = vpop.f32.mrf.mxu0
      %v2165 = vadd.f32 0.0, %v2164
      %2166 = vmatmul.bf16.gmra.mxu0 %v1877
      %v2167 = vpop.f32.mrf.mxu0
      %v2168 = vadd.f32 0.0, %v2167
      %v2169 = vpop.f32.mrf.mxu0
      %v2170 = vadd.f32 0.0, %v2169
      %2171 = vmatmul.bf16.gmra.mxu0 %v1878
      %v2172 = vpop.f32.mrf.mxu0
      %v2173 = vadd.f32 0.0, %v2172
      %v2174 = vpop.f32.mrf.mxu0
      %v2175 = vadd.f32 0.0, %v2174
      %2176 = vmatmul.bf16.gmra.mxu0 %v1879
      %v2177 = vpop.f32.mrf.mxu0
      %v2178 = vadd.f32 0.0, %v2177
      %v2179 = vpop.f32.mrf.mxu0
      %v2180 = vadd.f32 0.0, %v2179
      %2181 = vmatmul.bf16.gmra.mxu0 %v1880
      %v2182 = vpop.f32.mrf.mxu0
      %v2183 = vadd.f32 0.0, %v2182
      %v2184 = vpop.f32.mrf.mxu0
      %v2185 = vadd.f32 0.0, %v2184
      %2186 = vdwg.mxu0
      %2187 = vmatpush.bf16.msra.mxu0 %v2065
      %2188 = vmatpush.bf16.msra.mxu0 %v2064
      %2189 = vmatpush.bf16.msra.mxu0 %v2063
      %2190 = vmatpush.bf16.msra.mxu0 %v2062
      %2191 = vmatpush.bf16.msra.mxu0 %v2061
      %2192 = vmatpush.bf16.msra.mxu0 %v2060
      %2193 = vmatpush.bf16.msra.mxu0 %v2059
      %2194 = vmatpush.bf16.msra.mxu0 %v2058
      %2195 = vmatmul.bf16.gmra.mxu0 %v1866
      %v2196 = vpop.f32.mrf.mxu0
      %v2197 = vadd.f32 %v2108, %v2196
      %v2198 = vpop.f32.mrf.mxu0
      %v2199 = vadd.f32 %v2110, %v2198
      %2200 = vmatmul.bf16.gmra.mxu0 %v1867
      %v2201 = vpop.f32.mrf.mxu0
      %v2202 = vadd.f32 %v2113, %v2201
      %v2203 = vpop.f32.mrf.mxu0
      %v2204 = vadd.f32 %v2115, %v2203
      %2205 = vmatmul.bf16.gmra.mxu0 %v1868
      %v2206 = vpop.f32.mrf.mxu0
      %v2207 = vadd.f32 %v2118, %v2206
      %v2208 = vpop.f32.mrf.mxu0
      %v2209 = vadd.f32 %v2120, %v2208
      %2210 = vmatmul.bf16.gmra.mxu0 %v1869
      %v2211 = vpop.f32.mrf.mxu0
      %v2212 = vadd.f32 %v2123, %v2211
      %v2213 = vpop.f32.mrf.mxu0
      %v2214 = vadd.f32 %v2125, %v2213
      %2215 = vmatmul.bf16.gmra.mxu0 %v1870
      %v2216 = vpop.f32.mrf.mxu0
      %v2217 = vadd.f32 %v2128, %v2216
      %v2218 = vpop.f32.mrf.mxu0
      %v2219 = vadd.f32 %v2130, %v2218
      %2220 = vmatmul.bf16.gmra.mxu0 %v1871
      %v2221 = vpop.f32.mrf.mxu0
      %v2222 = vadd.f32 %v2133, %v2221
      %v2223 = vpop.f32.mrf.mxu0
      %v2224 = vadd.f32 %v2135, %v2223
      %2225 = vmatmul.bf16.gmra.mxu0 %v1872
      %v2226 = vpop.f32.mrf.mxu0
      %v2227 = vadd.f32 %v2138, %v2226
      %v2228 = vpop.f32.mrf.mxu0
      %v2229 = vadd.f32 %v2140, %v2228
      %2230 = vmatmul.bf16.gmra.mxu0 %v1873
      %v2231 = vpop.f32.mrf.mxu0
      %v2232 = vadd.f32 %v2143, %v2231
      %v2233 = vpop.f32.mrf.mxu0
      %v2234 = vadd.f32 %v2145, %v2233
      %2235 = vmatmul.bf16.gmra.mxu0 %v1874
      %v2236 = vpop.f32.mrf.mxu0
      %v2237 = vadd.f32 %v2148, %v2236
      %v2238 = vpop.f32.mrf.mxu0
      %v2239 = vadd.f32 %v2150, %v2238
      %2240 = vmatmul.bf16.gmra.mxu0 %v1875
      %v2241 = vpop.f32.mrf.mxu0
      %v2242 = vadd.f32 %v2153, %v2241
      %v2243 = vpop.f32.mrf.mxu0
      %v2244 = vadd.f32 %v2155, %v2243
      %2245 = vmatmul.bf16.gmra.mxu0 %v1876
      %v2246 = vpop.f32.mrf.mxu0
      %v2247 = vadd.f32 %v2158, %v2246
      %v2248 = vpop.f32.mrf.mxu0
      %v2249 = vadd.f32 %v2160, %v2248
      %2250 = vmatmul.bf16.gmra.mxu0 %v1877
      %v2251 = vpop.f32.mrf.mxu0
      %v2252 = vadd.f32 %v2163, %v2251
      %v2253 = vpop.f32.mrf.mxu0
      %v2254 = vadd.f32 %v2165, %v2253
      %2255 = vmatmul.bf16.gmra.mxu0 %v1878
      %v2256 = vpop.f32.mrf.mxu0
      %v2257 = vadd.f32 %v2168, %v2256
      %v2258 = vpop.f32.mrf.mxu0
      %v2259 = vadd.f32 %v2170, %v2258
      %2260 = vmatmul.bf16.gmra.mxu0 %v1879
      %v2261 = vpop.f32.mrf.mxu0
      %v2262 = vadd.f32 %v2173, %v2261
      %v2263 = vpop.f32.mrf.mxu0
      %v2264 = vadd.f32 %v2175, %v2263
      %2265 = vmatmul.bf16.gmra.mxu0 %v1880
      %v2266 = vpop.f32.mrf.mxu0
      %v2267 = vadd.f32 %v2178, %v2266
      %v2268 = vpop.f32.mrf.mxu0
      %v2269 = vadd.f32 %v2180, %v2268
      %2270 = vmatmul.bf16.gmra.mxu0 %v1899
      %v2271 = vpop.f32.mrf.mxu0
      %v2272 = vadd.f32 %v2183, %v2271
      %v2273 = vpop.f32.mrf.mxu0
      %v2274 = vadd.f32 %v2185, %v2273
      %2275 = vdwg.mxu0
      %2276 = vmatpush.bf16.msra.mxu0 %v2073
      %2277 = vmatpush.bf16.msra.mxu0 %v2072
      %2278 = vmatpush.bf16.msra.mxu0 %v2071
      %2279 = vmatpush.bf16.msra.mxu0 %v2070
      %2280 = vmatpush.bf16.msra.mxu0 %v2069
      %2281 = vmatpush.bf16.msra.mxu0 %v2068
      %2282 = vmatpush.bf16.msra.mxu0 %v2067
      %2283 = vmatpush.bf16.msra.mxu0 %v2066
      %2284 = vmatmul.bf16.gmra.mxu0 %v1867
      %v2285 = vpop.f32.mrf.mxu0
      %v2286 = vadd.f32 %v2197, %v2285
      %v2287 = vpop.f32.mrf.mxu0
      %v2288 = vadd.f32 %v2199, %v2287
      %2289 = vmatmul.bf16.gmra.mxu0 %v1868
      %v2290 = vpop.f32.mrf.mxu0
      %v2291 = vadd.f32 %v2202, %v2290
      %v2292 = vpop.f32.mrf.mxu0
      %v2293 = vadd.f32 %v2204, %v2292
      %2294 = vmatmul.bf16.gmra.mxu0 %v1869
      %v2295 = vpop.f32.mrf.mxu0
      %v2296 = vadd.f32 %v2207, %v2295
      %v2297 = vpop.f32.mrf.mxu0
      %v2298 = vadd.f32 %v2209, %v2297
      %2299 = vmatmul.bf16.gmra.mxu0 %v1870
      %v2300 = vpop.f32.mrf.mxu0
      %v2301 = vadd.f32 %v2212, %v2300
      %v2302 = vpop.f32.mrf.mxu0
      %v2303 = vadd.f32 %v2214, %v2302
      %2304 = vmatmul.bf16.gmra.mxu0 %v1871
      %v2305 = vpop.f32.mrf.mxu0
      %v2306 = vadd.f32 %v2217, %v2305
      %v2307 = vpop.f32.mrf.mxu0
      %v2308 = vadd.f32 %v2219, %v2307
      %2309 = vmatmul.bf16.gmra.mxu0 %v1872
      %v2310 = vpop.f32.mrf.mxu0
      %v2311 = vadd.f32 %v2222, %v2310
      %v2312 = vpop.f32.mrf.mxu0
      %v2313 = vadd.f32 %v2224, %v2312
      %2314 = vmatmul.bf16.gmra.mxu0 %v1873
      %v2315 = vpop.f32.mrf.mxu0
      %v2316 = vadd.f32 %v2227, %v2315
      %v2317 = vpop.f32.mrf.mxu0
      %v2318 = vadd.f32 %v2229, %v2317
      %2319 = vmatmul.bf16.gmra.mxu0 %v1874
      %v2320 = vpop.f32.mrf.mxu0
      %v2321 = vadd.f32 %v2232, %v2320
      %v2322 = vpop.f32.mrf.mxu0
      %v2323 = vadd.f32 %v2234, %v2322
      %2324 = vmatmul.bf16.gmra.mxu0 %v1875
      %v2325 = vpop.f32.mrf.mxu0
      %v2326 = vadd.f32 %v2237, %v2325
      %v2327 = vpop.f32.mrf.mxu0
      %v2328 = vadd.f32 %v2239, %v2327
      %2329 = vmatmul.bf16.gmra.mxu0 %v1876
      %v2330 = vpop.f32.mrf.mxu0
      %v2331 = vadd.f32 %v2242, %v2330
      %v2332 = vpop.f32.mrf.mxu0
      %v2333 = vadd.f32 %v2244, %v2332
      %2334 = vmatmul.bf16.gmra.mxu0 %v1877
      %v2335 = vpop.f32.mrf.mxu0
      %v2336 = vadd.f32 %v2247, %v2335
      %v2337 = vpop.f32.mrf.mxu0
      %v2338 = vadd.f32 %v2249, %v2337
      %2339 = vmatmul.bf16.gmra.mxu0 %v1878
      %v2340 = vpop.f32.mrf.mxu0
      %v2341 = vadd.f32 %v2252, %v2340
      %v2342 = vpop.f32.mrf.mxu0
      %v2343 = vadd.f32 %v2254, %v2342
      %2344 = vmatmul.bf16.gmra.mxu0 %v1879
      %v2345 = vpop.f32.mrf.mxu0
      %v2346 = vadd.f32 %v2257, %v2345
      %v2347 = vpop.f32.mrf.mxu0
      %v2348 = vadd.f32 %v2259, %v2347
      %2349 = vmatmul.bf16.gmra.mxu0 %v1880
      %v2350 = vpop.f32.mrf.mxu0
      %v2351 = vadd.f32 %v2262, %v2350
      %v2352 = vpop.f32.mrf.mxu0
      %v2353 = vadd.f32 %v2264, %v2352
      %2354 = vmatmul.bf16.gmra.mxu0 %v1899
      %v2355 = vpop.f32.mrf.mxu0
      %v2356 = vadd.f32 %v2267, %v2355
      %v2357 = vpop.f32.mrf.mxu0
      %v2358 = vadd.f32 %v2269, %v2357
      %2359 = vmatmul.bf16.gmra.mxu0 %v1903
      %v2360 = vpop.f32.mrf.mxu0
      %v2361 = vadd.f32 %v2272, %v2360
      %v2362 = vpop.f32.mrf.mxu0
      %v2363 = vadd.f32 %v2274, %v2362
      %2364 = vdwg.mxu0
      %v2413 = vunpack.c.l.b16 %v1350
      %v2414 = vunpack.c.l.b16 %v1351
      %v2415 = vunpack.c.l.b16 %v1352
      %v2416 = vunpack.c.l.b16 %v1353
      %v2417 = vunpack.c.l.b16 %v1354
      %v2418 = vunpack.c.l.b16 %v1355
      %v2419 = vunpack.c.l.b16 %v1356
      %v2420 = vunpack.c.l.b16 %v1357
      %v2421 = vunpack.c.l.b16 %v1358
      %v2422 = vunpack.c.l.b16 %v1359
      %v2423 = vunpack.c.l.b16 %v1360
      %v2424 = vunpack.c.l.b16 %v1361
      %v2425 = vunpack.c.l.b16 %v1362
      %v2426 = vunpack.c.l.b16 %v1363
      %v2427 = vunpack.c.l.b16 %v1364
      %v2428 = vunpack.c.l.b16 %v1365
      %v2429 = vunpack.c.l.b16 %v1366
      %v2430 = vunpack.c.l.b16 %v1367
      %v2431 = vunpack.c.l.b16 %v1368
      %v2432 = vunpack.c.l.b16 %v1369
      %v2433 = vunpack.c.l.b16 %v1370
      %v2434 = vunpack.c.l.b16 %v1371
      %v2435 = vunpack.c.l.b16 %v1372
      %v2436 = vunpack.c.l.b16 %v1373
      %v2437 = vunpack.c.l.b16 %v1374
      %v2438 = vunpack.c.l.b16 %v1375
      %v2439 = vunpack.c.l.b16 %v1376
      %v2440 = vunpack.c.l.b16 %v1377
      %v2441 = vunpack.c.l.b16 %v1378
      %v2442 = vunpack.c.l.b16 %v1379
      %v2443 = vunpack.c.l.b16 %v1380
      %v2444 = vunpack.c.l.b16 %v1381
      %v2445 = vunpack.c.l.b16 %v1382
      %v2446 = vunpack.c.l.b16 %v1383
      %v2447 = vunpack.c.l.b16 %v1384
      %v2448 = vunpack.c.l.b16 %v1385
      %v2449 = vunpack.c.l.b16 %v1386
      %v2450 = vunpack.c.l.b16 %v1387
      %v2451 = vunpack.c.l.b16 %v1388
      %v2452 = vunpack.c.l.b16 %v1389
      %v2453 = vunpack.c.l.b16 %v1390
      %v2454 = vunpack.c.l.b16 %v1391
      %v2455 = vunpack.c.l.b16 %v1392
      %v2456 = vunpack.c.l.b16 %v1393
      %v2457 = vunpack.c.l.b16 %v1394
      %v2458 = vunpack.c.l.b16 %v1395
      %v2459 = vunpack.c.l.b16 %v1396
      %v2460 = vunpack.c.l.b16 %v1397
      %v2461 = vpack.c.b16 %v2414, %v2413
      %v2462 = vpack.c.b16 %v2416, %v2415
      %v2463 = vpack.c.b16 %v2418, %v2417
      %v2464 = vpack.c.b16 %v2420, %v2419
      %v2465 = vpack.c.b16 %v2422, %v2421
      %v2466 = vpack.c.b16 %v2424, %v2423
      %v2467 = vpack.c.b16 %v2426, %v2425
      %v2468 = vpack.c.b16 %v2428, %v2427
      %v2469 = vpack.c.b16 %v2430, %v2429
      %v2470 = vpack.c.b16 %v2432, %v2431
      %v2471 = vpack.c.b16 %v2434, %v2433
      %v2472 = vpack.c.b16 %v2436, %v2435
      %v2473 = vpack.c.b16 %v2438, %v2437
      %v2474 = vpack.c.b16 %v2440, %v2439
      %v2475 = vpack.c.b16 %v2442, %v2441
      %v2476 = vpack.c.b16 %v2444, %v2443
      %v2477 = vpack.c.b16 %v2446, %v2445
      %v2478 = vpack.c.b16 %v2448, %v2447
      %v2479 = vpack.c.b16 %v2450, %v2449
      %v2480 = vpack.c.b16 %v2452, %v2451
      %v2481 = vpack.c.b16 %v2454, %v2453
      %v2482 = vpack.c.b16 %v2456, %v2455
      %v2483 = vpack.c.b16 %v2458, %v2457
      %v2484 = vpack.c.b16 %v2460, %v2459
      %2509 = vmatpush.bf16.msra.mxu0 %v2468
      %2510 = vmatpush.bf16.msra.mxu0 %v2467
      %2511 = vmatpush.bf16.msra.mxu0 %v2466
      %2512 = vmatpush.bf16.msra.mxu0 %v2465
      %2513 = vmatpush.bf16.msra.mxu0 %v2464
      %2514 = vmatpush.bf16.msra.mxu0 %v2463
      %2515 = vmatpush.bf16.msra.mxu0 %v2462
      %2516 = vmatpush.bf16.msra.mxu0 %v2461
      %2517 = vmatmul.bf16.gmra.mxu0 %v1306
      %v2518 = vpop.f32.mrf.mxu0
      %v2519 = vadd.f32 %v2286, %v2518
      %v2520 = vpop.f32.mrf.mxu0
      %v2521 = vadd.f32 %v2288, %v2520
      %2522 = vmatmul.bf16.gmra.mxu0 %v1307
      %v2523 = vpop.f32.mrf.mxu0
      %v2524 = vadd.f32 %v2291, %v2523
      %v2525 = vpop.f32.mrf.mxu0
      %v2526 = vadd.f32 %v2293, %v2525
      %2527 = vmatmul.bf16.gmra.mxu0 %v1308
      %v2528 = vpop.f32.mrf.mxu0
      %v2529 = vadd.f32 %v2296, %v2528
      %v2530 = vpop.f32.mrf.mxu0
      %v2531 = vadd.f32 %v2298, %v2530
      %2532 = vmatmul.bf16.gmra.mxu0 %v1309
      %v2533 = vpop.f32.mrf.mxu0
      %v2534 = vadd.f32 %v2301, %v2533
      %v2535 = vpop.f32.mrf.mxu0
      %v2536 = vadd.f32 %v2303, %v2535
      %2537 = vmatmul.bf16.gmra.mxu0 %v1310
      %v2538 = vpop.f32.mrf.mxu0
      %v2539 = vadd.f32 %v2306, %v2538
      %v2540 = vpop.f32.mrf.mxu0
      %v2541 = vadd.f32 %v2308, %v2540
      %2542 = vmatmul.bf16.gmra.mxu0 %v1311
      %v2543 = vpop.f32.mrf.mxu0
      %v2544 = vadd.f32 %v2311, %v2543
      %v2545 = vpop.f32.mrf.mxu0
      %v2546 = vadd.f32 %v2313, %v2545
      %2547 = vmatmul.bf16.gmra.mxu0 %v1312
      %v2548 = vpop.f32.mrf.mxu0
      %v2549 = vadd.f32 %v2316, %v2548
      %v2550 = vpop.f32.mrf.mxu0
      %v2551 = vadd.f32 %v2318, %v2550
      %2552 = vmatmul.bf16.gmra.mxu0 %v1313
      %v2553 = vpop.f32.mrf.mxu0
      %v2554 = vadd.f32 %v2321, %v2553
      %v2555 = vpop.f32.mrf.mxu0
      %v2556 = vadd.f32 %v2323, %v2555
      %2557 = vmatmul.bf16.gmra.mxu0 %v1314
      %v2558 = vpop.f32.mrf.mxu0
      %v2559 = vadd.f32 %v2326, %v2558
      %v2560 = vpop.f32.mrf.mxu0
      %v2561 = vadd.f32 %v2328, %v2560
      %2562 = vmatmul.bf16.gmra.mxu0 %v1315
      %v2563 = vpop.f32.mrf.mxu0
      %v2564 = vadd.f32 %v2331, %v2563
      %v2565 = vpop.f32.mrf.mxu0
      %v2566 = vadd.f32 %v2333, %v2565
      %2567 = vmatmul.bf16.gmra.mxu0 %v1316
      %v2568 = vpop.f32.mrf.mxu0
      %v2569 = vadd.f32 %v2336, %v2568
      %v2570 = vpop.f32.mrf.mxu0
      %v2571 = vadd.f32 %v2338, %v2570
      %2572 = vmatmul.bf16.gmra.mxu0 %v1317
      %v2573 = vpop.f32.mrf.mxu0
      %v2574 = vadd.f32 %v2341, %v2573
      %v2575 = vpop.f32.mrf.mxu0
      %v2576 = vadd.f32 %v2343, %v2575
      %2577 = vmatmul.bf16.gmra.mxu0 %v1318
      %v2578 = vpop.f32.mrf.mxu0
      %v2579 = vadd.f32 %v2346, %v2578
      %v2580 = vpop.f32.mrf.mxu0
      %v2581 = vadd.f32 %v2348, %v2580
      %2582 = vmatmul.bf16.gmra.mxu0 %v1319
      %v2583 = vpop.f32.mrf.mxu0
      %v2584 = vadd.f32 %v2351, %v2583
      %v2585 = vpop.f32.mrf.mxu0
      %v2586 = vadd.f32 %v2353, %v2585
      %2587 = vmatmul.bf16.gmra.mxu0 %v1320
      %v2588 = vpop.f32.mrf.mxu0
      %v2589 = vadd.f32 %v2356, %v2588
      %v2590 = vpop.f32.mrf.mxu0
      %v2591 = vadd.f32 %v2358, %v2590
      %2592 = vmatmul.bf16.gmra.mxu0 %v1321
      %v2593 = vpop.f32.mrf.mxu0
      %v2594 = vadd.f32 %v2361, %v2593
      %v2595 = vpop.f32.mrf.mxu0
      %v2596 = vadd.f32 %v2363, %v2595
      %2597 = vdwg.mxu0
      %2598 = vmatpush.bf16.msra.mxu0 %v2476
      %2599 = vmatpush.bf16.msra.mxu0 %v2475
      %2600 = vmatpush.bf16.msra.mxu0 %v2474
      %2601 = vmatpush.bf16.msra.mxu0 %v2473
      %2602 = vmatpush.bf16.msra.mxu0 %v2472
      %2603 = vmatpush.bf16.msra.mxu0 %v2471
      %2604 = vmatpush.bf16.msra.mxu0 %v2470
      %2605 = vmatpush.bf16.msra.mxu0 %v2469
      %2606 = vmatmul.bf16.gmra.mxu0 %v1307
      %v2607 = vpop.f32.mrf.mxu0
      %v2608 = vadd.f32 %v2519, %v2607
      %v2609 = vpop.f32.mrf.mxu0
      %v2610 = vadd.f32 %v2521, %v2609
      %2611 = vmatmul.bf16.gmra.mxu0 %v1308
      %v2612 = vpop.f32.mrf.mxu0
      %v2613 = vadd.f32 %v2524, %v2612
      %v2614 = vpop.f32.mrf.mxu0
      %v2615 = vadd.f32 %v2526, %v2614
      %2616 = vmatmul.bf16.gmra.mxu0 %v1309
      %v2617 = vpop.f32.mrf.mxu0
      %v2618 = vadd.f32 %v2529, %v2617
      %v2619 = vpop.f32.mrf.mxu0
      %v2620 = vadd.f32 %v2531, %v2619
      %2621 = vmatmul.bf16.gmra.mxu0 %v1310
      %v2622 = vpop.f32.mrf.mxu0
      %v2623 = vadd.f32 %v2534, %v2622
      %v2624 = vpop.f32.mrf.mxu0
      %v2625 = vadd.f32 %v2536, %v2624
      %2626 = vmatmul.bf16.gmra.mxu0 %v1311
      %v2627 = vpop.f32.mrf.mxu0
      %v2628 = vadd.f32 %v2539, %v2627
      %v2629 = vpop.f32.mrf.mxu0
      %v2630 = vadd.f32 %v2541, %v2629
      %2631 = vmatmul.bf16.gmra.mxu0 %v1312
      %v2632 = vpop.f32.mrf.mxu0
      %v2633 = vadd.f32 %v2544, %v2632
      %v2634 = vpop.f32.mrf.mxu0
      %v2635 = vadd.f32 %v2546, %v2634
      %2636 = vmatmul.bf16.gmra.mxu0 %v1313
      %v2637 = vpop.f32.mrf.mxu0
      %v2638 = vadd.f32 %v2549, %v2637
      %v2639 = vpop.f32.mrf.mxu0
      %v2640 = vadd.f32 %v2551, %v2639
      %2641 = vmatmul.bf16.gmra.mxu0 %v1314
      %v2642 = vpop.f32.mrf.mxu0
      %v2643 = vadd.f32 %v2554, %v2642
      %v2644 = vpop.f32.mrf.mxu0
      %v2645 = vadd.f32 %v2556, %v2644
      %2646 = vmatmul.bf16.gmra.mxu0 %v1315
      %v2647 = vpop.f32.mrf.mxu0
      %v2648 = vadd.f32 %v2559, %v2647
      %v2649 = vpop.f32.mrf.mxu0
      %v2650 = vadd.f32 %v2561, %v2649
      %2651 = vmatmul.bf16.gmra.mxu0 %v1316
      %v2652 = vpop.f32.mrf.mxu0
      %v2653 = vadd.f32 %v2564, %v2652
      %v2654 = vpop.f32.mrf.mxu0
      %v2655 = vadd.f32 %v2566, %v2654
      %2656 = vmatmul.bf16.gmra.mxu0 %v1317
      %v2657 = vpop.f32.mrf.mxu0
      %v2658 = vadd.f32 %v2569, %v2657
      %v2659 = vpop.f32.mrf.mxu0
      %v2660 = vadd.f32 %v2571, %v2659
      %2661 = vmatmul.bf16.gmra.mxu0 %v1318
      %v2662 = vpop.f32.mrf.mxu0
      %v2663 = vadd.f32 %v2574, %v2662
      %v2664 = vpop.f32.mrf.mxu0
      %v2665 = vadd.f32 %v2576, %v2664
      %2666 = vmatmul.bf16.gmra.mxu0 %v1319
      %v2667 = vpop.f32.mrf.mxu0
      %v2668 = vadd.f32 %v2579, %v2667
      %v2669 = vpop.f32.mrf.mxu0
      %v2670 = vadd.f32 %v2581, %v2669
      %2671 = vmatmul.bf16.gmra.mxu0 %v1320
      %v2672 = vpop.f32.mrf.mxu0
      %v2673 = vadd.f32 %v2584, %v2672
      %v2674 = vpop.f32.mrf.mxu0
      %v2675 = vadd.f32 %v2586, %v2674
      %2676 = vmatmul.bf16.gmra.mxu0 %v1321
      %v2677 = vpop.f32.mrf.mxu0
      %v2678 = vadd.f32 %v2589, %v2677
      %v2679 = vpop.f32.mrf.mxu0
      %v2680 = vadd.f32 %v2591, %v2679
      %2681 = vmatmul.bf16.gmra.mxu0 %v1342
      %v2682 = vpop.f32.mrf.mxu0
      %v2683 = vadd.f32 %v2594, %v2682
      %v2684 = vpop.f32.mrf.mxu0
      %v2685 = vadd.f32 %v2596, %v2684
      %2686 = vdwg.mxu0
      %2687 = vmatpush.bf16.msra.mxu0 %v2484
      %2688 = vmatpush.bf16.msra.mxu0 %v2483
      %2689 = vmatpush.bf16.msra.mxu0 %v2482
      %2690 = vmatpush.bf16.msra.mxu0 %v2481
      %2691 = vmatpush.bf16.msra.mxu0 %v2480
      %2692 = vmatpush.bf16.msra.mxu0 %v2479
      %2693 = vmatpush.bf16.msra.mxu0 %v2478
      %2694 = vmatpush.bf16.msra.mxu0 %v2477
      %2695 = vmatmul.bf16.gmra.mxu0 %v1308
      %v2696 = vpop.f32.mrf.mxu0
      %v2697 = vadd.f32 %v2608, %v2696
      %v2698 = vpop.f32.mrf.mxu0
      %v2699 = vadd.f32 %v2610, %v2698
      %2700 = vmatmul.bf16.gmra.mxu0 %v1309
      %v2701 = vpop.f32.mrf.mxu0
      %v2702 = vadd.f32 %v2613, %v2701
      %v2703 = vpop.f32.mrf.mxu0
      %v2704 = vadd.f32 %v2615, %v2703
      %2705 = vmatmul.bf16.gmra.mxu0 %v1310
      %v2706 = vpop.f32.mrf.mxu0
      %v2707 = vadd.f32 %v2618, %v2706
      %v2708 = vpop.f32.mrf.mxu0
      %v2709 = vadd.f32 %v2620, %v2708
      %2710 = vmatmul.bf16.gmra.mxu0 %v1311
      %v2711 = vpop.f32.mrf.mxu0
      %v2712 = vadd.f32 %v2623, %v2711
      %v2713 = vpop.f32.mrf.mxu0
      %v2714 = vadd.f32 %v2625, %v2713
      %2715 = vmatmul.bf16.gmra.mxu0 %v1312
      %v2716 = vpop.f32.mrf.mxu0
      %v2717 = vadd.f32 %v2628, %v2716
      %v2718 = vpop.f32.mrf.mxu0
      %v2719 = vadd.f32 %v2630, %v2718
      %2720 = vmatmul.bf16.gmra.mxu0 %v1313
      %v2721 = vpop.f32.mrf.mxu0
      %v2722 = vadd.f32 %v2633, %v2721
      %v2723 = vpop.f32.mrf.mxu0
      %v2724 = vadd.f32 %v2635, %v2723
      %2725 = vmatmul.bf16.gmra.mxu0 %v1314
      %v2726 = vpop.f32.mrf.mxu0
      %v2727 = vadd.f32 %v2638, %v2726
      %v2728 = vpop.f32.mrf.mxu0
      %v2729 = vadd.f32 %v2640, %v2728
      %2730 = vmatmul.bf16.gmra.mxu0 %v1315
      %v2731 = vpop.f32.mrf.mxu0
      %v2732 = vadd.f32 %v2643, %v2731
      %v2733 = vpop.f32.mrf.mxu0
      %v2734 = vadd.f32 %v2645, %v2733
      %2735 = vmatmul.bf16.gmra.mxu0 %v1316
      %v2736 = vpop.f32.mrf.mxu0
      %v2737 = vadd.f32 %v2648, %v2736
      %v2738 = vpop.f32.mrf.mxu0
      %v2739 = vadd.f32 %v2650, %v2738
      %2740 = vmatmul.bf16.gmra.mxu0 %v1317
      %v2741 = vpop.f32.mrf.mxu0
      %v2742 = vadd.f32 %v2653, %v2741
      %v2743 = vpop.f32.mrf.mxu0
      %v2744 = vadd.f32 %v2655, %v2743
      %2745 = vmatmul.bf16.gmra.mxu0 %v1318
      %v2746 = vpop.f32.mrf.mxu0
      %v2747 = vadd.f32 %v2658, %v2746
      %v2748 = vpop.f32.mrf.mxu0
      %v2749 = vadd.f32 %v2660, %v2748
      %2750 = vmatmul.bf16.gmra.mxu0 %v1319
      %v2751 = vpop.f32.mrf.mxu0
      %v2752 = vadd.f32 %v2663, %v2751
      %v2753 = vpop.f32.mrf.mxu0
      %v2754 = vadd.f32 %v2665, %v2753
      %2755 = vmatmul.bf16.gmra.mxu0 %v1320
      %v2756 = vpop.f32.mrf.mxu0
      %v2757 = vadd.f32 %v2668, %v2756
      %v2758 = vpop.f32.mrf.mxu0
      %v2759 = vadd.f32 %v2670, %v2758
      %2760 = vmatmul.bf16.gmra.mxu0 %v1321
      %v2761 = vpop.f32.mrf.mxu0
      %v2762 = vadd.f32 %v2673, %v2761
      %v2763 = vpop.f32.mrf.mxu0
      %v2764 = vadd.f32 %v2675, %v2763
      %2765 = vmatmul.bf16.gmra.mxu0 %v1342
      %v2766 = vpop.f32.mrf.mxu0
      %v2767 = vadd.f32 %v2678, %v2766
      %v2768 = vpop.f32.mrf.mxu0
      %v2769 = vadd.f32 %v2680, %v2768
      %2770 = vmatmul.bf16.gmra.mxu0 %v1348
      %v2771 = vpop.f32.mrf.mxu0
      %v2772 = vadd.f32 %v2683, %v2771
      %v2773 = vpop.f32.mrf.mxu0
      %v2774 = vadd.f32 %v2685, %v2773
      %2775 = vdwg.mxu0
      %vm2792 = vcmask 1042432
      %vm2793 = vcmask 1046532
      %vm2794 = vmor %vm2792, %vm2793
      %v2795 = vrot.slane %v1188, 5
      %v2796 = vrot.slane %v2795, 4
      %v2797 = vrot.slane %v1189, 5
      %v2798 = vsel %vm2794, %v2796, %v2797
      %v2799 = vrot.slane %v2797, 4
      %v2800 = vrot.slane %v1190, 5
      %v2801 = vsel %vm2794, %v2799, %v2800
      %v2802 = vrot.slane %v1191, 5
      %v2803 = vrot.slane %v2802, 4
      %v2804 = vrot.slane %v1192, 5
      %v2805 = vsel %vm2794, %v2803, %v2804
      %v2806 = vrot.slane %v2804, 4
      %v2807 = vrot.slane %v1193, 5
      %v2808 = vsel %vm2794, %v2806, %v2807
      %v2809 = vrot.slane %v1194, 5
      %v2810 = vrot.slane %v2809, 4
      %v2811 = vrot.slane %v1195, 5
      %v2812 = vsel %vm2794, %v2810, %v2811
      %v2813 = vrot.slane %v2811, 4
      %v2814 = vrot.slane %v1196, 5
      %v2815 = vsel %vm2794, %v2813, %v2814
      %v2816 = vrot.slane %v1197, 5
      %v2817 = vrot.slane %v2816, 4
      %v2818 = vrot.slane %v1198, 5
      %v2819 = vsel %vm2794, %v2817, %v2818
      %v2820 = vrot.slane %v2818, 4
      %v2821 = vrot.slane %v1199, 5
      %v2822 = vsel %vm2794, %v2820, %v2821
      %v2823 = vrot.slane %v1200, 5
      %v2824 = vrot.slane %v2823, 4
      %v2825 = vrot.slane %v1201, 5
      %v2826 = vsel %vm2794, %v2824, %v2825
      %v2827 = vrot.slane %v2825, 4
      %v2828 = vrot.slane %v1202, 5
      %v2829 = vsel %vm2794, %v2827, %v2828
      %v2830 = vrot.slane %v1203, 5
      %v2831 = vrot.slane %v2830, 4
      %v2832 = vrot.slane %v1204, 5
      %v2833 = vsel %vm2794, %v2831, %v2832
      %v2834 = vrot.slane %v2832, 4
      %v2835 = vrot.slane %v1205, 5
      %v2836 = vsel %vm2794, %v2834, %v2835
      %v2837 = vrot.slane %v1206, 5
      %v2838 = vrot.slane %v2837, 4
      %v2839 = vrot.slane %v1207, 5
      %v2840 = vsel %vm2794, %v2838, %v2839
      %v2841 = vrot.slane %v2839, 4
      %v2842 = vrot.slane %v1208, 5
      %v2843 = vsel %vm2794, %v2841, %v2842
      %v2844 = vrot.slane %v1209, 5
      %v2845 = vrot.slane %v2844, 4
      %v2846 = vrot.slane %v1210, 5
      %v2847 = vsel %vm2794, %v2845, %v2846
      %v2848 = vrot.slane %v2846, 4
      %v2849 = vrot.slane %v1211, 5
      %v2850 = vsel %vm2794, %v2848, %v2849
      %v2851 = vrot.slane %v1212, 5
      %v2852 = vrot.slane %v2851, 4
      %v2853 = vrot.slane %v1213, 5
      %v2854 = vsel %vm2794, %v2852, %v2853
      %v2855 = vrot.slane %v2853, 4
      %v2856 = vrot.slane %v1214, 5
      %v2857 = vsel %vm2794, %v2855, %v2856
      %v2858 = vrot.slane %v1215, 5
      %v2859 = vrot.slane %v2858, 4
      %v2860 = vrot.slane %v1216, 5
      %v2861 = vsel %vm2794, %v2859, %v2860
      %v2862 = vrot.slane %v2860, 4
      %v2863 = vrot.slane %v1217, 5
      %v2864 = vsel %vm2794, %v2862, %v2863
      %v2865 = vrot.slane %v1218, 5
      %v2866 = vrot.slane %v2865, 4
      %v2867 = vrot.slane %v1219, 5
      %v2868 = vsel %vm2794, %v2866, %v2867
      %v2869 = vrot.slane %v2867, 4
      %v2870 = vrot.slane %v1220, 5
      %v2871 = vsel %vm2794, %v2869, %v2870
      %v2872 = vrot.slane %v1221, 5
      %v2873 = vrot.slane %v2872, 4
      %v2874 = vrot.slane %v1222, 5
      %v2875 = vsel %vm2794, %v2873, %v2874
      %v2876 = vrot.slane %v2874, 4
      %v2877 = vrot.slane %v1223, 5
      %v2878 = vsel %vm2794, %v2876, %v2877
      %v2879 = vrot.slane %v1224, 5
      %v2880 = vrot.slane %v2879, 4
      %v2881 = vrot.slane %v1225, 5
      %v2882 = vsel %vm2794, %v2880, %v2881
      %v2883 = vrot.slane %v2881, 4
      %v2884 = vrot.slane %v1226, 5
      %v2885 = vsel %vm2794, %v2883, %v2884
      %v2886 = vrot.slane %v1227, 5
      %v2887 = vrot.slane %v2886, 4
      %v2888 = vrot.slane %v1228, 5
      %v2889 = vsel %vm2794, %v2887, %v2888
      %v2890 = vrot.slane %v2888, 4
      %v2891 = vrot.slane %v1229, 5
      %v2892 = vsel %vm2794, %v2890, %v2891
      %v2893 = vrot.slane %v1230, 5
      %v2894 = vrot.slane %v2893, 4
      %v2895 = vrot.slane %v1231, 5
      %v2896 = vsel %vm2794, %v2894, %v2895
      %v2897 = vrot.slane %v2895, 4
      %v2898 = vrot.slane %v1232, 5
      %v2899 = vsel %vm2794, %v2897, %v2898
      %v2900 = vrot.slane %v1233, 5
      %v2901 = vrot.slane %v2900, 4
      %v2902 = vrot.slane %v1234, 5
      %v2903 = vsel %vm2794, %v2901, %v2902
      %v2904 = vrot.slane %v2902, 4
      %v2905 = vrot.slane %v1235, 5
      %v2906 = vsel %vm2794, %v2904, %v2905
      %v2908 = vrot.slane %v1236, 5
      %v2909 = vrot.slane %v2908, 4
      %v2910 = vrot.slane %v1237, 5
      %v2911 = vsel %vm2794, %v2909, %v2910
      %v2912 = vrot.slane %v2910, 4
      %v2913 = vrot.slane %v1238, 5
      %v2914 = vsel %vm2794, %v2912, %v2913
      %v2916 = vrot.slane %v1239, 5
      %v2917 = vrot.slane %v2916, 4
      %v2918 = vrot.slane %v1240, 5
      %v2919 = vsel %vm2794, %v2917, %v2918
      %v2920 = vrot.slane %v2918, 4
      %v2921 = vrot.slane %v1241, 5
      %v2922 = vsel %vm2794, %v2920, %v2921
      %v2923 = vunpack.c.l.b16 %v2798
      %v2924 = vunpack.c.l.b16 %v2801
      %v2925 = vunpack.c.l.b16 %v2805
      %v2926 = vunpack.c.l.b16 %v2808
      %v2927 = vunpack.c.l.b16 %v2812
      %v2928 = vunpack.c.l.b16 %v2815
      %v2929 = vunpack.c.l.b16 %v2819
      %v2930 = vunpack.c.l.b16 %v2822
      %v2931 = vunpack.c.l.b16 %v2826
      %v2932 = vunpack.c.l.b16 %v2829
      %v2933 = vunpack.c.l.b16 %v2833
      %v2934 = vunpack.c.l.b16 %v2836
      %v2935 = vunpack.c.l.b16 %v2840
      %v2936 = vunpack.c.l.b16 %v2843
      %v2937 = vunpack.c.l.b16 %v2847
      %v2938 = vunpack.c.l.b16 %v2850
      %v2939 = vunpack.c.l.b16 %v2854
      %v2940 = vunpack.c.l.b16 %v2857
      %v2941 = vunpack.c.l.b16 %v2861
      %v2942 = vunpack.c.l.b16 %v2864
      %v2943 = vunpack.c.l.b16 %v2868
      %v2944 = vunpack.c.l.b16 %v2871
      %v2945 = vunpack.c.l.b16 %v2875
      %v2946 = vunpack.c.l.b16 %v2878
      %v2947 = vunpack.c.l.b16 %v2882
      %v2948 = vunpack.c.l.b16 %v2885
      %v2949 = vunpack.c.l.b16 %v2889
      %v2950 = vunpack.c.l.b16 %v2892
      %v2951 = vunpack.c.l.b16 %v2896
      %v2952 = vunpack.c.l.b16 %v2899
      %v2953 = vunpack.c.l.b16 %v2903
      %v2954 = vunpack.c.l.b16 %v2906
      %v2955 = vpack.c.b16 %v2924, %v2923
      %v2956 = vpack.c.b16 %v2926, %v2925
      %v2957 = vpack.c.b16 %v2928, %v2927
      %v2958 = vpack.c.b16 %v2930, %v2929
      %v2959 = vpack.c.b16 %v2932, %v2931
      %v2960 = vpack.c.b16 %v2934, %v2933
      %v2961 = vpack.c.b16 %v2936, %v2935
      %v2962 = vpack.c.b16 %v2938, %v2937
      %v2963 = vpack.c.b16 %v2940, %v2939
      %v2964 = vpack.c.b16 %v2942, %v2941
      %v2965 = vpack.c.b16 %v2944, %v2943
      %v2966 = vpack.c.b16 %v2946, %v2945
      %v2967 = vpack.c.b16 %v2948, %v2947
      %v2968 = vpack.c.b16 %v2950, %v2949
      %v2969 = vpack.c.b16 %v2952, %v2951
      %v2970 = vpack.c.b16 %v2954, %v2953
      %v2987 = vunpack.c.l.b16 %v2911
      %v2988 = vunpack.c.l.b16 %v2914
      %v2989 = vpack.c.b16 %v2988, %v2987
      %v2991 = vunpack.c.l.b16 %v2919
      %v2992 = vunpack.c.l.b16 %v2922
      %v2993 = vpack.c.b16 %v2992, %v2991
      %s2995 = scalar_lea.vmem %s3, 384
      %v2996 = vld [vmem:[%s2995] sm:$0xf]
      %v2997 = vld [vmem:[%s2995 + $0x4] sm:$0xf]
      %v2998 = vld [vmem:[%s2995 + $0x8] sm:$0xf]
      %v2999 = vld [vmem:[%s2995 + $0xc] sm:$0xf]
      %v3000 = vld [vmem:[%s2995 + $0x10] sm:$0xf]
      %v3001 = vld [vmem:[%s2995 + $0x14] sm:$0xf]
      %v3002 = vld [vmem:[%s2995 + $0x18] sm:$0xf]
      %v3003 = vld [vmem:[%s2995 + $0x1c] sm:$0xf]
      %v3004 = vld [vmem:[%s2995 + $0x20] sm:$0xf]
      %v3005 = vld [vmem:[%s2995 + $0x24] sm:$0xf]
      %v3006 = vld [vmem:[%s2995 + $0x28] sm:$0xf]
      %v3007 = vld [vmem:[%s2995 + $0x2c] sm:$0xf]
      %v3008 = vld [vmem:[%s2995 + $0x30] sm:$0xf]
      %v3009 = vld [vmem:[%s2995 + $0x34] sm:$0xf]
      %v3010 = vld [vmem:[%s2995 + $0x38] sm:$0xf]
      %v3011 = vld [vmem:[%s2995 + $0x3c] sm:$0xf]
      %v3012 = vld [vmem:[%s2995 + $0x40] sm:$0xf]
      %v3013 = vld [vmem:[%s2995 + $0x44] sm:$0xf]
      %v3014 = vld [vmem:[%s2995 + $0x48] sm:$0xf]
      %v3015 = vld [vmem:[%s2995 + $0x4c] sm:$0xf]
      %v3016 = vld [vmem:[%s2995 + $0x50] sm:$0xf]
      %v3017 = vld [vmem:[%s2995 + $0x54] sm:$0xf]
      %v3018 = vld [vmem:[%s2995 + $0x58] sm:$0xf]
      %v3019 = vld [vmem:[%s2995 + $0x5c] sm:$0xf]
      %v3020 = vld [vmem:[%s2995 + $0x60] sm:$0xf]
      %v3021 = vld [vmem:[%s2995 + $0x64] sm:$0xf]
      %v3022 = vld [vmem:[%s2995 + $0x68] sm:$0xf]
      %v3023 = vld [vmem:[%s2995 + $0x6c] sm:$0xf]
      %v3024 = vld [vmem:[%s2995 + $0x70] sm:$0xf]
      %v3025 = vld [vmem:[%s2995 + $0x74] sm:$0xf]
      %v3026 = vld [vmem:[%s2995 + $0x78] sm:$0xf]
      %v3027 = vld [vmem:[%s2995 + $0x7c] sm:$0xf]
      %v3028 = vld [vmem:[%s2995 + $0x80] sm:$0xf]
      %v3029 = vld [vmem:[%s2995 + $0x84] sm:$0xf]
      %v3030 = vld [vmem:[%s2995 + $0x88] sm:$0xf]
      %v3031 = vld [vmem:[%s2995 + $0x8c] sm:$0xf]
      %v3032 = vld [vmem:[%s2995 + $0x90] sm:$0xf]
      %v3033 = vld [vmem:[%s2995 + $0x94] sm:$0xf]
      %v3034 = vld [vmem:[%s2995 + $0x98] sm:$0xf]
      %v3035 = vld [vmem:[%s2995 + $0x9c] sm:$0xf]
      %v3036 = vld [vmem:[%s2995 + $0xa0] sm:$0xf]
      %v3037 = vld [vmem:[%s2995 + $0xa4] sm:$0xf]
      %v3038 = vld [vmem:[%s2995 + $0xa8] sm:$0xf]
      %v3039 = vld [vmem:[%s2995 + $0xac] sm:$0xf]
      %v3040 = vld [vmem:[%s2995 + $0xb0] sm:$0xf]
      %v3041 = vld [vmem:[%s2995 + $0xb4] sm:$0xf]
      %v3042 = vld [vmem:[%s2995 + $0xb8] sm:$0xf]
      %v3043 = vld [vmem:[%s2995 + $0xbc] sm:$0xf]
      %v3092 = vunpack.c.l.b16 %v2996
      %v3093 = vunpack.c.l.b16 %v2997
      %v3094 = vunpack.c.l.b16 %v2998
      %v3095 = vunpack.c.l.b16 %v2999
      %v3096 = vunpack.c.l.b16 %v3000
      %v3097 = vunpack.c.l.b16 %v3001
      %v3098 = vunpack.c.l.b16 %v3002
      %v3099 = vunpack.c.l.b16 %v3003
      %v3100 = vunpack.c.l.b16 %v3004
      %v3101 = vunpack.c.l.b16 %v3005
      %v3102 = vunpack.c.l.b16 %v3006
      %v3103 = vunpack.c.l.b16 %v3007
      %v3104 = vunpack.c.l.b16 %v3008
      %v3105 = vunpack.c.l.b16 %v3009
      %v3106 = vunpack.c.l.b16 %v3010
      %v3107 = vunpack.c.l.b16 %v3011
      %v3108 = vunpack.c.l.b16 %v3012
      %v3109 = vunpack.c.l.b16 %v3013
      %v3110 = vunpack.c.l.b16 %v3014
      %v3111 = vunpack.c.l.b16 %v3015
      %v3112 = vunpack.c.l.b16 %v3016
      %v3113 = vunpack.c.l.b16 %v3017
      %v3114 = vunpack.c.l.b16 %v3018
      %v3115 = vunpack.c.l.b16 %v3019
      %v3116 = vunpack.c.l.b16 %v3020
      %v3117 = vunpack.c.l.b16 %v3021
      %v3118 = vunpack.c.l.b16 %v3022
      %v3119 = vunpack.c.l.b16 %v3023
      %v3120 = vunpack.c.l.b16 %v3024
      %v3121 = vunpack.c.l.b16 %v3025
      %v3122 = vunpack.c.l.b16 %v3026
      %v3123 = vunpack.c.l.b16 %v3027
      %v3124 = vunpack.c.l.b16 %v3028
      %v3125 = vunpack.c.l.b16 %v3029
      %v3126 = vunpack.c.l.b16 %v3030
      %v3127 = vunpack.c.l.b16 %v3031
      %v3128 = vunpack.c.l.b16 %v3032
      %v3129 = vunpack.c.l.b16 %v3033
      %v3130 = vunpack.c.l.b16 %v3034
      %v3131 = vunpack.c.l.b16 %v3035
      %v3132 = vunpack.c.l.b16 %v3036
      %v3133 = vunpack.c.l.b16 %v3037
      %v3134 = vunpack.c.l.b16 %v3038
      %v3135 = vunpack.c.l.b16 %v3039
      %v3136 = vunpack.c.l.b16 %v3040
      %v3137 = vunpack.c.l.b16 %v3041
      %v3138 = vunpack.c.l.b16 %v3042
      %v3139 = vunpack.c.l.b16 %v3043
      %v3140 = vpack.c.b16 %v3093, %v3092
      %v3141 = vpack.c.b16 %v3095, %v3094
      %v3142 = vpack.c.b16 %v3097, %v3096
      %v3143 = vpack.c.b16 %v3099, %v3098
      %v3144 = vpack.c.b16 %v3101, %v3100
      %v3145 = vpack.c.b16 %v3103, %v3102
      %v3146 = vpack.c.b16 %v3105, %v3104
      %v3147 = vpack.c.b16 %v3107, %v3106
      %v3148 = vpack.c.b16 %v3109, %v3108
      %v3149 = vpack.c.b16 %v3111, %v3110
      %v3150 = vpack.c.b16 %v3113, %v3112
      %v3151 = vpack.c.b16 %v3115, %v3114
      %v3152 = vpack.c.b16 %v3117, %v3116
      %v3153 = vpack.c.b16 %v3119, %v3118
      %v3154 = vpack.c.b16 %v3121, %v3120
      %v3155 = vpack.c.b16 %v3123, %v3122
      %v3156 = vpack.c.b16 %v3125, %v3124
      %v3157 = vpack.c.b16 %v3127, %v3126
      %v3158 = vpack.c.b16 %v3129, %v3128
      %v3159 = vpack.c.b16 %v3131, %v3130
      %v3160 = vpack.c.b16 %v3133, %v3132
      %v3161 = vpack.c.b16 %v3135, %v3134
      %v3162 = vpack.c.b16 %v3137, %v3136
      %v3163 = vpack.c.b16 %v3139, %v3138
      %3188 = vmatpush.bf16.msra.mxu0 %v3147
      %3189 = vmatpush.bf16.msra.mxu0 %v3146
      %3190 = vmatpush.bf16.msra.mxu0 %v3145
      %3191 = vmatpush.bf16.msra.mxu0 %v3144
      %3192 = vmatpush.bf16.msra.mxu0 %v3143
      %3193 = vmatpush.bf16.msra.mxu0 %v3142
      %3194 = vmatpush.bf16.msra.mxu0 %v3141
      %3195 = vmatpush.bf16.msra.mxu0 %v3140
      %3196 = vmatmul.bf16.gmra.mxu0 %v2955
      %v3197 = vpop.f32.mrf.mxu0
      %v3198 = vadd.f32 0.0, %v3197
      %v3199 = vpop.f32.mrf.mxu0
      %v3200 = vadd.f32 0.0, %v3199
      %3201 = vmatmul.bf16.gmra.mxu0 %v2956
      %v3202 = vpop.f32.mrf.mxu0
      %v3203 = vadd.f32 0.0, %v3202
      %v3204 = vpop.f32.mrf.mxu0
      %v3205 = vadd.f32 0.0, %v3204
      %3206 = vmatmul.bf16.gmra.mxu0 %v2957
      %v3207 = vpop.f32.mrf.mxu0
      %v3208 = vadd.f32 0.0, %v3207
      %v3209 = vpop.f32.mrf.mxu0
      %v3210 = vadd.f32 0.0, %v3209
      %3211 = vmatmul.bf16.gmra.mxu0 %v2958
      %v3212 = vpop.f32.mrf.mxu0
      %v3213 = vadd.f32 0.0, %v3212
      %v3214 = vpop.f32.mrf.mxu0
      %v3215 = vadd.f32 0.0, %v3214
      %3216 = vmatmul.bf16.gmra.mxu0 %v2959
      %v3217 = vpop.f32.mrf.mxu0
      %v3218 = vadd.f32 0.0, %v3217
      %v3219 = vpop.f32.mrf.mxu0
      %v3220 = vadd.f32 0.0, %v3219
      %3221 = vmatmul.bf16.gmra.mxu0 %v2960
      %v3222 = vpop.f32.mrf.mxu0
      %v3223 = vadd.f32 0.0, %v3222
      %v3224 = vpop.f32.mrf.mxu0
      %v3225 = vadd.f32 0.0, %v3224
      %3226 = vmatmul.bf16.gmra.mxu0 %v2961
      %v3227 = vpop.f32.mrf.mxu0
      %v3228 = vadd.f32 0.0, %v3227
      %v3229 = vpop.f32.mrf.mxu0
      %v3230 = vadd.f32 0.0, %v3229
      %3231 = vmatmul.bf16.gmra.mxu0 %v2962
      %v3232 = vpop.f32.mrf.mxu0
      %v3233 = vadd.f32 0.0, %v3232
      %v3234 = vpop.f32.mrf.mxu0
      %v3235 = vadd.f32 0.0, %v3234
      %3236 = vmatmul.bf16.gmra.mxu0 %v2963
      %v3237 = vpop.f32.mrf.mxu0
      %v3238 = vadd.f32 0.0, %v3237
      %v3239 = vpop.f32.mrf.mxu0
      %v3240 = vadd.f32 0.0, %v3239
      %3241 = vmatmul.bf16.gmra.mxu0 %v2964
      %v3242 = vpop.f32.mrf.mxu0
      %v3243 = vadd.f32 0.0, %v3242
      %v3244 = vpop.f32.mrf.mxu0
      %v3245 = vadd.f32 0.0, %v3244
      %3246 = vmatmul.bf16.gmra.mxu0 %v2965
      %v3247 = vpop.f32.mrf.mxu0
      %v3248 = vadd.f32 0.0, %v3247
      %v3249 = vpop.f32.mrf.mxu0
      %v3250 = vadd.f32 0.0, %v3249
      %3251 = vmatmul.bf16.gmra.mxu0 %v2966
      %v3252 = vpop.f32.mrf.mxu0
      %v3253 = vadd.f32 0.0, %v3252
      %v3254 = vpop.f32.mrf.mxu0
      %v3255 = vadd.f32 0.0, %v3254
      %3256 = vmatmul.bf16.gmra.mxu0 %v2967
      %v3257 = vpop.f32.mrf.mxu0
      %v3258 = vadd.f32 0.0, %v3257
      %v3259 = vpop.f32.mrf.mxu0
      %v3260 = vadd.f32 0.0, %v3259
      %3261 = vmatmul.bf16.gmra.mxu0 %v2968
      %v3262 = vpop.f32.mrf.mxu0
      %v3263 = vadd.f32 0.0, %v3262
      %v3264 = vpop.f32.mrf.mxu0
      %v3265 = vadd.f32 0.0, %v3264
      %3266 = vmatmul.bf16.gmra.mxu0 %v2969
      %v3267 = vpop.f32.mrf.mxu0
      %v3268 = vadd.f32 0.0, %v3267
      %v3269 = vpop.f32.mrf.mxu0
      %v3270 = vadd.f32 0.0, %v3269
      %3271 = vmatmul.bf16.gmra.mxu0 %v2970
      %v3272 = vpop.f32.mrf.mxu0
      %v3273 = vadd.f32 0.0, %v3272
      %v3274 = vpop.f32.mrf.mxu0
      %v3275 = vadd.f32 0.0, %v3274
      %3276 = vdwg.mxu0
      %3277 = vmatpush.bf16.msra.mxu0 %v3155
      %3278 = vmatpush.bf16.msra.mxu0 %v3154
      %3279 = vmatpush.bf16.msra.mxu0 %v3153
      %3280 = vmatpush.bf16.msra.mxu0 %v3152
      %3281 = vmatpush.bf16.msra.mxu0 %v3151
      %3282 = vmatpush.bf16.msra.mxu0 %v3150
      %3283 = vmatpush.bf16.msra.mxu0 %v3149
      %3284 = vmatpush.bf16.msra.mxu0 %v3148
      %3285 = vmatmul.bf16.gmra.mxu0 %v2956
      %v3286 = vpop.f32.mrf.mxu0
      %v3287 = vadd.f32 %v3198, %v3286
      %v3288 = vpop.f32.mrf.mxu0
      %v3289 = vadd.f32 %v3200, %v3288
      %3290 = vmatmul.bf16.gmra.mxu0 %v2957
      %v3291 = vpop.f32.mrf.mxu0
      %v3292 = vadd.f32 %v3203, %v3291
      %v3293 = vpop.f32.mrf.mxu0
      %v3294 = vadd.f32 %v3205, %v3293
      %3295 = vmatmul.bf16.gmra.mxu0 %v2958
      %v3296 = vpop.f32.mrf.mxu0
      %v3297 = vadd.f32 %v3208, %v3296
      %v3298 = vpop.f32.mrf.mxu0
      %v3299 = vadd.f32 %v3210, %v3298
      %3300 = vmatmul.bf16.gmra.mxu0 %v2959
      %v3301 = vpop.f32.mrf.mxu0
      %v3302 = vadd.f32 %v3213, %v3301
      %v3303 = vpop.f32.mrf.mxu0
      %v3304 = vadd.f32 %v3215, %v3303
      %3305 = vmatmul.bf16.gmra.mxu0 %v2960
      %v3306 = vpop.f32.mrf.mxu0
      %v3307 = vadd.f32 %v3218, %v3306
      %v3308 = vpop.f32.mrf.mxu0
      %v3309 = vadd.f32 %v3220, %v3308
      %3310 = vmatmul.bf16.gmra.mxu0 %v2961
      %v3311 = vpop.f32.mrf.mxu0
      %v3312 = vadd.f32 %v3223, %v3311
      %v3313 = vpop.f32.mrf.mxu0
      %v3314 = vadd.f32 %v3225, %v3313
      %3315 = vmatmul.bf16.gmra.mxu0 %v2962
      %v3316 = vpop.f32.mrf.mxu0
      %v3317 = vadd.f32 %v3228, %v3316
      %v3318 = vpop.f32.mrf.mxu0
      %v3319 = vadd.f32 %v3230, %v3318
      %3320 = vmatmul.bf16.gmra.mxu0 %v2963
      %v3321 = vpop.f32.mrf.mxu0
      %v3322 = vadd.f32 %v3233, %v3321
      %v3323 = vpop.f32.mrf.mxu0
      %v3324 = vadd.f32 %v3235, %v3323
      %3325 = vmatmul.bf16.gmra.mxu0 %v2964
      %v3326 = vpop.f32.mrf.mxu0
      %v3327 = vadd.f32 %v3238, %v3326
      %v3328 = vpop.f32.mrf.mxu0
      %v3329 = vadd.f32 %v3240, %v3328
      %3330 = vmatmul.bf16.gmra.mxu0 %v2965
      %v3331 = vpop.f32.mrf.mxu0
      %v3332 = vadd.f32 %v3243, %v3331
      %v3333 = vpop.f32.mrf.mxu0
      %v3334 = vadd.f32 %v3245, %v3333
      %3335 = vmatmul.bf16.gmra.mxu0 %v2966
      %v3336 = vpop.f32.mrf.mxu0
      %v3337 = vadd.f32 %v3248, %v3336
      %v3338 = vpop.f32.mrf.mxu0
      %v3339 = vadd.f32 %v3250, %v3338
      %3340 = vmatmul.bf16.gmra.mxu0 %v2967
      %v3341 = vpop.f32.mrf.mxu0
      %v3342 = vadd.f32 %v3253, %v3341
      %v3343 = vpop.f32.mrf.mxu0
      %v3344 = vadd.f32 %v3255, %v3343
      %3345 = vmatmul.bf16.gmra.mxu0 %v2968
      %v3346 = vpop.f32.mrf.mxu0
      %v3347 = vadd.f32 %v3258, %v3346
      %v3348 = vpop.f32.mrf.mxu0
      %v3349 = vadd.f32 %v3260, %v3348
      %3350 = vmatmul.bf16.gmra.mxu0 %v2969
      %v3351 = vpop.f32.mrf.mxu0
      %v3352 = vadd.f32 %v3263, %v3351
      %v3353 = vpop.f32.mrf.mxu0
      %v3354 = vadd.f32 %v3265, %v3353
      %3355 = vmatmul.bf16.gmra.mxu0 %v2970
      %v3356 = vpop.f32.mrf.mxu0
      %v3357 = vadd.f32 %v3268, %v3356
      %v3358 = vpop.f32.mrf.mxu0
      %v3359 = vadd.f32 %v3270, %v3358
      %3360 = vmatmul.bf16.gmra.mxu0 %v2989
      %v3361 = vpop.f32.mrf.mxu0
      %v3362 = vadd.f32 %v3273, %v3361
      %v3363 = vpop.f32.mrf.mxu0
      %v3364 = vadd.f32 %v3275, %v3363
      %3365 = vdwg.mxu0
      %3366 = vmatpush.bf16.msra.mxu0 %v3163
      %3367 = vmatpush.bf16.msra.mxu0 %v3162
      %3368 = vmatpush.bf16.msra.mxu0 %v3161
      %3369 = vmatpush.bf16.msra.mxu0 %v3160
      %3370 = vmatpush.bf16.msra.mxu0 %v3159
      %3371 = vmatpush.bf16.msra.mxu0 %v3158
      %3372 = vmatpush.bf16.msra.mxu0 %v3157
      %3373 = vmatpush.bf16.msra.mxu0 %v3156
      %3374 = vmatmul.bf16.gmra.mxu0 %v2957
      %v3375 = vpop.f32.mrf.mxu0
      %v3376 = vadd.f32 %v3287, %v3375
      %v3377 = vpop.f32.mrf.mxu0
      %v3378 = vadd.f32 %v3289, %v3377
      %3379 = vmatmul.bf16.gmra.mxu0 %v2958
      %v3380 = vpop.f32.mrf.mxu0
      %v3381 = vadd.f32 %v3292, %v3380
      %v3382 = vpop.f32.mrf.mxu0
      %v3383 = vadd.f32 %v3294, %v3382
      %3384 = vmatmul.bf16.gmra.mxu0 %v2959
      %v3385 = vpop.f32.mrf.mxu0
      %v3386 = vadd.f32 %v3297, %v3385
      %v3387 = vpop.f32.mrf.mxu0
      %v3388 = vadd.f32 %v3299, %v3387
      %3389 = vmatmul.bf16.gmra.mxu0 %v2960
      %v3390 = vpop.f32.mrf.mxu0
      %v3391 = vadd.f32 %v3302, %v3390
      %v3392 = vpop.f32.mrf.mxu0
      %v3393 = vadd.f32 %v3304, %v3392
      %3394 = vmatmul.bf16.gmra.mxu0 %v2961
      %v3395 = vpop.f32.mrf.mxu0
      %v3396 = vadd.f32 %v3307, %v3395
      %v3397 = vpop.f32.mrf.mxu0
      %v3398 = vadd.f32 %v3309, %v3397
      %3399 = vmatmul.bf16.gmra.mxu0 %v2962
      %v3400 = vpop.f32.mrf.mxu0
      %v3401 = vadd.f32 %v3312, %v3400
      %v3402 = vpop.f32.mrf.mxu0
      %v3403 = vadd.f32 %v3314, %v3402
      %3404 = vmatmul.bf16.gmra.mxu0 %v2963
      %v3405 = vpop.f32.mrf.mxu0
      %v3406 = vadd.f32 %v3317, %v3405
      %v3407 = vpop.f32.mrf.mxu0
      %v3408 = vadd.f32 %v3319, %v3407
      %3409 = vmatmul.bf16.gmra.mxu0 %v2964
      %v3410 = vpop.f32.mrf.mxu0
      %v3411 = vadd.f32 %v3322, %v3410
      %v3412 = vpop.f32.mrf.mxu0
      %v3413 = vadd.f32 %v3324, %v3412
      %3414 = vmatmul.bf16.gmra.mxu0 %v2965
      %v3415 = vpop.f32.mrf.mxu0
      %v3416 = vadd.f32 %v3327, %v3415
      %v3417 = vpop.f32.mrf.mxu0
      %v3418 = vadd.f32 %v3329, %v3417
      %3419 = vmatmul.bf16.gmra.mxu0 %v2966
      %v3420 = vpop.f32.mrf.mxu0
      %v3421 = vadd.f32 %v3332, %v3420
      %v3422 = vpop.f32.mrf.mxu0
      %v3423 = vadd.f32 %v3334, %v3422
      %3424 = vmatmul.bf16.gmra.mxu0 %v2967
      %v3425 = vpop.f32.mrf.mxu0
      %v3426 = vadd.f32 %v3337, %v3425
      %v3427 = vpop.f32.mrf.mxu0
      %v3428 = vadd.f32 %v3339, %v3427
      %3429 = vmatmul.bf16.gmra.mxu0 %v2968
      %v3430 = vpop.f32.mrf.mxu0
      %v3431 = vadd.f32 %v3342, %v3430
      %v3432 = vpop.f32.mrf.mxu0
      %v3433 = vadd.f32 %v3344, %v3432
      %3434 = vmatmul.bf16.gmra.mxu0 %v2969
      %v3435 = vpop.f32.mrf.mxu0
      %v3436 = vadd.f32 %v3347, %v3435
      %v3437 = vpop.f32.mrf.mxu0
      %v3438 = vadd.f32 %v3349, %v3437
      %3439 = vmatmul.bf16.gmra.mxu0 %v2970
      %v3440 = vpop.f32.mrf.mxu0
      %v3441 = vadd.f32 %v3352, %v3440
      %v3442 = vpop.f32.mrf.mxu0
      %v3443 = vadd.f32 %v3354, %v3442
      %3444 = vmatmul.bf16.gmra.mxu0 %v2989
      %v3445 = vpop.f32.mrf.mxu0
      %v3446 = vadd.f32 %v3357, %v3445
      %v3447 = vpop.f32.mrf.mxu0
      %v3448 = vadd.f32 %v3359, %v3447
      %3449 = vmatmul.bf16.gmra.mxu0 %v2993
      %v3450 = vpop.f32.mrf.mxu0
      %v3451 = vadd.f32 %v3362, %v3450
      %v3452 = vpop.f32.mrf.mxu0
      %v3453 = vadd.f32 %v3364, %v3452
      %3454 = vdwg.mxu0
      %v3455 = vadd.f32 %v2697, %v3376
      %v3456 = vadd.f32 %v2699, %v3378
      %v3457 = vadd.f32 %v2702, %v3381
      %v3458 = vadd.f32 %v2704, %v3383
      %v3459 = vadd.f32 %v2707, %v3386
      %v3460 = vadd.f32 %v2709, %v3388
      %v3461 = vadd.f32 %v2712, %v3391
      %v3462 = vadd.f32 %v2714, %v3393
      %v3463 = vadd.f32 %v2717, %v3396
      %v3464 = vadd.f32 %v2719, %v3398
      %v3465 = vadd.f32 %v2722, %v3401
      %v3466 = vadd.f32 %v2724, %v3403
      %v3467 = vadd.f32 %v2727, %v3406
      %v3468 = vadd.f32 %v2729, %v3408
      %v3469 = vadd.f32 %v2732, %v3411
      %v3470 = vadd.f32 %v2734, %v3413
      %v3471 = vadd.f32 %v2737, %v3416
      %v3472 = vadd.f32 %v2739, %v3418
      %v3473 = vadd.f32 %v2742, %v3421
      %v3474 = vadd.f32 %v2744, %v3423
      %v3475 = vadd.f32 %v2747, %v3426
      %v3476 = vadd.f32 %v2749, %v3428
      %v3477 = vadd.f32 %v2752, %v3431
      %v3478 = vadd.f32 %v2754, %v3433
      %v3479 = vadd.f32 %v2757, %v3436
      %v3480 = vadd.f32 %v2759, %v3438
      %v3481 = vadd.f32 %v2762, %v3441
      %v3482 = vadd.f32 %v2764, %v3443
      %v3483 = vadd.f32 %v2767, %v3446
      %v3484 = vadd.f32 %v2769, %v3448
      %v3485 = vadd.f32 %v2772, %v3451
      %v3486 = vadd.f32 %v2774, %v3453
      %v3487 = vpack.c.bf16 %v3455, %v3455
      %v3488 = vpack.c.bf16 %v3456, %v3456
      %v3489 = vpack.c.bf16 %v3457, %v3457
      %v3490 = vpack.c.bf16 %v3458, %v3458
      %v3491 = vpack.c.bf16 %v3459, %v3459
      %v3492 = vpack.c.bf16 %v3460, %v3460
      %v3493 = vpack.c.bf16 %v3461, %v3461
      %v3494 = vpack.c.bf16 %v3462, %v3462
      %v3495 = vpack.c.bf16 %v3463, %v3463
      %v3496 = vpack.c.bf16 %v3464, %v3464
      %v3497 = vpack.c.bf16 %v3465, %v3465
      %v3498 = vpack.c.bf16 %v3466, %v3466
      %v3499 = vpack.c.bf16 %v3467, %v3467
      %v3500 = vpack.c.bf16 %v3468, %v3468
      %v3501 = vpack.c.bf16 %v3469, %v3469
      %v3502 = vpack.c.bf16 %v3470, %v3470
      %v3503 = vpack.c.bf16 %v3471, %v3471
      %v3504 = vpack.c.bf16 %v3472, %v3472
      %v3505 = vpack.c.bf16 %v3473, %v3473
      %v3506 = vpack.c.bf16 %v3474, %v3474
      %v3507 = vpack.c.bf16 %v3475, %v3475
      %v3508 = vpack.c.bf16 %v3476, %v3476
      %v3509 = vpack.c.bf16 %v3477, %v3477
      %v3510 = vpack.c.bf16 %v3478, %v3478
      %v3511 = vpack.c.bf16 %v3479, %v3479
      %v3512 = vpack.c.bf16 %v3480, %v3480
      %v3513 = vpack.c.bf16 %v3481, %v3481
      %v3514 = vpack.c.bf16 %v3482, %v3482
      %v3515 = vpack.c.bf16 %v3483, %v3483
      %v3516 = vpack.c.bf16 %v3484, %v3484
      %v3517 = vpack.c.bf16 %v3485, %v3485
      %v3518 = vpack.c.bf16 %v3486, %v3486
      %3519 = vst [vmem:[%s509] sm:$0xf] %v3487
      %3520 = vst [vmem:[%s509 + $0x4] sm:$0xf] %v3488
      %3521 = vst [vmem:[%s509 + $0x8] sm:$0xf] %v3489
      %3522 = vst [vmem:[%s509 + $0xc] sm:$0xf] %v3490
      %3523 = vst [vmem:[%s509 + $0x10] sm:$0xf] %v3491
      %3524 = vst [vmem:[%s509 + $0x14] sm:$0xf] %v3492
      %3525 = vst [vmem:[%s509 + $0x18] sm:$0xf] %v3493
      %3526 = vst [vmem:[%s509 + $0x1c] sm:$0xf] %v3494
      %3527 = vst [vmem:[%s509 + $0x20] sm:$0xf] %v3495
      %3528 = vst [vmem:[%s509 + $0x24] sm:$0xf] %v3496
      %3529 = vst [vmem:[%s509 + $0x28] sm:$0xf] %v3497
      %3530 = vst [vmem:[%s509 + $0x2c] sm:$0xf] %v3498
      %3531 = vst [vmem:[%s509 + $0x30] sm:$0xf] %v3499
      %3532 = vst [vmem:[%s509 + $0x34] sm:$0xf] %v3500
      %3533 = vst [vmem:[%s509 + $0x38] sm:$0xf] %v3501
      %3534 = vst [vmem:[%s509 + $0x3c] sm:$0xf] %v3502
      %3535 = vst [vmem:[%s509 + $0x40] sm:$0xf] %v3503
      %3536 = vst [vmem:[%s509 + $0x44] sm:$0xf] %v3504
      %3537 = vst [vmem:[%s509 + $0x48] sm:$0xf] %v3505
      %3538 = vst [vmem:[%s509 + $0x4c] sm:$0xf] %v3506
      %3539 = vst [vmem:[%s509 + $0x50] sm:$0xf] %v3507
      %3540 = vst [vmem:[%s509 + $0x54] sm:$0xf] %v3508
      %3541 = vst [vmem:[%s509 + $0x58] sm:$0xf] %v3509
      %3542 = vst [vmem:[%s509 + $0x5c] sm:$0xf] %v3510
      %3543 = vst [vmem:[%s509 + $0x60] sm:$0xf] %v3511
      %3544 = vst [vmem:[%s509 + $0x64] sm:$0xf] %v3512
      %3545 = vst [vmem:[%s509 + $0x68] sm:$0xf] %v3513
      %3546 = vst [vmem:[%s509 + $0x6c] sm:$0xf] %v3514
      %3547 = vst [vmem:[%s509 + $0x70] sm:$0xf] %v3515
      %3548 = vst [vmem:[%s509 + $0x74] sm:$0xf] %v3516
      %3549 = vst [vmem:[%s509 + $0x78] sm:$0xf] %v3517
      %3550 = vst [vmem:[%s509 + $0x7c] sm:$0xf] %v3518
      %v3551 = vadd.f32 %v3455, %v3456
      %v3552 = vadd.f32 %v3551, %v3457
      %v3553 = vadd.f32 %v3552, %v3458
      %v3554 = vadd.f32 %v3553, %v3459
      %v3555 = vadd.f32 %v3554, %v3460
      %v3556 = vadd.f32 %v3555, %v3461
      %v3557 = vadd.f32 %v3556, %v3462
      %v3558 = vadd.f32 %v3557, %v3463
      %v3559 = vadd.f32 %v3558, %v3464
      %v3560 = vadd.f32 %v3559, %v3465
      %v3561 = vadd.f32 %v3560, %v3466
      %v3562 = vadd.f32 %v3561, %v3467
      %v3563 = vadd.f32 %v3562, %v3468
      %v3564 = vadd.f32 %v3563, %v3469
      %v3565 = vadd.f32 %v3564, %v3470
      %v3566 = vadd.f32 %v3565, %v3471
      %v3567 = vadd.f32 %v3566, %v3472
      %v3568 = vadd.f32 %v3567, %v3473
      %v3569 = vadd.f32 %v3568, %v3474
      %v3570 = vadd.f32 %v3569, %v3475
      %v3571 = vadd.f32 %v3570, %v3476
      %v3572 = vadd.f32 %v3571, %v3477
      %v3573 = vadd.f32 %v3572, %v3478
      %v3574 = vadd.f32 %v3573, %v3479
      %v3575 = vadd.f32 %v3574, %v3480
      %v3576 = vadd.f32 %v3575, %v3481
      %v3577 = vadd.f32 %v3576, %v3482
      %v3578 = vadd.f32 %v3577, %v3483
      %v3579 = vadd.f32 %v3578, %v3484
      %v3580 = vadd.f32 %v3579, %v3485
      %v3581 = vadd.f32 %v3580, %v3486
      %v3582 = vrot.slane %v3581, 4
      %v3583 = vadd.f32 %v3581, %v3582
      %v3584 = vrot.slane %v3583, 2
      %v3585 = vadd.f32 %v3583, %v3584
      %v3586 = vrot.slane %v3585, 1
      %v3587 = vadd.f32 %v3585, %v3586
      %v3588 = vmul.f32 %v3455, %v3455
      %v3589 = vmul.f32 %v3456, %v3456
      %v3590 = vmul.f32 %v3457, %v3457
      %v3591 = vmul.f32 %v3458, %v3458
      %v3592 = vmul.f32 %v3459, %v3459
      %v3593 = vmul.f32 %v3460, %v3460
      %v3594 = vmul.f32 %v3461, %v3461
      %v3595 = vmul.f32 %v3462, %v3462
      %v3596 = vmul.f32 %v3463, %v3463
      %v3597 = vmul.f32 %v3464, %v3464
      %v3598 = vmul.f32 %v3465, %v3465
      %v3599 = vmul.f32 %v3466, %v3466
      %v3600 = vmul.f32 %v3467, %v3467
      %v3601 = vmul.f32 %v3468, %v3468
      %v3602 = vmul.f32 %v3469, %v3469
      %v3603 = vmul.f32 %v3470, %v3470
      %v3604 = vmul.f32 %v3471, %v3471
      %v3605 = vmul.f32 %v3472, %v3472
      %v3606 = vmul.f32 %v3473, %v3473
      %v3607 = vmul.f32 %v3474, %v3474
      %v3608 = vmul.f32 %v3475, %v3475
      %v3609 = vmul.f32 %v3476, %v3476
      %v3610 = vmul.f32 %v3477, %v3477
      %v3611 = vmul.f32 %v3478, %v3478
      %v3612 = vmul.f32 %v3479, %v3479
      %v3613 = vmul.f32 %v3480, %v3480
      %v3614 = vmul.f32 %v3481, %v3481
      %v3615 = vmul.f32 %v3482, %v3482
      %v3616 = vmul.f32 %v3483, %v3483
      %v3617 = vmul.f32 %v3484, %v3484
      %v3618 = vmul.f32 %v3485, %v3485
      %v3619 = vmul.f32 %v3486, %v3486
      %v3620 = vadd.f32 %v3588, %v3589
      %v3621 = vadd.f32 %v3620, %v3590
      %v3622 = vadd.f32 %v3621, %v3591
      %v3623 = vadd.f32 %v3622, %v3592
      %v3624 = vadd.f32 %v3623, %v3593
      %v3625 = vadd.f32 %v3624, %v3594
      %v3626 = vadd.f32 %v3625, %v3595
      %v3627 = vadd.f32 %v3626, %v3596
      %v3628 = vadd.f32 %v3627, %v3597
      %v3629 = vadd.f32 %v3628, %v3598
      %v3630 = vadd.f32 %v3629, %v3599
      %v3631 = vadd.f32 %v3630, %v3600
      %v3632 = vadd.f32 %v3631, %v3601
      %v3633 = vadd.f32 %v3632, %v3602
      %v3634 = vadd.f32 %v3633, %v3603
      %v3635 = vadd.f32 %v3634, %v3604
      %v3636 = vadd.f32 %v3635, %v3605
      %v3637 = vadd.f32 %v3636, %v3606
      %v3638 = vadd.f32 %v3637, %v3607
      %v3639 = vadd.f32 %v3638, %v3608
      %v3640 = vadd.f32 %v3639, %v3609
      %v3641 = vadd.f32 %v3640, %v3610
      %v3642 = vadd.f32 %v3641, %v3611
      %v3643 = vadd.f32 %v3642, %v3612
      %v3644 = vadd.f32 %v3643, %v3613
      %v3645 = vadd.f32 %v3644, %v3614
      %v3646 = vadd.f32 %v3645, %v3615
      %v3647 = vadd.f32 %v3646, %v3616
      %v3648 = vadd.f32 %v3647, %v3617
      %v3649 = vadd.f32 %v3648, %v3618
      %v3650 = vadd.f32 %v3649, %v3619
      %v3651 = vrot.slane %v3650, 4
      %v3652 = vadd.f32 %v3650, %v3651
      %v3653 = vrot.slane %v3652, 2
      %v3654 = vadd.f32 %v3652, %v3653
      %v3655 = vrot.slane %v3654, 1
      %v3656 = vadd.f32 %v3654, %v3655
      %vm3657 = vcmask 1040384
      %v3658 = vsel %vm3657, %v3587, %v3656
      %3659 = vst [vmem:[%s517] sm:$0x3] %v3658
      %v3660 = vld [vmem:[%s464] sm:$0xf]
      %v3661 = vld [vmem:[%s464 + $0x4] sm:$0xf]
      %v3662 = vld [vmem:[%s464 + $0x8] sm:$0xf]
      %v3663 = vld [vmem:[%s464 + $0xc] sm:$0xf]
      %v3664 = vld [vmem:[%s464 + $0x10] sm:$0xf]
      %v3665 = vld [vmem:[%s464 + $0x14] sm:$0xf]
      %v3666 = vld [vmem:[%s464 + $0x18] sm:$0xf]
      %v3667 = vld [vmem:[%s464 + $0x1c] sm:$0xf]
      %v3668 = vld [vmem:[%s464 + $0x20] sm:$0xf]
      %v3669 = vld [vmem:[%s464 + $0x24] sm:$0xf]
      %v3670 = vld [vmem:[%s464 + $0x28] sm:$0xf]
      %v3671 = vld [vmem:[%s464 + $0x2c] sm:$0xf]
      %v3672 = vld [vmem:[%s464 + $0x30] sm:$0xf]
      %v3673 = vld [vmem:[%s464 + $0x34] sm:$0xf]
      %v3674 = vld [vmem:[%s464 + $0x38] sm:$0xf]
      %v3675 = vld [vmem:[%s464 + $0x3c] sm:$0xf]
      %v3676 = vld [vmem:[%s464 + $0x40] sm:$0xf]
      %v3677 = vld [vmem:[%s464 + $0x44] sm:$0xf]
      %v3678 = vld [vmem:[%s464 + $0x48] sm:$0xf]
      %v3679 = vld [vmem:[%s464 + $0x4c] sm:$0xf]
      %v3680 = vld [vmem:[%s464 + $0x50] sm:$0xf]
      %v3681 = vld [vmem:[%s464 + $0x54] sm:$0xf]
      %v3682 = vld [vmem:[%s464 + $0x58] sm:$0xf]
      %v3683 = vld [vmem:[%s464 + $0x5c] sm:$0xf]
      %v3684 = vld [vmem:[%s464 + $0x60] sm:$0xf]
      %v3685 = vld [vmem:[%s464 + $0x64] sm:$0xf]
      %v3686 = vld [vmem:[%s464 + $0x68] sm:$0xf]
      %v3687 = vld [vmem:[%s464 + $0x6c] sm:$0xf]
      %v3688 = vld [vmem:[%s464 + $0x70] sm:$0xf]
      %v3689 = vld [vmem:[%s464 + $0x74] sm:$0xf]
      %v3690 = vld [vmem:[%s464 + $0x78] sm:$0xf]
      %v3691 = vld [vmem:[%s464 + $0x7c] sm:$0xf]
      %v3692 = vld [vmem:[%s4] sm:$0xf]
      %v3693 = vld [vmem:[%s4 + $0x4] sm:$0xf]
      %v3694 = vld [vmem:[%s4 + $0x8] sm:$0xf]
      %v3695 = vld [vmem:[%s4 + $0xc] sm:$0xf]
      %v3696 = vld [vmem:[%s4 + $0x10] sm:$0xf]
      %v3697 = vld [vmem:[%s4 + $0x14] sm:$0xf]
      %v3698 = vld [vmem:[%s4 + $0x18] sm:$0xf]
      %v3699 = vld [vmem:[%s4 + $0x1c] sm:$0xf]
      %v3700 = vld [vmem:[%s4 + $0x20] sm:$0xf]
      %v3701 = vld [vmem:[%s4 + $0x24] sm:$0xf]
      %v3702 = vld [vmem:[%s4 + $0x28] sm:$0xf]
      %v3703 = vld [vmem:[%s4 + $0x2c] sm:$0xf]
      %v3704 = vld [vmem:[%s4 + $0x30] sm:$0xf]
      %v3705 = vld [vmem:[%s4 + $0x34] sm:$0xf]
      %v3706 = vld [vmem:[%s4 + $0x38] sm:$0xf]
      %v3707 = vld [vmem:[%s4 + $0x3c] sm:$0xf]
      %v3740 = vunpack.c.l.b16 %v3660
      %v3741 = vunpack.c.l.b16 %v3661
      %v3742 = vunpack.c.l.b16 %v3662
      %v3743 = vunpack.c.l.b16 %v3663
      %v3744 = vunpack.c.l.b16 %v3664
      %v3745 = vunpack.c.l.b16 %v3665
      %v3746 = vunpack.c.l.b16 %v3666
      %v3747 = vunpack.c.l.b16 %v3667
      %v3748 = vunpack.c.l.b16 %v3668
      %v3749 = vunpack.c.l.b16 %v3669
      %v3750 = vunpack.c.l.b16 %v3670
      %v3751 = vunpack.c.l.b16 %v3671
      %v3752 = vunpack.c.l.b16 %v3672
      %v3753 = vunpack.c.l.b16 %v3673
      %v3754 = vunpack.c.l.b16 %v3674
      %v3755 = vunpack.c.l.b16 %v3675
      %v3756 = vunpack.c.l.b16 %v3676
      %v3757 = vunpack.c.l.b16 %v3677
      %v3758 = vunpack.c.l.b16 %v3678
      %v3759 = vunpack.c.l.b16 %v3679
      %v3760 = vunpack.c.l.b16 %v3680
      %v3761 = vunpack.c.l.b16 %v3681
      %v3762 = vunpack.c.l.b16 %v3682
      %v3763 = vunpack.c.l.b16 %v3683
      %v3764 = vunpack.c.l.b16 %v3684
      %v3765 = vunpack.c.l.b16 %v3685
      %v3766 = vunpack.c.l.b16 %v3686
      %v3767 = vunpack.c.l.b16 %v3687
      %v3768 = vunpack.c.l.b16 %v3688
      %v3769 = vunpack.c.l.b16 %v3689
      %v3770 = vunpack.c.l.b16 %v3690
      %v3771 = vunpack.c.l.b16 %v3691
      %v3772 = vpack.c.b16 %v3741, %v3740
      %v3773 = vpack.c.b16 %v3743, %v3742
      %v3774 = vpack.c.b16 %v3745, %v3744
      %v3775 = vpack.c.b16 %v3747, %v3746
      %v3776 = vpack.c.b16 %v3749, %v3748
      %v3777 = vpack.c.b16 %v3751, %v3750
      %v3778 = vpack.c.b16 %v3753, %v3752
      %v3779 = vpack.c.b16 %v3755, %v3754
      %v3780 = vpack.c.b16 %v3757, %v3756
      %v3781 = vpack.c.b16 %v3759, %v3758
      %v3782 = vpack.c.b16 %v3761, %v3760
      %v3783 = vpack.c.b16 %v3763, %v3762
      %v3784 = vpack.c.b16 %v3765, %v3764
      %v3785 = vpack.c.b16 %v3767, %v3766
      %v3786 = vpack.c.b16 %v3769, %v3768
      %v3787 = vpack.c.b16 %v3771, %v3770
      %v3820 = vunpack.c.l.b16 %v3692
      %v3821 = vunpack.c.l.b16 %v3693
      %v3822 = vunpack.c.l.b16 %v3694
      %v3823 = vunpack.c.l.b16 %v3695
      %v3824 = vunpack.c.l.b16 %v3696
      %v3825 = vunpack.c.l.b16 %v3697
      %v3826 = vunpack.c.l.b16 %v3698
      %v3827 = vunpack.c.l.b16 %v3699
      %v3828 = vunpack.c.l.b16 %v3700
      %v3829 = vunpack.c.l.b16 %v3701
      %v3830 = vunpack.c.l.b16 %v3702
      %v3831 = vunpack.c.l.b16 %v3703
      %v3832 = vunpack.c.l.b16 %v3704
      %v3833 = vunpack.c.l.b16 %v3705
      %v3834 = vunpack.c.l.b16 %v3706
      %v3835 = vunpack.c.l.b16 %v3707
      %v3836 = vpack.c.b16 %v3821, %v3820
      %v3837 = vpack.c.b16 %v3823, %v3822
      %v3838 = vpack.c.b16 %v3825, %v3824
      %v3839 = vpack.c.b16 %v3827, %v3826
      %v3840 = vpack.c.b16 %v3829, %v3828
      %v3841 = vpack.c.b16 %v3831, %v3830
      %v3842 = vpack.c.b16 %v3833, %v3832
      %v3843 = vpack.c.b16 %v3835, %v3834
      %3852 = vmatpush.bf16.msra.mxu0 %v3843
      %3853 = vmatpush.bf16.msra.mxu0 %v3842
      %3854 = vmatpush.bf16.msra.mxu0 %v3841
      %3855 = vmatpush.bf16.msra.mxu0 %v3840
      %3856 = vmatpush.bf16.msra.mxu0 %v3839
      %3857 = vmatpush.bf16.msra.mxu0 %v3838
      %3858 = vmatpush.bf16.msra.mxu0 %v3837
      %3859 = vmatpush.bf16.msra.mxu0 %v3836
      %3860 = vmatmul.bf16.gmra.mxu0 %v3772
      %v3861 = vpop.f32.mrf.mxu0
      %v3862 = vadd.f32 0.0, %v3861
      %v3863 = vpop.f32.mrf.mxu0
      %v3864 = vadd.f32 0.0, %v3863
      %3865 = vmatmul.bf16.gmra.mxu0 %v3773
      %v3866 = vpop.f32.mrf.mxu0
      %v3867 = vadd.f32 0.0, %v3866
      %v3868 = vpop.f32.mrf.mxu0
      %v3869 = vadd.f32 0.0, %v3868
      %3870 = vmatmul.bf16.gmra.mxu0 %v3774
      %v3871 = vpop.f32.mrf.mxu0
      %v3872 = vadd.f32 0.0, %v3871
      %v3873 = vpop.f32.mrf.mxu0
      %v3874 = vadd.f32 0.0, %v3873
      %3875 = vmatmul.bf16.gmra.mxu0 %v3775
      %v3876 = vpop.f32.mrf.mxu0
      %v3877 = vadd.f32 0.0, %v3876
      %v3878 = vpop.f32.mrf.mxu0
      %v3879 = vadd.f32 0.0, %v3878
      %3880 = vmatmul.bf16.gmra.mxu0 %v3776
      %v3881 = vpop.f32.mrf.mxu0
      %v3882 = vadd.f32 0.0, %v3881
      %v3883 = vpop.f32.mrf.mxu0
      %v3884 = vadd.f32 0.0, %v3883
      %3885 = vmatmul.bf16.gmra.mxu0 %v3777
      %v3886 = vpop.f32.mrf.mxu0
      %v3887 = vadd.f32 0.0, %v3886
      %v3888 = vpop.f32.mrf.mxu0
      %v3889 = vadd.f32 0.0, %v3888
      %3890 = vmatmul.bf16.gmra.mxu0 %v3778
      %v3891 = vpop.f32.mrf.mxu0
      %v3892 = vadd.f32 0.0, %v3891
      %v3893 = vpop.f32.mrf.mxu0
      %v3894 = vadd.f32 0.0, %v3893
      %3895 = vmatmul.bf16.gmra.mxu0 %v3779
      %v3896 = vpop.f32.mrf.mxu0
      %v3897 = vadd.f32 0.0, %v3896
      %v3898 = vpop.f32.mrf.mxu0
      %v3899 = vadd.f32 0.0, %v3898
      %3900 = vmatmul.bf16.gmra.mxu0 %v3780
      %v3901 = vpop.f32.mrf.mxu0
      %v3902 = vadd.f32 0.0, %v3901
      %v3903 = vpop.f32.mrf.mxu0
      %v3904 = vadd.f32 0.0, %v3903
      %3905 = vmatmul.bf16.gmra.mxu0 %v3781
      %v3906 = vpop.f32.mrf.mxu0
      %v3907 = vadd.f32 0.0, %v3906
      %v3908 = vpop.f32.mrf.mxu0
      %v3909 = vadd.f32 0.0, %v3908
      %3910 = vmatmul.bf16.gmra.mxu0 %v3782
      %v3911 = vpop.f32.mrf.mxu0
      %v3912 = vadd.f32 0.0, %v3911
      %v3913 = vpop.f32.mrf.mxu0
      %v3914 = vadd.f32 0.0, %v3913
      %3915 = vmatmul.bf16.gmra.mxu0 %v3783
      %v3916 = vpop.f32.mrf.mxu0
      %v3917 = vadd.f32 0.0, %v3916
      %v3918 = vpop.f32.mrf.mxu0
      %v3919 = vadd.f32 0.0, %v3918
      %3920 = vmatmul.bf16.gmra.mxu0 %v3784
      %v3921 = vpop.f32.mrf.mxu0
      %v3922 = vadd.f32 0.0, %v3921
      %v3923 = vpop.f32.mrf.mxu0
      %v3924 = vadd.f32 0.0, %v3923
      %3925 = vmatmul.bf16.gmra.mxu0 %v3785
      %v3926 = vpop.f32.mrf.mxu0
      %v3927 = vadd.f32 0.0, %v3926
      %v3928 = vpop.f32.mrf.mxu0
      %v3929 = vadd.f32 0.0, %v3928
      %3930 = vmatmul.bf16.gmra.mxu0 %v3786
      %v3931 = vpop.f32.mrf.mxu0
      %v3932 = vadd.f32 0.0, %v3931
      %v3933 = vpop.f32.mrf.mxu0
      %v3934 = vadd.f32 0.0, %v3933
      %3935 = vmatmul.bf16.gmra.mxu0 %v3787
      %v3936 = vpop.f32.mrf.mxu0
      %v3937 = vadd.f32 0.0, %v3936
      %v3938 = vpop.f32.mrf.mxu0
      %v3939 = vadd.f32 0.0, %v3938
      %3940 = vdwg.mxu0
      %v3941 = vpack.c.bf16 %v3862, %v3862
      %v3942 = vpack.c.bf16 %v3864, %v3864
      %v3943 = vpack.c.bf16 %v3867, %v3867
      %v3944 = vpack.c.bf16 %v3869, %v3869
      %v3945 = vpack.c.bf16 %v3872, %v3872
      %v3946 = vpack.c.bf16 %v3874, %v3874
      %v3947 = vpack.c.bf16 %v3877, %v3877
      %v3948 = vpack.c.bf16 %v3879, %v3879
      %v3949 = vpack.c.bf16 %v3882, %v3882
      %v3950 = vpack.c.bf16 %v3884, %v3884
      %v3951 = vpack.c.bf16 %v3887, %v3887
      %v3952 = vpack.c.bf16 %v3889, %v3889
      %v3953 = vpack.c.bf16 %v3892, %v3892
      %v3954 = vpack.c.bf16 %v3894, %v3894
      %v3955 = vpack.c.bf16 %v3897, %v3897
      %v3956 = vpack.c.bf16 %v3899, %v3899
      %v3957 = vpack.c.bf16 %v3902, %v3902
      %v3958 = vpack.c.bf16 %v3904, %v3904
      %v3959 = vpack.c.bf16 %v3907, %v3907
      %v3960 = vpack.c.bf16 %v3909, %v3909
      %v3961 = vpack.c.bf16 %v3912, %v3912
      %v3962 = vpack.c.bf16 %v3914, %v3914
      %v3963 = vpack.c.bf16 %v3917, %v3917
      %v3964 = vpack.c.bf16 %v3919, %v3919
      %v3965 = vpack.c.bf16 %v3922, %v3922
      %v3966 = vpack.c.bf16 %v3924, %v3924
      %v3967 = vpack.c.bf16 %v3927, %v3927
      %v3968 = vpack.c.bf16 %v3929, %v3929
      %v3969 = vpack.c.bf16 %v3932, %v3932
      %v3970 = vpack.c.bf16 %v3934, %v3934
      %v3971 = vpack.c.bf16 %v3937, %v3937
      %v3972 = vpack.c.bf16 %v3939, %v3939
      %3973 = vst [vmem:[%s527] sm:$0xf] %v3941
      %3974 = vst [vmem:[%s527 + $0x4] sm:$0xf] %v3942
      %3975 = vst [vmem:[%s527 + $0x8] sm:$0xf] %v3943
      %3976 = vst [vmem:[%s527 + $0xc] sm:$0xf] %v3944
      %3977 = vst [vmem:[%s527 + $0x10] sm:$0xf] %v3945
      %3978 = vst [vmem:[%s527 + $0x14] sm:$0xf] %v3946
      %3979 = vst [vmem:[%s527 + $0x18] sm:$0xf] %v3947
      %3980 = vst [vmem:[%s527 + $0x1c] sm:$0xf] %v3948
      %3981 = vst [vmem:[%s527 + $0x20] sm:$0xf] %v3949
      %3982 = vst [vmem:[%s527 + $0x24] sm:$0xf] %v3950
      %3983 = vst [vmem:[%s527 + $0x28] sm:$0xf] %v3951
      %3984 = vst [vmem:[%s527 + $0x2c] sm:$0xf] %v3952
      %3985 = vst [vmem:[%s527 + $0x30] sm:$0xf] %v3953
      %3986 = vst [vmem:[%s527 + $0x34] sm:$0xf] %v3954
      %3987 = vst [vmem:[%s527 + $0x38] sm:$0xf] %v3955
      %3988 = vst [vmem:[%s527 + $0x3c] sm:$0xf] %v3956
      %3989 = vst [vmem:[%s527 + $0x40] sm:$0xf] %v3957
      %3990 = vst [vmem:[%s527 + $0x44] sm:$0xf] %v3958
      %3991 = vst [vmem:[%s527 + $0x48] sm:$0xf] %v3959
      %3992 = vst [vmem:[%s527 + $0x4c] sm:$0xf] %v3960
      %3993 = vst [vmem:[%s527 + $0x50] sm:$0xf] %v3961
      %3994 = vst [vmem:[%s527 + $0x54] sm:$0xf] %v3962
      %3995 = vst [vmem:[%s527 + $0x58] sm:$0xf] %v3963
      %3996 = vst [vmem:[%s527 + $0x5c] sm:$0xf] %v3964
      %3997 = vst [vmem:[%s527 + $0x60] sm:$0xf] %v3965
      %3998 = vst [vmem:[%s527 + $0x64] sm:$0xf] %v3966
      %3999 = vst [vmem:[%s527 + $0x68] sm:$0xf] %v3967
      %4000 = vst [vmem:[%s527 + $0x6c] sm:$0xf] %v3968
      %4001 = vst [vmem:[%s527 + $0x70] sm:$0xf] %v3969
      %4002 = vst [vmem:[%s527 + $0x74] sm:$0xf] %v3970
      %4003 = vst [vmem:[%s527 + $0x78] sm:$0xf] %v3971
      %4004 = vst [vmem:[%s527 + $0x7c] sm:$0xf] %v3972
      %v4005 = vadd.f32 %v3862, %v3864
      %v4006 = vadd.f32 %v4005, %v3867
      %v4007 = vadd.f32 %v4006, %v3869
      %v4008 = vadd.f32 %v4007, %v3872
      %v4009 = vadd.f32 %v4008, %v3874
      %v4010 = vadd.f32 %v4009, %v3877
      %v4011 = vadd.f32 %v4010, %v3879
      %v4012 = vadd.f32 %v4011, %v3882
      %v4013 = vadd.f32 %v4012, %v3884
      %v4014 = vadd.f32 %v4013, %v3887
      %v4015 = vadd.f32 %v4014, %v3889
      %v4016 = vadd.f32 %v4015, %v3892
      %v4017 = vadd.f32 %v4016, %v3894
      %v4018 = vadd.f32 %v4017, %v3897
      %v4019 = vadd.f32 %v4018, %v3899
      %v4020 = vadd.f32 %v4019, %v3902
      %v4021 = vadd.f32 %v4020, %v3904
      %v4022 = vadd.f32 %v4021, %v3907
      %v4023 = vadd.f32 %v4022, %v3909
      %v4024 = vadd.f32 %v4023, %v3912
      %v4025 = vadd.f32 %v4024, %v3914
      %v4026 = vadd.f32 %v4025, %v3917
      %v4027 = vadd.f32 %v4026, %v3919
      %v4028 = vadd.f32 %v4027, %v3922
      %v4029 = vadd.f32 %v4028, %v3924
      %v4030 = vadd.f32 %v4029, %v3927
      %v4031 = vadd.f32 %v4030, %v3929
      %v4032 = vadd.f32 %v4031, %v3932
      %v4033 = vadd.f32 %v4032, %v3934
      %v4034 = vadd.f32 %v4033, %v3937
      %v4035 = vadd.f32 %v4034, %v3939
      %v4036 = vrot.slane %v4035, 4
      %v4037 = vadd.f32 %v4035, %v4036
      %v4038 = vrot.slane %v4037, 2
      %v4039 = vadd.f32 %v4037, %v4038
      %v4040 = vrot.slane %v4039, 1
      %v4041 = vadd.f32 %v4039, %v4040
      %v4042 = vmul.f32 %v3862, %v3862
      %v4043 = vmul.f32 %v3864, %v3864
      %v4044 = vmul.f32 %v3867, %v3867
      %v4045 = vmul.f32 %v3869, %v3869
      %v4046 = vmul.f32 %v3872, %v3872
      %v4047 = vmul.f32 %v3874, %v3874
      %v4048 = vmul.f32 %v3877, %v3877
      %v4049 = vmul.f32 %v3879, %v3879
      %v4050 = vmul.f32 %v3882, %v3882
      %v4051 = vmul.f32 %v3884, %v3884
      %v4052 = vmul.f32 %v3887, %v3887
      %v4053 = vmul.f32 %v3889, %v3889
      %v4054 = vmul.f32 %v3892, %v3892
      %v4055 = vmul.f32 %v3894, %v3894
      %v4056 = vmul.f32 %v3897, %v3897
      %v4057 = vmul.f32 %v3899, %v3899
      %v4058 = vmul.f32 %v3902, %v3902
      %v4059 = vmul.f32 %v3904, %v3904
      %v4060 = vmul.f32 %v3907, %v3907
      %v4061 = vmul.f32 %v3909, %v3909
      %v4062 = vmul.f32 %v3912, %v3912
      %v4063 = vmul.f32 %v3914, %v3914
      %v4064 = vmul.f32 %v3917, %v3917
      %v4065 = vmul.f32 %v3919, %v3919
      %v4066 = vmul.f32 %v3922, %v3922
      %v4067 = vmul.f32 %v3924, %v3924
      %v4068 = vmul.f32 %v3927, %v3927
      %v4069 = vmul.f32 %v3929, %v3929
      %v4070 = vmul.f32 %v3932, %v3932
      %v4071 = vmul.f32 %v3934, %v3934
      %v4072 = vmul.f32 %v3937, %v3937
      %v4073 = vmul.f32 %v3939, %v3939
      %v4074 = vadd.f32 %v4042, %v4043
      %v4075 = vadd.f32 %v4074, %v4044
      %v4076 = vadd.f32 %v4075, %v4045
      %v4077 = vadd.f32 %v4076, %v4046
      %v4078 = vadd.f32 %v4077, %v4047
      %v4079 = vadd.f32 %v4078, %v4048
      %v4080 = vadd.f32 %v4079, %v4049
      %v4081 = vadd.f32 %v4080, %v4050
      %v4082 = vadd.f32 %v4081, %v4051
      %v4083 = vadd.f32 %v4082, %v4052
      %v4084 = vadd.f32 %v4083, %v4053
      %v4085 = vadd.f32 %v4084, %v4054
      %v4086 = vadd.f32 %v4085, %v4055
      %v4087 = vadd.f32 %v4086, %v4056
      %v4088 = vadd.f32 %v4087, %v4057
      %v4089 = vadd.f32 %v4088, %v4058
      %v4090 = vadd.f32 %v4089, %v4059
      %v4091 = vadd.f32 %v4090, %v4060
      %v4092 = vadd.f32 %v4091, %v4061
      %v4093 = vadd.f32 %v4092, %v4062
      %v4094 = vadd.f32 %v4093, %v4063
      %v4095 = vadd.f32 %v4094, %v4064
      %v4096 = vadd.f32 %v4095, %v4065
      %v4097 = vadd.f32 %v4096, %v4066
      %v4098 = vadd.f32 %v4097, %v4067
      %v4099 = vadd.f32 %v4098, %v4068
      %v4100 = vadd.f32 %v4099, %v4069
      %v4101 = vadd.f32 %v4100, %v4070
      %v4102 = vadd.f32 %v4101, %v4071
      %v4103 = vadd.f32 %v4102, %v4072
      %v4104 = vadd.f32 %v4103, %v4073
      %v4105 = vrot.slane %v4104, 4
      %v4106 = vadd.f32 %v4104, %v4105
      %v4107 = vrot.slane %v4106, 2
      %v4108 = vadd.f32 %v4106, %v4107
      %v4109 = vrot.slane %v4108, 1
      %v4110 = vadd.f32 %v4108, %v4109
      %v4111 = vsel %vm3657, %v4041, %v4110
      %4112 = vst [vmem:[%s535] sm:$0x3] %v4111
      %s4113 = smul.u32 16, %s25
      %p4114 = scmp.lt.s32.totalorder %s24, 1
      %s4115 = scalar_select %p4114, %s24, 1
      %p4116 = scmp.lt.s32.totalorder %s4113, 15
      %s4117 = scalar_select %p4116, %s4113, 15
      %s4118 = smul.addr %s4117, 2
      %s4119 = smul.addr %s4115, 32
      %s4120 = sadd.s32 %s4118, %s4119
      %s4121 = smul.addr %s4120, 4
      %s4122 = scalar_lea.vmem %s5, %s4121
      %p4123 = scmp.lt.s32.totalorder %s24, 1
      %s4124 = scalar_select %p4123, %s24, 1
      %p4125 = scmp.lt.s32.totalorder %s25, 0
      %s4126 = scalar_select %p4125, %s25, 0
      %s4127 = sadd.s32 %s4126, %s4124
      %s4128 = smul.addr %s4127, 2
      %s4129 = scalar_lea.vmem %s6, %s4128
      %s4130 = smul.u32 16, %s25
      %p4131 = scmp.lt.s32.totalorder %s24, 1
      %s4132 = scalar_select %p4131, %s24, 1
      %p4133 = scmp.lt.s32.totalorder %s4130, 15
      %s4134 = scalar_select %p4133, %s4130, 15
      %s4135 = smul.addr %s4134, 2
      %s4136 = smul.addr %s4132, 32
      %s4137 = sadd.s32 %s4135, %s4136
      %s4138 = smul.addr %s4137, 4
      %s4139 = scalar_lea.vmem %s7, %s4138
      %p4140 = scmp.lt.s32.totalorder %s24, 1
      %s4141 = scalar_select %p4140, %s24, 1
      %p4142 = scmp.lt.s32.totalorder %s25, 0
      %s4143 = scalar_select %p4142, %s25, 0
      %s4144 = sadd.s32 %s4143, %s4141
      %s4145 = smul.addr %s4144, 2
      %s4146 = scalar_lea.vmem %s8, %s4145
      // Predicated region
      $region45: #{_lambda_.3} parent=39 // pred_check
        %p4147 = pneg %p194
      $region46: #{_lambda_.3} parent=39 // pred_check_branch
        %4149 = sbr.rel (%p4147) target = $region48
      $region47: #{_lambda_.3} parent=39 // pred_region
        %s4150 = smul.u32 16, %s25
      $region48: #{_lambda_.3} parent=39 // pred_fallthru
        _
      // Predicated region
      $region49: #{_lambda_.3} parent=39 // pred_check
        %p4151 = pneg %p222
      $region50: #{_lambda_.3} parent=39 // pred_check_branch
        %4153 = sbr.rel (%p4151) target = $region52
      $region51: #{_lambda_.3} parent=39 // pred_region
        _
      $region52: #{_lambda_.3} parent=39 // pred_fallthru
        _
      // Predicated region
      $region53: #{_lambda_.3} parent=39 // pred_check
        %p4154 = pneg %p250
      $region54: #{_lambda_.3} parent=39 // pred_check_branch
        %4156 = sbr.rel (%p4154) target = $region56
      $region55: #{_lambda_.3} parent=39 // pred_region
        %s4157 = smul.u32 16, %s25
      $region56: #{_lambda_.3} parent=39 // pred_fallthru
        _
      // Predicated region
      $region57: #{_lambda_.3} parent=39 // pred_check
        %p4158 = pneg %p278
      $region58: #{_lambda_.3} parent=39 // pred_check_branch
        %4160 = sbr.rel (%p4158) target = $region60
      $region59: #{_lambda_.3} parent=39 // pred_region
        _
      $region60: #{_lambda_.3} parent=39 // pred_fallthru
        _
    $region40: #{_lambda_.3} parent=5 // pred_fallthru
      _
    %p4161 = scmp.le.s32.totalorder 2, %s15
    // Predicated region
    $region61: #{_lambda_.3} parent=5 // pred_check
      %p4162 = pneg %p4161
    $region62: #{_lambda_.3} parent=5 // pred_check_branch
      %4164 = sbr.rel (%p4162) target = $region64
    $region63: #{_lambda_.3} parent=5 // pred_region
      %s4165 = ssub.s32 %s15, 2
      // Predicated region
      $region65: #{_lambda_.3} parent=63 // pred_check
        %p4166 = pneg %p200
      $region66: #{_lambda_.3} parent=63 // pred_check_branch
        %4168 = sbr.rel (%p4166) target = $region68
      $region67: #{_lambda_.3} parent=63 // pred_region
        %s4169 = smul.u32 16, %s27
        %p4170 = scmp.lt.s32.totalorder %s26, 1
        %s4171 = scalar_select %p4170, %s26, 1
        %p4172 = scmp.lt.s32.totalorder %s4169, 15
        %s4173 = scalar_select %p4172, %s4169, 15
        %s4174 = smul.addr %s4173, 2
        %s4175 = smul.addr %s4171, 32
        %s4176 = sadd.s32 %s4174, %s4175
        %s4177 = smul.addr %s4176, 4
        %s4178 = scalar_lea.vmem %s5, %s4177
      $region68: #{_lambda_.3} parent=63 // pred_fallthru
        _
      // Predicated region
      $region69: #{_lambda_.3} parent=63 // pred_check
        %p4179 = pneg %p228
      $region70: #{_lambda_.3} parent=63 // pred_check_branch
        %4181 = sbr.rel (%p4179) target = $region72
      $region71: #{_lambda_.3} parent=63 // pred_region
        %p4182 = scmp.lt.s32.totalorder %s26, 1
        %s4183 = scalar_select %p4182, %s26, 1
        %p4184 = scmp.lt.s32.totalorder %s27, 0
        %s4185 = scalar_select %p4184, %s27, 0
        %s4186 = sadd.s32 %s4185, %s4183
        %s4187 = smul.addr %s4186, 2
        %s4188 = scalar_lea.vmem %s6, %s4187
      $region72: #{_lambda_.3} parent=63 // pred_fallthru
        _
      // Predicated region
      $region73: #{_lambda_.3} parent=63 // pred_check
        %p4189 = pneg %p256
      $region74: #{_lambda_.3} parent=63 // pred_check_branch
        %4191 = sbr.rel (%p4189) target = $region76
      $region75: #{_lambda_.3} parent=63 // pred_region
        %s4192 = smul.u32 16, %s27
        %p4193 = scmp.lt.s32.totalorder %s26, 1
        %s4194 = scalar_select %p4193, %s26, 1
        %p4195 = scmp.lt.s32.totalorder %s4192, 15
        %s4196 = scalar_select %p4195, %s4192, 15
        %s4197 = smul.addr %s4196, 2
        %s4198 = smul.addr %s4194, 32
        %s4199 = sadd.s32 %s4197, %s4198
        %s4200 = smul.addr %s4199, 4
        %s4201 = scalar_lea.vmem %s7, %s4200
      $region76: #{_lambda_.3} parent=63 // pred_fallthru
        _
      // Predicated region
      $region77: #{_lambda_.3} parent=63 // pred_check
        %p4202 = pneg %p284
      $region78: #{_lambda_.3} parent=63 // pred_check_branch
        %4204 = sbr.rel (%p4202) target = $region80
      $region79: #{_lambda_.3} parent=63 // pred_region
        %p4205 = scmp.lt.s32.totalorder %s26, 1
        %s4206 = scalar_select %p4205, %s26, 1
        %p4207 = scmp.lt.s32.totalorder %s27, 0
        %s4208 = scalar_select %p4207, %s27, 0
        %s4209 = sadd.s32 %s4208, %s4206
        %s4210 = smul.addr %s4209, 2
        %s4211 = scalar_lea.vmem %s8, %s4210
      $region80: #{_lambda_.3} parent=63 // pred_fallthru
        _
    $region64: #{_lambda_.3} parent=5 // pred_fallthru
      _
  $region6: #{_lambda_.3} parent=0 // loop_footer
    %s19 = sadd.s32 1, %s15
  $region7: #{_lambda_.3} parent=0 // loop_footer_branch
    %14 = sbr.rel target = $region3
  $region8: #{_lambda_.3} parent=0 // loop_exit
    _

</llo_original>
